<compile_context>
chip_gen: v7x
topology: tpu7x:2x2x1
jax: 0.10.0
libtpu: 0.0.40
codegen_flags: <defaults>
</compile_context>

<pallas_src>
import math
from functools import partial

import numpy as np
import jax
import jax.numpy as jnp
from jax.experimental import pallas as pl
from jax.experimental.pallas import tpu as pltpu

NEG = -1e9      # additive attention-mask value (ONMT uses -1e18 masked_fill; -1e9 is safe in f32)
LN_EPS = 1e-6   # ONMT transformer LayerNorm eps

_PAR1 = pltpu.CompilerParams(dimension_semantics=("parallel",))
# [R4] raise the scoped VMEM limit for the big fused kernels (v5e default is 16 MiB)
_BIG = pltpu.CompilerParams(dimension_semantics=("parallel",),
                            vmem_limit_bytes=64 * 1024 * 1024)


def _row_tile(m, target=256):
    """Largest row tile <= target that divides m (multiple of 8 when actually tiling). [R11]"""
    if m <= target:
        return m
    t = (target // 8) * 8
    while t >= 8:
        if m % t == 0:
            return t
        t -= 8
    return m


# --------------------------------------------------------------------------------------
# Fused prenet kernels (Linear + *sqrt(D) + positional encoding [+ speaker term])  [R6]
# --------------------------------------------------------------------------------------

def _prenet_enc_kernel(cd_ref, spk_ref, wc_ref, ws_ref, b_ref, pe_ref, o_ref, *, scale):
    # (code|spk) concat folded into split weights; spk projection + PE add done in-kernel.
    y = jnp.dot(cd_ref[0].astype(jnp.bfloat16), wc_ref[...],
                preferred_element_type=jnp.float32)                       # (L, D)
    y_spk = jnp.dot(spk_ref[0].astype(jnp.bfloat16), ws_ref[...],
                    preferred_element_type=jnp.float32)                   # (1, D)
    o_ref[0] = ((y + y_spk + b_ref[...]) * scale + pe_ref[...]).astype(o_ref.dtype)


def prenet_enc_block(cd, spk3, pe, p, D):
    B, L, dim_code = cd.shape
    dim_spk = spk3.shape[2]
    return pl.pallas_call(
        partial(_prenet_enc_kernel, scale=math.sqrt(D)),
        out_shape=jax.ShapeDtypeStruct((B, L, D), jnp.bfloat16),
        grid=(B,),
        in_specs=[pl.BlockSpec((1, L, dim_code), lambda b: (b, 0, 0)),
                  pl.BlockSpec((1, 1, dim_spk), lambda b: (b, 0, 0)),
                  pl.BlockSpec((dim_code, D), lambda b: (0, 0)),
                  pl.BlockSpec((dim_spk, D), lambda b: (0, 0)),
                  pl.BlockSpec((1, D), lambda b: (0, 0)),
                  pl.BlockSpec((L, D), lambda b: (0, 0))],
        out_specs=pl.BlockSpec((1, L, D), lambda b: (b, 0, 0)),
        compiler_params=_PAR1,
    )(cd, spk3, p['w_code'], p['w_spk'], p['b'], pe)


def _prenet_dec_kernel(x_ref, w_ref, b_ref, pe_ref, o_ref, *, scale):
    y = jnp.dot(x_ref[0].astype(jnp.bfloat16), w_ref[...],
                preferred_element_type=jnp.float32) + b_ref[...]
    o_ref[0] = (y * scale + pe_ref[...]).astype(o_ref.dtype)


def prenet_dec_block(tgt_b, pe, p, Dd):
    B, T, F = tgt_b.shape
    return pl.pallas_call(
        partial(_prenet_dec_kernel, scale=math.sqrt(Dd)),
        out_shape=jax.ShapeDtypeStruct((B, T, Dd), jnp.bfloat16),
        grid=(B,),
        in_specs=[pl.BlockSpec((1, T, F), lambda b: (b, 0, 0)),
                  pl.BlockSpec((F, Dd), lambda b: (0, 0)),
                  pl.BlockSpec((1, Dd), lambda b: (0, 0)),
                  pl.BlockSpec((T, Dd), lambda b: (0, 0))],
        out_specs=pl.BlockSpec((1, T, Dd), lambda b: (b, 0, 0)),
        compiler_params=_PAR1,
    )(tgt_b, p['w'], p['b'], pe)


# --------------------------------------------------------------------------------------
# Fused pre-LN FFN (+ optional fused final LayerNorm)  [R5][R7]
# --------------------------------------------------------------------------------------

def _ffn_kernel(x_ref, g_ref, b_ref, w1_ref, b1_ref, w2_ref, b2_ref, *args, eps, final_ln):
    if final_ln:
        g2_ref, bb2_ref, o_ref = args
    else:
        (o_ref,) = args
    x = x_ref[...].astype(jnp.float32)
    mu = jnp.mean(x, axis=-1, keepdims=True)
    xc = x - mu
    var = jnp.mean(xc * xc, axis=-1, keepdims=True)
    xn = xc * jax.lax.rsqrt(var + eps) * g_ref[...] + b_ref[...]
    h = jnp.maximum(jnp.dot(xn.astype(jnp.bfloat16), w1_ref[...],
                            preferred_element_type=jnp.float32) + b1_ref[...], 0.0)
    y = jnp.dot(h.astype(jnp.bfloat16), w2_ref[...],
                preferred_element_type=jnp.float32) + b2_ref[...] + x
    if final_ln:
        mu2 = jnp.mean(y, axis=-1, keepdims=True)
        yc = y - mu2
        var2 = jnp.mean(yc * yc, axis=-1, keepdims=True)
        y = yc * jax.lax.rsqrt(var2 + eps) * g2_ref[...] + bb2_ref[...]
    o_ref[...] = y.astype(o_ref.dtype)


def ffn_block(x2d, p, final_ln=None):
    M, D = x2d.shape
    F = p['w1'].shape[1]
    tm = _row_tile(M)
    in_specs = [pl.BlockSpec((tm, D), lambda i: (i, 0)),
                pl.BlockSpec((1, D), lambda i: (0, 0)),
                pl.BlockSpec((1, D), lambda i: (0, 0)),
                pl.BlockSpec((D, F), lambda i: (0, 0)),
                pl.BlockSpec((1, F), lambda i: (0, 0)),
                pl.BlockSpec((F, D), lambda i: (0, 0)),
                pl.BlockSpec((1, D), lambda i: (0, 0))]
    args = [x2d, p['ln_g'], p['ln_b'], p['w1'], p['b1'], p['w2'], p['b2']]
    if final_ln is not None:
        in_specs += [pl.BlockSpec((1, D), lambda i: (0, 0)),
                     pl.BlockSpec((1, D), lambda i: (0, 0))]
        args += [final_ln[0], final_ln[1]]
    return pl.pallas_call(
        partial(_ffn_kernel, eps=LN_EPS, final_ln=final_ln is not None),
        out_shape=jax.ShapeDtypeStruct((M, D), jnp.bfloat16),
        grid=(M // tm,),
        in_specs=in_specs,
        out_specs=pl.BlockSpec((tm, D), lambda i: (i, 0)),
        compiler_params=_BIG,
    )(*args)


# --------------------------------------------------------------------------------------
# Fused decoder-final-LayerNorm + postnet (single lane-dense output; gate = col 0)  [R10]
# --------------------------------------------------------------------------------------

def _postnet_kernel(x_ref, g_ref, bta_ref, w_ref, b_ref, o_ref, *, eps):
    x = x_ref[...].astype(jnp.float32)
    mu = jnp.mean(x, axis=-1, keepdims=True)
    xc = x - mu
    var = jnp.mean(xc * xc, axis=-1, keepdims=True)
    xn = xc * jax.lax.rsqrt(var + eps) * g_ref[...] + bta_ref[...]
    o_ref[...] = jnp.dot(xn.astype(jnp.bfloat16), w_ref[...],
                         preferred_element_type=jnp.float32) + b_ref[...]


def postnet_block(x2d, p):
    M, D = x2d.shape
    Nout = p['w'].shape[1]
    tm = _row_tile(M)
    return pl.pallas_call(
        partial(_postnet_kernel, eps=LN_EPS),
        out_shape=jax.ShapeDtypeStruct((M, Nout), jnp.float32),
        grid=(M // tm,),
        in_specs=[pl.BlockSpec((tm, D), lambda i: (i, 0)),
                  pl.BlockSpec((1, D), lambda i: (0, 0)),
                  pl.BlockSpec((1, D), lambda i: (0, 0)),
                  pl.BlockSpec((D, Nout), lambda i: (0, 0)),
                  pl.BlockSpec((1, Nout), lambda i: (0, 0))],
        out_specs=pl.BlockSpec((tm, Nout), lambda i: (i, 0)),
        compiler_params=_PAR1,
    )(x2d, p['ln_g'], p['ln_b'], p['w'], p['b'])


# --------------------------------------------------------------------------------------
# Fused multi-head attention blocks (pre-LN + QKV + softmax + single out-proj + residual)
# Masks built in-kernel from scalar-prefetched lengths (SMEM).  [R1][R5]
# --------------------------------------------------------------------------------------

def _self_attn_kernel(len_ref, x_ref, lng_ref, lnb_ref, wqkv_ref, bqkv_ref,
                      wo_ref, bo_ref, o_ref, *, heads, causal, eps):
    b = pl.program_id(0)
    L, D = x_ref.shape[1], x_ref.shape[2]
    hd = D // heads
    scale = 1.0 / math.sqrt(hd)

    x = x_ref[0].astype(jnp.float32)                          # (L, D)
    mu = jnp.mean(x, axis=-1, keepdims=True)
    xc = x - mu
    var = jnp.mean(xc * xc, axis=-1, keepdims=True)
    xn = xc * jax.lax.rsqrt(var + eps) * lng_ref[...] + lnb_ref[...]

    qkv = jnp.dot(xn.astype(jnp.bfloat16), wqkv_ref[...],
                  preferred_element_type=jnp.float32) + bqkv_ref[...]   # (L, 3D) f32

    n_valid = len_ref[b]
    col = jax.lax.broadcasted_iota(jnp.int32, (L, L), 1)
    valid = col < n_valid
    if causal:
        row = jax.lax.broadcasted_iota(jnp.int32, (L, L), 0)
        valid = jnp.logical_and(valid, col <= row)

    # TODO(synk): whole-sequence scores (no flash-style Lk tiling); fine at these dims (R3).
    ctx_heads = []
    for h in range(heads):
        qh = (qkv[:, h * hd:(h + 1) * hd] * scale).astype(jnp.bfloat16)
        kh = qkv[:, D + h * hd:D + (h + 1) * hd].astype(jnp.bfloat16)
        vh = qkv[:, 2 * D + h * hd:2 * D + (h + 1) * hd].astype(jnp.bfloat16)
        s = jax.lax.dot_general(qh, kh, (((1,), (1,)), ((), ())),
                                preferred_element_type=jnp.float32)      # (L, L) f32
        s = jnp.where(valid, s, NEG)
        m = jnp.max(s, axis=-1, keepdims=True)
        p = jnp.exp(s - m)
        p = p * pl.reciprocal(jnp.sum(p, axis=-1, keepdims=True), approx=True)
        ctx_heads.append(jnp.dot(p.astype(jnp.bfloat16), vh,
                                 preferred_element_type=jnp.float32))    # (L, hd)
    ctx = jnp.concatenate(ctx_heads, axis=-1)                            # (L, D)
    out = jnp.dot(ctx.astype(jnp.bfloat16), wo_ref[...],                 # single out-proj [R1]
                  preferred_element_type=jnp.float32)
    o_ref[0] = (out + bo_ref[...] + x).astype(o_ref.dtype)


def mha_self_block(x, lengths, p, heads, causal):
    """x: (B, L, D) bf16; lengths: (B,) int key-padding lengths. Returns attn(LN(x)) + x (bf16)."""
    B, L, D = x.shape
    gs = pltpu.PrefetchScalarGridSpec(
        num_scalar_prefetch=1,
        grid=(B,),
        in_specs=[pl.BlockSpec((1, L, D), lambda b, lens: (b, 0, 0)),
                  pl.BlockSpec((1, D), lambda b, lens: (0, 0)),
                  pl.BlockSpec((1, D), lambda b, lens: (0, 0)),
                  pl.BlockSpec((D, 3 * D), lambda b, lens: (0, 0)),
                  pl.BlockSpec((1, 3 * D), lambda b, lens: (0, 0)),
                  pl.BlockSpec((D, D), lambda b, lens: (0, 0)),
                  pl.BlockSpec((1, D), lambda b, lens: (0, 0))],
        out_specs=pl.BlockSpec((1, L, D), lambda b, lens: (b, 0, 0)),
    )
    return pl.pallas_call(
        partial(_self_attn_kernel, heads=heads, causal=causal, eps=LN_EPS),
        out_shape=jax.ShapeDtypeStruct((B, L, D), jnp.bfloat16),
        grid_spec=gs,
        compiler_params=_BIG,
    )(lengths.astype(jnp.int32), x, p['ln_g'], p['ln_b'], p['wqkv'], p['bqkv'],
      p['wo'], p['bo'])


def _cross_attn_kernel(lenm_ref, x_ref, mem_ref, spk_ref, wspk_ref, bspk_ref,
                       lng_ref, lnb_ref, wq_ref, bq_ref, wkv_ref, bkv_ref,
                       wo_ref, bo_ref, o_ref, *, heads, eps):
    b = pl.program_id(0)
    Lq, D = x_ref.shape[1], x_ref.shape[2]
    Lm = mem_ref.shape[1]
    hd = D // heads
    scale = 1.0 / math.sqrt(hd)

    x = x_ref[0].astype(jnp.float32)
    mu = jnp.mean(x, axis=-1, keepdims=True)
    xc = x - mu
    var = jnp.mean(xc * xc, axis=-1, keepdims=True)
    xn = xc * jax.lax.rsqrt(var + eps) * lng_ref[...] + lnb_ref[...]

    q = jnp.dot(xn.astype(jnp.bfloat16), wq_ref[...],
                preferred_element_type=jnp.float32) + bq_ref[...]        # (Lq, D)

    # [R7] speaker memory-token (position 0) projected in-kernel: folds the encoder_spk linear
    # and the [spk; memory] concat of the reference into the attention kernel (always valid).
    tok0 = jnp.dot(spk_ref[0].astype(jnp.bfloat16), wspk_ref[...],
                   preferred_element_type=jnp.float32) + bspk_ref[...]   # (1, D)
    kv = jnp.dot(mem_ref[0].astype(jnp.bfloat16), wkv_ref[...],
                 preferred_element_type=jnp.float32) + bkv_ref[...]      # (Lm, 2D)
    kv0 = jnp.dot(tok0.astype(jnp.bfloat16), wkv_ref[...],
                  preferred_element_type=jnp.float32) + bkv_ref[...]     # (1, 2D)

    n_valid = lenm_ref[b]                                                # valid memory_tx keys
    col = jax.lax.broadcasted_iota(jnp.int32, (Lq, Lm), 1)
    valid = col < n_valid

    ctx_heads = []
    for h in range(heads):
        qh = (q[:, h * hd:(h + 1) * hd] * scale).astype(jnp.bfloat16)
        kh = kv[:, h * hd:(h + 1) * hd].astype(jnp.bfloat16)
        vh = kv[:, D + h * hd:D + (h + 1) * hd].astype(jnp.bfloat16)
        k0 = kv0[:, h * hd:(h + 1) * hd]                                 # (1, hd) f32
        v0 = kv0[:, D + h * hd:D + (h + 1) * hd]                         # (1, hd) f32
        s = jax.lax.dot_general(qh, kh, (((1,), (1,)), ((), ())),
                                preferred_element_type=jnp.float32)      # (Lq, Lm)
        s = jnp.where(valid, s, NEG)
        s0 = jnp.sum(qh.astype(jnp.float32) * k0, axis=-1, keepdims=True)  # (Lq, 1) spk token
        m = jnp.maximum(jnp.max(s, axis=-1, keepdims=True), s0)
        p = jnp.exp(s - m)
        p0 = jnp.exp(s0 - m)
        inv = pl.reciprocal(jnp.sum(p, axis=-1, keepdims=True) + p0, approx=True)
        ctx = jnp.dot(p.astype(jnp.bfloat16), vh, preferred_element_type=jnp.float32)
        ctx_heads.append((ctx + p0 * v0) * inv)
    ctx = jnp.concatenate(ctx_heads, axis=-1)                            # (Lq, D)
    out = jnp.dot(ctx.astype(jnp.bfloat16), wo_ref[...],                 # single out-proj [R1]
                  preferred_element_type=jnp.float32)
    o_ref[0] = (out + bo_ref[...] + x).astype(o_ref.dtype)


def mha_cross_block(x, mem, spk3, mem_lengths, p, p_spk, heads):
    """x: (B,Lq,D) bf16, mem: (B,Lm,D) bf16, spk3: (B,1,dim_spk), mem_lengths: valid mem keys.
    The speaker token (always valid, memory position 0) is built in-kernel, so this is
    equivalent to ONMT attention over [spk; memory] with memory_lengths = mem_lengths + 1."""
    B, Lq, D = x.shape
    Lm = mem.shape[1]
    dim_spk = spk3.shape[2]
    gs = pltpu.PrefetchScalarGridSpec(
        num_scalar_prefetch=1,
        grid=(B,),
        in_specs=[pl.BlockSpec((1, Lq, D), lambda b, lens: (b, 0, 0)),
                  pl.BlockSpec((1, Lm, D), lambda b, lens: (b, 0, 0)),
                  pl.BlockSpec((1, 1, dim_spk), lambda b, lens: (b, 0, 0)),
                  pl.BlockSpec((dim_spk, D), lambda b, lens: (0, 0)),
                  pl.BlockSpec((1, D), lambda b, lens: (0, 0)),
                  pl.BlockSpec((1, D), lambda b, lens: (0, 0)),
                  pl.BlockSpec((1, D), lambda b, lens: (0, 0)),
                  pl.BlockSpec((D, D), lambda b, lens: (0, 0)),
                  pl.BlockSpec((1, D), lambda b, lens: (0, 0)),
                  pl.BlockSpec((D, 2 * D), lambda b, lens: (0, 0)),
                  pl.BlockSpec((1, 2 * D), lambda b, lens: (0, 0)),
                  pl.BlockSpec((D, D), lambda b, lens: (0, 0)),
                  pl.BlockSpec((1, D), lambda b, lens: (0, 0))],
        out_specs=pl.BlockSpec((1, Lq, D), lambda b, lens: (b, 0, 0)),
    )
    return pl.pallas_call(
        partial(_cross_attn_kernel, heads=heads, eps=LN_EPS),
        out_shape=jax.ShapeDtypeStruct((B, Lq, D), jnp.bfloat16),
        grid_spec=gs,
        compiler_params=_BIG,
    )(mem_lengths.astype(jnp.int32), x, mem, spk3, p_spk['w'], p_spk['b'],
      p['ln_g'], p['ln_b'], p['wq'], p['bq'], p['wkv'], p['bkv'], p['wo'], p['bo'])


# --------------------------------------------------------------------------------------
# Fused encoder_cd (masked linear) + filter-bank segment-mean + bmm kernel  [R9]
# --------------------------------------------------------------------------------------

def _code_fb_kernel(len_ref, cep_ref, aux_ref, w_ref, b_ref, o_ref):
    b = pl.program_id(0)
    Tl = cep_ref.shape[1]
    Ls = aux_ref.shape[1]
    # TODO(synk): Encoder_Code_2 internals not provided; masked linear approximation.
    cd = jnp.dot(cep_ref[0].astype(jnp.bfloat16), w_ref[...],
                 preferred_element_type=jnp.float32) + b_ref[...]        # (Tl, dim_code)
    aux = aux_ref[0]                                                     # (Ls, 3): start, end, inv*mask
    ti = jax.lax.broadcasted_iota(jnp.int32, (Ls, Tl), 1)
    tf = ti.astype(jnp.float32)
    seg = jnp.logical_and(tf >= aux[:, 0:1], tf < aux[:, 1:2])
    # fold mask_long (treated as prefix/length mask) into the filter bank
    seg = jnp.logical_and(seg, ti < len_ref[b])
    fb = jnp.where(seg, aux[:, 2:3], 0.0)                                # (Ls, Tl) filter bank
    o_ref[0] = jnp.dot(fb.astype(jnp.bfloat16), cd.astype(jnp.bfloat16),
                       preferred_element_type=jnp.float32).astype(o_ref.dtype)


def code_fb_block(cep, long_lens, aux, p):
    B, Tl, dim_cep = cep.shape
    Ls = aux.shape[1]
    dim_code = p['w'].shape[1]
    gs = pltpu.PrefetchScalarGridSpec(
        num_scalar_prefetch=1,
        grid=(B,),
        in_specs=[pl.BlockSpec((1, Tl, dim_cep), lambda b, lens: (b, 0, 0)),
                  pl.BlockSpec((1, Ls, 3), lambda b, lens: (b, 0, 0)),
                  pl.BlockSpec((dim_cep, dim_code), lambda b, lens: (0, 0)),
                  pl.BlockSpec((1, dim_code), lambda b, lens: (0, 0))],
        out_specs=pl.BlockSpec((1, Ls, dim_code), lambda b, lens: (b, 0, 0)),
    )
    return pl.pallas_call(
        _code_fb_kernel,
        out_shape=jax.ShapeDtypeStruct((B, Ls, dim_code), jnp.bfloat16),
        grid_spec=gs,
        compiler_params=_PAR1,
    )(long_lens.astype(jnp.int32), cep, aux, p['w'], p['b'])


# --------------------------------------------------------------------------------------
# Generator_2 forward
# --------------------------------------------------------------------------------------

def generator2_forward(params, hp, cep_in, mask_long, codes_mask, num_rep, len_short,
                       tgt_spect, len_spect, spk_emb):
    B, T_long, _ = cep_in.shape
    L_short = num_rep.shape[1]
    heads = hp['heads']
    D = hp['enc_rnn_size']
    Dd = hp['dec_rnn_size']

    # --- encoder_cd + filter_bank_mean + bmm (fused, per-batch grid) --------------------
    num_rep_i = num_rep.astype(jnp.int32)
    cum = jnp.cumsum(num_rep_i, axis=1)
    start = cum - num_rep_i
    invc = codes_mask.astype(jnp.float32) / jnp.maximum(num_rep_i, 1).astype(jnp.float32)
    aux = jnp.stack([start.astype(jnp.float32), cum.astype(jnp.float32), invc], axis=-1)
    long_lens = jnp.sum(mask_long, axis=1).astype(jnp.int32)
    cd_short = code_fb_block(cep_in, long_lens, aux, params['enc_cd'])   # (B, L_short, dim_code) bf16

    spk3 = spk_emb.reshape(B, 1, -1)

    # --- encoder_tx : Prenet (concat folded, PE + spk term in-kernel) + 1 pre-LN layer ---
    # TODO(synk): exact ONMT encoder layer count unknown; single pre-LN layer used.
    pe_enc = params['pe_enc'][:L_short, :]
    h = prenet_enc_block(cd_short, spk3, pe_enc, params['tx_prenet'], D)  # (B, L_short, D) bf16
    h = mha_self_block(h, len_short, params['enc_layer']['self_attn'], heads, causal=False)
    memory_tx = ffn_block(h.reshape(B * L_short, D), params['enc_layer']['ffn'],
                          final_ln=(params['enc_ln_g'], params['enc_ln_b'])
                          ).reshape(B, L_short, D)                        # encoder final LN fused [R7]

    # --- decoder_sp : Prenet + 1 pre-LN layer + final LN + postnet -----------------------
    # TODO(synk): exact ONMT decoder layer count unknown; single pre-LN layer used.
    # TODO(synk): (T,B,·)<->(B,T,·) transposes kept in XLA (review R8): B<8 sublane blocks
    #             are not (8,128)-legal BlockSpecs.
    T_dec = tgt_spect.shape[0]
    tgt_b = jnp.transpose(tgt_spect, (1, 0, 2))                           # (B, T_dec, dim_freq)
    pe_dec = params['pe_dec'][:T_dec, :]
    d = prenet_dec_block(tgt_b, pe_dec, params['dec_prenet'], Dd)         # (B, T_dec, Dd) bf16

    d = mha_self_block(d, len_spect, params['dec_layer']['self_attn'], heads, causal=True)
    # speaker-token prepend + encoder_spk linear folded into the cross-attn kernel [R7]
    d = mha_cross_block(d, memory_tx, spk3, len_short,
                        params['dec_layer']['ctx_attn'], params['enc_spk'], heads)
    d = ffn_block(d.reshape(B * T_dec, Dd), params['dec_layer']['ffn'])

    sg = postnet_block(d, params['postnet'])                              # (B*T_dec, dim_freq+1) f32
    sg = sg.reshape(B, T_dec, -1)
    spect = sg[:, :, 1:].transpose(1, 0, 2)                               # (T_dec, B, dim_freq)
    gate = sg[:, :, :1].transpose(1, 0, 2)                                # (T_dec, B, 1)
    return spect, gate


# --------------------------------------------------------------------------------------
# Deterministic parameter init (matmul weights in bf16, biases / LN params in f32)
# --------------------------------------------------------------------------------------

def _lin_p(key, din, dout):
    return {'w': (0.02 * jax.random.normal(key, (din, dout), jnp.float32)).astype(jnp.bfloat16),
            'b': jnp.zeros((1, dout), jnp.float32)}


def _mha_self_p(key, d):
    ks = jax.random.split(key, 4)
    wq, wk, wv, wo = [0.02 * jax.random.normal(k, (d, d), jnp.float32) for k in ks]
    return {'ln_g': jnp.ones((1, d), jnp.float32), 'ln_b': jnp.zeros((1, d), jnp.float32),
            'wqkv': jnp.concatenate([wq, wk, wv], axis=1).astype(jnp.bfloat16),
            'bqkv': jnp.zeros((1, 3 * d), jnp.float32),
            'wo': wo.astype(jnp.bfloat16),                 # (D, D) single out-proj [R1]
            'bo': jnp.zeros((1, d), jnp.float32)}


def _mha_cross_p(key, d):
    ks = jax.random.split(key, 4)
    wq, wk, wv, wo = [0.02 * jax.random.normal(k, (d, d), jnp.float32) for k in ks]
    return {'ln_g': jnp.ones((1, d), jnp.float32), 'ln_b': jnp.zeros((1, d), jnp.float32),
            'wq': wq.astype(jnp.bfloat16), 'bq': jnp.zeros((1, d), jnp.float32),
            'wkv': jnp.concatenate([wk, wv], axis=1).astype(jnp.bfloat16),
            'bkv': jnp.zeros((1, 2 * d), jnp.float32),
            'wo': wo.astype(jnp.bfloat16),                 # (D, D) single out-proj [R1]
            'bo': jnp.zeros((1, d), jnp.float32)}


def _ffn_p(key, d, dff):
    k1, k2 = jax.random.split(key)
    return {'ln_g': jnp.ones((1, d), jnp.float32), 'ln_b': jnp.zeros((1, d), jnp.float32),
            'w1': (0.02 * jax.random.normal(k1, (d, dff), jnp.float32)).astype(jnp.bfloat16),
            'b1': jnp.zeros((1, dff), jnp.float32),
            'w2': (0.02 * jax.random.normal(k2, (dff, d), jnp.float32)).astype(jnp.bfloat16),
            'b2': jnp.zeros((1, d), jnp.float32)}


def make_pe(max_len, dim):
    pos = np.arange(max_len, dtype=np.float32)[:, None]
    div = np.exp(np.arange(0, dim, 2, dtype=np.float32) * -(math.log(10000.0) / dim))
    pe = np.zeros((max_len, dim), dtype=np.float32)
    pe[:, 0::2] = np.sin(pos * div)
    pe[:, 1::2] = np.cos(pos * div)
    return jnp.asarray(pe)


def init_params(key, hp):
    ks = jax.random.split(key, 12)
    D, Dd = hp['enc_rnn_size'], hp['dec_rnn_size']
    # prenet weight for the concatenated (code | spk) input, split into the two halves
    w_pre = 0.02 * jax.random.normal(ks[2], (hp['dim_code'] + hp['dim_spk'], D), jnp.float32)
    return {
        'enc_cd': _lin_p(ks[0], hp['dim_cep'], hp['dim_code']),
        'enc_spk': _lin_p(ks[1], hp['dim_spk'], D),
        'tx_prenet': {'w_code': w_pre[:hp['dim_code']].astype(jnp.bfloat16),
                      'w_spk': w_pre[hp['dim_code']:].astype(jnp.bfloat16),
                      'b': jnp.zeros((1, D), jnp.float32)},
        'pe_enc': make_pe(hp['max_len'], D),
        'enc_layer': {'self_attn': _mha_self_p(ks[3], D),
                      'ffn': _ffn_p(ks[4], D, hp['ff'])},
        'enc_ln_g': jnp.ones((1, D), jnp.float32), 'enc_ln_b': jnp.zeros((1, D), jnp.float32),
        'dec_prenet': _lin_p(ks[5], hp['dim_freq'], Dd),
        'pe_dec': make_pe(hp['max_len'], Dd),
        'dec_layer': {'self_attn': _mha_self_p(ks[6], Dd),
                      'ctx_attn': _mha_cross_p(ks[7], Dd),
                      'ffn': _ffn_p(ks[8], Dd, hp['ff'])},
        # postnet Linear(dec_rnn_size, dim_freq+1): column 0 -> gate, columns 1: -> spect [R10]
        'postnet': {'ln_g': jnp.ones((1, Dd), jnp.float32),
                    'ln_b': jnp.zeros((1, Dd), jnp.float32),
                    'w': (0.02 * jax.random.normal(ks[9], (Dd, hp['dim_freq'] + 1),
                                                   jnp.float32)).astype(jnp.bfloat16),
                    'b': jnp.zeros((1, hp['dim_freq'] + 1), jnp.float32)},
    }


# --------------------------------------------------------------------------------------

if __name__ == "__main__":
    hp = dict(dim_freq=16, dim_code=8, dim_spk=8, dim_cep=20,
              enc_rnn_size=32, dec_rnn_size=32, heads=4, ff=64, max_len=1600)

    B, T_long, L_short, T_dec = 2, 16, 8, 8
    key = jax.random.PRNGKey(0)
    kp, k1, k2, k3 = jax.random.split(key, 4)

    params = init_params(kp, hp)

    cep_in = jax.random.normal(k1, (B, T_long, hp['dim_cep']), jnp.float32)
    long_lens = jnp.array([16, 12], jnp.int32)
    mask_long = (jnp.arange(T_long)[None, :] < long_lens[:, None]).astype(jnp.float32)
    len_short = jnp.array([8, 6], jnp.int32)
    codes_mask = (jnp.arange(L_short)[None, :] < len_short[:, None]).astype(jnp.float32)
    num_rep = jnp.full((B, L_short), 2, jnp.int32)            # run lengths, sum <= T_long
    tgt_spect = jax.random.normal(k2, (T_dec, B, hp['dim_freq']), jnp.float32)
    len_spect = jnp.array([8, 7], jnp.int32)
    spk_emb = jax.random.normal(k3, (B, hp['dim_spk']), jnp.float32)

    fwd = jax.jit(partial(generator2_forward, params, hp))
    spect, gate = fwd(cep_in, mask_long, codes_mask, num_rep, len_short,
                      tgt_spect, len_spect, spk_emb)
    jax.block_until_ready((spect, gate))

    assert spect.shape == (T_dec, B, hp['dim_freq'])
    assert gate.shape == (T_dec, B, 1)
    assert bool(jnp.all(jnp.isfinite(spect))) and bool(jnp.all(jnp.isfinite(gate)))
    print("KERNEL_OK")
</pallas_src>

<mosaic_0001>
module attributes {stable_mosaic.version = 11 : i64} {
  func.func @_code_fb_kernel(%arg0: i32, %arg1: memref<2xi32, #tpu.memory_space<smem>>, %arg2: memref<1x16x20xf32, #tpu.memory_space<vmem>>, %arg3: memref<1x8x3xf32, #tpu.memory_space<vmem>>, %arg4: memref<20x8xbf16, #tpu.memory_space<vmem>>, %arg5: memref<1x8xf32, #tpu.memory_space<vmem>>, %arg6: memref<1x8x8xbf16, #tpu.memory_space<vmem>>) attributes {dimension_semantics = [#tpu.dimension_semantics<parallel>], iteration_bounds = array<i64: 2>, scalar_prefetch = 1 : i64, scratch_operands = 0 : i64, tpu.core_type = #tpu.core_type<tc>, window_params = [{transform_indices = @transform_0, window_bounds = array<i64: 1, 16, 20>}, {transform_indices = @transform_1, window_bounds = array<i64: 1, 8, 3>}, {pipeline_mode = #tpu.pipeline_mode<synchronous>, transform_indices = @transform_2, window_bounds = array<i64: 20, 8>}, {pipeline_mode = #tpu.pipeline_mode<synchronous>, transform_indices = @transform_3, window_bounds = array<i64: 1, 8>}, {transform_indices = @transform_4, window_bounds = array<i64: 1, 8, 8>}]} {
    %c0 = arith.constant 0 : index
    %c0_0 = arith.constant 0 : index
    %c0_1 = arith.constant 0 : index
    %0 = vector.load %arg2[%c0, %c0_0, %c0_1] : memref<1x16x20xf32, #tpu.memory_space<vmem>>, vector<1x16x20xf32>
    %1 = vector.shape_cast %0 : vector<1x16x20xf32> to vector<16x20xf32>
    %2 = arith.truncf %1 : vector<16x20xf32> to vector<16x20xbf16>
    %c0_2 = arith.constant 0 : index
    %c0_3 = arith.constant 0 : index
    %3 = vector.load %arg4[%c0_2, %c0_3] : memref<20x8xbf16, #tpu.memory_space<vmem>>, vector<20x8xbf16>
    %cst = arith.constant dense<0.000000e+00> : vector<16x8xf32>
    %4 = tpu.matmul %2, %3, %cst {dimension_numbers = #tpu.dot_dimension_numbers<[1], [0], [0], [1], [0, 0, 1, 1], [], []>} : vector<16x20xbf16>, vector<20x8xbf16>, vector<16x8xf32> -> vector<16x8xf32>
    %c0_4 = arith.constant 0 : index
    %c0_5 = arith.constant 0 : index
    %5 = vector.load %arg5[%c0_4, %c0_5] : memref<1x8xf32, #tpu.memory_space<vmem>>, vector<1x8xf32>
    %6 = vector.broadcast %5 : vector<1x8xf32> to vector<16x8xf32>
    %7 = arith.addf %4, %6 : vector<16x8xf32>
    %c0_6 = arith.constant 0 : index
    %c0_7 = arith.constant 0 : index
    %c0_8 = arith.constant 0 : index
    %8 = vector.load %arg3[%c0_6, %c0_7, %c0_8] : memref<1x8x3xf32, #tpu.memory_space<vmem>>, vector<1x8x3xf32>
    %9 = vector.shape_cast %8 : vector<1x8x3xf32> to vector<8x3xf32>
    %10 = tpu.iota {dimensions = array<i32: 1>} : vector<8x16xi32>
    %11 = arith.sitofp %10 : vector<8x16xi32> to vector<8x16xf32>
    %12 = vector.extract_strided_slice %9 {offsets = [0, 0], sizes = [8, 1], strides = [1, 1]} : vector<8x3xf32> to vector<8x1xf32>
    %13 = vector.broadcast %12 : vector<8x1xf32> to vector<8x16xf32>
    %14 = arith.cmpf oge, %11, %13 : vector<8x16xf32>
    %15 = vector.extract_strided_slice %9 {offsets = [0, 1], sizes = [8, 1], strides = [1, 1]} : vector<8x3xf32> to vector<8x1xf32>
    %16 = vector.broadcast %15 : vector<8x1xf32> to vector<8x16xf32>
    %17 = arith.cmpf olt, %11, %16 : vector<8x16xf32>
    %18 = arith.andi %14, %17 : vector<8x16xi1>
    %19 = arith.index_cast %arg0 : i32 to index
    %20 = memref.load %arg1[%19] : memref<2xi32, #tpu.memory_space<smem>>
    %21 = vector.broadcast %20 : i32 to vector<8x16xi32>
    %22 = arith.cmpi slt, %10, %21 : vector<8x16xi32>
    %23 = arith.andi %18, %22 : vector<8x16xi1>
    %24 = vector.extract_strided_slice %9 {offsets = [0, 2], sizes = [8, 1], strides = [1, 1]} : vector<8x3xf32> to vector<8x1xf32>
    %cst_9 = arith.constant 0.000000e+00 : f32
    %25 = vector.shape_cast %24 : vector<8x1xf32> to vector<8x1xf32>
    %26 = vector.broadcast %25 : vector<8x1xf32> to vector<8x16xf32>
    %27 = vector.broadcast %cst_9 : f32 to vector<8x16xf32>
    %28 = arith.select %23, %26, %27 : vector<8x16xi1>, vector<8x16xf32>
    %29 = arith.truncf %28 : vector<8x16xf32> to vector<8x16xbf16>
    %30 = arith.truncf %7 : vector<16x8xf32> to vector<16x8xbf16>
    %cst_10 = arith.constant dense<0.000000e+00> : vector<8x8xf32>
    %31 = tpu.matmul %29, %30, %cst_10 {dimension_numbers = #tpu.dot_dimension_numbers<[1], [0], [0], [1], [0, 0, 1, 1], [], []>} : vector<8x16xbf16>, vector<16x8xbf16>, vector<8x8xf32> -> vector<8x8xf32>
    %32 = arith.truncf %31 : vector<8x8xf32> to vector<8x8xbf16>
    %c0_11 = arith.constant 0 : index
    %c0_12 = arith.constant 0 : index
    %c0_13 = arith.constant 0 : index
    %33 = vector.load %arg6[%c0_11, %c0_12, %c0_13] : memref<1x8x8xbf16, #tpu.memory_space<vmem>>, vector<1x8x8xbf16>
    %34 = vector.shape_cast %33 : vector<1x8x8xbf16> to vector<8x8xbf16>
    %35 = vector.shape_cast %32 : vector<8x8xbf16> to vector<1x8x8xbf16>
    tpu.vector_store %arg6[%c0_11, %c0_12, %c0_13], %35 {strides = array<i32>} : memref<1x8x8xbf16, #tpu.memory_space<vmem>>, vector<1x8x8xbf16>,
    return
  }
  func.func @transform_0(%arg0: i32, %arg1: memref<2xi32, #tpu.memory_space<smem>>) -> (i32, i32, i32) {
    %c0_i32 = arith.constant 0 : i32
    %c0_i32_0 = arith.constant 0 : i32
    %c0_i32_1 = arith.constant 0 : i32
    return %arg0, %c0_i32, %c0_i32_0 : i32, i32, i32
  }
  func.func @transform_1(%arg0: i32, %arg1: memref<2xi32, #tpu.memory_space<smem>>) -> (i32, i32, i32) {
    %c0_i32 = arith.constant 0 : i32
    %c0_i32_0 = arith.constant 0 : i32
    %c0_i32_1 = arith.constant 0 : i32
    return %arg0, %c0_i32, %c0_i32_0 : i32, i32, i32
  }
  func.func @transform_2(%arg0: i32, %arg1: memref<2xi32, #tpu.memory_space<smem>>) -> (i32, i32) {
    %c0_i32 = arith.constant 0 : i32
    %c0_i32_0 = arith.constant 0 : i32
    %c0_i32_1 = arith.constant 0 : i32
    return %c0_i32, %c0_i32_0 : i32, i32
  }
  func.func @transform_3(%arg0: i32, %arg1: memref<2xi32, #tpu.memory_space<smem>>) -> (i32, i32) {
    %c0_i32 = arith.constant 0 : i32
    %c0_i32_0 = arith.constant 0 : i32
    %c0_i32_1 = arith.constant 0 : i32
    return %c0_i32, %c0_i32_0 : i32, i32
  }
  func.func @transform_4(%arg0: i32, %arg1: memref<2xi32, #tpu.memory_space<smem>>) -> (i32, i32, i32) {
    %c0_i32 = arith.constant 0 : i32
    %c0_i32_0 = arith.constant 0 : i32
    %c0_i32_1 = arith.constant 0 : i32
    return %arg0, %c0_i32, %c0_i32_0 : i32, i32, i32
  }
}

module attributes {stable_mosaic.version = 11 : i64} {
  func.func @_prenet_enc_kernel(%arg0: i32, %arg1: memref<1x8x8xbf16, #tpu.memory_space<vmem>>, %arg2: memref<1x1x8xf32, #tpu.memory_space<vmem>>, %arg3: memref<8x32xbf16, #tpu.memory_space<vmem>>, %arg4: memref<8x32xbf16, #tpu.memory_space<vmem>>, %arg5: memref<1x32xf32, #tpu.memory_space<vmem>>, %arg6: memref<8x32xf32, #tpu.memory_space<vmem>>, %arg7: memref<1x8x32xbf16, #tpu.memory_space<vmem>>) attributes {dimension_semantics = [#tpu.dimension_semantics<parallel>], iteration_bounds = array<i64: 2>, scalar_prefetch = 0 : i64, scratch_operands = 0 : i64, tpu.core_type = #tpu.core_type<tc>, window_params = [{transform_indices = @transform_0, window_bounds = array<i64: 1, 8, 8>}, {transform_indices = @transform_1, window_bounds = array<i64: 1, 1, 8>}, {pipeline_mode = #tpu.pipeline_mode<synchronous>, transform_indices = @transform_2, window_bounds = array<i64: 8, 32>}, {pipeline_mode = #tpu.pipeline_mode<synchronous>, transform_indices = @transform_3, window_bounds = array<i64: 8, 32>}, {pipeline_mode = #tpu.pipeline_mode<synchronous>, transform_indices = @transform_4, window_bounds = array<i64: 1, 32>}, {pipeline_mode = #tpu.pipeline_mode<synchronous>, transform_indices = @transform_5, window_bounds = array<i64: 8, 32>}, {transform_indices = @transform_6, window_bounds = array<i64: 1, 8, 32>}]} {
    %c0 = arith.constant 0 : index
    %c0_0 = arith.constant 0 : index
    %c0_1 = arith.constant 0 : index
    %0 = vector.load %arg1[%c0, %c0_0, %c0_1] : memref<1x8x8xbf16, #tpu.memory_space<vmem>>, vector<1x8x8xbf16>
    %1 = vector.shape_cast %0 : vector<1x8x8xbf16> to vector<8x8xbf16>
    %c0_2 = arith.constant 0 : index
    %c0_3 = arith.constant 0 : index
    %2 = vector.load %arg3[%c0_2, %c0_3] : memref<8x32xbf16, #tpu.memory_space<vmem>>, vector<8x32xbf16>
    %cst = arith.constant dense<0.000000e+00> : vector<8x32xf32>
    %3 = tpu.matmul %1, %2, %cst {dimension_numbers = #tpu.dot_dimension_numbers<[1], [0], [0], [1], [0, 0, 1, 1], [], []>} : vector<8x8xbf16>, vector<8x32xbf16>, vector<8x32xf32> -> vector<8x32xf32>
    %c0_4 = arith.constant 0 : index
    %c0_5 = arith.constant 0 : index
    %c0_6 = arith.constant 0 : index
    %4 = vector.load %arg2[%c0_4, %c0_5, %c0_6] : memref<1x1x8xf32, #tpu.memory_space<vmem>>, vector<1x1x8xf32>
    %5 = vector.shape_cast %4 : vector<1x1x8xf32> to vector<1x8xf32>
    %6 = arith.truncf %5 : vector<1x8xf32> to vector<1x8xbf16>
    %c0_7 = arith.constant 0 : index
    %c0_8 = arith.constant 0 : index
    %7 = vector.load %arg4[%c0_7, %c0_8] : memref<8x32xbf16, #tpu.memory_space<vmem>>, vector<8x32xbf16>
    %cst_9 = arith.constant dense<0.000000e+00> : vector<1x32xf32>
    %8 = tpu.matmul %6, %7, %cst_9 {dimension_numbers = #tpu.dot_dimension_numbers<[1], [0], [0], [1], [0, 0, 1, 1], [], []>} : vector<1x8xbf16>, vector<8x32xbf16>, vector<1x32xf32> -> vector<1x32xf32>
    %9 = vector.broadcast %8 : vector<1x32xf32> to vector<8x32xf32>
    %10 = arith.addf %3, %9 : vector<8x32xf32>
    %c0_10 = arith.constant 0 : index
    %c0_11 = arith.constant 0 : index
    %11 = vector.load %arg5[%c0_10, %c0_11] : memref<1x32xf32, #tpu.memory_space<vmem>>, vector<1x32xf32>
    %12 = vector.broadcast %11 : vector<1x32xf32> to vector<8x32xf32>
    %13 = arith.addf %10, %12 : vector<8x32xf32>
    %cst_12 = arith.constant 5.65685415 : f32
    %14 = vector.broadcast %cst_12 : f32 to vector<8x32xf32>
    %15 = arith.mulf %13, %14 : vector<8x32xf32>
    %c0_13 = arith.constant 0 : index
    %c0_14 = arith.constant 0 : index
    %16 = vector.load %arg6[%c0_13, %c0_14] : memref<8x32xf32, #tpu.memory_space<vmem>>, vector<8x32xf32>
    %17 = arith.addf %15, %16 : vector<8x32xf32>
    %18 = arith.truncf %17 : vector<8x32xf32> to vector<8x32xbf16>
    %c0_15 = arith.constant 0 : index
    %c0_16 = arith.constant 0 : index
    %c0_17 = arith.constant 0 : index
    %19 = vector.load %arg7[%c0_15, %c0_16, %c0_17] : memref<1x8x32xbf16, #tpu.memory_space<vmem>>, vector<1x8x32xbf16>
    %20 = vector.shape_cast %19 : vector<1x8x32xbf16> to vector<8x32xbf16>
    %21 = vector.shape_cast %18 : vector<8x32xbf16> to vector<1x8x32xbf16>
    tpu.vector_store %arg7[%c0_15, %c0_16, %c0_17], %21 {strides = array<i32>} : memref<1x8x32xbf16, #tpu.memory_space<vmem>>, vector<1x8x32xbf16>,
    return
  }
  func.func @transform_0(%arg0: i32) -> (i32, i32, i32) {
    %c0_i32 = arith.constant 0 : i32
    %c0_i32_0 = arith.constant 0 : i32
    %c0_i32_1 = arith.constant 0 : i32
    return %arg0, %c0_i32, %c0_i32_0 : i32, i32, i32
  }
  func.func @transform_1(%arg0: i32) -> (i32, i32, i32) {
    %c0_i32 = arith.constant 0 : i32
    %c0_i32_0 = arith.constant 0 : i32
    %c0_i32_1 = arith.constant 0 : i32
    return %arg0, %c0_i32, %c0_i32_0 : i32, i32, i32
  }
  func.func @transform_2(%arg0: i32) -> (i32, i32) {
    %c0_i32 = arith.constant 0 : i32
    %c0_i32_0 = arith.constant 0 : i32
    %c0_i32_1 = arith.constant 0 : i32
    return %c0_i32, %c0_i32_0 : i32, i32
  }
  func.func @transform_3(%arg0: i32) -> (i32, i32) {
    %c0_i32 = arith.constant 0 : i32
    %c0_i32_0 = arith.constant 0 : i32
    %c0_i32_1 = arith.constant 0 : i32
    return %c0_i32, %c0_i32_0 : i32, i32
  }
  func.func @transform_4(%arg0: i32) -> (i32, i32) {
    %c0_i32 = arith.constant 0 : i32
    %c0_i32_0 = arith.constant 0 : i32
    %c0_i32_1 = arith.constant 0 : i32
    return %c0_i32, %c0_i32_0 : i32, i32
  }
  func.func @transform_5(%arg0: i32) -> (i32, i32) {
    %c0_i32 = arith.constant 0 : i32
    %c0_i32_0 = arith.constant 0 : i32
    %c0_i32_1 = arith.constant 0 : i32
    return %c0_i32, %c0_i32_0 : i32, i32
  }
  func.func @transform_6(%arg0: i32) -> (i32, i32, i32) {
    %c0_i32 = arith.constant 0 : i32
    %c0_i32_0 = arith.constant 0 : i32
    %c0_i32_1 = arith.constant 0 : i32
    return %arg0, %c0_i32, %c0_i32_0 : i32, i32, i32
  }
}

module attributes {stable_mosaic.version = 11 : i64} {
  func.func @_self_attn_kernel(%arg0: i32, %arg1: memref<2xi32, #tpu.memory_space<smem>>, %arg2: memref<1x8x32xbf16, #tpu.memory_space<vmem>>, %arg3: memref<1x32xf32, #tpu.memory_space<vmem>>, %arg4: memref<1x32xf32, #tpu.memory_space<vmem>>, %arg5: memref<32x96xbf16, #tpu.memory_space<vmem>>, %arg6: memref<1x96xf32, #tpu.memory_space<vmem>>, %arg7: memref<32x32xbf16, #tpu.memory_space<vmem>>, %arg8: memref<1x32xf32, #tpu.memory_space<vmem>>, %arg9: memref<1x8x32xbf16, #tpu.memory_space<vmem>>) attributes {dimension_semantics = [#tpu.dimension_semantics<parallel>], iteration_bounds = array<i64: 2>, scalar_prefetch = 1 : i64, scratch_operands = 0 : i64, tpu.core_type = #tpu.core_type<tc>, window_params = [{transform_indices = @transform_0, window_bounds = array<i64: 1, 8, 32>}, {pipeline_mode = #tpu.pipeline_mode<synchronous>, transform_indices = @transform_1, window_bounds = array<i64: 1, 32>}, {pipeline_mode = #tpu.pipeline_mode<synchronous>, transform_indices = @transform_2, window_bounds = array<i64: 1, 32>}, {pipeline_mode = #tpu.pipeline_mode<synchronous>, transform_indices = @transform_3, window_bounds = array<i64: 32, 96>}, {pipeline_mode = #tpu.pipeline_mode<synchronous>, transform_indices = @transform_4, window_bounds = array<i64: 1, 96>}, {pipeline_mode = #tpu.pipeline_mode<synchronous>, transform_indices = @transform_5, window_bounds = array<i64: 32, 32>}, {pipeline_mode = #tpu.pipeline_mode<synchronous>, transform_indices = @transform_6, window_bounds = array<i64: 1, 32>}, {transform_indices = @transform_7, window_bounds = array<i64: 1, 8, 32>}]} {
    %c0 = arith.constant 0 : index
    %c0_0 = arith.constant 0 : index
    %c0_1 = arith.constant 0 : index
    %0 = vector.load %arg2[%c0, %c0_0, %c0_1] : memref<1x8x32xbf16, #tpu.memory_space<vmem>>, vector<1x8x32xbf16>
    %1 = vector.shape_cast %0 : vector<1x8x32xbf16> to vector<8x32xbf16>
    %2 = arith.extf %1 : vector<8x32xbf16> to vector<8x32xf32>
    %cst = arith.constant dense<0.000000e+00> : vector<8xf32>
    %3 = vector.multi_reduction <add>, %2, %cst [1] : vector<8x32xf32> to vector<8xf32>
    %4 = vector.shape_cast %3 : vector<8xf32> to vector<8x1xf32>
    %cst_2 = arith.constant 3.200000e+01 : f32
    %5 = vector.broadcast %cst_2 : f32 to vector<8x1xf32>
    %6 = arith.divf %4, %5 : vector<8x1xf32>
    %7 = vector.broadcast %6 : vector<8x1xf32> to vector<8x32xf32>
    %8 = arith.subf %2, %7 : vector<8x32xf32>
    %9 = arith.mulf %8, %8 : vector<8x32xf32>
    %cst_3 = arith.constant dense<0.000000e+00> : vector<8xf32>
    %10 = vector.multi_reduction <add>, %9, %cst_3 [1] : vector<8x32xf32> to vector<8xf32>
    %11 = vector.shape_cast %10 : vector<8xf32> to vector<8x1xf32>
    %cst_4 = arith.constant 3.200000e+01 : f32
    %12 = vector.broadcast %cst_4 : f32 to vector<8x1xf32>
    %13 = arith.divf %11, %12 : vector<8x1xf32>
    %cst_5 = arith.constant 9.99999997E-7 : f32
    %14 = vector.broadcast %cst_5 : f32 to vector<8x1xf32>
    %15 = arith.addf %13, %14 : vector<8x1xf32>
    %16 = math.rsqrt %15 : vector<8x1xf32>
    %17 = vector.broadcast %16 : vector<8x1xf32> to vector<8x32xf32>
    %18 = arith.mulf %8, %17 : vector<8x32xf32>
    %c0_6 = arith.constant 0 : index
    %c0_7 = arith.constant 0 : index
    %19 = vector.load %arg3[%c0_6, %c0_7] : memref<1x32xf32, #tpu.memory_space<vmem>>, vector<1x32xf32>
    %20 = vector.broadcast %19 : vector<1x32xf32> to vector<8x32xf32>
    %21 = arith.mulf %18, %20 : vector<8x32xf32>
    %c0_8 = arith.constant 0 : index
    %c0_9 = arith.constant 0 : index
    %22 = vector.load %arg4[%c0_8, %c0_9] : memref<1x32xf32, #tpu.memory_space<vmem>>, vector<1x32xf32>
    %23 = vector.broadcast %22 : vector<1x32xf32> to vector<8x32xf32>
    %24 = arith.addf %21, %23 : vector<8x32xf32>
    %25 = arith.truncf %24 : vector<8x32xf32> to vector<8x32xbf16>
    %c0_10 = arith.constant 0 : index
    %c0_11 = arith.constant 0 : index
    %26 = vector.load %arg5[%c0_10, %c0_11] : memref<32x96xbf16, #tpu.memory_space<vmem>>, vector<32x96xbf16>
    %cst_12 = arith.constant dense<0.000000e+00> : vector<8x96xf32>
    %27 = tpu.matmul %25, %26, %cst_12 {dimension_numbers = #tpu.dot_dimension_numbers<[1], [0], [0], [1], [0, 0, 1, 1], [], []>} : vector<8x32xbf16>, vector<32x96xbf16>, vector<8x96xf32> -> vector<8x96xf32>
    %c0_13 = arith.constant 0 : index
    %c0_14 = arith.constant 0 : index
    %28 = vector.load %arg6[%c0_13, %c0_14] : memref<1x96xf32, #tpu.memory_space<vmem>>, vector<1x96xf32>
    %29 = vector.broadcast %28 : vector<1x96xf32> to vector<8x96xf32>
    %30 = arith.addf %27, %29 : vector<8x96xf32>
    %31 = arith.index_cast %arg0 : i32 to index
    %32 = memref.load %arg1[%31] : memref<2xi32, #tpu.memory_space<smem>>
    %33 = tpu.iota {dimensions = array<i32: 1>} : vector<8x8xi32>
    %34 = vector.broadcast %32 : i32 to vector<8x8xi32>
    %35 = arith.cmpi slt, %33, %34 : vector<8x8xi32>
    %36 = vector.extract_strided_slice %30 {offsets = [0, 0], sizes = [8, 8], strides = [1, 1]} : vector<8x96xf32> to vector<8x8xf32>
    %cst_15 = arith.constant 0.353553385 : f32
    %37 = vector.broadcast %cst_15 : f32 to vector<8x8xf32>
    %38 = arith.mulf %36, %37 : vector<8x8xf32>
    %39 = arith.truncf %38 : vector<8x8xf32> to vector<8x8xbf16>
    %40 = vector.extract_strided_slice %30 {offsets = [0, 32], sizes = [8, 8], strides = [1, 1]} : vector<8x96xf32> to vector<8x8xf32>
    %41 = arith.truncf %40 : vector<8x8xf32> to vector<8x8xbf16>
    %42 = vector.extract_strided_slice %30 {offsets = [0, 64], sizes = [8, 8], strides = [1, 1]} : vector<8x96xf32> to vector<8x8xf32>
    %43 = arith.truncf %42 : vector<8x8xf32> to vector<8x8xbf16>
    %cst_16 = arith.constant dense<0.000000e+00> : vector<8x8xf32>
    %44 = tpu.matmul %39, %41, %cst_16 {dimension_numbers = #tpu.dot_dimension_numbers<[1], [1], [0], [0], [0, 0, 1, 0], [], []>} : vector<8x8xbf16>, vector<8x8xbf16>, vector<8x8xf32> -> vector<8x8xf32>
    %cst_17 = arith.constant -1.000000e+09 : f32
    %45 = vector.broadcast %cst_17 : f32 to vector<8x8xf32>
    %46 = arith.select %35, %44, %45 : vector<8x8xi1>, vector<8x8xf32>
    %cst_18 = arith.constant dense<0xFF800000> : vector<8xf32>
    %47 = vector.multi_reduction <maximumf>, %46, %cst_18 [1] : vector<8x8xf32> to vector<8xf32>
    %48 = vector.shape_cast %47 : vector<8xf32> to vector<8x1xf32>
    %49 = vector.broadcast %48 : vector<8x1xf32> to vector<8x8xf32>
    %50 = arith.subf %46, %49 : vector<8x8xf32>
    %51 = math.exp %50 : vector<8x8xf32>
    %cst_19 = arith.constant dense<0.000000e+00> : vector<8xf32>
    %52 = vector.multi_reduction <add>, %51, %cst_19 [1] : vector<8x8xf32> to vector<8xf32>
    %53 = vector.shape_cast %52 : vector<8xf32> to vector<8x1xf32>
    %54 = tpu.reciprocal %53 {approx = true} : vector<8x1xf32> -> vector<8x1xf32>
    %55 = vector.broadcast %54 : vector<8x1xf32> to vector<8x8xf32>
    %56 = arith.mulf %51, %55 : vector<8x8xf32>
    %57 = arith.truncf %56 : vector<8x8xf32> to vector<8x8xbf16>
    %cst_20 = arith.constant dense<0.000000e+00> : vector<8x8xf32>
    %58 = tpu.matmul %57, %43, %cst_20 {dimension_numbers = #tpu.dot_dimension_numbers<[1], [0], [0], [1], [0, 0, 1, 1], [], []>} : vector<8x8xbf16>, vector<8x8xbf16>, vector<8x8xf32> -> vector<8x8xf32>
    %59 = vector.extract_strided_slice %30 {offsets = [0, 8], sizes = [8, 8], strides = [1, 1]} : vector<8x96xf32> to vector<8x8xf32>
    %cst_21 = arith.constant 0.353553385 : f32
    %60 = vector.broadcast %cst_21 : f32 to vector<8x8xf32>
    %61 = arith.mulf %59, %60 : vector<8x8xf32>
    %62 = arith.truncf %61 : vector<8x8xf32> to vector<8x8xbf16>
    %63 = vector.extract_strided_slice %30 {offsets = [0, 40], sizes = [8, 8], strides = [1, 1]} : vector<8x96xf32> to vector<8x8xf32>
    %64 = arith.truncf %63 : vector<8x8xf32> to vector<8x8xbf16>
    %65 = vector.extract_strided_slice %30 {offsets = [0, 72], sizes = [8, 8], strides = [1, 1]} : vector<8x96xf32> to vector<8x8xf32>
    %66 = arith.truncf %65 : vector<8x8xf32> to vector<8x8xbf16>
    %cst_22 = arith.constant dense<0.000000e+00> : vector<8x8xf32>
    %67 = tpu.matmul %62, %64, %cst_22 {dimension_numbers = #tpu.dot_dimension_numbers<[1], [1], [0], [0], [0, 0, 1, 0], [], []>} : vector<8x8xbf16>, vector<8x8xbf16>, vector<8x8xf32> -> vector<8x8xf32>
    %cst_23 = arith.constant -1.000000e+09 : f32
    %68 = vector.broadcast %cst_23 : f32 to vector<8x8xf32>
    %69 = arith.select %35, %67, %68 : vector<8x8xi1>, vector<8x8xf32>
    %cst_24 = arith.constant dense<0xFF800000> : vector<8xf32>
    %70 = vector.multi_reduction <maximumf>, %69, %cst_24 [1] : vector<8x8xf32> to vector<8xf32>
    %71 = vector.shape_cast %70 : vector<8xf32> to vector<8x1xf32>
    %72 = vector.broadcast %71 : vector<8x1xf32> to vector<8x8xf32>
    %73 = arith.subf %69, %72 : vector<8x8xf32>
    %74 = math.exp %73 : vector<8x8xf32>
    %cst_25 = arith.constant dense<0.000000e+00> : vector<8xf32>
    %75 = vector.multi_reduction <add>, %74, %cst_25 [1] : vector<8x8xf32> to vector<8xf32>
    %76 = vector.shape_cast %75 : vector<8xf32> to vector<8x1xf32>
    %77 = tpu.reciprocal %76 {approx = true} : vector<8x1xf32> -> vector<8x1xf32>
    %78 = vector.broadcast %77 : vector<8x1xf32> to vector<8x8xf32>
    %79 = arith.mulf %74, %78 : vector<8x8xf32>
    %80 = arith.truncf %79 : vector<8x8xf32> to vector<8x8xbf16>
    %cst_26 = arith.constant dense<0.000000e+00> : vector<8x8xf32>
    %81 = tpu.matmul %80, %66, %cst_26 {dimension_numbers = #tpu.dot_dimension_numbers<[1], [0], [0], [1], [0, 0, 1, 1], [], []>} : vector<8x8xbf16>, vector<8x8xbf16>, vector<8x8xf32> -> vector<8x8xf32>
    %82 = vector.extract_strided_slice %30 {offsets = [0, 16], sizes = [8, 8], strides = [1, 1]} : vector<8x96xf32> to vector<8x8xf32>
    %cst_27 = arith.constant 0.353553385 : f32
    %83 = vector.broadcast %cst_27 : f32 to vector<8x8xf32>
    %84 = arith.mulf %82, %83 : vector<8x8xf32>
    %85 = arith.truncf %84 : vector<8x8xf32> to vector<8x8xbf16>
    %86 = vector.extract_strided_slice %30 {offsets = [0, 48], sizes = [8, 8], strides = [1, 1]} : vector<8x96xf32> to vector<8x8xf32>
    %87 = arith.truncf %86 : vector<8x8xf32> to vector<8x8xbf16>
    %88 = vector.extract_strided_slice %30 {offsets = [0, 80], sizes = [8, 8], strides = [1, 1]} : vector<8x96xf32> to vector<8x8xf32>
    %89 = arith.truncf %88 : vector<8x8xf32> to vector<8x8xbf16>
    %cst_28 = arith.constant dense<0.000000e+00> : vector<8x8xf32>
    %90 = tpu.matmul %85, %87, %cst_28 {dimension_numbers = #tpu.dot_dimension_numbers<[1], [1], [0], [0], [0, 0, 1, 0], [], []>} : vector<8x8xbf16>, vector<8x8xbf16>, vector<8x8xf32> -> vector<8x8xf32>
    %cst_29 = arith.constant -1.000000e+09 : f32
    %91 = vector.broadcast %cst_29 : f32 to vector<8x8xf32>
    %92 = arith.select %35, %90, %91 : vector<8x8xi1>, vector<8x8xf32>
    %cst_30 = arith.constant dense<0xFF800000> : vector<8xf32>
    %93 = vector.multi_reduction <maximumf>, %92, %cst_30 [1] : vector<8x8xf32> to vector<8xf32>
    %94 = vector.shape_cast %93 : vector<8xf32> to vector<8x1xf32>
    %95 = vector.broadcast %94 : vector<8x1xf32> to vector<8x8xf32>
    %96 = arith.subf %92, %95 : vector<8x8xf32>
    %97 = math.exp %96 : vector<8x8xf32>
    %cst_31 = arith.constant dense<0.000000e+00> : vector<8xf32>
    %98 = vector.multi_reduction <add>, %97, %cst_31 [1] : vector<8x8xf32> to vector<8xf32>
    %99 = vector.shape_cast %98 : vector<8xf32> to vector<8x1xf32>
    %100 = tpu.reciprocal %99 {approx = true} : vector<8x1xf32> -> vector<8x1xf32>
    %101 = vector.broadcast %100 : vector<8x1xf32> to vector<8x8xf32>
    %102 = arith.mulf %97, %101 : vector<8x8xf32>
    %103 = arith.truncf %102 : vector<8x8xf32> to vector<8x8xbf16>
    %cst_32 = arith.constant dense<0.000000e+00> : vector<8x8xf32>
    %104 = tpu.matmul %103, %89, %cst_32 {dimension_numbers = #tpu.dot_dimension_numbers<[1], [0], [0], [1], [0, 0, 1, 1], [], []>} : vector<8x8xbf16>, vector<8x8xbf16>, vector<8x8xf32> -> vector<8x8xf32>
    %105 = vector.extract_strided_slice %30 {offsets = [0, 24], sizes = [8, 8], strides = [1, 1]} : vector<8x96xf32> to vector<8x8xf32>
    %cst_33 = arith.constant 0.353553385 : f32
    %106 = vector.broadcast %cst_33 : f32 to vector<8x8xf32>
    %107 = arith.mulf %105, %106 : vector<8x8xf32>
    %108 = arith.truncf %107 : vector<8x8xf32> to vector<8x8xbf16>
    %109 = vector.extract_strided_slice %30 {offsets = [0, 56], sizes = [8, 8], strides = [1, 1]} : vector<8x96xf32> to vector<8x8xf32>
    %110 = arith.truncf %109 : vector<8x8xf32> to vector<8x8xbf16>
    %111 = vector.extract_strided_slice %30 {offsets = [0, 88], sizes = [8, 8], strides = [1, 1]} : vector<8x96xf32> to vector<8x8xf32>
    %112 = arith.truncf %111 : vector<8x8xf32> to vector<8x8xbf16>
    %cst_34 = arith.constant dense<0.000000e+00> : vector<8x8xf32>
    %113 = tpu.matmul %108, %110, %cst_34 {dimension_numbers = #tpu.dot_dimension_numbers<[1], [1], [0], [0], [0, 0, 1, 0], [], []>} : vector<8x8xbf16>, vector<8x8xbf16>, vector<8x8xf32> -> vector<8x8xf32>
    %cst_35 = arith.constant -1.000000e+09 : f32
    %114 = vector.broadcast %cst_35 : f32 to vector<8x8xf32>
    %115 = arith.select %35, %113, %114 : vector<8x8xi1>, vector<8x8xf32>
    %cst_36 = arith.constant dense<0xFF800000> : vector<8xf32>
    %116 = vector.multi_reduction <maximumf>, %115, %cst_36 [1] : vector<8x8xf32> to vector<8xf32>
    %117 = vector.shape_cast %116 : vector<8xf32> to vector<8x1xf32>
    %118 = vector.broadcast %117 : vector<8x1xf32> to vector<8x8xf32>
    %119 = arith.subf %115, %118 : vector<8x8xf32>
    %120 = math.exp %119 : vector<8x8xf32>
    %cst_37 = arith.constant dense<0.000000e+00> : vector<8xf32>
    %121 = vector.multi_reduction <add>, %120, %cst_37 [1] : vector<8x8xf32> to vector<8xf32>
    %122 = vector.shape_cast %121 : vector<8xf32> to vector<8x1xf32>
    %123 = tpu.reciprocal %122 {approx = true} : vector<8x1xf32> -> vector<8x1xf32>
    %124 = vector.broadcast %123 : vector<8x1xf32> to vector<8x8xf32>
    %125 = arith.mulf %120, %124 : vector<8x8xf32>
    %126 = arith.truncf %125 : vector<8x8xf32> to vector<8x8xbf16>
    %cst_38 = arith.constant dense<0.000000e+00> : vector<8x8xf32>
    %127 = tpu.matmul %126, %112, %cst_38 {dimension_numbers = #tpu.dot_dimension_numbers<[1], [0], [0], [1], [0, 0, 1, 1], [], []>} : vector<8x8xbf16>, vector<8x8xbf16>, vector<8x8xf32> -> vector<8x8xf32>
    %128 = tpu.concatenate %58, %81, %104, %127 in 1 : vector<8x8xf32>, vector<8x8xf32>, vector<8x8xf32>, vector<8x8xf32> -> vector<8x32xf32>
    %129 = arith.truncf %128 : vector<8x32xf32> to vector<8x32xbf16>
    %c0_39 = arith.constant 0 : index
    %c0_40 = arith.constant 0 : index
    %130 = vector.load %arg7[%c0_39, %c0_40] : memref<32x32xbf16, #tpu.memory_space<vmem>>, vector<32x32xbf16>
    %cst_41 = arith.constant dense<0.000000e+00> : vector<8x32xf32>
    %131 = tpu.matmul %129, %130, %cst_41 {dimension_numbers = #tpu.dot_dimension_numbers<[1], [0], [0], [1], [0, 0, 1, 1], [], []>} : vector<8x32xbf16>, vector<32x32xbf16>, vector<8x32xf32> -> vector<8x32xf32>
    %c0_42 = arith.constant 0 : index
    %c0_43 = arith.constant 0 : index
    %132 = vector.load %arg8[%c0_42, %c0_43] : memref<1x32xf32, #tpu.memory_space<vmem>>, vector<1x32xf32>
    %133 = vector.broadcast %132 : vector<1x32xf32> to vector<8x32xf32>
    %134 = arith.addf %131, %133 : vector<8x32xf32>
    %135 = arith.addf %134, %2 : vector<8x32xf32>
    %136 = arith.truncf %135 : vector<8x32xf32> to vector<8x32xbf16>
    %c0_44 = arith.constant 0 : index
    %c0_45 = arith.constant 0 : index
    %c0_46 = arith.constant 0 : index
    %137 = vector.load %arg9[%c0_44, %c0_45, %c0_46] : memref<1x8x32xbf16, #tpu.memory_space<vmem>>, vector<1x8x32xbf16>
    %138 = vector.shape_cast %137 : vector<1x8x32xbf16> to vector<8x32xbf16>
    %139 = vector.shape_cast %136 : vector<8x32xbf16> to vector<1x8x32xbf16>
    tpu.vector_store %arg9[%c0_44, %c0_45, %c0_46], %139 {strides = array<i32>} : memref<1x8x32xbf16, #tpu.memory_space<vmem>>, vector<1x8x32xbf16>,
    return
  }
  func.func @transform_0(%arg0: i32, %arg1: memref<2xi32, #tpu.memory_space<smem>>) -> (i32, i32, i32) {
    %c0_i32 = arith.constant 0 : i32
    %c0_i32_0 = arith.constant 0 : i32
    %c0_i32_1 = arith.constant 0 : i32
    return %arg0, %c0_i32, %c0_i32_0 : i32, i32, i32
  }
  func.func @transform_1(%arg0: i32, %arg1: memref<2xi32, #tpu.memory_space<smem>>) -> (i32, i32) {
    %c0_i32 = arith.constant 0 : i32
    %c0_i32_0 = arith.constant 0 : i32
    %c0_i32_1 = arith.constant 0 : i32
    return %c0_i32, %c0_i32_0 : i32, i32
  }
  func.func @transform_2(%arg0: i32, %arg1: memref<2xi32, #tpu.memory_space<smem>>) -> (i32, i32) {
    %c0_i32 = arith.constant 0 : i32
    %c0_i32_0 = arith.constant 0 : i32
    %c0_i32_1 = arith.constant 0 : i32
    return %c0_i32, %c0_i32_0 : i32, i32
  }
  func.func @transform_3(%arg0: i32, %arg1: memref<2xi32, #tpu.memory_space<smem>>) -> (i32, i32) {
    %c0_i32 = arith.constant 0 : i32
    %c0_i32_0 = arith.constant 0 : i32
    %c0_i32_1 = arith.constant 0 : i32
    return %c0_i32, %c0_i32_0 : i32, i32
  }
  func.func @transform_4(%arg0: i32, %arg1: memref<2xi32, #tpu.memory_space<smem>>) -> (i32, i32) {
    %c0_i32 = arith.constant 0 : i32
    %c0_i32_0 = arith.constant 0 : i32
    %c0_i32_1 = arith.constant 0 : i32
    return %c0_i32, %c0_i32_0 : i32, i32
  }
  func.func @transform_5(%arg0: i32, %arg1: memref<2xi32, #tpu.memory_space<smem>>) -> (i32, i32) {
    %c0_i32 = arith.constant 0 : i32
    %c0_i32_0 = arith.constant 0 : i32
    %c0_i32_1 = arith.constant 0 : i32
    return %c0_i32, %c0_i32_0 : i32, i32
  }
  func.func @transform_6(%arg0: i32, %arg1: memref<2xi32, #tpu.memory_space<smem>>) -> (i32, i32) {
    %c0_i32 = arith.constant 0 : i32
    %c0_i32_0 = arith.constant 0 : i32
    %c0_i32_1 = arith.constant 0 : i32
    return %c0_i32, %c0_i32_0 : i32, i32
  }
  func.func @transform_7(%arg0: i32, %arg1: memref<2xi32, #tpu.memory_space<smem>>) -> (i32, i32, i32) {
    %c0_i32 = arith.constant 0 : i32
    %c0_i32_0 = arith.constant 0 : i32
    %c0_i32_1 = arith.constant 0 : i32
    return %arg0, %c0_i32, %c0_i32_0 : i32, i32, i32
  }
}

module attributes {stable_mosaic.version = 11 : i64} {
  func.func @_ffn_kernel(%arg0: i32, %arg1: memref<16x32xbf16, #tpu.memory_space<vmem>>, %arg2: memref<1x32xf32, #tpu.memory_space<vmem>>, %arg3: memref<1x32xf32, #tpu.memory_space<vmem>>, %arg4: memref<32x64xbf16, #tpu.memory_space<vmem>>, %arg5: memref<1x64xf32, #tpu.memory_space<vmem>>, %arg6: memref<64x32xbf16, #tpu.memory_space<vmem>>, %arg7: memref<1x32xf32, #tpu.memory_space<vmem>>, %arg8: memref<1x32xf32, #tpu.memory_space<vmem>>, %arg9: memref<1x32xf32, #tpu.memory_space<vmem>>, %arg10: memref<16x32xbf16, #tpu.memory_space<vmem>>) attributes {dimension_semantics = [#tpu.dimension_semantics<parallel>], iteration_bounds = array<i64: 1>, scalar_prefetch = 0 : i64, scratch_operands = 0 : i64, tpu.core_type = #tpu.core_type<tc>, window_params = [{transform_indices = @transform_0, window_bounds = array<i64: 16, 32>}, {pipeline_mode = #tpu.pipeline_mode<synchronous>, transform_indices = @transform_1, window_bounds = array<i64: 1, 32>}, {pipeline_mode = #tpu.pipeline_mode<synchronous>, transform_indices = @transform_2, window_bounds = array<i64: 1, 32>}, {pipeline_mode = #tpu.pipeline_mode<synchronous>, transform_indices = @transform_3, window_bounds = array<i64: 32, 64>}, {pipeline_mode = #tpu.pipeline_mode<synchronous>, transform_indices = @transform_4, window_bounds = array<i64: 1, 64>}, {pipeline_mode = #tpu.pipeline_mode<synchronous>, transform_indices = @transform_5, window_bounds = array<i64: 64, 32>}, {pipeline_mode = #tpu.pipeline_mode<synchronous>, transform_indices = @transform_6, window_bounds = array<i64: 1, 32>}, {pipeline_mode = #tpu.pipeline_mode<synchronous>, transform_indices = @transform_7, window_bounds = array<i64: 1, 32>}, {pipeline_mode = #tpu.pipeline_mode<synchronous>, transform_indices = @transform_8, window_bounds = array<i64: 1, 32>}, {transform_indices = @transform_9, window_bounds = array<i64: 16, 32>}]} {
    %c0 = arith.constant 0 : index
    %c0_0 = arith.constant 0 : index
    %0 = vector.load %arg1[%c0, %c0_0] : memref<16x32xbf16, #tpu.memory_space<vmem>>, vector<16x32xbf16>
    %1 = arith.extf %0 : vector<16x32xbf16> to vector<16x32xf32>
    %cst = arith.constant dense<0.000000e+00> : vector<16xf32>
    %2 = vector.multi_reduction <add>, %1, %cst [1] : vector<16x32xf32> to vector<16xf32>
    %3 = vector.shape_cast %2 : vector<16xf32> to vector<16x1xf32>
    %cst_1 = arith.constant 3.200000e+01 : f32
    %4 = vector.broadcast %cst_1 : f32 to vector<16x1xf32>
    %5 = arith.divf %3, %4 : vector<16x1xf32>
    %6 = vector.broadcast %5 : vector<16x1xf32> to vector<16x32xf32>
    %7 = arith.subf %1, %6 : vector<16x32xf32>
    %8 = arith.mulf %7, %7 : vector<16x32xf32>
    %cst_2 = arith.constant dense<0.000000e+00> : vector<16xf32>
    %9 = vector.multi_reduction <add>, %8, %cst_2 [1] : vector<16x32xf32> to vector<16xf32>
    %10 = vector.shape_cast %9 : vector<16xf32> to vector<16x1xf32>
    %cst_3 = arith.constant 3.200000e+01 : f32
    %11 = vector.broadcast %cst_3 : f32 to vector<16x1xf32>
    %12 = arith.divf %10, %11 : vector<16x1xf32>
    %cst_4 = arith.constant 9.99999997E-7 : f32
    %13 = vector.broadcast %cst_4 : f32 to vector<16x1xf32>
    %14 = arith.addf %12, %13 : vector<16x1xf32>
    %15 = math.rsqrt %14 : vector<16x1xf32>
    %16 = vector.broadcast %15 : vector<16x1xf32> to vector<16x32xf32>
    %17 = arith.mulf %7, %16 : vector<16x32xf32>
    %c0_5 = arith.constant 0 : index
    %c0_6 = arith.constant 0 : index
    %18 = vector.load %arg2[%c0_5, %c0_6] : memref<1x32xf32, #tpu.memory_space<vmem>>, vector<1x32xf32>
    %19 = vector.broadcast %18 : vector<1x32xf32> to vector<16x32xf32>
    %20 = arith.mulf %17, %19 : vector<16x32xf32>
    %c0_7 = arith.constant 0 : index
    %c0_8 = arith.constant 0 : index
    %21 = vector.load %arg3[%c0_7, %c0_8] : memref<1x32xf32, #tpu.memory_space<vmem>>, vector<1x32xf32>
    %22 = vector.broadcast %21 : vector<1x32xf32> to vector<16x32xf32>
    %23 = arith.addf %20, %22 : vector<16x32xf32>
    %24 = arith.truncf %23 : vector<16x32xf32> to vector<16x32xbf16>
    %c0_9 = arith.constant 0 : index
    %c0_10 = arith.constant 0 : index
    %25 = vector.load %arg4[%c0_9, %c0_10] : memref<32x64xbf16, #tpu.memory_space<vmem>>, vector<32x64xbf16>
    %cst_11 = arith.constant dense<0.000000e+00> : vector<16x64xf32>
    %26 = tpu.matmul %24, %25, %cst_11 {dimension_numbers = #tpu.dot_dimension_numbers<[1], [0], [0], [1], [0, 0, 1, 1], [], []>} : vector<16x32xbf16>, vector<32x64xbf16>, vector<16x64xf32> -> vector<16x64xf32>
    %c0_12 = arith.constant 0 : index
    %c0_13 = arith.constant 0 : index
    %27 = vector.load %arg5[%c0_12, %c0_13] : memref<1x64xf32, #tpu.memory_space<vmem>>, vector<1x64xf32>
    %28 = vector.broadcast %27 : vector<1x64xf32> to vector<16x64xf32>
    %29 = arith.addf %26, %28 : vector<16x64xf32>
    %cst_14 = arith.constant 0.000000e+00 : f32
    %30 = vector.broadcast %cst_14 : f32 to vector<16x64xf32>
    %31 = arith.maximumf %29, %30 : vector<16x64xf32>
    %32 = arith.truncf %31 : vector<16x64xf32> to vector<16x64xbf16>
    %c0_15 = arith.constant 0 : index
    %c0_16 = arith.constant 0 : index
    %33 = vector.load %arg6[%c0_15, %c0_16] : memref<64x32xbf16, #tpu.memory_space<vmem>>, vector<64x32xbf16>
    %cst_17 = arith.constant dense<0.000000e+00> : vector<16x32xf32>
    %34 = tpu.matmul %32, %33, %cst_17 {dimension_numbers = #tpu.dot_dimension_numbers<[1], [0], [0], [1], [0, 0, 1, 1], [], []>} : vector<16x64xbf16>, vector<64x32xbf16>, vector<16x32xf32> -> vector<16x32xf32>
    %c0_18 = arith.constant 0 : index
    %c0_19 = arith.constant 0 : index
    %35 = vector.load %arg7[%c0_18, %c0_19] : memref<1x32xf32, #tpu.memory_space<vmem>>, vector<1x32xf32>
    %36 = vector.broadcast %35 : vector<1x32xf32> to vector<16x32xf32>
    %37 = arith.addf %34, %36 : vector<16x32xf32>
    %38 = arith.addf %37, %1 : vector<16x32xf32>
    %cst_20 = arith.constant dense<0.000000e+00> : vector<16xf32>
    %39 = vector.multi_reduction <add>, %38, %cst_20 [1] : vector<16x32xf32> to vector<16xf32>
    %40 = vector.shape_cast %39 : vector<16xf32> to vector<16x1xf32>
    %cst_21 = arith.constant 3.200000e+01 : f32
    %41 = vector.broadcast %cst_21 : f32 to vector<16x1xf32>
    %42 = arith.divf %40, %41 : vector<16x1xf32>
    %43 = vector.broadcast %42 : vector<16x1xf32> to vector<16x32xf32>
    %44 = arith.subf %38, %43 : vector<16x32xf32>
    %45 = arith.mulf %44, %44 : vector<16x32xf32>
    %cst_22 = arith.constant dense<0.000000e+00> : vector<16xf32>
    %46 = vector.multi_reduction <add>, %45, %cst_22 [1] : vector<16x32xf32> to vector<16xf32>
    %47 = vector.shape_cast %46 : vector<16xf32> to vector<16x1xf32>
    %cst_23 = arith.constant 3.200000e+01 : f32
    %48 = vector.broadcast %cst_23 : f32 to vector<16x1xf32>
    %49 = arith.divf %47, %48 : vector<16x1xf32>
    %cst_24 = arith.constant 9.99999997E-7 : f32
    %50 = vector.broadcast %cst_24 : f32 to vector<16x1xf32>
    %51 = arith.addf %49, %50 : vector<16x1xf32>
    %52 = math.rsqrt %51 : vector<16x1xf32>
    %53 = vector.broadcast %52 : vector<16x1xf32> to vector<16x32xf32>
    %54 = arith.mulf %44, %53 : vector<16x32xf32>
    %c0_25 = arith.constant 0 : index
    %c0_26 = arith.constant 0 : index
    %55 = vector.load %arg8[%c0_25, %c0_26] : memref<1x32xf32, #tpu.memory_space<vmem>>, vector<1x32xf32>
    %56 = vector.broadcast %55 : vector<1x32xf32> to vector<16x32xf32>
    %57 = arith.mulf %54, %56 : vector<16x32xf32>
    %c0_27 = arith.constant 0 : index
    %c0_28 = arith.constant 0 : index
    %58 = vector.load %arg9[%c0_27, %c0_28] : memref<1x32xf32, #tpu.memory_space<vmem>>, vector<1x32xf32>
    %59 = vector.broadcast %58 : vector<1x32xf32> to vector<16x32xf32>
    %60 = arith.addf %57, %59 : vector<16x32xf32>
    %61 = arith.truncf %60 : vector<16x32xf32> to vector<16x32xbf16>
    %c0_29 = arith.constant 0 : index
    %c0_30 = arith.constant 0 : index
    %62 = vector.load %arg10[%c0_29, %c0_30] : memref<16x32xbf16, #tpu.memory_space<vmem>>, vector<16x32xbf16>
    tpu.vector_store %arg10[%c0_29, %c0_30], %61 {strides = array<i32>} : memref<16x32xbf16, #tpu.memory_space<vmem>>, vector<16x32xbf16>,
    return
  }
  func.func @transform_0(%arg0: i32) -> (i32, i32) {
    %c0_i32 = arith.constant 0 : i32
    %c0_i32_0 = arith.constant 0 : i32
    return %arg0, %c0_i32 : i32, i32
  }
  func.func @transform_1(%arg0: i32) -> (i32, i32) {
    %c0_i32 = arith.constant 0 : i32
    %c0_i32_0 = arith.constant 0 : i32
    %c0_i32_1 = arith.constant 0 : i32
    return %c0_i32, %c0_i32_0 : i32, i32
  }
  func.func @transform_2(%arg0: i32) -> (i32, i32) {
    %c0_i32 = arith.constant 0 : i32
    %c0_i32_0 = arith.constant 0 : i32
    %c0_i32_1 = arith.constant 0 : i32
    return %c0_i32, %c0_i32_0 : i32, i32
  }
  func.func @transform_3(%arg0: i32) -> (i32, i32) {
    %c0_i32 = arith.constant 0 : i32
    %c0_i32_0 = arith.constant 0 : i32
    %c0_i32_1 = arith.constant 0 : i32
    return %c0_i32, %c0_i32_0 : i32, i32
  }
  func.func @transform_4(%arg0: i32) -> (i32, i32) {
    %c0_i32 = arith.constant 0 : i32
    %c0_i32_0 = arith.constant 0 : i32
    %c0_i32_1 = arith.constant 0 : i32
    return %c0_i32, %c0_i32_0 : i32, i32
  }
  func.func @transform_5(%arg0: i32) -> (i32, i32) {
    %c0_i32 = arith.constant 0 : i32
    %c0_i32_0 = arith.constant 0 : i32
    %c0_i32_1 = arith.constant 0 : i32
    return %c0_i32, %c0_i32_0 : i32, i32
  }
  func.func @transform_6(%arg0: i32) -> (i32, i32) {
    %c0_i32 = arith.constant 0 : i32
    %c0_i32_0 = arith.constant 0 : i32
    %c0_i32_1 = arith.constant 0 : i32
    return %c0_i32, %c0_i32_0 : i32, i32
  }
  func.func @transform_7(%arg0: i32) -> (i32, i32) {
    %c0_i32 = arith.constant 0 : i32
    %c0_i32_0 = arith.constant 0 : i32
    %c0_i32_1 = arith.constant 0 : i32
    return %c0_i32, %c0_i32_0 : i32, i32
  }
  func.func @transform_8(%arg0: i32) -> (i32, i32) {
    %c0_i32 = arith.constant 0 : i32
    %c0_i32_0 = arith.constant 0 : i32
    %c0_i32_1 = arith.constant 0 : i32
    return %c0_i32, %c0_i32_0 : i32, i32
  }
  func.func @transform_9(%arg0: i32) -> (i32, i32) {
    %c0_i32 = arith.constant 0 : i32
    %c0_i32_0 = arith.constant 0 : i32
    return %arg0, %c0_i32 : i32, i32
  }
}

module attributes {stable_mosaic.version = 11 : i64} {
  func.func @_prenet_dec_kernel(%arg0: i32, %arg1: memref<1x8x16xf32, #tpu.memory_space<vmem>>, %arg2: memref<16x32xbf16, #tpu.memory_space<vmem>>, %arg3: memref<1x32xf32, #tpu.memory_space<vmem>>, %arg4: memref<8x32xf32, #tpu.memory_space<vmem>>, %arg5: memref<1x8x32xbf16, #tpu.memory_space<vmem>>) attributes {dimension_semantics = [#tpu.dimension_semantics<parallel>], iteration_bounds = array<i64: 2>, scalar_prefetch = 0 : i64, scratch_operands = 0 : i64, tpu.core_type = #tpu.core_type<tc>, window_params = [{transform_indices = @transform_0, window_bounds = array<i64: 1, 8, 16>}, {pipeline_mode = #tpu.pipeline_mode<synchronous>, transform_indices = @transform_1, window_bounds = array<i64: 16, 32>}, {pipeline_mode = #tpu.pipeline_mode<synchronous>, transform_indices = @transform_2, window_bounds = array<i64: 1, 32>}, {pipeline_mode = #tpu.pipeline_mode<synchronous>, transform_indices = @transform_3, window_bounds = array<i64: 8, 32>}, {transform_indices = @transform_4, window_bounds = array<i64: 1, 8, 32>}]} {
    %c0 = arith.constant 0 : index
    %c0_0 = arith.constant 0 : index
    %c0_1 = arith.constant 0 : index
    %0 = vector.load %arg1[%c0, %c0_0, %c0_1] : memref<1x8x16xf32, #tpu.memory_space<vmem>>, vector<1x8x16xf32>
    %1 = vector.shape_cast %0 : vector<1x8x16xf32> to vector<8x16xf32>
    %2 = arith.truncf %1 : vector<8x16xf32> to vector<8x16xbf16>
    %c0_2 = arith.constant 0 : index
    %c0_3 = arith.constant 0 : index
    %3 = vector.load %arg2[%c0_2, %c0_3] : memref<16x32xbf16, #tpu.memory_space<vmem>>, vector<16x32xbf16>
    %cst = arith.constant dense<0.000000e+00> : vector<8x32xf32>
    %4 = tpu.matmul %2, %3, %cst {dimension_numbers = #tpu.dot_dimension_numbers<[1], [0], [0], [1], [0, 0, 1, 1], [], []>} : vector<8x16xbf16>, vector<16x32xbf16>, vector<8x32xf32> -> vector<8x32xf32>
    %c0_4 = arith.constant 0 : index
    %c0_5 = arith.constant 0 : index
    %5 = vector.load %arg3[%c0_4, %c0_5] : memref<1x32xf32, #tpu.memory_space<vmem>>, vector<1x32xf32>
    %6 = vector.broadcast %5 : vector<1x32xf32> to vector<8x32xf32>
    %7 = arith.addf %4, %6 : vector<8x32xf32>
    %cst_6 = arith.constant 5.65685415 : f32
    %8 = vector.broadcast %cst_6 : f32 to vector<8x32xf32>
    %9 = arith.mulf %7, %8 : vector<8x32xf32>
    %c0_7 = arith.constant 0 : index
    %c0_8 = arith.constant 0 : index
    %10 = vector.load %arg4[%c0_7, %c0_8] : memref<8x32xf32, #tpu.memory_space<vmem>>, vector<8x32xf32>
    %11 = arith.addf %9, %10 : vector<8x32xf32>
    %12 = arith.truncf %11 : vector<8x32xf32> to vector<8x32xbf16>
    %c0_9 = arith.constant 0 : index
    %c0_10 = arith.constant 0 : index
    %c0_11 = arith.constant 0 : index
    %13 = vector.load %arg5[%c0_9, %c0_10, %c0_11] : memref<1x8x32xbf16, #tpu.memory_space<vmem>>, vector<1x8x32xbf16>
    %14 = vector.shape_cast %13 : vector<1x8x32xbf16> to vector<8x32xbf16>
    %15 = vector.shape_cast %12 : vector<8x32xbf16> to vector<1x8x32xbf16>
    tpu.vector_store %arg5[%c0_9, %c0_10, %c0_11], %15 {strides = array<i32>} : memref<1x8x32xbf16, #tpu.memory_space<vmem>>, vector<1x8x32xbf16>,
    return
  }
  func.func @transform_0(%arg0: i32) -> (i32, i32, i32) {
    %c0_i32 = arith.constant 0 : i32
    %c0_i32_0 = arith.constant 0 : i32
    %c0_i32_1 = arith.constant 0 : i32
    return %arg0, %c0_i32, %c0_i32_0 : i32, i32, i32
  }
  func.func @transform_1(%arg0: i32) -> (i32, i32) {
    %c0_i32 = arith.constant 0 : i32
    %c0_i32_0 = arith.constant 0 : i32
    %c0_i32_1 = arith.constant 0 : i32
    return %c0_i32, %c0_i32_0 : i32, i32
  }
  func.func @transform_2(%arg0: i32) -> (i32, i32) {
    %c0_i32 = arith.constant 0 : i32
    %c0_i32_0 = arith.constant 0 : i32
    %c0_i32_1 = arith.constant 0 : i32
    return %c0_i32, %c0_i32_0 : i32, i32
  }
  func.func @transform_3(%arg0: i32) -> (i32, i32) {
    %c0_i32 = arith.constant 0 : i32
    %c0_i32_0 = arith.constant 0 : i32
    %c0_i32_1 = arith.constant 0 : i32
    return %c0_i32, %c0_i32_0 : i32, i32
  }
  func.func @transform_4(%arg0: i32) -> (i32, i32, i32) {
    %c0_i32 = arith.constant 0 : i32
    %c0_i32_0 = arith.constant 0 : i32
    %c0_i32_1 = arith.constant 0 : i32
    return %arg0, %c0_i32, %c0_i32_0 : i32, i32, i32
  }
}

module attributes {stable_mosaic.version = 11 : i64} {
  func.func @_self_attn_kernel(%arg0: i32, %arg1: memref<2xi32, #tpu.memory_space<smem>>, %arg2: memref<1x8x32xbf16, #tpu.memory_space<vmem>>, %arg3: memref<1x32xf32, #tpu.memory_space<vmem>>, %arg4: memref<1x32xf32, #tpu.memory_space<vmem>>, %arg5: memref<32x96xbf16, #tpu.memory_space<vmem>>, %arg6: memref<1x96xf32, #tpu.memory_space<vmem>>, %arg7: memref<32x32xbf16, #tpu.memory_space<vmem>>, %arg8: memref<1x32xf32, #tpu.memory_space<vmem>>, %arg9: memref<1x8x32xbf16, #tpu.memory_space<vmem>>) attributes {dimension_semantics = [#tpu.dimension_semantics<parallel>], iteration_bounds = array<i64: 2>, scalar_prefetch = 1 : i64, scratch_operands = 0 : i64, tpu.core_type = #tpu.core_type<tc>, window_params = [{transform_indices = @transform_0, window_bounds = array<i64: 1, 8, 32>}, {pipeline_mode = #tpu.pipeline_mode<synchronous>, transform_indices = @transform_1, window_bounds = array<i64: 1, 32>}, {pipeline_mode = #tpu.pipeline_mode<synchronous>, transform_indices = @transform_2, window_bounds = array<i64: 1, 32>}, {pipeline_mode = #tpu.pipeline_mode<synchronous>, transform_indices = @transform_3, window_bounds = array<i64: 32, 96>}, {pipeline_mode = #tpu.pipeline_mode<synchronous>, transform_indices = @transform_4, window_bounds = array<i64: 1, 96>}, {pipeline_mode = #tpu.pipeline_mode<synchronous>, transform_indices = @transform_5, window_bounds = array<i64: 32, 32>}, {pipeline_mode = #tpu.pipeline_mode<synchronous>, transform_indices = @transform_6, window_bounds = array<i64: 1, 32>}, {transform_indices = @transform_7, window_bounds = array<i64: 1, 8, 32>}]} {
    %c0 = arith.constant 0 : index
    %c0_0 = arith.constant 0 : index
    %c0_1 = arith.constant 0 : index
    %0 = vector.load %arg2[%c0, %c0_0, %c0_1] : memref<1x8x32xbf16, #tpu.memory_space<vmem>>, vector<1x8x32xbf16>
    %1 = vector.shape_cast %0 : vector<1x8x32xbf16> to vector<8x32xbf16>
    %2 = arith.extf %1 : vector<8x32xbf16> to vector<8x32xf32>
    %cst = arith.constant dense<0.000000e+00> : vector<8xf32>
    %3 = vector.multi_reduction <add>, %2, %cst [1] : vector<8x32xf32> to vector<8xf32>
    %4 = vector.shape_cast %3 : vector<8xf32> to vector<8x1xf32>
    %cst_2 = arith.constant 3.200000e+01 : f32
    %5 = vector.broadcast %cst_2 : f32 to vector<8x1xf32>
    %6 = arith.divf %4, %5 : vector<8x1xf32>
    %7 = vector.broadcast %6 : vector<8x1xf32> to vector<8x32xf32>
    %8 = arith.subf %2, %7 : vector<8x32xf32>
    %9 = arith.mulf %8, %8 : vector<8x32xf32>
    %cst_3 = arith.constant dense<0.000000e+00> : vector<8xf32>
    %10 = vector.multi_reduction <add>, %9, %cst_3 [1] : vector<8x32xf32> to vector<8xf32>
    %11 = vector.shape_cast %10 : vector<8xf32> to vector<8x1xf32>
    %cst_4 = arith.constant 3.200000e+01 : f32
    %12 = vector.broadcast %cst_4 : f32 to vector<8x1xf32>
    %13 = arith.divf %11, %12 : vector<8x1xf32>
    %cst_5 = arith.constant 9.99999997E-7 : f32
    %14 = vector.broadcast %cst_5 : f32 to vector<8x1xf32>
    %15 = arith.addf %13, %14 : vector<8x1xf32>
    %16 = math.rsqrt %15 : vector<8x1xf32>
    %17 = vector.broadcast %16 : vector<8x1xf32> to vector<8x32xf32>
    %18 = arith.mulf %8, %17 : vector<8x32xf32>
    %c0_6 = arith.constant 0 : index
    %c0_7 = arith.constant 0 : index
    %19 = vector.load %arg3[%c0_6, %c0_7] : memref<1x32xf32, #tpu.memory_space<vmem>>, vector<1x32xf32>
    %20 = vector.broadcast %19 : vector<1x32xf32> to vector<8x32xf32>
    %21 = arith.mulf %18, %20 : vector<8x32xf32>
    %c0_8 = arith.constant 0 : index
    %c0_9 = arith.constant 0 : index
    %22 = vector.load %arg4[%c0_8, %c0_9] : memref<1x32xf32, #tpu.memory_space<vmem>>, vector<1x32xf32>
    %23 = vector.broadcast %22 : vector<1x32xf32> to vector<8x32xf32>
    %24 = arith.addf %21, %23 : vector<8x32xf32>
    %25 = arith.truncf %24 : vector<8x32xf32> to vector<8x32xbf16>
    %c0_10 = arith.constant 0 : index
    %c0_11 = arith.constant 0 : index
    %26 = vector.load %arg5[%c0_10, %c0_11] : memref<32x96xbf16, #tpu.memory_space<vmem>>, vector<32x96xbf16>
    %cst_12 = arith.constant dense<0.000000e+00> : vector<8x96xf32>
    %27 = tpu.matmul %25, %26, %cst_12 {dimension_numbers = #tpu.dot_dimension_numbers<[1], [0], [0], [1], [0, 0, 1, 1], [], []>} : vector<8x32xbf16>, vector<32x96xbf16>, vector<8x96xf32> -> vector<8x96xf32>
    %c0_13 = arith.constant 0 : index
    %c0_14 = arith.constant 0 : index
    %28 = vector.load %arg6[%c0_13, %c0_14] : memref<1x96xf32, #tpu.memory_space<vmem>>, vector<1x96xf32>
    %29 = vector.broadcast %28 : vector<1x96xf32> to vector<8x96xf32>
    %30 = arith.addf %27, %29 : vector<8x96xf32>
    %31 = arith.index_cast %arg0 : i32 to index
    %32 = memref.load %arg1[%31] : memref<2xi32, #tpu.memory_space<smem>>
    %33 = tpu.iota {dimensions = array<i32: 1>} : vector<8x8xi32>
    %34 = vector.broadcast %32 : i32 to vector<8x8xi32>
    %35 = arith.cmpi slt, %33, %34 : vector<8x8xi32>
    %36 = tpu.iota {dimensions = array<i32: 0>} : vector<8x8xi32>
    %37 = arith.cmpi sle, %33, %36 : vector<8x8xi32>
    %38 = arith.andi %35, %37 : vector<8x8xi1>
    %39 = vector.extract_strided_slice %30 {offsets = [0, 0], sizes = [8, 8], strides = [1, 1]} : vector<8x96xf32> to vector<8x8xf32>
    %cst_15 = arith.constant 0.353553385 : f32
    %40 = vector.broadcast %cst_15 : f32 to vector<8x8xf32>
    %41 = arith.mulf %39, %40 : vector<8x8xf32>
    %42 = arith.truncf %41 : vector<8x8xf32> to vector<8x8xbf16>
    %43 = vector.extract_strided_slice %30 {offsets = [0, 32], sizes = [8, 8], strides = [1, 1]} : vector<8x96xf32> to vector<8x8xf32>
    %44 = arith.truncf %43 : vector<8x8xf32> to vector<8x8xbf16>
    %45 = vector.extract_strided_slice %30 {offsets = [0, 64], sizes = [8, 8], strides = [1, 1]} : vector<8x96xf32> to vector<8x8xf32>
    %46 = arith.truncf %45 : vector<8x8xf32> to vector<8x8xbf16>
    %cst_16 = arith.constant dense<0.000000e+00> : vector<8x8xf32>
    %47 = tpu.matmul %42, %44, %cst_16 {dimension_numbers = #tpu.dot_dimension_numbers<[1], [1], [0], [0], [0, 0, 1, 0], [], []>} : vector<8x8xbf16>, vector<8x8xbf16>, vector<8x8xf32> -> vector<8x8xf32>
    %cst_17 = arith.constant -1.000000e+09 : f32
    %48 = vector.broadcast %cst_17 : f32 to vector<8x8xf32>
    %49 = arith.select %38, %47, %48 : vector<8x8xi1>, vector<8x8xf32>
    %cst_18 = arith.constant dense<0xFF800000> : vector<8xf32>
    %50 = vector.multi_reduction <maximumf>, %49, %cst_18 [1] : vector<8x8xf32> to vector<8xf32>
    %51 = vector.shape_cast %50 : vector<8xf32> to vector<8x1xf32>
    %52 = vector.broadcast %51 : vector<8x1xf32> to vector<8x8xf32>
    %53 = arith.subf %49, %52 : vector<8x8xf32>
    %54 = math.exp %53 : vector<8x8xf32>
    %cst_19 = arith.constant dense<0.000000e+00> : vector<8xf32>
    %55 = vector.multi_reduction <add>, %54, %cst_19 [1] : vector<8x8xf32> to vector<8xf32>
    %56 = vector.shape_cast %55 : vector<8xf32> to vector<8x1xf32>
    %57 = tpu.reciprocal %56 {approx = true} : vector<8x1xf32> -> vector<8x1xf32>
    %58 = vector.broadcast %57 : vector<8x1xf32> to vector<8x8xf32>
    %59 = arith.mulf %54, %58 : vector<8x8xf32>
    %60 = arith.truncf %59 : vector<8x8xf32> to vector<8x8xbf16>
    %cst_20 = arith.constant dense<0.000000e+00> : vector<8x8xf32>
    %61 = tpu.matmul %60, %46, %cst_20 {dimension_numbers = #tpu.dot_dimension_numbers<[1], [0], [0], [1], [0, 0, 1, 1], [], []>} : vector<8x8xbf16>, vector<8x8xbf16>, vector<8x8xf32> -> vector<8x8xf32>
    %62 = vector.extract_strided_slice %30 {offsets = [0, 8], sizes = [8, 8], strides = [1, 1]} : vector<8x96xf32> to vector<8x8xf32>
    %cst_21 = arith.constant 0.353553385 : f32
    %63 = vector.broadcast %cst_21 : f32 to vector<8x8xf32>
    %64 = arith.mulf %62, %63 : vector<8x8xf32>
    %65 = arith.truncf %64 : vector<8x8xf32> to vector<8x8xbf16>
    %66 = vector.extract_strided_slice %30 {offsets = [0, 40], sizes = [8, 8], strides = [1, 1]} : vector<8x96xf32> to vector<8x8xf32>
    %67 = arith.truncf %66 : vector<8x8xf32> to vector<8x8xbf16>
    %68 = vector.extract_strided_slice %30 {offsets = [0, 72], sizes = [8, 8], strides = [1, 1]} : vector<8x96xf32> to vector<8x8xf32>
    %69 = arith.truncf %68 : vector<8x8xf32> to vector<8x8xbf16>
    %cst_22 = arith.constant dense<0.000000e+00> : vector<8x8xf32>
    %70 = tpu.matmul %65, %67, %cst_22 {dimension_numbers = #tpu.dot_dimension_numbers<[1], [1], [0], [0], [0, 0, 1, 0], [], []>} : vector<8x8xbf16>, vector<8x8xbf16>, vector<8x8xf32> -> vector<8x8xf32>
    %cst_23 = arith.constant -1.000000e+09 : f32
    %71 = vector.broadcast %cst_23 : f32 to vector<8x8xf32>
    %72 = arith.select %38, %70, %71 : vector<8x8xi1>, vector<8x8xf32>
    %cst_24 = arith.constant dense<0xFF800000> : vector<8xf32>
    %73 = vector.multi_reduction <maximumf>, %72, %cst_24 [1] : vector<8x8xf32> to vector<8xf32>
    %74 = vector.shape_cast %73 : vector<8xf32> to vector<8x1xf32>
    %75 = vector.broadcast %74 : vector<8x1xf32> to vector<8x8xf32>
    %76 = arith.subf %72, %75 : vector<8x8xf32>
    %77 = math.exp %76 : vector<8x8xf32>
    %cst_25 = arith.constant dense<0.000000e+00> : vector<8xf32>
    %78 = vector.multi_reduction <add>, %77, %cst_25 [1] : vector<8x8xf32> to vector<8xf32>
    %79 = vector.shape_cast %78 : vector<8xf32> to vector<8x1xf32>
    %80 = tpu.reciprocal %79 {approx = true} : vector<8x1xf32> -> vector<8x1xf32>
    %81 = vector.broadcast %80 : vector<8x1xf32> to vector<8x8xf32>
    %82 = arith.mulf %77, %81 : vector<8x8xf32>
    %83 = arith.truncf %82 : vector<8x8xf32> to vector<8x8xbf16>
    %cst_26 = arith.constant dense<0.000000e+00> : vector<8x8xf32>
    %84 = tpu.matmul %83, %69, %cst_26 {dimension_numbers = #tpu.dot_dimension_numbers<[1], [0], [0], [1], [0, 0, 1, 1], [], []>} : vector<8x8xbf16>, vector<8x8xbf16>, vector<8x8xf32> -> vector<8x8xf32>
    %85 = vector.extract_strided_slice %30 {offsets = [0, 16], sizes = [8, 8], strides = [1, 1]} : vector<8x96xf32> to vector<8x8xf32>
    %cst_27 = arith.constant 0.353553385 : f32
    %86 = vector.broadcast %cst_27 : f32 to vector<8x8xf32>
    %87 = arith.mulf %85, %86 : vector<8x8xf32>
    %88 = arith.truncf %87 : vector<8x8xf32> to vector<8x8xbf16>
    %89 = vector.extract_strided_slice %30 {offsets = [0, 48], sizes = [8, 8], strides = [1, 1]} : vector<8x96xf32> to vector<8x8xf32>
    %90 = arith.truncf %89 : vector<8x8xf32> to vector<8x8xbf16>
    %91 = vector.extract_strided_slice %30 {offsets = [0, 80], sizes = [8, 8], strides = [1, 1]} : vector<8x96xf32> to vector<8x8xf32>
    %92 = arith.truncf %91 : vector<8x8xf32> to vector<8x8xbf16>
    %cst_28 = arith.constant dense<0.000000e+00> : vector<8x8xf32>
    %93 = tpu.matmul %88, %90, %cst_28 {dimension_numbers = #tpu.dot_dimension_numbers<[1], [1], [0], [0], [0, 0, 1, 0], [], []>} : vector<8x8xbf16>, vector<8x8xbf16>, vector<8x8xf32> -> vector<8x8xf32>
    %cst_29 = arith.constant -1.000000e+09 : f32
    %94 = vector.broadcast %cst_29 : f32 to vector<8x8xf32>
    %95 = arith.select %38, %93, %94 : vector<8x8xi1>, vector<8x8xf32>
    %cst_30 = arith.constant dense<0xFF800000> : vector<8xf32>
    %96 = vector.multi_reduction <maximumf>, %95, %cst_30 [1] : vector<8x8xf32> to vector<8xf32>
    %97 = vector.shape_cast %96 : vector<8xf32> to vector<8x1xf32>
    %98 = vector.broadcast %97 : vector<8x1xf32> to vector<8x8xf32>
    %99 = arith.subf %95, %98 : vector<8x8xf32>
    %100 = math.exp %99 : vector<8x8xf32>
    %cst_31 = arith.constant dense<0.000000e+00> : vector<8xf32>
    %101 = vector.multi_reduction <add>, %100, %cst_31 [1] : vector<8x8xf32> to vector<8xf32>
    %102 = vector.shape_cast %101 : vector<8xf32> to vector<8x1xf32>
    %103 = tpu.reciprocal %102 {approx = true} : vector<8x1xf32> -> vector<8x1xf32>
    %104 = vector.broadcast %103 : vector<8x1xf32> to vector<8x8xf32>
    %105 = arith.mulf %100, %104 : vector<8x8xf32>
    %106 = arith.truncf %105 : vector<8x8xf32> to vector<8x8xbf16>
    %cst_32 = arith.constant dense<0.000000e+00> : vector<8x8xf32>
    %107 = tpu.matmul %106, %92, %cst_32 {dimension_numbers = #tpu.dot_dimension_numbers<[1], [0], [0], [1], [0, 0, 1, 1], [], []>} : vector<8x8xbf16>, vector<8x8xbf16>, vector<8x8xf32> -> vector<8x8xf32>
    %108 = vector.extract_strided_slice %30 {offsets = [0, 24], sizes = [8, 8], strides = [1, 1]} : vector<8x96xf32> to vector<8x8xf32>
    %cst_33 = arith.constant 0.353553385 : f32
    %109 = vector.broadcast %cst_33 : f32 to vector<8x8xf32>
    %110 = arith.mulf %108, %109 : vector<8x8xf32>
    %111 = arith.truncf %110 : vector<8x8xf32> to vector<8x8xbf16>
    %112 = vector.extract_strided_slice %30 {offsets = [0, 56], sizes = [8, 8], strides = [1, 1]} : vector<8x96xf32> to vector<8x8xf32>
    %113 = arith.truncf %112 : vector<8x8xf32> to vector<8x8xbf16>
    %114 = vector.extract_strided_slice %30 {offsets = [0, 88], sizes = [8, 8], strides = [1, 1]} : vector<8x96xf32> to vector<8x8xf32>
    %115 = arith.truncf %114 : vector<8x8xf32> to vector<8x8xbf16>
    %cst_34 = arith.constant dense<0.000000e+00> : vector<8x8xf32>
    %116 = tpu.matmul %111, %113, %cst_34 {dimension_numbers = #tpu.dot_dimension_numbers<[1], [1], [0], [0], [0, 0, 1, 0], [], []>} : vector<8x8xbf16>, vector<8x8xbf16>, vector<8x8xf32> -> vector<8x8xf32>
    %cst_35 = arith.constant -1.000000e+09 : f32
    %117 = vector.broadcast %cst_35 : f32 to vector<8x8xf32>
    %118 = arith.select %38, %116, %117 : vector<8x8xi1>, vector<8x8xf32>
    %cst_36 = arith.constant dense<0xFF800000> : vector<8xf32>
    %119 = vector.multi_reduction <maximumf>, %118, %cst_36 [1] : vector<8x8xf32> to vector<8xf32>
    %120 = vector.shape_cast %119 : vector<8xf32> to vector<8x1xf32>
    %121 = vector.broadcast %120 : vector<8x1xf32> to vector<8x8xf32>
    %122 = arith.subf %118, %121 : vector<8x8xf32>
    %123 = math.exp %122 : vector<8x8xf32>
    %cst_37 = arith.constant dense<0.000000e+00> : vector<8xf32>
    %124 = vector.multi_reduction <add>, %123, %cst_37 [1] : vector<8x8xf32> to vector<8xf32>
    %125 = vector.shape_cast %124 : vector<8xf32> to vector<8x1xf32>
    %126 = tpu.reciprocal %125 {approx = true} : vector<8x1xf32> -> vector<8x1xf32>
    %127 = vector.broadcast %126 : vector<8x1xf32> to vector<8x8xf32>
    %128 = arith.mulf %123, %127 : vector<8x8xf32>
    %129 = arith.truncf %128 : vector<8x8xf32> to vector<8x8xbf16>
    %cst_38 = arith.constant dense<0.000000e+00> : vector<8x8xf32>
    %130 = tpu.matmul %129, %115, %cst_38 {dimension_numbers = #tpu.dot_dimension_numbers<[1], [0], [0], [1], [0, 0, 1, 1], [], []>} : vector<8x8xbf16>, vector<8x8xbf16>, vector<8x8xf32> -> vector<8x8xf32>
    %131 = tpu.concatenate %61, %84, %107, %130 in 1 : vector<8x8xf32>, vector<8x8xf32>, vector<8x8xf32>, vector<8x8xf32> -> vector<8x32xf32>
    %132 = arith.truncf %131 : vector<8x32xf32> to vector<8x32xbf16>
    %c0_39 = arith.constant 0 : index
    %c0_40 = arith.constant 0 : index
    %133 = vector.load %arg7[%c0_39, %c0_40] : memref<32x32xbf16, #tpu.memory_space<vmem>>, vector<32x32xbf16>
    %cst_41 = arith.constant dense<0.000000e+00> : vector<8x32xf32>
    %134 = tpu.matmul %132, %133, %cst_41 {dimension_numbers = #tpu.dot_dimension_numbers<[1], [0], [0], [1], [0, 0, 1, 1], [], []>} : vector<8x32xbf16>, vector<32x32xbf16>, vector<8x32xf32> -> vector<8x32xf32>
    %c0_42 = arith.constant 0 : index
    %c0_43 = arith.constant 0 : index
    %135 = vector.load %arg8[%c0_42, %c0_43] : memref<1x32xf32, #tpu.memory_space<vmem>>, vector<1x32xf32>
    %136 = vector.broadcast %135 : vector<1x32xf32> to vector<8x32xf32>
    %137 = arith.addf %134, %136 : vector<8x32xf32>
    %138 = arith.addf %137, %2 : vector<8x32xf32>
    %139 = arith.truncf %138 : vector<8x32xf32> to vector<8x32xbf16>
    %c0_44 = arith.constant 0 : index
    %c0_45 = arith.constant 0 : index
    %c0_46 = arith.constant 0 : index
    %140 = vector.load %arg9[%c0_44, %c0_45, %c0_46] : memref<1x8x32xbf16, #tpu.memory_space<vmem>>, vector<1x8x32xbf16>
    %141 = vector.shape_cast %140 : vector<1x8x32xbf16> to vector<8x32xbf16>
    %142 = vector.shape_cast %139 : vector<8x32xbf16> to vector<1x8x32xbf16>
    tpu.vector_store %arg9[%c0_44, %c0_45, %c0_46], %142 {strides = array<i32>} : memref<1x8x32xbf16, #tpu.memory_space<vmem>>, vector<1x8x32xbf16>,
    return
  }
  func.func @transform_0(%arg0: i32, %arg1: memref<2xi32, #tpu.memory_space<smem>>) -> (i32, i32, i32) {
    %c0_i32 = arith.constant 0 : i32
    %c0_i32_0 = arith.constant 0 : i32
    %c0_i32_1 = arith.constant 0 : i32
    return %arg0, %c0_i32, %c0_i32_0 : i32, i32, i32
  }
  func.func @transform_1(%arg0: i32, %arg1: memref<2xi32, #tpu.memory_space<smem>>) -> (i32, i32) {
    %c0_i32 = arith.constant 0 : i32
    %c0_i32_0 = arith.constant 0 : i32
    %c0_i32_1 = arith.constant 0 : i32
    return %c0_i32, %c0_i32_0 : i32, i32
  }
  func.func @transform_2(%arg0: i32, %arg1: memref<2xi32, #tpu.memory_space<smem>>) -> (i32, i32) {
    %c0_i32 = arith.constant 0 : i32
    %c0_i32_0 = arith.constant 0 : i32
    %c0_i32_1 = arith.constant 0 : i32
    return %c0_i32, %c0_i32_0 : i32, i32
  }
  func.func @transform_3(%arg0: i32, %arg1: memref<2xi32, #tpu.memory_space<smem>>) -> (i32, i32) {
    %c0_i32 = arith.constant 0 : i32
    %c0_i32_0 = arith.constant 0 : i32
    %c0_i32_1 = arith.constant 0 : i32
    return %c0_i32, %c0_i32_0 : i32, i32
  }
  func.func @transform_4(%arg0: i32, %arg1: memref<2xi32, #tpu.memory_space<smem>>) -> (i32, i32) {
    %c0_i32 = arith.constant 0 : i32
    %c0_i32_0 = arith.constant 0 : i32
    %c0_i32_1 = arith.constant 0 : i32
    return %c0_i32, %c0_i32_0 : i32, i32
  }
  func.func @transform_5(%arg0: i32, %arg1: memref<2xi32, #tpu.memory_space<smem>>) -> (i32, i32) {
    %c0_i32 = arith.constant 0 : i32
    %c0_i32_0 = arith.constant 0 : i32
    %c0_i32_1 = arith.constant 0 : i32
    return %c0_i32, %c0_i32_0 : i32, i32
  }
  func.func @transform_6(%arg0: i32, %arg1: memref<2xi32, #tpu.memory_space<smem>>) -> (i32, i32) {
    %c0_i32 = arith.constant 0 : i32
    %c0_i32_0 = arith.constant 0 : i32
    %c0_i32_1 = arith.constant 0 : i32
    return %c0_i32, %c0_i32_0 : i32, i32
  }
  func.func @transform_7(%arg0: i32, %arg1: memref<2xi32, #tpu.memory_space<smem>>) -> (i32, i32, i32) {
    %c0_i32 = arith.constant 0 : i32
    %c0_i32_0 = arith.constant 0 : i32
    %c0_i32_1 = arith.constant 0 : i32
    return %arg0, %c0_i32, %c0_i32_0 : i32, i32, i32
  }
}

module attributes {stable_mosaic.version = 11 : i64} {
  func.func @_cross_attn_kernel(%arg0: i32, %arg1: memref<2xi32, #tpu.memory_space<smem>>, %arg2: memref<1x8x32xbf16, #tpu.memory_space<vmem>>, %arg3: memref<1x8x32xbf16, #tpu.memory_space<vmem>>, %arg4: memref<1x1x8xf32, #tpu.memory_space<vmem>>, %arg5: memref<8x32xbf16, #tpu.memory_space<vmem>>, %arg6: memref<1x32xf32, #tpu.memory_space<vmem>>, %arg7: memref<1x32xf32, #tpu.memory_space<vmem>>, %arg8: memref<1x32xf32, #tpu.memory_space<vmem>>, %arg9: memref<32x32xbf16, #tpu.memory_space<vmem>>, %arg10: memref<1x32xf32, #tpu.memory_space<vmem>>, %arg11: memref<32x64xbf16, #tpu.memory_space<vmem>>, %arg12: memref<1x64xf32, #tpu.memory_space<vmem>>, %arg13: memref<32x32xbf16, #tpu.memory_space<vmem>>, %arg14: memref<1x32xf32, #tpu.memory_space<vmem>>, %arg15: memref<1x8x32xbf16, #tpu.memory_space<vmem>>) attributes {dimension_semantics = [#tpu.dimension_semantics<parallel>], iteration_bounds = array<i64: 2>, scalar_prefetch = 1 : i64, scratch_operands = 0 : i64, tpu.core_type = #tpu.core_type<tc>, window_params = [{transform_indices = @transform_0, window_bounds = array<i64: 1, 8, 32>}, {transform_indices = @transform_1, window_bounds = array<i64: 1, 8, 32>}, {transform_indices = @transform_2, window_bounds = array<i64: 1, 1, 8>}, {pipeline_mode = #tpu.pipeline_mode<synchronous>, transform_indices = @transform_3, window_bounds = array<i64: 8, 32>}, {pipeline_mode = #tpu.pipeline_mode<synchronous>, transform_indices = @transform_4, window_bounds = array<i64: 1, 32>}, {pipeline_mode = #tpu.pipeline_mode<synchronous>, transform_indices = @transform_5, window_bounds = array<i64: 1, 32>}, {pipeline_mode = #tpu.pipeline_mode<synchronous>, transform_indices = @transform_6, window_bounds = array<i64: 1, 32>}, {pipeline_mode = #tpu.pipeline_mode<synchronous>, transform_indices = @transform_7, window_bounds = array<i64: 32, 32>}, {pipeline_mode = #tpu.pipeline_mode<synchronous>, transform_indices = @transform_8, window_bounds = array<i64: 1, 32>}, {pipeline_mode = #tpu.pipeline_mode<synchronous>, transform_indices = @transform_9, window_bounds = array<i64: 32, 64>}, {pipeline_mode = #tpu.pipeline_mode<synchronous>, transform_indices = @transform_10, window_bounds = array<i64: 1, 64>}, {pipeline_mode = #tpu.pipeline_mode<synchronous>, transform_indices = @transform_11, window_bounds = array<i64: 32, 32>}, {pipeline_mode = #tpu.pipeline_mode<synchronous>, transform_indices = @transform_12, window_bounds = array<i64: 1, 32>}, {transform_indices = @transform_13, window_bounds = array<i64: 1, 8, 32>}]} {
    %c0 = arith.constant 0 : index
    %c0_0 = arith.constant 0 : index
    %c0_1 = arith.constant 0 : index
    %0 = vector.load %arg2[%c0, %c0_0, %c0_1] : memref<1x8x32xbf16, #tpu.memory_space<vmem>>, vector<1x8x32xbf16>
    %1 = vector.shape_cast %0 : vector<1x8x32xbf16> to vector<8x32xbf16>
    %2 = arith.extf %1 : vector<8x32xbf16> to vector<8x32xf32>
    %cst = arith.constant dense<0.000000e+00> : vector<8xf32>
    %3 = vector.multi_reduction <add>, %2, %cst [1] : vector<8x32xf32> to vector<8xf32>
    %4 = vector.shape_cast %3 : vector<8xf32> to vector<8x1xf32>
    %cst_2 = arith.constant 3.200000e+01 : f32
    %5 = vector.broadcast %cst_2 : f32 to vector<8x1xf32>
    %6 = arith.divf %4, %5 : vector<8x1xf32>
    %7 = vector.broadcast %6 : vector<8x1xf32> to vector<8x32xf32>
    %8 = arith.subf %2, %7 : vector<8x32xf32>
    %9 = arith.mulf %8, %8 : vector<8x32xf32>
    %cst_3 = arith.constant dense<0.000000e+00> : vector<8xf32>
    %10 = vector.multi_reduction <add>, %9, %cst_3 [1] : vector<8x32xf32> to vector<8xf32>
    %11 = vector.shape_cast %10 : vector<8xf32> to vector<8x1xf32>
    %cst_4 = arith.constant 3.200000e+01 : f32
    %12 = vector.broadcast %cst_4 : f32 to vector<8x1xf32>
    %13 = arith.divf %11, %12 : vector<8x1xf32>
    %cst_5 = arith.constant 9.99999997E-7 : f32
    %14 = vector.broadcast %cst_5 : f32 to vector<8x1xf32>
    %15 = arith.addf %13, %14 : vector<8x1xf32>
    %16 = math.rsqrt %15 : vector<8x1xf32>
    %17 = vector.broadcast %16 : vector<8x1xf32> to vector<8x32xf32>
    %18 = arith.mulf %8, %17 : vector<8x32xf32>
    %c0_6 = arith.constant 0 : index
    %c0_7 = arith.constant 0 : index
    %19 = vector.load %arg7[%c0_6, %c0_7] : memref<1x32xf32, #tpu.memory_space<vmem>>, vector<1x32xf32>
    %20 = vector.broadcast %19 : vector<1x32xf32> to vector<8x32xf32>
    %21 = arith.mulf %18, %20 : vector<8x32xf32>
    %c0_8 = arith.constant 0 : index
    %c0_9 = arith.constant 0 : index
    %22 = vector.load %arg8[%c0_8, %c0_9] : memref<1x32xf32, #tpu.memory_space<vmem>>, vector<1x32xf32>
    %23 = vector.broadcast %22 : vector<1x32xf32> to vector<8x32xf32>
    %24 = arith.addf %21, %23 : vector<8x32xf32>
    %25 = arith.truncf %24 : vector<8x32xf32> to vector<8x32xbf16>
    %c0_10 = arith.constant 0 : index
    %c0_11 = arith.constant 0 : index
    %26 = vector.load %arg9[%c0_10, %c0_11] : memref<32x32xbf16, #tpu.memory_space<vmem>>, vector<32x32xbf16>
    %cst_12 = arith.constant dense<0.000000e+00> : vector<8x32xf32>
    %27 = tpu.matmul %25, %26, %cst_12 {dimension_numbers = #tpu.dot_dimension_numbers<[1], [0], [0], [1], [0, 0, 1, 1], [], []>} : vector<8x32xbf16>, vector<32x32xbf16>, vector<8x32xf32> -> vector<8x32xf32>
    %c0_13 = arith.constant 0 : index
    %c0_14 = arith.constant 0 : index
    %28 = vector.load %arg10[%c0_13, %c0_14] : memref<1x32xf32, #tpu.memory_space<vmem>>, vector<1x32xf32>
    %29 = vector.broadcast %28 : vector<1x32xf32> to vector<8x32xf32>
    %30 = arith.addf %27, %29 : vector<8x32xf32>
    %c0_15 = arith.constant 0 : index
    %c0_16 = arith.constant 0 : index
    %c0_17 = arith.constant 0 : index
    %31 = vector.load %arg4[%c0_15, %c0_16, %c0_17] : memref<1x1x8xf32, #tpu.memory_space<vmem>>, vector<1x1x8xf32>
    %32 = vector.shape_cast %31 : vector<1x1x8xf32> to vector<1x8xf32>
    %33 = arith.truncf %32 : vector<1x8xf32> to vector<1x8xbf16>
    %c0_18 = arith.constant 0 : index
    %c0_19 = arith.constant 0 : index
    %34 = vector.load %arg5[%c0_18, %c0_19] : memref<8x32xbf16, #tpu.memory_space<vmem>>, vector<8x32xbf16>
    %cst_20 = arith.constant dense<0.000000e+00> : vector<1x32xf32>
    %35 = tpu.matmul %33, %34, %cst_20 {dimension_numbers = #tpu.dot_dimension_numbers<[1], [0], [0], [1], [0, 0, 1, 1], [], []>} : vector<1x8xbf16>, vector<8x32xbf16>, vector<1x32xf32> -> vector<1x32xf32>
    %c0_21 = arith.constant 0 : index
    %c0_22 = arith.constant 0 : index
    %36 = vector.load %arg6[%c0_21, %c0_22] : memref<1x32xf32, #tpu.memory_space<vmem>>, vector<1x32xf32>
    %37 = arith.addf %35, %36 : vector<1x32xf32>
    %c0_23 = arith.constant 0 : index
    %c0_24 = arith.constant 0 : index
    %c0_25 = arith.constant 0 : index
    %38 = vector.load %arg3[%c0_23, %c0_24, %c0_25] : memref<1x8x32xbf16, #tpu.memory_space<vmem>>, vector<1x8x32xbf16>
    %39 = vector.shape_cast %38 : vector<1x8x32xbf16> to vector<8x32xbf16>
    %c0_26 = arith.constant 0 : index
    %c0_27 = arith.constant 0 : index
    %40 = vector.load %arg11[%c0_26, %c0_27] : memref<32x64xbf16, #tpu.memory_space<vmem>>, vector<32x64xbf16>
    %cst_28 = arith.constant dense<0.000000e+00> : vector<8x64xf32>
    %41 = tpu.matmul %39, %40, %cst_28 {dimension_numbers = #tpu.dot_dimension_numbers<[1], [0], [0], [1], [0, 0, 1, 1], [], []>} : vector<8x32xbf16>, vector<32x64xbf16>, vector<8x64xf32> -> vector<8x64xf32>
    %c0_29 = arith.constant 0 : index
    %c0_30 = arith.constant 0 : index
    %42 = vector.load %arg12[%c0_29, %c0_30] : memref<1x64xf32, #tpu.memory_space<vmem>>, vector<1x64xf32>
    %43 = vector.broadcast %42 : vector<1x64xf32> to vector<8x64xf32>
    %44 = arith.addf %41, %43 : vector<8x64xf32>
    %45 = arith.truncf %37 : vector<1x32xf32> to vector<1x32xbf16>
    %c0_31 = arith.constant 0 : index
    %c0_32 = arith.constant 0 : index
    %46 = vector.load %arg11[%c0_31, %c0_32] : memref<32x64xbf16, #tpu.memory_space<vmem>>, vector<32x64xbf16>
    %cst_33 = arith.constant dense<0.000000e+00> : vector<1x64xf32>
    %47 = tpu.matmul %45, %46, %cst_33 {dimension_numbers = #tpu.dot_dimension_numbers<[1], [0], [0], [1], [0, 0, 1, 1], [], []>} : vector<1x32xbf16>, vector<32x64xbf16>, vector<1x64xf32> -> vector<1x64xf32>
    %c0_34 = arith.constant 0 : index
    %c0_35 = arith.constant 0 : index
    %48 = vector.load %arg12[%c0_34, %c0_35] : memref<1x64xf32, #tpu.memory_space<vmem>>, vector<1x64xf32>
    %49 = arith.addf %47, %48 : vector<1x64xf32>
    %50 = arith.index_cast %arg0 : i32 to index
    %51 = memref.load %arg1[%50] : memref<2xi32, #tpu.memory_space<smem>>
    %52 = tpu.iota {dimensions = array<i32: 1>} : vector<8x8xi32>
    %53 = vector.broadcast %51 : i32 to vector<8x8xi32>
    %54 = arith.cmpi slt, %52, %53 : vector<8x8xi32>
    %55 = vector.extract_strided_slice %30 {offsets = [0, 0], sizes = [8, 8], strides = [1, 1]} : vector<8x32xf32> to vector<8x8xf32>
    %cst_36 = arith.constant 0.353553385 : f32
    %56 = vector.broadcast %cst_36 : f32 to vector<8x8xf32>
    %57 = arith.mulf %55, %56 : vector<8x8xf32>
    %58 = arith.truncf %57 : vector<8x8xf32> to vector<8x8xbf16>
    %59 = vector.extract_strided_slice %44 {offsets = [0, 0], sizes = [8, 8], strides = [1, 1]} : vector<8x64xf32> to vector<8x8xf32>
    %60 = arith.truncf %59 : vector<8x8xf32> to vector<8x8xbf16>
    %61 = vector.extract_strided_slice %44 {offsets = [0, 32], sizes = [8, 8], strides = [1, 1]} : vector<8x64xf32> to vector<8x8xf32>
    %62 = arith.truncf %61 : vector<8x8xf32> to vector<8x8xbf16>
    %63 = vector.extract_strided_slice %49 {offsets = [0, 0], sizes = [1, 8], strides = [1, 1]} : vector<1x64xf32> to vector<1x8xf32>
    %64 = vector.extract_strided_slice %49 {offsets = [0, 32], sizes = [1, 8], strides = [1, 1]} : vector<1x64xf32> to vector<1x8xf32>
    %cst_37 = arith.constant dense<0.000000e+00> : vector<8x8xf32>
    %65 = tpu.matmul %58, %60, %cst_37 {dimension_numbers = #tpu.dot_dimension_numbers<[1], [1], [0], [0], [0, 0, 1, 0], [], []>} : vector<8x8xbf16>, vector<8x8xbf16>, vector<8x8xf32> -> vector<8x8xf32>
    %cst_38 = arith.constant -1.000000e+09 : f32
    %66 = vector.broadcast %cst_38 : f32 to vector<8x8xf32>
    %67 = arith.select %54, %65, %66 : vector<8x8xi1>, vector<8x8xf32>
    %68 = arith.extf %58 : vector<8x8xbf16> to vector<8x8xf32>
    %69 = vector.broadcast %63 : vector<1x8xf32> to vector<8x8xf32>
    %70 = arith.mulf %68, %69 : vector<8x8xf32>
    %cst_39 = arith.constant dense<0.000000e+00> : vector<8xf32>
    %71 = vector.multi_reduction <add>, %70, %cst_39 [1] : vector<8x8xf32> to vector<8xf32>
    %72 = vector.shape_cast %71 : vector<8xf32> to vector<8x1xf32>
    %cst_40 = arith.constant dense<0xFF800000> : vector<8xf32>
    %73 = vector.multi_reduction <maximumf>, %67, %cst_40 [1] : vector<8x8xf32> to vector<8xf32>
    %74 = vector.shape_cast %73 : vector<8xf32> to vector<8x1xf32>
    %75 = arith.maximumf %74, %72 : vector<8x1xf32>
    %76 = vector.broadcast %75 : vector<8x1xf32> to vector<8x8xf32>
    %77 = arith.subf %67, %76 : vector<8x8xf32>
    %78 = math.exp %77 : vector<8x8xf32>
    %79 = arith.subf %72, %75 : vector<8x1xf32>
    %80 = math.exp %79 : vector<8x1xf32>
    %cst_41 = arith.constant dense<0.000000e+00> : vector<8xf32>
    %81 = vector.multi_reduction <add>, %78, %cst_41 [1] : vector<8x8xf32> to vector<8xf32>
    %82 = vector.shape_cast %81 : vector<8xf32> to vector<8x1xf32>
    %83 = arith.addf %82, %80 : vector<8x1xf32>
    %84 = tpu.reciprocal %83 {approx = true} : vector<8x1xf32> -> vector<8x1xf32>
    %85 = arith.truncf %78 : vector<8x8xf32> to vector<8x8xbf16>
    %cst_42 = arith.constant dense<0.000000e+00> : vector<8x8xf32>
    %86 = tpu.matmul %85, %62, %cst_42 {dimension_numbers = #tpu.dot_dimension_numbers<[1], [0], [0], [1], [0, 0, 1, 1], [], []>} : vector<8x8xbf16>, vector<8x8xbf16>, vector<8x8xf32> -> vector<8x8xf32>
    %87 = vector.broadcast %80 : vector<8x1xf32> to vector<8x8xf32>
    %88 = vector.broadcast %64 : vector<1x8xf32> to vector<8x8xf32>
    %89 = arith.mulf %87, %88 : vector<8x8xf32>
    %90 = arith.addf %86, %89 : vector<8x8xf32>
    %91 = vector.broadcast %84 : vector<8x1xf32> to vector<8x8xf32>
    %92 = arith.mulf %90, %91 : vector<8x8xf32>
    %93 = vector.extract_strided_slice %30 {offsets = [0, 8], sizes = [8, 8], strides = [1, 1]} : vector<8x32xf32> to vector<8x8xf32>
    %cst_43 = arith.constant 0.353553385 : f32
    %94 = vector.broadcast %cst_43 : f32 to vector<8x8xf32>
    %95 = arith.mulf %93, %94 : vector<8x8xf32>
    %96 = arith.truncf %95 : vector<8x8xf32> to vector<8x8xbf16>
    %97 = vector.extract_strided_slice %44 {offsets = [0, 8], sizes = [8, 8], strides = [1, 1]} : vector<8x64xf32> to vector<8x8xf32>
    %98 = arith.truncf %97 : vector<8x8xf32> to vector<8x8xbf16>
    %99 = vector.extract_strided_slice %44 {offsets = [0, 40], sizes = [8, 8], strides = [1, 1]} : vector<8x64xf32> to vector<8x8xf32>
    %100 = arith.truncf %99 : vector<8x8xf32> to vector<8x8xbf16>
    %101 = vector.extract_strided_slice %49 {offsets = [0, 8], sizes = [1, 8], strides = [1, 1]} : vector<1x64xf32> to vector<1x8xf32>
    %102 = vector.extract_strided_slice %49 {offsets = [0, 40], sizes = [1, 8], strides = [1, 1]} : vector<1x64xf32> to vector<1x8xf32>
    %cst_44 = arith.constant dense<0.000000e+00> : vector<8x8xf32>
    %103 = tpu.matmul %96, %98, %cst_44 {dimension_numbers = #tpu.dot_dimension_numbers<[1], [1], [0], [0], [0, 0, 1, 0], [], []>} : vector<8x8xbf16>, vector<8x8xbf16>, vector<8x8xf32> -> vector<8x8xf32>
    %cst_45 = arith.constant -1.000000e+09 : f32
    %104 = vector.broadcast %cst_45 : f32 to vector<8x8xf32>
    %105 = arith.select %54, %103, %104 : vector<8x8xi1>, vector<8x8xf32>
    %106 = arith.extf %96 : vector<8x8xbf16> to vector<8x8xf32>
    %107 = vector.broadcast %101 : vector<1x8xf32> to vector<8x8xf32>
    %108 = arith.mulf %106, %107 : vector<8x8xf32>
    %cst_46 = arith.constant dense<0.000000e+00> : vector<8xf32>
    %109 = vector.multi_reduction <add>, %108, %cst_46 [1] : vector<8x8xf32> to vector<8xf32>
    %110 = vector.shape_cast %109 : vector<8xf32> to vector<8x1xf32>
    %cst_47 = arith.constant dense<0xFF800000> : vector<8xf32>
    %111 = vector.multi_reduction <maximumf>, %105, %cst_47 [1] : vector<8x8xf32> to vector<8xf32>
    %112 = vector.shape_cast %111 : vector<8xf32> to vector<8x1xf32>
    %113 = arith.maximumf %112, %110 : vector<8x1xf32>
    %114 = vector.broadcast %113 : vector<8x1xf32> to vector<8x8xf32>
    %115 = arith.subf %105, %114 : vector<8x8xf32>
    %116 = math.exp %115 : vector<8x8xf32>
    %117 = arith.subf %110, %113 : vector<8x1xf32>
    %118 = math.exp %117 : vector<8x1xf32>
    %cst_48 = arith.constant dense<0.000000e+00> : vector<8xf32>
    %119 = vector.multi_reduction <add>, %116, %cst_48 [1] : vector<8x8xf32> to vector<8xf32>
    %120 = vector.shape_cast %119 : vector<8xf32> to vector<8x1xf32>
    %121 = arith.addf %120, %118 : vector<8x1xf32>
    %122 = tpu.reciprocal %121 {approx = true} : vector<8x1xf32> -> vector<8x1xf32>
    %123 = arith.truncf %116 : vector<8x8xf32> to vector<8x8xbf16>
    %cst_49 = arith.constant dense<0.000000e+00> : vector<8x8xf32>
    %124 = tpu.matmul %123, %100, %cst_49 {dimension_numbers = #tpu.dot_dimension_numbers<[1], [0], [0], [1], [0, 0, 1, 1], [], []>} : vector<8x8xbf16>, vector<8x8xbf16>, vector<8x8xf32> -> vector<8x8xf32>
    %125 = vector.broadcast %118 : vector<8x1xf32> to vector<8x8xf32>
    %126 = vector.broadcast %102 : vector<1x8xf32> to vector<8x8xf32>
    %127 = arith.mulf %125, %126 : vector<8x8xf32>
    %128 = arith.addf %124, %127 : vector<8x8xf32>
    %129 = vector.broadcast %122 : vector<8x1xf32> to vector<8x8xf32>
    %130 = arith.mulf %128, %129 : vector<8x8xf32>
    %131 = vector.extract_strided_slice %30 {offsets = [0, 16], sizes = [8, 8], strides = [1, 1]} : vector<8x32xf32> to vector<8x8xf32>
    %cst_50 = arith.constant 0.353553385 : f32
    %132 = vector.broadcast %cst_50 : f32 to vector<8x8xf32>
    %133 = arith.mulf %131, %132 : vector<8x8xf32>
    %134 = arith.truncf %133 : vector<8x8xf32> to vector<8x8xbf16>
    %135 = vector.extract_strided_slice %44 {offsets = [0, 16], sizes = [8, 8], strides = [1, 1]} : vector<8x64xf32> to vector<8x8xf32>
    %136 = arith.truncf %135 : vector<8x8xf32> to vector<8x8xbf16>
    %137 = vector.extract_strided_slice %44 {offsets = [0, 48], sizes = [8, 8], strides = [1, 1]} : vector<8x64xf32> to vector<8x8xf32>
    %138 = arith.truncf %137 : vector<8x8xf32> to vector<8x8xbf16>
    %139 = vector.extract_strided_slice %49 {offsets = [0, 16], sizes = [1, 8], strides = [1, 1]} : vector<1x64xf32> to vector<1x8xf32>
    %140 = vector.extract_strided_slice %49 {offsets = [0, 48], sizes = [1, 8], strides = [1, 1]} : vector<1x64xf32> to vector<1x8xf32>
    %cst_51 = arith.constant dense<0.000000e+00> : vector<8x8xf32>
    %141 = tpu.matmul %134, %136, %cst_51 {dimension_numbers = #tpu.dot_dimension_numbers<[1], [1], [0], [0], [0, 0, 1, 0], [], []>} : vector<8x8xbf16>, vector<8x8xbf16>, vector<8x8xf32> -> vector<8x8xf32>
    %cst_52 = arith.constant -1.000000e+09 : f32
    %142 = vector.broadcast %cst_52 : f32 to vector<8x8xf32>
    %143 = arith.select %54, %141, %142 : vector<8x8xi1>, vector<8x8xf32>
    %144 = arith.extf %134 : vector<8x8xbf16> to vector<8x8xf32>
    %145 = vector.broadcast %139 : vector<1x8xf32> to vector<8x8xf32>
    %146 = arith.mulf %144, %145 : vector<8x8xf32>
    %cst_53 = arith.constant dense<0.000000e+00> : vector<8xf32>
    %147 = vector.multi_reduction <add>, %146, %cst_53 [1] : vector<8x8xf32> to vector<8xf32>
    %148 = vector.shape_cast %147 : vector<8xf32> to vector<8x1xf32>
    %cst_54 = arith.constant dense<0xFF800000> : vector<8xf32>
    %149 = vector.multi_reduction <maximumf>, %143, %cst_54 [1] : vector<8x8xf32> to vector<8xf32>
    %150 = vector.shape_cast %149 : vector<8xf32> to vector<8x1xf32>
    %151 = arith.maximumf %150, %148 : vector<8x1xf32>
    %152 = vector.broadcast %151 : vector<8x1xf32> to vector<8x8xf32>
    %153 = arith.subf %143, %152 : vector<8x8xf32>
    %154 = math.exp %153 : vector<8x8xf32>
    %155 = arith.subf %148, %151 : vector<8x1xf32>
    %156 = math.exp %155 : vector<8x1xf32>
    %cst_55 = arith.constant dense<0.000000e+00> : vector<8xf32>
    %157 = vector.multi_reduction <add>, %154, %cst_55 [1] : vector<8x8xf32> to vector<8xf32>
    %158 = vector.shape_cast %157 : vector<8xf32> to vector<8x1xf32>
    %159 = arith.addf %158, %156 : vector<8x1xf32>
    %160 = tpu.reciprocal %159 {approx = true} : vector<8x1xf32> -> vector<8x1xf32>
    %161 = arith.truncf %154 : vector<8x8xf32> to vector<8x8xbf16>
    %cst_56 = arith.constant dense<0.000000e+00> : vector<8x8xf32>
    %162 = tpu.matmul %161, %138, %cst_56 {dimension_numbers = #tpu.dot_dimension_numbers<[1], [0], [0], [1], [0, 0, 1, 1], [], []>} : vector<8x8xbf16>, vector<8x8xbf16>, vector<8x8xf32> -> vector<8x8xf32>
    %163 = vector.broadcast %156 : vector<8x1xf32> to vector<8x8xf32>
    %164 = vector.broadcast %140 : vector<1x8xf32> to vector<8x8xf32>
    %165 = arith.mulf %163, %164 : vector<8x8xf32>
    %166 = arith.addf %162, %165 : vector<8x8xf32>
    %167 = vector.broadcast %160 : vector<8x1xf32> to vector<8x8xf32>
    %168 = arith.mulf %166, %167 : vector<8x8xf32>
    %169 = vector.extract_strided_slice %30 {offsets = [0, 24], sizes = [8, 8], strides = [1, 1]} : vector<8x32xf32> to vector<8x8xf32>
    %cst_57 = arith.constant 0.353553385 : f32
    %170 = vector.broadcast %cst_57 : f32 to vector<8x8xf32>
    %171 = arith.mulf %169, %170 : vector<8x8xf32>
    %172 = arith.truncf %171 : vector<8x8xf32> to vector<8x8xbf16>
    %173 = vector.extract_strided_slice %44 {offsets = [0, 24], sizes = [8, 8], strides = [1, 1]} : vector<8x64xf32> to vector<8x8xf32>
    %174 = arith.truncf %173 : vector<8x8xf32> to vector<8x8xbf16>
    %175 = vector.extract_strided_slice %44 {offsets = [0, 56], sizes = [8, 8], strides = [1, 1]} : vector<8x64xf32> to vector<8x8xf32>
    %176 = arith.truncf %175 : vector<8x8xf32> to vector<8x8xbf16>
    %177 = vector.extract_strided_slice %49 {offsets = [0, 24], sizes = [1, 8], strides = [1, 1]} : vector<1x64xf32> to vector<1x8xf32>
    %178 = vector.extract_strided_slice %49 {offsets = [0, 56], sizes = [1, 8], strides = [1, 1]} : vector<1x64xf32> to vector<1x8xf32>
    %cst_58 = arith.constant dense<0.000000e+00> : vector<8x8xf32>
    %179 = tpu.matmul %172, %174, %cst_58 {dimension_numbers = #tpu.dot_dimension_numbers<[1], [1], [0], [0], [0, 0, 1, 0], [], []>} : vector<8x8xbf16>, vector<8x8xbf16>, vector<8x8xf32> -> vector<8x8xf32>
    %cst_59 = arith.constant -1.000000e+09 : f32
    %180 = vector.broadcast %cst_59 : f32 to vector<8x8xf32>
    %181 = arith.select %54, %179, %180 : vector<8x8xi1>, vector<8x8xf32>
    %182 = arith.extf %172 : vector<8x8xbf16> to vector<8x8xf32>
    %183 = vector.broadcast %177 : vector<1x8xf32> to vector<8x8xf32>
    %184 = arith.mulf %182, %183 : vector<8x8xf32>
    %cst_60 = arith.constant dense<0.000000e+00> : vector<8xf32>
    %185 = vector.multi_reduction <add>, %184, %cst_60 [1] : vector<8x8xf32> to vector<8xf32>
    %186 = vector.shape_cast %185 : vector<8xf32> to vector<8x1xf32>
    %cst_61 = arith.constant dense<0xFF800000> : vector<8xf32>
    %187 = vector.multi_reduction <maximumf>, %181, %cst_61 [1] : vector<8x8xf32> to vector<8xf32>
    %188 = vector.shape_cast %187 : vector<8xf32> to vector<8x1xf32>
    %189 = arith.maximumf %188, %186 : vector<8x1xf32>
    %190 = vector.broadcast %189 : vector<8x1xf32> to vector<8x8xf32>
    %191 = arith.subf %181, %190 : vector<8x8xf32>
    %192 = math.exp %191 : vector<8x8xf32>
    %193 = arith.subf %186, %189 : vector<8x1xf32>
    %194 = math.exp %193 : vector<8x1xf32>
    %cst_62 = arith.constant dense<0.000000e+00> : vector<8xf32>
    %195 = vector.multi_reduction <add>, %192, %cst_62 [1] : vector<8x8xf32> to vector<8xf32>
    %196 = vector.shape_cast %195 : vector<8xf32> to vector<8x1xf32>
    %197 = arith.addf %196, %194 : vector<8x1xf32>
    %198 = tpu.reciprocal %197 {approx = true} : vector<8x1xf32> -> vector<8x1xf32>
    %199 = arith.truncf %192 : vector<8x8xf32> to vector<8x8xbf16>
    %cst_63 = arith.constant dense<0.000000e+00> : vector<8x8xf32>
    %200 = tpu.matmul %199, %176, %cst_63 {dimension_numbers = #tpu.dot_dimension_numbers<[1], [0], [0], [1], [0, 0, 1, 1], [], []>} : vector<8x8xbf16>, vector<8x8xbf16>, vector<8x8xf32> -> vector<8x8xf32>
    %201 = vector.broadcast %194 : vector<8x1xf32> to vector<8x8xf32>
    %202 = vector.broadcast %178 : vector<1x8xf32> to vector<8x8xf32>
    %203 = arith.mulf %201, %202 : vector<8x8xf32>
    %204 = arith.addf %200, %203 : vector<8x8xf32>
    %205 = vector.broadcast %198 : vector<8x1xf32> to vector<8x8xf32>
    %206 = arith.mulf %204, %205 : vector<8x8xf32>
    %207 = tpu.concatenate %92, %130, %168, %206 in 1 : vector<8x8xf32>, vector<8x8xf32>, vector<8x8xf32>, vector<8x8xf32> -> vector<8x32xf32>
    %208 = arith.truncf %207 : vector<8x32xf32> to vector<8x32xbf16>
    %c0_64 = arith.constant 0 : index
    %c0_65 = arith.constant 0 : index
    %209 = vector.load %arg13[%c0_64, %c0_65] : memref<32x32xbf16, #tpu.memory_space<vmem>>, vector<32x32xbf16>
    %cst_66 = arith.constant dense<0.000000e+00> : vector<8x32xf32>
    %210 = tpu.matmul %208, %209, %cst_66 {dimension_numbers = #tpu.dot_dimension_numbers<[1], [0], [0], [1], [0, 0, 1, 1], [], []>} : vector<8x32xbf16>, vector<32x32xbf16>, vector<8x32xf32> -> vector<8x32xf32>
    %c0_67 = arith.constant 0 : index
    %c0_68 = arith.constant 0 : index
    %211 = vector.load %arg14[%c0_67, %c0_68] : memref<1x32xf32, #tpu.memory_space<vmem>>, vector<1x32xf32>
    %212 = vector.broadcast %211 : vector<1x32xf32> to vector<8x32xf32>
    %213 = arith.addf %210, %212 : vector<8x32xf32>
    %214 = arith.addf %213, %2 : vector<8x32xf32>
    %215 = arith.truncf %214 : vector<8x32xf32> to vector<8x32xbf16>
    %c0_69 = arith.constant 0 : index
    %c0_70 = arith.constant 0 : index
    %c0_71 = arith.constant 0 : index
    %216 = vector.load %arg15[%c0_69, %c0_70, %c0_71] : memref<1x8x32xbf16, #tpu.memory_space<vmem>>, vector<1x8x32xbf16>
    %217 = vector.shape_cast %216 : vector<1x8x32xbf16> to vector<8x32xbf16>
    %218 = vector.shape_cast %215 : vector<8x32xbf16> to vector<1x8x32xbf16>
    tpu.vector_store %arg15[%c0_69, %c0_70, %c0_71], %218 {strides = array<i32>} : memref<1x8x32xbf16, #tpu.memory_space<vmem>>, vector<1x8x32xbf16>,
    return
  }
  func.func @transform_0(%arg0: i32, %arg1: memref<2xi32, #tpu.memory_space<smem>>) -> (i32, i32, i32) {
    %c0_i32 = arith.constant 0 : i32
    %c0_i32_0 = arith.constant 0 : i32
    %c0_i32_1 = arith.constant 0 : i32
    return %arg0, %c0_i32, %c0_i32_0 : i32, i32, i32
  }
  func.func @transform_1(%arg0: i32, %arg1: memref<2xi32, #tpu.memory_space<smem>>) -> (i32, i32, i32) {
    %c0_i32 = arith.constant 0 : i32
    %c0_i32_0 = arith.constant 0 : i32
    %c0_i32_1 = arith.constant 0 : i32
    return %arg0, %c0_i32, %c0_i32_0 : i32, i32, i32
  }
  func.func @transform_2(%arg0: i32, %arg1: memref<2xi32, #tpu.memory_space<smem>>) -> (i32, i32, i32) {
    %c0_i32 = arith.constant 0 : i32
    %c0_i32_0 = arith.constant 0 : i32
    %c0_i32_1 = arith.constant 0 : i32
    return %arg0, %c0_i32, %c0_i32_0 : i32, i32, i32
  }
  func.func @transform_3(%arg0: i32, %arg1: memref<2xi32, #tpu.memory_space<smem>>) -> (i32, i32) {
    %c0_i32 = arith.constant 0 : i32
    %c0_i32_0 = arith.constant 0 : i32
    %c0_i32_1 = arith.constant 0 : i32
    return %c0_i32, %c0_i32_0 : i32, i32
  }
  func.func @transform_4(%arg0: i32, %arg1: memref<2xi32, #tpu.memory_space<smem>>) -> (i32, i32) {
    %c0_i32 = arith.constant 0 : i32
    %c0_i32_0 = arith.constant 0 : i32
    %c0_i32_1 = arith.constant 0 : i32
    return %c0_i32, %c0_i32_0 : i32, i32
  }
  func.func @transform_5(%arg0: i32, %arg1: memref<2xi32, #tpu.memory_space<smem>>) -> (i32, i32) {
    %c0_i32 = arith.constant 0 : i32
    %c0_i32_0 = arith.constant 0 : i32
    %c0_i32_1 = arith.constant 0 : i32
    return %c0_i32, %c0_i32_0 : i32, i32
  }
  func.func @transform_6(%arg0: i32, %arg1: memref<2xi32, #tpu.memory_space<smem>>) -> (i32, i32) {
    %c0_i32 = arith.constant 0 : i32
    %c0_i32_0 = arith.constant 0 : i32
    %c0_i32_1 = arith.constant 0 : i32
    return %c0_i32, %c0_i32_0 : i32, i32
  }
  func.func @transform_7(%arg0: i32, %arg1: memref<2xi32, #tpu.memory_space<smem>>) -> (i32, i32) {
    %c0_i32 = arith.constant 0 : i32
    %c0_i32_0 = arith.constant 0 : i32
    %c0_i32_1 = arith.constant 0 : i32
    return %c0_i32, %c0_i32_0 : i32, i32
  }
  func.func @transform_8(%arg0: i32, %arg1: memref<2xi32, #tpu.memory_space<smem>>) -> (i32, i32) {
    %c0_i32 = arith.constant 0 : i32
    %c0_i32_0 = arith.constant 0 : i32
    %c0_i32_1 = arith.constant 0 : i32
    return %c0_i32, %c0_i32_0 : i32, i32
  }
  func.func @transform_9(%arg0: i32, %arg1: memref<2xi32, #tpu.memory_space<smem>>) -> (i32, i32) {
    %c0_i32 = arith.constant 0 : i32
    %c0_i32_0 = arith.constant 0 : i32
    %c0_i32_1 = arith.constant 0 : i32
    return %c0_i32, %c0_i32_0 : i32, i32
  }
  func.func @transform_10(%arg0: i32, %arg1: memref<2xi32, #tpu.memory_space<smem>>) -> (i32, i32) {
    %c0_i32 = arith.constant 0 : i32
    %c0_i32_0 = arith.constant 0 : i32
    %c0_i32_1 = arith.constant 0 : i32
    return %c0_i32, %c0_i32_0 : i32, i32
  }
  func.func @transform_11(%arg0: i32, %arg1: memref<2xi32, #tpu.memory_space<smem>>) -> (i32, i32) {
    %c0_i32 = arith.constant 0 : i32
    %c0_i32_0 = arith.constant 0 : i32
    %c0_i32_1 = arith.constant 0 : i32
    return %c0_i32, %c0_i32_0 : i32, i32
  }
  func.func @transform_12(%arg0: i32, %arg1: memref<2xi32, #tpu.memory_space<smem>>) -> (i32, i32) {
    %c0_i32 = arith.constant 0 : i32
    %c0_i32_0 = arith.constant 0 : i32
    %c0_i32_1 = arith.constant 0 : i32
    return %c0_i32, %c0_i32_0 : i32, i32
  }
  func.func @transform_13(%arg0: i32, %arg1: memref<2xi32, #tpu.memory_space<smem>>) -> (i32, i32, i32) {
    %c0_i32 = arith.constant 0 : i32
    %c0_i32_0 = arith.constant 0 : i32
    %c0_i32_1 = arith.constant 0 : i32
    return %arg0, %c0_i32, %c0_i32_0 : i32, i32, i32
  }
}

module attributes {stable_mosaic.version = 11 : i64} {
  func.func @_ffn_kernel(%arg0: i32, %arg1: memref<16x32xbf16, #tpu.memory_space<vmem>>, %arg2: memref<1x32xf32, #tpu.memory_space<vmem>>, %arg3: memref<1x32xf32, #tpu.memory_space<vmem>>, %arg4: memref<32x64xbf16, #tpu.memory_space<vmem>>, %arg5: memref<1x64xf32, #tpu.memory_space<vmem>>, %arg6: memref<64x32xbf16, #tpu.memory_space<vmem>>, %arg7: memref<1x32xf32, #tpu.memory_space<vmem>>, %arg8: memref<16x32xbf16, #tpu.memory_space<vmem>>) attributes {dimension_semantics = [#tpu.dimension_semantics<parallel>], iteration_bounds = array<i64: 1>, scalar_prefetch = 0 : i64, scratch_operands = 0 : i64, tpu.core_type = #tpu.core_type<tc>, window_params = [{transform_indices = @transform_0, window_bounds = array<i64: 16, 32>}, {pipeline_mode = #tpu.pipeline_mode<synchronous>, transform_indices = @transform_1, window_bounds = array<i64: 1, 32>}, {pipeline_mode = #tpu.pipeline_mode<synchronous>, transform_indices = @transform_2, window_bounds = array<i64: 1, 32>}, {pipeline_mode = #tpu.pipeline_mode<synchronous>, transform_indices = @transform_3, window_bounds = array<i64: 32, 64>}, {pipeline_mode = #tpu.pipeline_mode<synchronous>, transform_indices = @transform_4, window_bounds = array<i64: 1, 64>}, {pipeline_mode = #tpu.pipeline_mode<synchronous>, transform_indices = @transform_5, window_bounds = array<i64: 64, 32>}, {pipeline_mode = #tpu.pipeline_mode<synchronous>, transform_indices = @transform_6, window_bounds = array<i64: 1, 32>}, {transform_indices = @transform_7, window_bounds = array<i64: 16, 32>}]} {
    %c0 = arith.constant 0 : index
    %c0_0 = arith.constant 0 : index
    %0 = vector.load %arg1[%c0, %c0_0] : memref<16x32xbf16, #tpu.memory_space<vmem>>, vector<16x32xbf16>
    %1 = arith.extf %0 : vector<16x32xbf16> to vector<16x32xf32>
    %cst = arith.constant dense<0.000000e+00> : vector<16xf32>
    %2 = vector.multi_reduction <add>, %1, %cst [1] : vector<16x32xf32> to vector<16xf32>
    %3 = vector.shape_cast %2 : vector<16xf32> to vector<16x1xf32>
    %cst_1 = arith.constant 3.200000e+01 : f32
    %4 = vector.broadcast %cst_1 : f32 to vector<16x1xf32>
    %5 = arith.divf %3, %4 : vector<16x1xf32>
    %6 = vector.broadcast %5 : vector<16x1xf32> to vector<16x32xf32>
    %7 = arith.subf %1, %6 : vector<16x32xf32>
    %8 = arith.mulf %7, %7 : vector<16x32xf32>
    %cst_2 = arith.constant dense<0.000000e+00> : vector<16xf32>
    %9 = vector.multi_reduction <add>, %8, %cst_2 [1] : vector<16x32xf32> to vector<16xf32>
    %10 = vector.shape_cast %9 : vector<16xf32> to vector<16x1xf32>
    %cst_3 = arith.constant 3.200000e+01 : f32
    %11 = vector.broadcast %cst_3 : f32 to vector<16x1xf32>
    %12 = arith.divf %10, %11 : vector<16x1xf32>
    %cst_4 = arith.constant 9.99999997E-7 : f32
    %13 = vector.broadcast %cst_4 : f32 to vector<16x1xf32>
    %14 = arith.addf %12, %13 : vector<16x1xf32>
    %15 = math.rsqrt %14 : vector<16x1xf32>
    %16 = vector.broadcast %15 : vector<16x1xf32> to vector<16x32xf32>
    %17 = arith.mulf %7, %16 : vector<16x32xf32>
    %c0_5 = arith.constant 0 : index
    %c0_6 = arith.constant 0 : index
    %18 = vector.load %arg2[%c0_5, %c0_6] : memref<1x32xf32, #tpu.memory_space<vmem>>, vector<1x32xf32>
    %19 = vector.broadcast %18 : vector<1x32xf32> to vector<16x32xf32>
    %20 = arith.mulf %17, %19 : vector<16x32xf32>
    %c0_7 = arith.constant 0 : index
    %c0_8 = arith.constant 0 : index
    %21 = vector.load %arg3[%c0_7, %c0_8] : memref<1x32xf32, #tpu.memory_space<vmem>>, vector<1x32xf32>
    %22 = vector.broadcast %21 : vector<1x32xf32> to vector<16x32xf32>
    %23 = arith.addf %20, %22 : vector<16x32xf32>
    %24 = arith.truncf %23 : vector<16x32xf32> to vector<16x32xbf16>
    %c0_9 = arith.constant 0 : index
    %c0_10 = arith.constant 0 : index
    %25 = vector.load %arg4[%c0_9, %c0_10] : memref<32x64xbf16, #tpu.memory_space<vmem>>, vector<32x64xbf16>
    %cst_11 = arith.constant dense<0.000000e+00> : vector<16x64xf32>
    %26 = tpu.matmul %24, %25, %cst_11 {dimension_numbers = #tpu.dot_dimension_numbers<[1], [0], [0], [1], [0, 0, 1, 1], [], []>} : vector<16x32xbf16>, vector<32x64xbf16>, vector<16x64xf32> -> vector<16x64xf32>
    %c0_12 = arith.constant 0 : index
    %c0_13 = arith.constant 0 : index
    %27 = vector.load %arg5[%c0_12, %c0_13] : memref<1x64xf32, #tpu.memory_space<vmem>>, vector<1x64xf32>
    %28 = vector.broadcast %27 : vector<1x64xf32> to vector<16x64xf32>
    %29 = arith.addf %26, %28 : vector<16x64xf32>
    %cst_14 = arith.constant 0.000000e+00 : f32
    %30 = vector.broadcast %cst_14 : f32 to vector<16x64xf32>
    %31 = arith.maximumf %29, %30 : vector<16x64xf32>
    %32 = arith.truncf %31 : vector<16x64xf32> to vector<16x64xbf16>
    %c0_15 = arith.constant 0 : index
    %c0_16 = arith.constant 0 : index
    %33 = vector.load %arg6[%c0_15, %c0_16] : memref<64x32xbf16, #tpu.memory_space<vmem>>, vector<64x32xbf16>
    %cst_17 = arith.constant dense<0.000000e+00> : vector<16x32xf32>
    %34 = tpu.matmul %32, %33, %cst_17 {dimension_numbers = #tpu.dot_dimension_numbers<[1], [0], [0], [1], [0, 0, 1, 1], [], []>} : vector<16x64xbf16>, vector<64x32xbf16>, vector<16x32xf32> -> vector<16x32xf32>
    %c0_18 = arith.constant 0 : index
    %c0_19 = arith.constant 0 : index
    %35 = vector.load %arg7[%c0_18, %c0_19] : memref<1x32xf32, #tpu.memory_space<vmem>>, vector<1x32xf32>
    %36 = vector.broadcast %35 : vector<1x32xf32> to vector<16x32xf32>
    %37 = arith.addf %34, %36 : vector<16x32xf32>
    %38 = arith.addf %37, %1 : vector<16x32xf32>
    %39 = arith.truncf %38 : vector<16x32xf32> to vector<16x32xbf16>
    %c0_20 = arith.constant 0 : index
    %c0_21 = arith.constant 0 : index
    %40 = vector.load %arg8[%c0_20, %c0_21] : memref<16x32xbf16, #tpu.memory_space<vmem>>, vector<16x32xbf16>
    tpu.vector_store %arg8[%c0_20, %c0_21], %39 {strides = array<i32>} : memref<16x32xbf16, #tpu.memory_space<vmem>>, vector<16x32xbf16>,
    return
  }
  func.func @transform_0(%arg0: i32) -> (i32, i32) {
    %c0_i32 = arith.constant 0 : i32
    %c0_i32_0 = arith.constant 0 : i32
    return %arg0, %c0_i32 : i32, i32
  }
  func.func @transform_1(%arg0: i32) -> (i32, i32) {
    %c0_i32 = arith.constant 0 : i32
    %c0_i32_0 = arith.constant 0 : i32
    %c0_i32_1 = arith.constant 0 : i32
    return %c0_i32, %c0_i32_0 : i32, i32
  }
  func.func @transform_2(%arg0: i32) -> (i32, i32) {
    %c0_i32 = arith.constant 0 : i32
    %c0_i32_0 = arith.constant 0 : i32
    %c0_i32_1 = arith.constant 0 : i32
    return %c0_i32, %c0_i32_0 : i32, i32
  }
  func.func @transform_3(%arg0: i32) -> (i32, i32) {
    %c0_i32 = arith.constant 0 : i32
    %c0_i32_0 = arith.constant 0 : i32
    %c0_i32_1 = arith.constant 0 : i32
    return %c0_i32, %c0_i32_0 : i32, i32
  }
  func.func @transform_4(%arg0: i32) -> (i32, i32) {
    %c0_i32 = arith.constant 0 : i32
    %c0_i32_0 = arith.constant 0 : i32
    %c0_i32_1 = arith.constant 0 : i32
    return %c0_i32, %c0_i32_0 : i32, i32
  }
  func.func @transform_5(%arg0: i32) -> (i32, i32) {
    %c0_i32 = arith.constant 0 : i32
    %c0_i32_0 = arith.constant 0 : i32
    %c0_i32_1 = arith.constant 0 : i32
    return %c0_i32, %c0_i32_0 : i32, i32
  }
  func.func @transform_6(%arg0: i32) -> (i32, i32) {
    %c0_i32 = arith.constant 0 : i32
    %c0_i32_0 = arith.constant 0 : i32
    %c0_i32_1 = arith.constant 0 : i32
    return %c0_i32, %c0_i32_0 : i32, i32
  }
  func.func @transform_7(%arg0: i32) -> (i32, i32) {
    %c0_i32 = arith.constant 0 : i32
    %c0_i32_0 = arith.constant 0 : i32
    return %arg0, %c0_i32 : i32, i32
  }
}

module attributes {stable_mosaic.version = 11 : i64} {
  func.func @_postnet_kernel(%arg0: i32, %arg1: memref<16x32xbf16, #tpu.memory_space<vmem>>, %arg2: memref<1x32xf32, #tpu.memory_space<vmem>>, %arg3: memref<1x32xf32, #tpu.memory_space<vmem>>, %arg4: memref<32x17xbf16, #tpu.memory_space<vmem>>, %arg5: memref<1x17xf32, #tpu.memory_space<vmem>>, %arg6: memref<16x17xf32, #tpu.memory_space<vmem>>) attributes {dimension_semantics = [#tpu.dimension_semantics<parallel>], iteration_bounds = array<i64: 1>, scalar_prefetch = 0 : i64, scratch_operands = 0 : i64, tpu.core_type = #tpu.core_type<tc>, window_params = [{transform_indices = @transform_0, window_bounds = array<i64: 16, 32>}, {pipeline_mode = #tpu.pipeline_mode<synchronous>, transform_indices = @transform_1, window_bounds = array<i64: 1, 32>}, {pipeline_mode = #tpu.pipeline_mode<synchronous>, transform_indices = @transform_2, window_bounds = array<i64: 1, 32>}, {pipeline_mode = #tpu.pipeline_mode<synchronous>, transform_indices = @transform_3, window_bounds = array<i64: 32, 17>}, {pipeline_mode = #tpu.pipeline_mode<synchronous>, transform_indices = @transform_4, window_bounds = array<i64: 1, 17>}, {transform_indices = @transform_5, window_bounds = array<i64: 16, 17>}]} {
    %c0 = arith.constant 0 : index
    %c0_0 = arith.constant 0 : index
    %0 = vector.load %arg1[%c0, %c0_0] : memref<16x32xbf16, #tpu.memory_space<vmem>>, vector<16x32xbf16>
    %1 = arith.extf %0 : vector<16x32xbf16> to vector<16x32xf32>
    %cst = arith.constant dense<0.000000e+00> : vector<16xf32>
    %2 = vector.multi_reduction <add>, %1, %cst [1] : vector<16x32xf32> to vector<16xf32>
    %3 = vector.shape_cast %2 : vector<16xf32> to vector<16x1xf32>
    %cst_1 = arith.constant 3.200000e+01 : f32
    %4 = vector.broadcast %cst_1 : f32 to vector<16x1xf32>
    %5 = arith.divf %3, %4 : vector<16x1xf32>
    %6 = vector.broadcast %5 : vector<16x1xf32> to vector<16x32xf32>
    %7 = arith.subf %1, %6 : vector<16x32xf32>
    %8 = arith.mulf %7, %7 : vector<16x32xf32>
    %cst_2 = arith.constant dense<0.000000e+00> : vector<16xf32>
    %9 = vector.multi_reduction <add>, %8, %cst_2 [1] : vector<16x32xf32> to vector<16xf32>
    %10 = vector.shape_cast %9 : vector<16xf32> to vector<16x1xf32>
    %cst_3 = arith.constant 3.200000e+01 : f32
    %11 = vector.broadcast %cst_3 : f32 to vector<16x1xf32>
    %12 = arith.divf %10, %11 : vector<16x1xf32>
    %cst_4 = arith.constant 9.99999997E-7 : f32
    %13 = vector.broadcast %cst_4 : f32 to vector<16x1xf32>
    %14 = arith.addf %12, %13 : vector<16x1xf32>
    %15 = math.rsqrt %14 : vector<16x1xf32>
    %16 = vector.broadcast %15 : vector<16x1xf32> to vector<16x32xf32>
    %17 = arith.mulf %7, %16 : vector<16x32xf32>
    %c0_5 = arith.constant 0 : index
    %c0_6 = arith.constant 0 : index
    %18 = vector.load %arg2[%c0_5, %c0_6] : memref<1x32xf32, #tpu.memory_space<vmem>>, vector<1x32xf32>
    %19 = vector.broadcast %18 : vector<1x32xf32> to vector<16x32xf32>
    %20 = arith.mulf %17, %19 : vector<16x32xf32>
    %c0_7 = arith.constant 0 : index
    %c0_8 = arith.constant 0 : index
    %21 = vector.load %arg3[%c0_7, %c0_8] : memref<1x32xf32, #tpu.memory_space<vmem>>, vector<1x32xf32>
    %22 = vector.broadcast %21 : vector<1x32xf32> to vector<16x32xf32>
    %23 = arith.addf %20, %22 : vector<16x32xf32>
    %24 = arith.truncf %23 : vector<16x32xf32> to vector<16x32xbf16>
    %c0_9 = arith.constant 0 : index
    %c0_10 = arith.constant 0 : index
    %25 = vector.load %arg4[%c0_9, %c0_10] : memref<32x17xbf16, #tpu.memory_space<vmem>>, vector<32x17xbf16>
    %cst_11 = arith.constant dense<0.000000e+00> : vector<16x17xf32>
    %26 = tpu.matmul %24, %25, %cst_11 {dimension_numbers = #tpu.dot_dimension_numbers<[1], [0], [0], [1], [0, 0, 1, 1], [], []>} : vector<16x32xbf16>, vector<32x17xbf16>, vector<16x17xf32> -> vector<16x17xf32>
    %c0_12 = arith.constant 0 : index
    %c0_13 = arith.constant 0 : index
    %27 = vector.load %arg5[%c0_12, %c0_13] : memref<1x17xf32, #tpu.memory_space<vmem>>, vector<1x17xf32>
    %28 = vector.broadcast %27 : vector<1x17xf32> to vector<16x17xf32>
    %29 = arith.addf %26, %28 : vector<16x17xf32>
    %c0_14 = arith.constant 0 : index
    %c0_15 = arith.constant 0 : index
    %30 = vector.load %arg6[%c0_14, %c0_15] : memref<16x17xf32, #tpu.memory_space<vmem>>, vector<16x17xf32>
    tpu.vector_store %arg6[%c0_14, %c0_15], %29 {strides = array<i32>} : memref<16x17xf32, #tpu.memory_space<vmem>>, vector<16x17xf32>,
    return
  }
  func.func @transform_0(%arg0: i32) -> (i32, i32) {
    %c0_i32 = arith.constant 0 : i32
    %c0_i32_0 = arith.constant 0 : i32
    return %arg0, %c0_i32 : i32, i32
  }
  func.func @transform_1(%arg0: i32) -> (i32, i32) {
    %c0_i32 = arith.constant 0 : i32
    %c0_i32_0 = arith.constant 0 : i32
    %c0_i32_1 = arith.constant 0 : i32
    return %c0_i32, %c0_i32_0 : i32, i32
  }
  func.func @transform_2(%arg0: i32) -> (i32, i32) {
    %c0_i32 = arith.constant 0 : i32
    %c0_i32_0 = arith.constant 0 : i32
    %c0_i32_1 = arith.constant 0 : i32
    return %c0_i32, %c0_i32_0 : i32, i32
  }
  func.func @transform_3(%arg0: i32) -> (i32, i32) {
    %c0_i32 = arith.constant 0 : i32
    %c0_i32_0 = arith.constant 0 : i32
    %c0_i32_1 = arith.constant 0 : i32
    return %c0_i32, %c0_i32_0 : i32, i32
  }
  func.func @transform_4(%arg0: i32) -> (i32, i32) {
    %c0_i32 = arith.constant 0 : i32
    %c0_i32_0 = arith.constant 0 : i32
    %c0_i32_1 = arith.constant 0 : i32
    return %c0_i32, %c0_i32_0 : i32, i32
  }
  func.func @transform_5(%arg0: i32) -> (i32, i32) {
    %c0_i32 = arith.constant 0 : i32
    %c0_i32_0 = arith.constant 0 : i32
    return %arg0, %c0_i32 : i32, i32
  }
}

</mosaic_0001>

<llo_original>
// kernel: generator2_forward.10
$region0: #{generator2_forward.10}
  #allocation0 [shape = 'u32[]', space=smem, size = 0x4, offset = 0x4, fixed_abs, tag = 'smem constant byte address 0x4 - core index']
  #allocation1 [shape = 'u32[144,128]{1,0:T(1,128)}', space=vmem, size = 0x12000, scoped, tag = 'internal scratch']
  %s0 = inlined_call_operand.vmem [shape: bf16[2,8,8], index: 0, kind: input, shape index: {}]
  %s1 = inlined_call_operand.vmem [shape: f32[2,1,8], index: 1, kind: input, shape index: {}]
  %s2 = inlined_call_operand.vmem [shape: bf16[8,32], index: 2, kind: input, shape index: {}]
  %s3 = inlined_call_operand.vmem [shape: bf16[8,32], index: 3, kind: input, shape index: {}]
  %s4 = inlined_call_operand.vmem [shape: f32[1,32], index: 4, kind: input, shape index: {}]
  %s5 = inlined_call_operand.vmem [shape: f32[8,32], index: 5, kind: input, shape index: {}]
  %s6 = inlined_call_operand.hbm [shape: bf16[2,8,32], index: 6, kind: output, shape index: {}]
  %s7 = sld [smem:[#allocation0]]
  $region57: #{generator2_forward.10} parent=0
    _
  %s9 = ssub.s32 1, %s7
  %s10 = scalar_select 0, %s9, %s7
  $region1: #{generator2_forward.10} parent=0
    #allocation2 [shape = 'u8[4096]{0}', space=vmem, size = 0x1000, scoped, tag = 'output window, operand 0']
    #allocation3 [shape = 's32[2]{0}', space=sflag, size = 0x8, scoped, tag = 'scoped memory for generator2_forward.10']
    %11 = vsyncpa [#allocation3], 0
    %s12 = scalar_lea.sflag [#allocation3], 1
    %13 = vsyncpa %s12, 0
    loop: start=0, step=1, limit=4
    $region2: #{generator2_forward.10} parent=1 // loop_pre_header
      _
    $region3: #{generator2_forward.10} parent=1 // loop_header
      %s15 = sphi 0, %s19
      %p16 = scmp.ge.s32.totalorder %s15, 4
      %s25 = sphi 0, %s27
      %s28 = sphi 0, %s25
      %s29 = sphi 0, %s28
      %s45 = sphi 0, %s29
      %s51 = sphi 0, %s53
      %s54 = sphi 0, %s51
      %s55 = sphi 0, %s54
      %s71 = sphi 0, %s55
      %s75 = sphi 0, %s75
      %s77 = sphi 0, %s75
      %s78 = sphi 0, %s77
      %s92 = sphi 0, %s78
      %s96 = sphi 0, %s96
      %s98 = sphi 0, %s96
      %s99 = sphi 0, %s98
      %s113 = sphi 0, %s99
      %s117 = sphi 0, %s117
      %s119 = sphi 0, %s117
      %s120 = sphi 0, %s119
      %s134 = sphi 0, %s120
      %s138 = sphi 0, %s138
      %s140 = sphi 0, %s138
      %s141 = sphi 0, %s140
      %s155 = sphi 0, %s141
      %s161 = sphi 0, %s163
      %s164 = sphi 0, %s161
      %s165 = sphi 0, %s164
      %s181 = sphi 0, %s165
    $region4: #{generator2_forward.10} parent=1 // loop_header_branch
      %18 = sbr.rel (%p16) target = $region8
    $region5: #{generator2_forward.10} parent=1 // loop_body
      %s20 = ssub.s32 %s15, 1
      %s21 = ssub.s32 %s15, 2
      %s22 = sadd.s32 %s15, 1
      %s23 = ssub.s32 %s15, %s22
      %p24 = scmp.eq.s32.totalorder %s23, 0
      %s26 = sadd.s32 %s25, 1
      %s27 = scalar_select %p24, %s25, %s26
      %p30 = pneg %p24
      %p31 = scmp.eq.s32.totalorder %s15, 1
      %p32 = por %p30, %p31
      %p33 = scmp.ne.s32.totalorder %s25, %s28
      %p34 = scmp.eq.s32.totalorder %s15, 0
      %p35 = por %p33, %p34
      %p36 = scmp.ne.s32.totalorder %s25, %s28
      %p37 = scmp.eq.s32.totalorder %s20, 1
      %p38 = por %p36, %p37
      %p39 = scmp.ne.s32.totalorder %s28, %s29
      %p40 = scmp.eq.s32.totalorder %s20, 0
      %p41 = por %p39, %p40
      %p42 = scmp.ne.s32.totalorder %s28, %s29
      %p43 = scmp.eq.s32.totalorder %s21, 1
      %p44 = por %p42, %p43
      %p46 = scmp.ne.s32.totalorder %s29, %s45
      %p47 = scmp.eq.s32.totalorder %s21, 0
      %p48 = por %p46, %p47
      %s49 = ssub.s32 %s15, %s22
      %p50 = scmp.eq.s32.totalorder %s49, 0
      %s52 = sadd.s32 %s51, 1
      %s53 = scalar_select %p50, %s51, %s52
      %p56 = pneg %p50
      %p57 = scmp.eq.s32.totalorder %s15, 1
      %p58 = por %p56, %p57
      %p59 = scmp.ne.s32.totalorder %s51, %s54
      %p60 = scmp.eq.s32.totalorder %s15, 0
      %p61 = por %p59, %p60
      %p62 = scmp.ne.s32.totalorder %s51, %s54
      %p63 = scmp.eq.s32.totalorder %s20, 1
      %p64 = por %p62, %p63
      %p65 = scmp.ne.s32.totalorder %s54, %s55
      %p66 = scmp.eq.s32.totalorder %s20, 0
      %p67 = por %p65, %p66
      %p68 = scmp.ne.s32.totalorder %s54, %s55
      %p69 = scmp.eq.s32.totalorder %s21, 1
      %p70 = por %p68, %p69
      %p72 = scmp.ne.s32.totalorder %s55, %s71
      %p73 = scmp.eq.s32.totalorder %s21, 0
      %p74 = por %p72, %p73
      %s76 = sadd.s32 %s75, 1
      %p79 = scmp.eq.s32.totalorder %s15, 1
      %p80 = scmp.ne.s32.totalorder %s75, %s77
      %p81 = scmp.eq.s32.totalorder %s15, 0
      %p82 = por %p80, %p81
      %p83 = scmp.ne.s32.totalorder %s75, %s77
      %p84 = scmp.eq.s32.totalorder %s20, 1
      %p85 = por %p83, %p84
      %p86 = scmp.ne.s32.totalorder %s77, %s78
      %p87 = scmp.eq.s32.totalorder %s20, 0
      %p88 = por %p86, %p87
      %p89 = scmp.ne.s32.totalorder %s77, %s78
      %p90 = scmp.eq.s32.totalorder %s21, 1
      %p91 = por %p89, %p90
      %p93 = scmp.ne.s32.totalorder %s78, %s92
      %p94 = scmp.eq.s32.totalorder %s21, 0
      %p95 = por %p93, %p94
      %s97 = sadd.s32 %s96, 1
      %p100 = scmp.eq.s32.totalorder %s15, 1
      %p101 = scmp.ne.s32.totalorder %s96, %s98
      %p102 = scmp.eq.s32.totalorder %s15, 0
      %p103 = por %p101, %p102
      %p104 = scmp.ne.s32.totalorder %s96, %s98
      %p105 = scmp.eq.s32.totalorder %s20, 1
      %p106 = por %p104, %p105
      %p107 = scmp.ne.s32.totalorder %s98, %s99
      %p108 = scmp.eq.s32.totalorder %s20, 0
      %p109 = por %p107, %p108
      %p110 = scmp.ne.s32.totalorder %s98, %s99
      %p111 = scmp.eq.s32.totalorder %s21, 1
      %p112 = por %p110, %p111
      %p114 = scmp.ne.s32.totalorder %s99, %s113
      %p115 = scmp.eq.s32.totalorder %s21, 0
      %p116 = por %p114, %p115
      %s118 = sadd.s32 %s117, 1
      %p121 = scmp.eq.s32.totalorder %s15, 1
      %p122 = scmp.ne.s32.totalorder %s117, %s119
      %p123 = scmp.eq.s32.totalorder %s15, 0
      %p124 = por %p122, %p123
      %p125 = scmp.ne.s32.totalorder %s117, %s119
      %p126 = scmp.eq.s32.totalorder %s20, 1
      %p127 = por %p125, %p126
      %p128 = scmp.ne.s32.totalorder %s119, %s120
      %p129 = scmp.eq.s32.totalorder %s20, 0
      %p130 = por %p128, %p129
      %p131 = scmp.ne.s32.totalorder %s119, %s120
      %p132 = scmp.eq.s32.totalorder %s21, 1
      %p133 = por %p131, %p132
      %p135 = scmp.ne.s32.totalorder %s120, %s134
      %p136 = scmp.eq.s32.totalorder %s21, 0
      %p137 = por %p135, %p136
      %s139 = sadd.s32 %s138, 1
      %p142 = scmp.eq.s32.totalorder %s15, 1
      %p143 = scmp.ne.s32.totalorder %s138, %s140
      %p144 = scmp.eq.s32.totalorder %s15, 0
      %p145 = por %p143, %p144
      %p146 = scmp.ne.s32.totalorder %s138, %s140
      %p147 = scmp.eq.s32.totalorder %s20, 1
      %p148 = por %p146, %p147
      %p149 = scmp.ne.s32.totalorder %s140, %s141
      %p150 = scmp.eq.s32.totalorder %s20, 0
      %p151 = por %p149, %p150
      %p152 = scmp.ne.s32.totalorder %s140, %s141
      %p153 = scmp.eq.s32.totalorder %s21, 1
      %p154 = por %p152, %p153
      %p156 = scmp.ne.s32.totalorder %s141, %s155
      %p157 = scmp.eq.s32.totalorder %s21, 0
      %p158 = por %p156, %p157
      %s159 = ssub.s32 %s15, %s22
      %p160 = scmp.eq.s32.totalorder %s159, 0
      %s162 = sadd.s32 %s161, 1
      %s163 = scalar_select %p160, %s161, %s162
      %p166 = pneg %p160
      %p167 = scmp.eq.s32.totalorder %s15, 1
      %p168 = por %p166, %p167
      %p169 = scmp.ne.s32.totalorder %s161, %s164
      %p170 = scmp.eq.s32.totalorder %s15, 0
      %p171 = por %p169, %p170
      %p172 = scmp.ne.s32.totalorder %s161, %s164
      %p173 = scmp.eq.s32.totalorder %s20, 1
      %p174 = por %p172, %p173
      %p175 = scmp.ne.s32.totalorder %s164, %s165
      %p176 = scmp.eq.s32.totalorder %s20, 0
      %p177 = por %p175, %p176
      %p178 = scmp.ne.s32.totalorder %s164, %s165
      %p179 = scmp.eq.s32.totalorder %s21, 1
      %p180 = por %p178, %p179
      %p182 = scmp.ne.s32.totalorder %s165, %s181
      %p183 = scmp.eq.s32.totalorder %s21, 0
      %p184 = por %p182, %p183
      %p185 = scmp.le.s32.totalorder 1, %s15
      %p186 = scmp.lt.s32.totalorder %s15, 3
      %p187 = pnand %p185, %p186
      %p188 = pneg %p187
      // Predicated region
      $region9: #{generator2_forward.10} parent=5 // pred_check
        _
      $region10: #{generator2_forward.10} parent=5 // pred_check_branch
        %190 = sbr.rel (%p187) target = $region12
      $region11: #{generator2_forward.10} parent=5 // pred_region
        %s191 = ssub.s32 %s15, 1
        // Predicated region
        $region13: #{generator2_forward.10} parent=11 // pred_check
          %p192 = pneg %p88
        $region14: #{generator2_forward.10} parent=11 // pred_check_branch
          %194 = sbr.rel (%p192) target = $region16
        $region15: #{generator2_forward.10} parent=11 // pred_region
          _
        $region16: #{generator2_forward.10} parent=11 // pred_fallthru
          _
        // Predicated region
        $region17: #{generator2_forward.10} parent=11 // pred_check
          %p195 = pneg %p109
        $region18: #{generator2_forward.10} parent=11 // pred_check_branch
          %197 = sbr.rel (%p195) target = $region20
        $region19: #{generator2_forward.10} parent=11 // pred_region
          _
        $region20: #{generator2_forward.10} parent=11 // pred_fallthru
          _
        // Predicated region
        $region21: #{generator2_forward.10} parent=11 // pred_check
          %p198 = pneg %p130
        $region22: #{generator2_forward.10} parent=11 // pred_check_branch
          %200 = sbr.rel (%p198) target = $region24
        $region23: #{generator2_forward.10} parent=11 // pred_region
          _
        $region24: #{generator2_forward.10} parent=11 // pred_fallthru
          _
        // Predicated region
        $region25: #{generator2_forward.10} parent=11 // pred_check
          %p201 = pneg %p151
        $region26: #{generator2_forward.10} parent=11 // pred_check_branch
          %203 = sbr.rel (%p201) target = $region28
        $region27: #{generator2_forward.10} parent=11 // pred_region
          _
        $region28: #{generator2_forward.10} parent=11 // pred_fallthru
          _
      $region12: #{generator2_forward.10} parent=5 // pred_fallthru
        _
      %p204 = scmp.lt.s32.totalorder %s15, 2
      // Predicated region
      $region29: #{generator2_forward.10} parent=5 // pred_check
        %p205 = pneg %p204
      $region30: #{generator2_forward.10} parent=5 // pred_check_branch
        %207 = sbr.rel (%p205) target = $region32
      $region31: #{generator2_forward.10} parent=5 // pred_region
        // Predicated region
        $region33: #{generator2_forward.10} parent=31 // pred_check
          %p208 = pneg %p35
        $region34: #{generator2_forward.10} parent=31 // pred_check_branch
          %210 = sbr.rel (%p208) target = $region36
        $region35: #{generator2_forward.10} parent=31 // pred_region
          %p211 = scmp.lt.s32.totalorder %s15, 1
          %s212 = scalar_select %p211, %s15, 1
          %s213 = smul.addr %s212, 4
          %s214 = scalar_lea.vmem %s0, %s213
        $region36: #{generator2_forward.10} parent=31 // pred_fallthru
          _
        // Predicated region
        $region37: #{generator2_forward.10} parent=31 // pred_check
          %p215 = pneg %p61
        $region38: #{generator2_forward.10} parent=31 // pred_check_branch
          %217 = sbr.rel (%p215) target = $region40
        $region39: #{generator2_forward.10} parent=31 // pred_region
          %p218 = scmp.lt.s32.totalorder %s15, 1
          %s219 = scalar_select %p218, %s15, 1
          %s220 = scalar_lea.vmem %s1, %s219
        $region40: #{generator2_forward.10} parent=31 // pred_fallthru
          _
      $region32: #{generator2_forward.10} parent=5 // pred_fallthru
        _
      %p221 = scmp.le.s32.totalorder 1, %s15
      %p222 = scmp.lt.s32.totalorder %s15, 3
      %p223 = pnand %p221, %p222
      %p224 = pneg %p223
      // Predicated region
      $region41: #{generator2_forward.10} parent=5 // pred_check
        _
      $region42: #{generator2_forward.10} parent=5 // pred_check_branch
        %226 = sbr.rel (%p223) target = $region44
      $region43: #{generator2_forward.10} parent=5 // pred_region
        %s227 = ssub.s32 %s15, 1
        %p228 = scmp.lt.s32.totalorder %s20, 1
        %s229 = scalar_select %p228, %s20, 1
        %s230 = smul.addr %s229, 4
        %s231 = scalar_lea.vmem %s0, %s230
        %p232 = pneg %p41
        %p233 = pneg %p38
        %p234 = scmp.lt.s32.totalorder %s20, 1
        %s235 = scalar_select %p234, %s20, 1
        %s236 = scalar_lea.vmem %s1, %s235
        %p237 = pneg %p67
        %p238 = pneg %p64
        %p239 = pneg %p88
        %p240 = pneg %p85
        %p241 = pneg %p109
        %p242 = pneg %p106
        %p243 = pneg %p130
        %p244 = pneg %p127
        %p245 = pneg %p151
        %p246 = pneg %p148
        %p247 = pneg %p177
        %p248 = pneg %p174
        %s249 = sand.u32 %s164, 1
        %s250 = scalar_lea.sflag [#allocation3], %s249
        %s251 = sand.u32 %s164, 1
        %s252 = smul.addr %s251, 4
        %s253 = scalar_lea.vmem [#allocation2], %s252
        %p254 = scmp.lt.s32.totalorder %s20, 1
        %s255 = scalar_select %p254, %s20, 1
        %s256 = smul.addr %s255, 4
        %s257 = scalar_lea.vmem %s0, %s256
        %p258 = scmp.lt.s32.totalorder %s20, 1
        %s259 = scalar_select %p258, %s20, 1
        %s260 = scalar_lea.vmem %s1, %s259
        %v262 = vld [vmem:[%s257] sm:$0xf]
        %v263 = vld [vmem:[%s2] sm:$0xf]
        %v264 = vld [vmem:[%s260] sm:$0x1]
        %v265 = vpack.c.bf16 %v264, %v264
        %v266 = vld [vmem:[%s3] sm:$0xf]
        %vm267 = vcmask 64512
        %v269 = vsel %vm267, %v265, 0
        %vm271 = vcmask 1043456
        %v273 = vsel %vm271, %v266, 0
        %275 = vmatprep.subr.bf16.mxu0 0
        %276 = vmatpush1.bf16.msra.mxu0 %v273
        %277 = vmatprep.subr.bf16.mxu0 0
        %278 = vmatpush1.bf16.msra.mxu0 0
        %279 = vmatprep.subr.bf16.mxu0 0
        %280 = vmatpush1.bf16.msra.mxu0 0
        %281 = vmatprep.subr.bf16.mxu0 0
        %282 = vmatpush1.bf16.msra.mxu0 0
        %283 = vmatprep.subr.bf16.mxu0 0
        %284 = vmatpush1.bf16.msra.mxu0 0
        %285 = vmatprep.subr.bf16.mxu0 0
        %286 = vmatpush1.bf16.msra.mxu0 0
        %287 = vmatprep.subr.bf16.mxu0 0
        %288 = vmatpush1.bf16.msra.mxu0 0
        %289 = vmatprep.subr.bf16.mxu0 0
        %290 = vmatpush1.bf16.msra.mxu0 0
        %291 = vmatprep.subr.bf16.mxu0 0
        %292 = vmatpush1.bf16.msra.mxu0 0
        %293 = vmatprep.subr.bf16.mxu0 0
        %294 = vmatpush1.bf16.msra.mxu0 0
        %295 = vmatprep.subr.bf16.mxu0 0
        %296 = vmatpush1.bf16.msra.mxu0 0
        %297 = vmatprep.subr.bf16.mxu0 0
        %298 = vmatpush1.bf16.msra.mxu0 0
        %299 = vmatprep.subr.bf16.mxu0 0
        %300 = vmatpush1.bf16.msra.mxu0 0
        %301 = vmatprep.subr.bf16.mxu0 0
        %302 = vmatpush1.bf16.msra.mxu0 0
        %303 = vmatprep.subr.bf16.mxu0 0
        %304 = vmatpush1.bf16.msra.mxu0 0
        %305 = vmatprep.subr.bf16.mxu0 0
        %306 = vmatpush1.bf16.msra.mxu0 0
        %307 = vmatprep.mubr.bf16.mxu0 0
        %308 = vmatmul.mubr.bf16.gmra.mrb[0].mxu0 %v269
        %v309 = vpop.f32.mrb[0].mxu0
        %v310 = vadd.f32 0.0, %v309
        %v311 = vpop.f32.mrb[0].mxu0
        %v312 = vpop.f32.mrb[0].mxu0
        %v313 = vpop.f32.mrb[0].mxu0
        %314 = vdwg.mxu0
        %v315 = vlaneseq
        %v316 = vshrl.u32 %v315, 7
        %v317 = vsub.s32 0, %v316
        %v318 = vrot.slane %v310, %v317
        %v320 = vsel %vm267, %v262, 0
        %v323 = vsel %vm271, %v263, 0
        %325 = vmatprep.subr.bf16.mxu0 0
        %326 = vmatpush1.bf16.msra.mxu0 %v323
        %327 = vmatprep.subr.bf16.mxu0 0
        %328 = vmatpush1.bf16.msra.mxu0 0
        %329 = vmatprep.subr.bf16.mxu0 0
        %330 = vmatpush1.bf16.msra.mxu0 0
        %331 = vmatprep.subr.bf16.mxu0 0
        %332 = vmatpush1.bf16.msra.mxu0 0
        %333 = vmatprep.subr.bf16.mxu0 0
        %334 = vmatpush1.bf16.msra.mxu0 0
        %335 = vmatprep.subr.bf16.mxu0 0
        %336 = vmatpush1.bf16.msra.mxu0 0
        %337 = vmatprep.subr.bf16.mxu0 0
        %338 = vmatpush1.bf16.msra.mxu0 0
        %339 = vmatprep.subr.bf16.mxu0 0
        %340 = vmatpush1.bf16.msra.mxu0 0
        %341 = vmatprep.subr.bf16.mxu0 0
        %342 = vmatpush1.bf16.msra.mxu0 0
        %343 = vmatprep.subr.bf16.mxu0 0
        %344 = vmatpush1.bf16.msra.mxu0 0
        %345 = vmatprep.subr.bf16.mxu0 0
        %346 = vmatpush1.bf16.msra.mxu0 0
        %347 = vmatprep.subr.bf16.mxu0 0
        %348 = vmatpush1.bf16.msra.mxu0 0
        %349 = vmatprep.subr.bf16.mxu0 0
        %350 = vmatpush1.bf16.msra.mxu0 0
        %351 = vmatprep.subr.bf16.mxu0 0
        %352 = vmatpush1.bf16.msra.mxu0 0
        %353 = vmatprep.subr.bf16.mxu0 0
        %354 = vmatpush1.bf16.msra.mxu0 0
        %355 = vmatprep.subr.bf16.mxu0 0
        %356 = vmatpush1.bf16.msra.mxu0 0
        %357 = vmatprep.mubr.bf16.mxu0 0
        %358 = vmatmul.mubr.bf16.gmra.mrb[0].mxu0 %v320
        %v359 = vpop.f32.mrb[0].mxu0
        %v360 = vadd.f32 %v318, %v359
        %v361 = vpop.f32.mrb[0].mxu0
        %v362 = vpop.f32.mrb[0].mxu0
        %v363 = vpop.f32.mrb[0].mxu0
        %364 = vdwg.mxu0
        %v365 = vld [vmem:[%s4] sm:$0x1]
        %v367 = vlaneseq
        %v368 = vshrl.u32 %v367, 7
        %v369 = vsub.s32 0, %v368
        %v370 = vrot.slane %v365, %v369
        %v372 = vadd.f32 %v360, %v370
        %v373 = vmul.f32 %v372, 5.656854
        %v374 = vld [vmem:[%s5] sm:$0xff]
        %v375 = vadd.f32 %v373, %v374
        %v376 = vpack.c.bf16 %v375, %v375
        %vm377 = vcmask 257024
        %378 = vst.msk [vmem:[%s253] sm:$0xf] %vm377, %v376
        %s379 = sand.u32 %s164, 1
        %s380 = scalar_lea.sflag [#allocation3], %s379
        %s381 = sand.u32 %s164, 1
        %s382 = smul.addr %s381, 4
        %s383 = scalar_lea.vmem [#allocation2], %s382
        // Predicated region
        $region45: #{generator2_forward.10} parent=43 // pred_check
          %p384 = pneg %p174
        $region46: #{generator2_forward.10} parent=43 // pred_check_branch
          %386 = sbr.rel (%p384) target = $region48
        $region47: #{generator2_forward.10} parent=43 // pred_region
          %s388 = ssub.s32 64, 64
          %389 = vsyncadd %s380, %s388
          %s390 = smul.addr %s20, 64
          %s391 = scalar_lea.hbm %s6, %s390
          %s393 = sshll.u32 %s383, 4
          %s394 = int_to_ptr.vmem [resolvable:$true] %s393
          %396 = dma.vmem_to_hbm [thread:$0]  %s394, 64, %s391, %s380
        $region48: #{generator2_forward.10} parent=43 // pred_fallthru
          _
      $region44: #{generator2_forward.10} parent=5 // pred_fallthru
        _
      %p397 = scmp.le.s32.totalorder 2, %s15
      // Predicated region
      $region49: #{generator2_forward.10} parent=5 // pred_check
        %p398 = pneg %p397
      $region50: #{generator2_forward.10} parent=5 // pred_check_branch
        %400 = sbr.rel (%p398) target = $region52
      $region51: #{generator2_forward.10} parent=5 // pred_region
        %s401 = ssub.s32 %s15, 2
        // Predicated region
        $region53: #{generator2_forward.10} parent=51 // pred_check
          %p402 = pneg %p180
        $region54: #{generator2_forward.10} parent=51 // pred_check_branch
          %404 = sbr.rel (%p402) target = $region56
        $region55: #{generator2_forward.10} parent=51 // pred_region
          %s405 = sand.u32 %s165, 1
          %s406 = scalar_lea.sflag [#allocation3], %s405
          %s407 = sand.u32 %s165, 1
          %s408 = smul.addr %s407, 4
          %s409 = scalar_lea.vmem [#allocation2], %s408
          %410 = dma.done %s406, 64
        $region56: #{generator2_forward.10} parent=51 // pred_fallthru
          _
      $region52: #{generator2_forward.10} parent=5 // pred_fallthru
        _
    $region6: #{generator2_forward.10} parent=1 // loop_footer
      %s19 = sadd.s32 1, %s15
    $region7: #{generator2_forward.10} parent=1 // loop_footer_branch
      %14 = sbr.rel target = $region3
    $region8: #{generator2_forward.10} parent=1 // loop_exit
      _
    %411 = vsyncpa [#allocation3], 1
    %s412 = scalar_lea.sflag [#allocation3], 1
    %413 = vsyncpa %s412, 1

// kernel: generator2_forward.9
$region0: #{generator2_forward.9}
  #allocation0 [shape = 'u32[]', space=smem, size = 0x4, offset = 0x4, fixed_abs, tag = 'smem constant byte address 0x4 - core index']
  #allocation1 [shape = 'u32[144,128]{1,0:T(1,128)}', space=vmem, size = 0x12000, scoped, tag = 'internal scratch']
  #allocation2 [shape = 's32[1]{0}', space=sflag, size = 0x4, scoped, tag = 'scoped memory for generator2_forward.9']
  #allocation3 [shape = 'u8[512]{0}', space=smem, size = 0x200, scoped, tag = 'prefetched SMEM operand 0']
  %s0 = inlined_call_operand.vmem [shape: s32[2], index: 0, kind: input, shape index: {}]
  %s1 = inlined_call_operand.vmem [shape: f32[2,16,20], index: 1, kind: input, shape index: {}]
  %s2 = inlined_call_operand.vmem [shape: f32[2,8,3], index: 2, kind: input, shape index: {}]
  %s3 = inlined_call_operand.vmem [shape: bf16[20,8], index: 3, kind: input, shape index: {}]
  %s4 = inlined_call_operand.vmem [shape: f32[1,8], index: 4, kind: input, shape index: {}]
  %s5 = inlined_call_operand.vmem [shape: bf16[2,8,8], index: 5, kind: output, shape index: {}]
  %s6 = sld [smem:[#allocation0]]
  $region49: #{generator2_forward.9} parent=0
    _
  %s8 = ssub.s32 1, %s6
  %s9 = scalar_select 0, %s8, %s6
  %s10 = sshll.u32 %s0, 4
  %s11 = int_to_ptr.vmem [resolvable:$true] %s10
  %13 = dma.vmem_to_smem %s11, 16, [#allocation3], [#allocation2]
  %14 = dma.done [#allocation2], 16
  %15 = sfence
  loop: start=0, step=1, limit=4
  $region2: #{generator2_forward.9} parent=0 // loop_pre_header
    _
  $region3: #{generator2_forward.9} parent=0 // loop_header
    %s17 = sphi 0, %s21
    %p18 = scmp.ge.s32.totalorder %s17, 4
    %s27 = sphi 0, %s29
    %s30 = sphi 0, %s27
    %s31 = sphi 0, %s30
    %s47 = sphi 0, %s31
    %s53 = sphi 0, %s55
    %s56 = sphi 0, %s53
    %s57 = sphi 0, %s56
    %s73 = sphi 0, %s57
    %s77 = sphi 0, %s77
    %s79 = sphi 0, %s77
    %s80 = sphi 0, %s79
    %s94 = sphi 0, %s80
    %s98 = sphi 0, %s98
    %s100 = sphi 0, %s98
    %s101 = sphi 0, %s100
    %s115 = sphi 0, %s101
    %s121 = sphi 0, %s123
    %s124 = sphi 0, %s121
    %s125 = sphi 0, %s124
    %s141 = sphi 0, %s125
  $region4: #{generator2_forward.9} parent=0 // loop_header_branch
    %20 = sbr.rel (%p18) target = $region8
  $region5: #{generator2_forward.9} parent=0 // loop_body
    %s22 = ssub.s32 %s17, 1
    %s23 = ssub.s32 %s17, 2
    %s24 = sadd.s32 %s17, 1
    %s25 = ssub.s32 %s17, %s24
    %p26 = scmp.eq.s32.totalorder %s25, 0
    %s28 = sadd.s32 %s27, 1
    %s29 = scalar_select %p26, %s27, %s28
    %p32 = pneg %p26
    %p33 = scmp.eq.s32.totalorder %s17, 1
    %p34 = por %p32, %p33
    %p35 = scmp.ne.s32.totalorder %s27, %s30
    %p36 = scmp.eq.s32.totalorder %s17, 0
    %p37 = por %p35, %p36
    %p38 = scmp.ne.s32.totalorder %s27, %s30
    %p39 = scmp.eq.s32.totalorder %s22, 1
    %p40 = por %p38, %p39
    %p41 = scmp.ne.s32.totalorder %s30, %s31
    %p42 = scmp.eq.s32.totalorder %s22, 0
    %p43 = por %p41, %p42
    %p44 = scmp.ne.s32.totalorder %s30, %s31
    %p45 = scmp.eq.s32.totalorder %s23, 1
    %p46 = por %p44, %p45
    %p48 = scmp.ne.s32.totalorder %s31, %s47
    %p49 = scmp.eq.s32.totalorder %s23, 0
    %p50 = por %p48, %p49
    %s51 = ssub.s32 %s17, %s24
    %p52 = scmp.eq.s32.totalorder %s51, 0
    %s54 = sadd.s32 %s53, 1
    %s55 = scalar_select %p52, %s53, %s54
    %p58 = pneg %p52
    %p59 = scmp.eq.s32.totalorder %s17, 1
    %p60 = por %p58, %p59
    %p61 = scmp.ne.s32.totalorder %s53, %s56
    %p62 = scmp.eq.s32.totalorder %s17, 0
    %p63 = por %p61, %p62
    %p64 = scmp.ne.s32.totalorder %s53, %s56
    %p65 = scmp.eq.s32.totalorder %s22, 1
    %p66 = por %p64, %p65
    %p67 = scmp.ne.s32.totalorder %s56, %s57
    %p68 = scmp.eq.s32.totalorder %s22, 0
    %p69 = por %p67, %p68
    %p70 = scmp.ne.s32.totalorder %s56, %s57
    %p71 = scmp.eq.s32.totalorder %s23, 1
    %p72 = por %p70, %p71
    %p74 = scmp.ne.s32.totalorder %s57, %s73
    %p75 = scmp.eq.s32.totalorder %s23, 0
    %p76 = por %p74, %p75
    %s78 = sadd.s32 %s77, 1
    %p81 = scmp.eq.s32.totalorder %s17, 1
    %p82 = scmp.ne.s32.totalorder %s77, %s79
    %p83 = scmp.eq.s32.totalorder %s17, 0
    %p84 = por %p82, %p83
    %p85 = scmp.ne.s32.totalorder %s77, %s79
    %p86 = scmp.eq.s32.totalorder %s22, 1
    %p87 = por %p85, %p86
    %p88 = scmp.ne.s32.totalorder %s79, %s80
    %p89 = scmp.eq.s32.totalorder %s22, 0
    %p90 = por %p88, %p89
    %p91 = scmp.ne.s32.totalorder %s79, %s80
    %p92 = scmp.eq.s32.totalorder %s23, 1
    %p93 = por %p91, %p92
    %p95 = scmp.ne.s32.totalorder %s80, %s94
    %p96 = scmp.eq.s32.totalorder %s23, 0
    %p97 = por %p95, %p96
    %s99 = sadd.s32 %s98, 1
    %p102 = scmp.eq.s32.totalorder %s17, 1
    %p103 = scmp.ne.s32.totalorder %s98, %s100
    %p104 = scmp.eq.s32.totalorder %s17, 0
    %p105 = por %p103, %p104
    %p106 = scmp.ne.s32.totalorder %s98, %s100
    %p107 = scmp.eq.s32.totalorder %s22, 1
    %p108 = por %p106, %p107
    %p109 = scmp.ne.s32.totalorder %s100, %s101
    %p110 = scmp.eq.s32.totalorder %s22, 0
    %p111 = por %p109, %p110
    %p112 = scmp.ne.s32.totalorder %s100, %s101
    %p113 = scmp.eq.s32.totalorder %s23, 1
    %p114 = por %p112, %p113
    %p116 = scmp.ne.s32.totalorder %s101, %s115
    %p117 = scmp.eq.s32.totalorder %s23, 0
    %p118 = por %p116, %p117
    %s119 = ssub.s32 %s17, %s24
    %p120 = scmp.eq.s32.totalorder %s119, 0
    %s122 = sadd.s32 %s121, 1
    %s123 = scalar_select %p120, %s121, %s122
    %p126 = pneg %p120
    %p127 = scmp.eq.s32.totalorder %s17, 1
    %p128 = por %p126, %p127
    %p129 = scmp.ne.s32.totalorder %s121, %s124
    %p130 = scmp.eq.s32.totalorder %s17, 0
    %p131 = por %p129, %p130
    %p132 = scmp.ne.s32.totalorder %s121, %s124
    %p133 = scmp.eq.s32.totalorder %s22, 1
    %p134 = por %p132, %p133
    %p135 = scmp.ne.s32.totalorder %s124, %s125
    %p136 = scmp.eq.s32.totalorder %s22, 0
    %p137 = por %p135, %p136
    %p138 = scmp.ne.s32.totalorder %s124, %s125
    %p139 = scmp.eq.s32.totalorder %s23, 1
    %p140 = por %p138, %p139
    %p142 = scmp.ne.s32.totalorder %s125, %s141
    %p143 = scmp.eq.s32.totalorder %s23, 0
    %p144 = por %p142, %p143
    %p145 = scmp.le.s32.totalorder 1, %s17
    %p146 = scmp.lt.s32.totalorder %s17, 3
    %p147 = pnand %p145, %p146
    %p148 = pneg %p147
    // Predicated region
    $region9: #{generator2_forward.9} parent=5 // pred_check
      _
    $region10: #{generator2_forward.9} parent=5 // pred_check_branch
      %150 = sbr.rel (%p147) target = $region12
    $region11: #{generator2_forward.9} parent=5 // pred_region
      %s151 = ssub.s32 %s17, 1
      // Predicated region
      $region13: #{generator2_forward.9} parent=11 // pred_check
        %p152 = pneg %p90
      $region14: #{generator2_forward.9} parent=11 // pred_check_branch
        %154 = sbr.rel (%p152) target = $region16
      $region15: #{generator2_forward.9} parent=11 // pred_region
        _
      $region16: #{generator2_forward.9} parent=11 // pred_fallthru
        _
      // Predicated region
      $region17: #{generator2_forward.9} parent=11 // pred_check
        %p155 = pneg %p111
      $region18: #{generator2_forward.9} parent=11 // pred_check_branch
        %157 = sbr.rel (%p155) target = $region20
      $region19: #{generator2_forward.9} parent=11 // pred_region
        _
      $region20: #{generator2_forward.9} parent=11 // pred_fallthru
        _
    $region12: #{generator2_forward.9} parent=5 // pred_fallthru
      _
    %p158 = scmp.lt.s32.totalorder %s17, 2
    // Predicated region
    $region21: #{generator2_forward.9} parent=5 // pred_check
      %p159 = pneg %p158
    $region22: #{generator2_forward.9} parent=5 // pred_check_branch
      %161 = sbr.rel (%p159) target = $region24
    $region23: #{generator2_forward.9} parent=5 // pred_region
      // Predicated region
      $region25: #{generator2_forward.9} parent=23 // pred_check
        %p162 = pneg %p37
      $region26: #{generator2_forward.9} parent=23 // pred_check_branch
        %164 = sbr.rel (%p162) target = $region28
      $region27: #{generator2_forward.9} parent=23 // pred_region
        %p165 = scmp.lt.s32.totalorder %s17, 1
        %s166 = scalar_select %p165, %s17, 1
        %s167 = smul.addr %s166, 2
        %s168 = smul.addr %s167, 8
        %s169 = scalar_lea.vmem %s1, %s168
      $region28: #{generator2_forward.9} parent=23 // pred_fallthru
        _
      // Predicated region
      $region29: #{generator2_forward.9} parent=23 // pred_check
        %p170 = pneg %p63
      $region30: #{generator2_forward.9} parent=23 // pred_check_branch
        %172 = sbr.rel (%p170) target = $region32
      $region31: #{generator2_forward.9} parent=23 // pred_region
        %p173 = scmp.lt.s32.totalorder %s17, 1
        %s174 = scalar_select %p173, %s17, 1
        %s175 = smul.addr %s174, 8
        %s176 = scalar_lea.vmem %s2, %s175
      $region32: #{generator2_forward.9} parent=23 // pred_fallthru
        _
    $region24: #{generator2_forward.9} parent=5 // pred_fallthru
      _
    %p177 = scmp.le.s32.totalorder 1, %s17
    %p178 = scmp.lt.s32.totalorder %s17, 3
    %p179 = pnand %p177, %p178
    %p180 = pneg %p179
    // Predicated region
    $region33: #{generator2_forward.9} parent=5 // pred_check
      _
    $region34: #{generator2_forward.9} parent=5 // pred_check_branch
      %182 = sbr.rel (%p179) target = $region36
    $region35: #{generator2_forward.9} parent=5 // pred_region
      %s183 = ssub.s32 %s17, 1
      %p184 = scmp.lt.s32.totalorder %s22, 1
      %s185 = scalar_select %p184, %s22, 1
      %s186 = smul.addr %s185, 2
      %s187 = smul.addr %s186, 8
      %s188 = scalar_lea.vmem %s1, %s187
      %p189 = pneg %p43
      %p190 = pneg %p40
      %p191 = scmp.lt.s32.totalorder %s22, 1
      %s192 = scalar_select %p191, %s22, 1
      %s193 = smul.addr %s192, 8
      %s194 = scalar_lea.vmem %s2, %s193
      %p195 = pneg %p69
      %p196 = pneg %p66
      %p197 = pneg %p90
      %p198 = pneg %p87
      %p199 = pneg %p111
      %p200 = pneg %p108
      %p201 = pneg %p137
      %p202 = pneg %p134
      %p203 = scmp.lt.s32.totalorder %s22, 1
      %s204 = scalar_select %p203, %s22, 1
      %s205 = smul.addr %s204, 4
      %s206 = scalar_lea.vmem %s5, %s205
      %p207 = scmp.lt.s32.totalorder %s22, 1
      %s208 = scalar_select %p207, %s22, 1
      %s209 = smul.addr %s208, 2
      %s210 = smul.addr %s209, 8
      %s211 = scalar_lea.vmem %s1, %s210
      %p212 = scmp.lt.s32.totalorder %s22, 1
      %s213 = scalar_select %p212, %s22, 1
      %s214 = smul.addr %s213, 8
      %s215 = scalar_lea.vmem %s2, %s214
      %p216 = scmp.lt.s32.totalorder %s22, 1
      %s217 = scalar_select %p216, %s22, 1
      %s218 = smul.addr %s217, 4
      %s219 = scalar_lea.vmem %s5, %s218
      %v221 = vld [vmem:[%s211] sm:$0xff]
      %v222 = vld [vmem:[%s211 + $0x8] sm:$0xff]
      %v223 = vpack.c.bf16 %v222, %v221
      %v224 = vld [vmem:[%s3] sm:$0xf]
      %v225 = vld [vmem:[%s3 + $0x4] sm:$0xf]
      %v226 = vld [vmem:[%s3 + $0x8] sm:$0x3]
      %v227 = vld [vmem:[%s4] sm:$0x1]
      %v229 = vlaneseq
      %v230 = vshrl.u32 %v229, 7
      %v231 = vsub.s32 0, %v230
      %v232 = vrot.slane %v227, %v231
      %v237 = vunpack.c.l.b16 %v224
      %v238 = vunpack.c.l.b16 %v225
      %v239 = vunpack.c.l.b16 %v226
      %v240 = vpack.c.b16 %v238, %v237
      %v241 = vpack.c.b16 %v239, %v239
      %vm243 = vcmask 162816
      %v245 = vsel %vm243, %v223, 0
      %vm247 = vcmask 1041408
      %v249 = vsel %vm247, %v241, 0
      %251 = vmatprep.subr.bf16.mxu0 0
      %252 = vmatpush1.bf16.msra.mxu0 %v240
      %253 = vmatprep.subr.bf16.mxu0 0
      %254 = vmatpush1.bf16.msra.mxu0 %v249
      %255 = vmatprep.subr.bf16.mxu0 0
      %256 = vmatpush1.bf16.msra.mxu0 0
      %257 = vmatprep.subr.bf16.mxu0 0
      %258 = vmatpush1.bf16.msra.mxu0 0
      %259 = vmatprep.subr.bf16.mxu0 0
      %260 = vmatpush1.bf16.msra.mxu0 0
      %261 = vmatprep.subr.bf16.mxu0 0
      %262 = vmatpush1.bf16.msra.mxu0 0
      %263 = vmatprep.subr.bf16.mxu0 0
      %264 = vmatpush1.bf16.msra.mxu0 0
      %265 = vmatprep.subr.bf16.mxu0 0
      %266 = vmatpush1.bf16.msra.mxu0 0
      %267 = vmatprep.subr.bf16.mxu0 0
      %268 = vmatpush1.bf16.msra.mxu0 0
      %269 = vmatprep.subr.bf16.mxu0 0
      %270 = vmatpush1.bf16.msra.mxu0 0
      %271 = vmatprep.subr.bf16.mxu0 0
      %272 = vmatpush1.bf16.msra.mxu0 0
      %273 = vmatprep.subr.bf16.mxu0 0
      %274 = vmatpush1.bf16.msra.mxu0 0
      %275 = vmatprep.subr.bf16.mxu0 0
      %276 = vmatpush1.bf16.msra.mxu0 0
      %277 = vmatprep.subr.bf16.mxu0 0
      %278 = vmatpush1.bf16.msra.mxu0 0
      %279 = vmatprep.subr.bf16.mxu0 0
      %280 = vmatpush1.bf16.msra.mxu0 0
      %281 = vmatprep.subr.bf16.mxu0 0
      %282 = vmatpush1.bf16.msra.mxu0 0
      %283 = vmatprep.mubr.bf16.mxu0 0
      %284 = vmatmul.mubr.bf16.gmra.mrb[0].mxu0 %v245
      %v285 = vpop.f32.mrb[0].mxu0
      %v286 = vadd.f32 %v232, %v285
      %v287 = vpop.f32.mrb[0].mxu0
      %v288 = vpop.f32.mrb[0].mxu0
      %v289 = vadd.f32 %v232, %v288
      %v290 = vpop.f32.mrb[0].mxu0
      %291 = vdwg.mxu0
      %v292 = vld [vmem:[%s215] sm:$0xff]
      %v293 = vlaneseq
      %v294 = vand.u32 %v293, 127
      %v295 = vcvt.s32.f32 %v294
      %297 = vset.pattern.permute.xlu0 0
      %298 = vperm.xlu0 %297, %v292
      %v299 = vpop.permute.xlu0 %298
      %vm301 = vcmp.ge.f32.partialorder %v295, %v299
      %302 = vset.pattern.permute.xlu0 1
      %303 = vperm.xlu0 %302, %v292
      %v304 = vpop.permute.xlu0 %303
      %vm306 = vcmp.lt.f32.partialorder %v295, %v304
      %vm307 = vmand %vm301, %vm306
      %s308 = sld [smem:[#allocation3 + %s22]]
      %v309 = vstv %s308
      %vm310 = vcmp.lt.s32.totalorder %v294, %v309
      %vm311 = vmand %vm307, %vm310
      %312 = vset.pattern.permute.xlu0 2
      %313 = vperm.xlu0 %312, %v292
      %v314 = vpop.permute.xlu0 %313
      %v316 = vsel %vm311, %v314, 0.0
      %v317 = vpack.c.bf16 %v316, %v316
      %v318 = vpack.c.bf16 %v289, %v286
      %vm319 = vcmask 130048
      %v321 = vsel %vm319, %v317, 0
      %323 = vmatprep.subr.bf16.mxu0 0
      %324 = vmatpush1.bf16.msra.mxu0 %v318
      %325 = vmatprep.subr.bf16.mxu0 0
      %326 = vmatpush1.bf16.msra.mxu0 0
      %327 = vmatprep.subr.bf16.mxu0 0
      %328 = vmatpush1.bf16.msra.mxu0 0
      %329 = vmatprep.subr.bf16.mxu0 0
      %330 = vmatpush1.bf16.msra.mxu0 0
      %331 = vmatprep.subr.bf16.mxu0 0
      %332 = vmatpush1.bf16.msra.mxu0 0
      %333 = vmatprep.subr.bf16.mxu0 0
      %334 = vmatpush1.bf16.msra.mxu0 0
      %335 = vmatprep.subr.bf16.mxu0 0
      %336 = vmatpush1.bf16.msra.mxu0 0
      %337 = vmatprep.subr.bf16.mxu0 0
      %338 = vmatpush1.bf16.msra.mxu0 0
      %339 = vmatprep.subr.bf16.mxu0 0
      %340 = vmatpush1.bf16.msra.mxu0 0
      %341 = vmatprep.subr.bf16.mxu0 0
      %342 = vmatpush1.bf16.msra.mxu0 0
      %343 = vmatprep.subr.bf16.mxu0 0
      %344 = vmatpush1.bf16.msra.mxu0 0
      %345 = vmatprep.subr.bf16.mxu0 0
      %346 = vmatpush1.bf16.msra.mxu0 0
      %347 = vmatprep.subr.bf16.mxu0 0
      %348 = vmatpush1.bf16.msra.mxu0 0
      %349 = vmatprep.subr.bf16.mxu0 0
      %350 = vmatpush1.bf16.msra.mxu0 0
      %351 = vmatprep.subr.bf16.mxu0 0
      %352 = vmatpush1.bf16.msra.mxu0 0
      %353 = vmatprep.subr.bf16.mxu0 0
      %354 = vmatpush1.bf16.msra.mxu0 0
      %355 = vmatprep.mubr.bf16.mxu0 0
      %356 = vmatmul.mubr.bf16.gmra.mrb[0].mxu0 %v321
      %v357 = vpop.f32.mrb[0].mxu0
      %v358 = vadd.f32 0.0, %v357
      %v359 = vpop.f32.mrb[0].mxu0
      %v360 = vpop.f32.mrb[0].mxu0
      %v361 = vpop.f32.mrb[0].mxu0
      %362 = vdwg.mxu0
      %v363 = vpack.c.bf16 %v358, %v358
      %vm364 = vcmask 60416
      %365 = vst.msk [vmem:[%s219] sm:$0xf] %vm364, %v363
      %p366 = scmp.lt.s32.totalorder %s22, 1
      %s367 = scalar_select %p366, %s22, 1
      %s368 = smul.addr %s367, 4
      %s369 = scalar_lea.vmem %s5, %s368
      // Predicated region
      $region37: #{generator2_forward.9} parent=35 // pred_check
        %p370 = pneg %p134
      $region38: #{generator2_forward.9} parent=35 // pred_check_branch
        %372 = sbr.rel (%p370) target = $region40
      $region39: #{generator2_forward.9} parent=35 // pred_region
        _
      $region40: #{generator2_forward.9} parent=35 // pred_fallthru
        _
    $region36: #{generator2_forward.9} parent=5 // pred_fallthru
      _
    %p373 = scmp.le.s32.totalorder 2, %s17
    // Predicated region
    $region41: #{generator2_forward.9} parent=5 // pred_check
      %p374 = pneg %p373
    $region42: #{generator2_forward.9} parent=5 // pred_check_branch
      %376 = sbr.rel (%p374) target = $region44
    $region43: #{generator2_forward.9} parent=5 // pred_region
      %s377 = ssub.s32 %s17, 2
      // Predicated region
      $region45: #{generator2_forward.9} parent=43 // pred_check
        %p378 = pneg %p140
      $region46: #{generator2_forward.9} parent=43 // pred_check_branch
        %380 = sbr.rel (%p378) target = $region48
      $region47: #{generator2_forward.9} parent=43 // pred_region
        %p381 = scmp.lt.s32.totalorder %s23, 1
        %s382 = scalar_select %p381, %s23, 1
        %s383 = smul.addr %s382, 4
        %s384 = scalar_lea.vmem %s5, %s383
      $region48: #{generator2_forward.9} parent=43 // pred_fallthru
        _
    $region44: #{generator2_forward.9} parent=5 // pred_fallthru
      _
  $region6: #{generator2_forward.9} parent=0 // loop_footer
    %s21 = sadd.s32 1, %s17
  $region7: #{generator2_forward.9} parent=0 // loop_footer_branch
    %16 = sbr.rel target = $region3
  $region8: #{generator2_forward.9} parent=0 // loop_exit
    _

// kernel: generator2_forward.12
$region0: #{generator2_forward.12}
  #allocation0 [shape = 'u32[]', space=smem, size = 0x4, offset = 0x4, fixed_abs, tag = 'smem constant byte address 0x4 - core index']
  #allocation1 [shape = 'u32[144,128]{1,0:T(1,128)}', space=vmem, size = 0x12000, scoped, tag = 'internal scratch']
  %s0 = inlined_call_operand.hbm [shape: bf16[16,32], index: 0, kind: input, shape index: {}]
  %s1 = inlined_call_operand.hbm [shape: f32[1,32], index: 1, kind: input, shape index: {}, may-alias: {1,7}]
  %s2 = inlined_call_operand.hbm [shape: f32[1,32], index: 2, kind: input, shape index: {}, may-alias: {2,6,8}]
  %s3 = inlined_call_operand.hbm [shape: bf16[32,64], index: 3, kind: input, shape index: {}]
  %s4 = inlined_call_operand.hbm [shape: f32[1,64], index: 4, kind: input, shape index: {}]
  %s5 = inlined_call_operand.hbm [shape: bf16[64,32], index: 5, kind: input, shape index: {}]
  %s6 = inlined_call_operand.hbm [shape: f32[1,32], index: 6, kind: input, shape index: {}, may-alias: {2,6,8}]
  %s7 = inlined_call_operand.hbm [shape: f32[1,32], index: 7, kind: input, shape index: {}, may-alias: {1,7}]
  %s8 = inlined_call_operand.hbm [shape: f32[1,32], index: 8, kind: input, shape index: {}, may-alias: {2,6,8}]
  %s9 = inlined_call_operand.hbm [shape: bf16[16,32], index: 9, kind: output, shape index: {}]
  %s10 = sld [smem:[#allocation0]]
  $region82: #{generator2_forward.12} parent=0
    _
  %s12 = ssub.s32 1, %s10
  %s13 = scalar_select 0, %s12, %s10
  $region1: #{generator2_forward.12} parent=0
    #allocation2 [shape = 'u8[4096]{0}', space=vmem, size = 0x1000, scoped, tag = 'input window, operand 0, single buffered']
    #allocation3 [shape = 's32[1]{0}', space=sflag, size = 0x4, scoped, tag = 'scoped memory for generator2_forward.12']
    #allocation4 [shape = 's32[1]{0}', space=sflag, size = 0x4, scoped, tag = 'scoped memory for generator2_forward.12']
    #allocation5 [shape = 'u8[512]{0}', space=vmem, size = 0x400, scoped, tag = 'input window, operand 1, single buffered']
    #allocation6 [shape = 's32[1]{0}', space=sflag, size = 0x4, scoped, tag = 'scoped memory for generator2_forward.12']
    #allocation7 [shape = 'u8[512]{0}', space=vmem, size = 0x400, scoped, tag = 'input window, operand 2, single buffered']
    #allocation8 [shape = 'u8[8192]{0}', space=vmem, size = 0x2000, scoped, tag = 'input window, operand 3, single buffered']
    #allocation9 [shape = 's32[1]{0}', space=sflag, size = 0x4, scoped, tag = 'scoped memory for generator2_forward.12']
    #allocation10 [shape = 'u8[512]{0}', space=vmem, size = 0x400, scoped, tag = 'input window, operand 4, single buffered']
    #allocation11 [shape = 'u8[16384]{0}', space=vmem, size = 0x4000, scoped, tag = 'input window, operand 5, single buffered']
    #allocation12 [shape = 's32[1]{0}', space=sflag, size = 0x4, scoped, tag = 'scoped memory for generator2_forward.12']
    #allocation13 [shape = 'u8[512]{0}', space=vmem, size = 0x400, scoped, tag = 'input window, operand 6, single buffered']
    #allocation14 [shape = 'u8[512]{0}', space=vmem, size = 0x400, scoped, tag = 'input window, operand 7, single buffered']
    #allocation15 [shape = 's32[1]{0}', space=sflag, size = 0x4, scoped, tag = 'scoped memory for generator2_forward.12']
    #allocation16 [shape = 'u8[512]{0}', space=vmem, size = 0x400, scoped, tag = 'input window, operand 8, single buffered']
    #allocation17 [shape = 'u8[4096]{0}', space=vmem, size = 0x1000, scoped, tag = 'output window, operand 0, single buffered']
    %14 = vsyncpa [#allocation3], 0
    %15 = vsyncpa [#allocation6], 0
    %16 = vsyncpa [#allocation9], 0
    %17 = vsyncpa [#allocation12], 0
    %18 = vsyncpa [#allocation15], 0
    %19 = vsyncpa [#allocation4], 0
    // Predicated region
    $region2: #{generator2_forward.12} parent=1 // pred_check
      _
    $region3: #{generator2_forward.12} parent=1 // pred_check_branch
      %21 = sbr.rel (0) target = $region5
    $region4: #{generator2_forward.12} parent=1 // pred_region
      %s23 = ssub.s32 128, 128
      %24 = vsyncadd [#allocation3], %s23
      %s25 = sshll.u32 [#allocation2], 4
      %s26 = int_to_ptr.vmem [resolvable:$true] %s25
      %31 = dma.hbm_to_vmem [thread:$0]  %s0, 128, %s26, [#allocation3], 64, 64, 4
    $region5: #{generator2_forward.12} parent=1 // pred_fallthru
      _
    // Predicated region
    $region6: #{generator2_forward.12} parent=1 // pred_check
      _
    $region7: #{generator2_forward.12} parent=1 // pred_check_branch
      %33 = sbr.rel (0) target = $region9
    $region8: #{generator2_forward.12} parent=1 // pred_region
      %s35 = ssub.s32 16, 16
      %36 = vsyncadd [#allocation6], %s35
      %s38 = sshll.u32 [#allocation5], 4
      %s39 = int_to_ptr.vmem [resolvable:$true] %s38
      %41 = dma.hbm_to_vmem [thread:$0]  %s1, 16, %s39, [#allocation6]
    $region9: #{generator2_forward.12} parent=1 // pred_fallthru
      _
    // Predicated region
    $region10: #{generator2_forward.12} parent=1 // pred_check
      _
    $region11: #{generator2_forward.12} parent=1 // pred_check_branch
      %43 = sbr.rel (0) target = $region13
    $region12: #{generator2_forward.12} parent=1 // pred_region
      %s45 = ssub.s32 16, 16
      %46 = vsyncadd [#allocation6], %s45
      %s48 = sshll.u32 [#allocation7], 4
      %s49 = int_to_ptr.vmem [resolvable:$true] %s48
      %51 = dma.hbm_to_vmem [thread:$0]  %s2, 16, %s49, [#allocation6]
    $region13: #{generator2_forward.12} parent=1 // pred_fallthru
      _
    // Predicated region
    $region14: #{generator2_forward.12} parent=1 // pred_check
      _
    $region15: #{generator2_forward.12} parent=1 // pred_check_branch
      %53 = sbr.rel (0) target = $region17
    $region16: #{generator2_forward.12} parent=1 // pred_region
      %s55 = ssub.s32 256, 256
      %56 = vsyncadd [#allocation9], %s55
      %s57 = sshll.u32 [#allocation8], 4
      %s58 = int_to_ptr.vmem [resolvable:$true] %s57
      %63 = dma.hbm_to_vmem [thread:$0]  %s3, 256, %s58, [#allocation9], 64, 64, 4
    $region17: #{generator2_forward.12} parent=1 // pred_fallthru
      _
    // Predicated region
    $region18: #{generator2_forward.12} parent=1 // pred_check
      _
    $region19: #{generator2_forward.12} parent=1 // pred_check_branch
      %65 = sbr.rel (0) target = $region21
    $region20: #{generator2_forward.12} parent=1 // pred_region
      %s67 = ssub.s32 16, 16
      %68 = vsyncadd [#allocation9], %s67
      %s70 = sshll.u32 [#allocation10], 4
      %s71 = int_to_ptr.vmem [resolvable:$true] %s70
      %73 = dma.hbm_to_vmem [thread:$0]  %s4, 16, %s71, [#allocation9]
    $region21: #{generator2_forward.12} parent=1 // pred_fallthru
      _
    // Predicated region
    $region22: #{generator2_forward.12} parent=1 // pred_check
      _
    $region23: #{generator2_forward.12} parent=1 // pred_check_branch
      %75 = sbr.rel (0) target = $region25
    $region24: #{generator2_forward.12} parent=1 // pred_region
      %s77 = ssub.s32 512, 512
      %78 = vsyncadd [#allocation12], %s77
      %s79 = sshll.u32 [#allocation11], 4
      %s80 = int_to_ptr.vmem [resolvable:$true] %s79
      %85 = dma.hbm_to_vmem [thread:$0]  %s5, 512, %s80, [#allocation12], 64, 64, 4
    $region25: #{generator2_forward.12} parent=1 // pred_fallthru
      _
    // Predicated region
    $region26: #{generator2_forward.12} parent=1 // pred_check
      _
    $region27: #{generator2_forward.12} parent=1 // pred_check_branch
      %87 = sbr.rel (0) target = $region29
    $region28: #{generator2_forward.12} parent=1 // pred_region
      %s89 = ssub.s32 16, 16
      %90 = vsyncadd [#allocation12], %s89
      %s92 = sshll.u32 [#allocation13], 4
      %s93 = int_to_ptr.vmem [resolvable:$true] %s92
      %95 = dma.hbm_to_vmem [thread:$0]  %s6, 16, %s93, [#allocation12]
    $region29: #{generator2_forward.12} parent=1 // pred_fallthru
      _
    // Predicated region
    $region30: #{generator2_forward.12} parent=1 // pred_check
      _
    $region31: #{generator2_forward.12} parent=1 // pred_check_branch
      %97 = sbr.rel (0) target = $region33
    $region32: #{generator2_forward.12} parent=1 // pred_region
      %s99 = ssub.s32 16, 16
      %100 = vsyncadd [#allocation15], %s99
      %s102 = sshll.u32 [#allocation14], 4
      %s103 = int_to_ptr.vmem [resolvable:$true] %s102
      %105 = dma.hbm_to_vmem [thread:$0]  %s7, 16, %s103, [#allocation15]
    $region33: #{generator2_forward.12} parent=1 // pred_fallthru
      _
    // Predicated region
    $region34: #{generator2_forward.12} parent=1 // pred_check
      _
    $region35: #{generator2_forward.12} parent=1 // pred_check_branch
      %107 = sbr.rel (0) target = $region37
    $region36: #{generator2_forward.12} parent=1 // pred_region
      %s109 = ssub.s32 16, 16
      %110 = vsyncadd [#allocation15], %s109
      %s112 = sshll.u32 [#allocation16], 4
      %s113 = int_to_ptr.vmem [resolvable:$true] %s112
      %115 = dma.hbm_to_vmem [thread:$0]  %s8, 16, %s113, [#allocation15]
    $region37: #{generator2_forward.12} parent=1 // pred_fallthru
      _
    // Predicated region
    $region38: #{generator2_forward.12} parent=1 // pred_check
      _
    $region39: #{generator2_forward.12} parent=1 // pred_check_branch
      %117 = sbr.rel (0) target = $region41
    $region40: #{generator2_forward.12} parent=1 // pred_region
      %118 = dma.done [#allocation3], 128
    $region41: #{generator2_forward.12} parent=1 // pred_fallthru
      _
    // Predicated region
    $region42: #{generator2_forward.12} parent=1 // pred_check
      _
    $region43: #{generator2_forward.12} parent=1 // pred_check_branch
      %120 = sbr.rel (0) target = $region45
    $region44: #{generator2_forward.12} parent=1 // pred_region
      %121 = dma.done [#allocation6], 16
    $region45: #{generator2_forward.12} parent=1 // pred_fallthru
      _
    // Predicated region
    $region46: #{generator2_forward.12} parent=1 // pred_check
      _
    $region47: #{generator2_forward.12} parent=1 // pred_check_branch
      %123 = sbr.rel (0) target = $region49
    $region48: #{generator2_forward.12} parent=1 // pred_region
      %124 = dma.done [#allocation6], 16
    $region49: #{generator2_forward.12} parent=1 // pred_fallthru
      _
    // Predicated region
    $region50: #{generator2_forward.12} parent=1 // pred_check
      _
    $region51: #{generator2_forward.12} parent=1 // pred_check_branch
      %126 = sbr.rel (0) target = $region53
    $region52: #{generator2_forward.12} parent=1 // pred_region
      %127 = dma.done [#allocation9], 256
    $region53: #{generator2_forward.12} parent=1 // pred_fallthru
      _
    // Predicated region
    $region54: #{generator2_forward.12} parent=1 // pred_check
      _
    $region55: #{generator2_forward.12} parent=1 // pred_check_branch
      %129 = sbr.rel (0) target = $region57
    $region56: #{generator2_forward.12} parent=1 // pred_region
      %130 = dma.done [#allocation9], 16
    $region57: #{generator2_forward.12} parent=1 // pred_fallthru
      _
    // Predicated region
    $region58: #{generator2_forward.12} parent=1 // pred_check
      _
    $region59: #{generator2_forward.12} parent=1 // pred_check_branch
      %132 = sbr.rel (0) target = $region61
    $region60: #{generator2_forward.12} parent=1 // pred_region
      %133 = dma.done [#allocation12], 512
    $region61: #{generator2_forward.12} parent=1 // pred_fallthru
      _
    // Predicated region
    $region62: #{generator2_forward.12} parent=1 // pred_check
      _
    $region63: #{generator2_forward.12} parent=1 // pred_check_branch
      %135 = sbr.rel (0) target = $region65
    $region64: #{generator2_forward.12} parent=1 // pred_region
      %136 = dma.done [#allocation12], 16
    $region65: #{generator2_forward.12} parent=1 // pred_fallthru
      _
    // Predicated region
    $region66: #{generator2_forward.12} parent=1 // pred_check
      _
    $region67: #{generator2_forward.12} parent=1 // pred_check_branch
      %138 = sbr.rel (0) target = $region69
    $region68: #{generator2_forward.12} parent=1 // pred_region
      %139 = dma.done [#allocation15], 16
    $region69: #{generator2_forward.12} parent=1 // pred_fallthru
      _
    // Predicated region
    $region70: #{generator2_forward.12} parent=1 // pred_check
      _
    $region71: #{generator2_forward.12} parent=1 // pred_check_branch
      %141 = sbr.rel (0) target = $region73
    $region72: #{generator2_forward.12} parent=1 // pred_region
      %142 = dma.done [#allocation15], 16
    $region73: #{generator2_forward.12} parent=1 // pred_fallthru
      _
    %v144 = vld [vmem:[#allocation2] sm:$0xf]
    %v145 = vld [vmem:[#allocation2 + $0x4] sm:$0xf]
    %v146 = vunpack.c.l.bf16 %v144
    %v147 = vunpack.c.l.bf16 %v145
    %vm148 = vcmask 261120
    %v149 = vsel %vm148, %v146, 0.0
    %150 = vadd.xlane.f32.xlu0 %v149
    %v151 = vpop.xlane.xlu0 %150
    %v152 = vsel %vm148, %v147, 0.0
    %153 = vadd.xlane.f32.xlu0 %v152
    %v154 = vpop.xlane.xlu0 %153
    %v155 = vrcp.pop 32.0
    %v156 = vmul.f32 %v151, %v155
    %v157 = vmul.f32 %v154, %v155
    %v158 = vsub.f32 %v146, %v156
    %v159 = vsub.f32 %v147, %v157
    %v160 = vmul.f32 %v158, %v158
    %v161 = vmul.f32 %v159, %v159
    %v162 = vsel %vm148, %v160, 0.0
    %163 = vadd.xlane.f32.xlu0 %v162
    %v164 = vpop.xlane.xlu0 %163
    %v165 = vsel %vm148, %v161, 0.0
    %166 = vadd.xlane.f32.xlu0 %v165
    %v167 = vpop.xlane.xlu0 %166
    %v168 = vmul.f32 %v164, %v155
    %v169 = vmul.f32 %v167, %v155
    %v170 = vadd.f32 %v168, 1e-06
    %v171 = vadd.f32 %v169, 1e-06
    %v172 = vrsqrt.pop %v170
    %v173 = vrsqrt.pop %v171
    %v174 = vmul.f32 %v158, %v172
    %v175 = vmul.f32 %v159, %v173
    %v176 = vld [vmem:[#allocation5] sm:$0x1]
    %v178 = vlaneseq
    %v179 = vshrl.u32 %v178, 7
    %v180 = vsub.s32 0, %v179
    %v181 = vrot.slane %v176, %v180
    %v183 = vmul.f32 %v174, %v181
    %v184 = vmul.f32 %v175, %v181
    %v185 = vld [vmem:[#allocation7] sm:$0x1]
    %v187 = vlaneseq
    %v188 = vshrl.u32 %v187, 7
    %v189 = vsub.s32 0, %v188
    %v190 = vrot.slane %v185, %v189
    %v192 = vadd.f32 %v183, %v190
    %v193 = vadd.f32 %v184, %v190
    %v194 = vpack.c.bf16 %v193, %v192
    %v195 = vld [vmem:[#allocation8] sm:$0xf]
    %v196 = vld [vmem:[#allocation8 + $0x4] sm:$0xf]
    %v197 = vld [vmem:[#allocation8 + $0x8] sm:$0xf]
    %v198 = vld [vmem:[#allocation8 + $0xc] sm:$0xf]
    %v199 = vld [vmem:[#allocation10] sm:$0x1]
    %v201 = vlaneseq
    %v202 = vshrl.u32 %v201, 7
    %v203 = vsub.s32 0, %v202
    %v204 = vrot.slane %v199, %v203
    %v210 = vunpack.c.l.b16 %v195
    %v211 = vunpack.c.l.b16 %v196
    %v212 = vunpack.c.l.b16 %v197
    %v213 = vunpack.c.l.b16 %v198
    %v214 = vpack.c.b16 %v211, %v210
    %v215 = vpack.c.b16 %v213, %v212
    %v219 = vsel %vm148, %v194, 0
    %221 = vmatprep.subr.bf16.mxu0 0
    %222 = vmatpush1.bf16.msra.mxu0 %v214
    %223 = vmatprep.subr.bf16.mxu0 0
    %224 = vmatpush1.bf16.msra.mxu0 %v215
    %225 = vmatprep.subr.bf16.mxu0 0
    %226 = vmatpush1.bf16.msra.mxu0 0
    %227 = vmatprep.subr.bf16.mxu0 0
    %228 = vmatpush1.bf16.msra.mxu0 0
    %229 = vmatprep.subr.bf16.mxu0 0
    %230 = vmatpush1.bf16.msra.mxu0 0
    %231 = vmatprep.subr.bf16.mxu0 0
    %232 = vmatpush1.bf16.msra.mxu0 0
    %233 = vmatprep.subr.bf16.mxu0 0
    %234 = vmatpush1.bf16.msra.mxu0 0
    %235 = vmatprep.subr.bf16.mxu0 0
    %236 = vmatpush1.bf16.msra.mxu0 0
    %237 = vmatprep.subr.bf16.mxu0 0
    %238 = vmatpush1.bf16.msra.mxu0 0
    %239 = vmatprep.subr.bf16.mxu0 0
    %240 = vmatpush1.bf16.msra.mxu0 0
    %241 = vmatprep.subr.bf16.mxu0 0
    %242 = vmatpush1.bf16.msra.mxu0 0
    %243 = vmatprep.subr.bf16.mxu0 0
    %244 = vmatpush1.bf16.msra.mxu0 0
    %245 = vmatprep.subr.bf16.mxu0 0
    %246 = vmatpush1.bf16.msra.mxu0 0
    %247 = vmatprep.subr.bf16.mxu0 0
    %248 = vmatpush1.bf16.msra.mxu0 0
    %249 = vmatprep.subr.bf16.mxu0 0
    %250 = vmatpush1.bf16.msra.mxu0 0
    %251 = vmatprep.subr.bf16.mxu0 0
    %252 = vmatpush1.bf16.msra.mxu0 0
    %253 = vmatprep.mubr.bf16.mxu0 0
    %254 = vmatmul.mubr.bf16.gmra.mrb[0].mxu0 %v219
    %v255 = vpop.f32.mrb[0].mxu0
    %v256 = vadd.f32 %v204, %v255
    %v257 = vpop.f32.mrb[0].mxu0
    %v258 = vpop.f32.mrb[0].mxu0
    %v259 = vadd.f32 %v204, %v258
    %v260 = vpop.f32.mrb[0].mxu0
    %261 = vdwg.mxu0
    %v262 = vmax.f32 %v256, 0.0
    %v263 = vmax.f32 %v259, 0.0
    %v264 = vpack.c.bf16 %v263, %v262
    %v265 = vld [vmem:[#allocation11] sm:$0xf]
    %v266 = vld [vmem:[#allocation11 + $0x4] sm:$0xf]
    %v267 = vld [vmem:[#allocation11 + $0x8] sm:$0xf]
    %v268 = vld [vmem:[#allocation11 + $0xc] sm:$0xf]
    %v269 = vld [vmem:[#allocation11 + $0x10] sm:$0xf]
    %v270 = vld [vmem:[#allocation11 + $0x14] sm:$0xf]
    %v271 = vld [vmem:[#allocation11 + $0x18] sm:$0xf]
    %v272 = vld [vmem:[#allocation11 + $0x1c] sm:$0xf]
    %v273 = vld [vmem:[#allocation13] sm:$0x1]
    %v275 = vlaneseq
    %v276 = vshrl.u32 %v275, 7
    %v277 = vsub.s32 0, %v276
    %v278 = vrot.slane %v273, %v277
    %v288 = vunpack.c.l.b16 %v265
    %v289 = vunpack.c.l.b16 %v266
    %v290 = vunpack.c.l.b16 %v267
    %v291 = vunpack.c.l.b16 %v268
    %v292 = vunpack.c.l.b16 %v269
    %v293 = vunpack.c.l.b16 %v270
    %v294 = vunpack.c.l.b16 %v271
    %v295 = vunpack.c.l.b16 %v272
    %v296 = vpack.c.b16 %v289, %v288
    %v297 = vpack.c.b16 %v291, %v290
    %v298 = vpack.c.b16 %v293, %v292
    %v299 = vpack.c.b16 %v295, %v294
    %vm304 = vcmask 523264
    %v306 = vsel %vm304, %v264, 0
    %308 = vmatprep.subr.bf16.mxu0 0
    %309 = vmatpush1.bf16.msra.mxu0 %v296
    %310 = vmatprep.subr.bf16.mxu0 0
    %311 = vmatpush1.bf16.msra.mxu0 %v297
    %312 = vmatprep.subr.bf16.mxu0 0
    %313 = vmatpush1.bf16.msra.mxu0 %v298
    %314 = vmatprep.subr.bf16.mxu0 0
    %315 = vmatpush1.bf16.msra.mxu0 %v299
    %316 = vmatprep.subr.bf16.mxu0 0
    %317 = vmatpush1.bf16.msra.mxu0 0
    %318 = vmatprep.subr.bf16.mxu0 0
    %319 = vmatpush1.bf16.msra.mxu0 0
    %320 = vmatprep.subr.bf16.mxu0 0
    %321 = vmatpush1.bf16.msra.mxu0 0
    %322 = vmatprep.subr.bf16.mxu0 0
    %323 = vmatpush1.bf16.msra.mxu0 0
    %324 = vmatprep.subr.bf16.mxu0 0
    %325 = vmatpush1.bf16.msra.mxu0 0
    %326 = vmatprep.subr.bf16.mxu0 0
    %327 = vmatpush1.bf16.msra.mxu0 0
    %328 = vmatprep.subr.bf16.mxu0 0
    %329 = vmatpush1.bf16.msra.mxu0 0
    %330 = vmatprep.subr.bf16.mxu0 0
    %331 = vmatpush1.bf16.msra.mxu0 0
    %332 = vmatprep.subr.bf16.mxu0 0
    %333 = vmatpush1.bf16.msra.mxu0 0
    %334 = vmatprep.subr.bf16.mxu0 0
    %335 = vmatpush1.bf16.msra.mxu0 0
    %336 = vmatprep.subr.bf16.mxu0 0
    %337 = vmatpush1.bf16.msra.mxu0 0
    %338 = vmatprep.subr.bf16.mxu0 0
    %339 = vmatpush1.bf16.msra.mxu0 0
    %340 = vmatprep.mubr.bf16.mxu0 0
    %341 = vmatmul.mubr.bf16.gmra.mrb[0].mxu0 %v306
    %v342 = vpop.f32.mrb[0].mxu0
    %v343 = vadd.f32 %v278, %v342
    %v344 = vpop.f32.mrb[0].mxu0
    %v345 = vpop.f32.mrb[0].mxu0
    %v346 = vadd.f32 %v278, %v345
    %v347 = vpop.f32.mrb[0].mxu0
    %348 = vdwg.mxu0
    %v349 = vadd.f32 %v343, %v146
    %v350 = vadd.f32 %v346, %v147
    %v351 = vsel %vm148, %v349, 0.0
    %352 = vadd.xlane.f32.xlu0 %v351
    %v353 = vpop.xlane.xlu0 %352
    %v354 = vsel %vm148, %v350, 0.0
    %355 = vadd.xlane.f32.xlu0 %v354
    %v356 = vpop.xlane.xlu0 %355
    %v357 = vmul.f32 %v353, %v155
    %v358 = vmul.f32 %v356, %v155
    %v359 = vsub.f32 %v349, %v357
    %v360 = vsub.f32 %v350, %v358
    %v361 = vmul.f32 %v359, %v359
    %v362 = vmul.f32 %v360, %v360
    %v363 = vsel %vm148, %v361, 0.0
    %364 = vadd.xlane.f32.xlu0 %v363
    %v365 = vpop.xlane.xlu0 %364
    %v366 = vsel %vm148, %v362, 0.0
    %367 = vadd.xlane.f32.xlu0 %v366
    %v368 = vpop.xlane.xlu0 %367
    %v369 = vmul.f32 %v365, %v155
    %v370 = vmul.f32 %v368, %v155
    %v371 = vadd.f32 %v369, 1e-06
    %v372 = vadd.f32 %v370, 1e-06
    %v373 = vrsqrt.pop %v371
    %v374 = vrsqrt.pop %v372
    %v375 = vmul.f32 %v359, %v373
    %v376 = vmul.f32 %v360, %v374
    %v377 = vld [vmem:[#allocation14] sm:$0x1]
    %v379 = vlaneseq
    %v380 = vshrl.u32 %v379, 7
    %v381 = vsub.s32 0, %v380
    %v382 = vrot.slane %v377, %v381
    %v384 = vmul.f32 %v375, %v382
    %v385 = vmul.f32 %v376, %v382
    %v386 = vld [vmem:[#allocation16] sm:$0x1]
    %v388 = vlaneseq
    %v389 = vshrl.u32 %v388, 7
    %v390 = vsub.s32 0, %v389
    %v391 = vrot.slane %v386, %v390
    %v393 = vadd.f32 %v384, %v391
    %v394 = vadd.f32 %v385, %v391
    %v395 = vpack.c.bf16 %v394, %v393
    %v397 = vunpack.c.l.b16 %v395
    %v398 = vunpack.c.h.b16 %v395
    %v399 = vpack.c.b16 %v397, %v397
    %v400 = vpack.c.b16 %v398, %v398
    %vm403 = vcmask 257024
    %404 = vst.msk [vmem:[#allocation17] sm:$0xf] %vm403, %v399
    %405 = vst.msk [vmem:[#allocation17 + $0x4] sm:$0xf] %vm403, %v400
    // Predicated region
    $region74: #{generator2_forward.12} parent=1 // pred_check
      _
    $region75: #{generator2_forward.12} parent=1 // pred_check_branch
      %407 = sbr.rel (0) target = $region77
    $region76: #{generator2_forward.12} parent=1 // pred_region
      %s409 = ssub.s32 128, 128
      %410 = vsyncadd [#allocation4], %s409
      %s411 = sshll.u32 [#allocation17], 4
      %s412 = int_to_ptr.vmem [resolvable:$true] %s411
      %417 = dma.vmem_to_hbm [thread:$0]  %s412, 128, %s9, [#allocation4], 64, 64, 4
    $region77: #{generator2_forward.12} parent=1 // pred_fallthru
      _
    // Predicated region
    $region78: #{generator2_forward.12} parent=1 // pred_check
      _
    $region79: #{generator2_forward.12} parent=1 // pred_check_branch
      %419 = sbr.rel (0) target = $region81
    $region80: #{generator2_forward.12} parent=1 // pred_region
      %420 = dma.done [#allocation4], 128
    $region81: #{generator2_forward.12} parent=1 // pred_fallthru
      _
    %421 = vsyncpa [#allocation3], 1
    %422 = vsyncpa [#allocation6], 1
    %423 = vsyncpa [#allocation9], 1
    %424 = vsyncpa [#allocation12], 1
    %425 = vsyncpa [#allocation15], 1
    %426 = vsyncpa [#allocation4], 1

// kernel: generator2_forward.11
$region0: #{generator2_forward.11}
  #allocation0 [shape = 'u32[]', space=smem, size = 0x4, offset = 0x4, fixed_abs, tag = 'smem constant byte address 0x4 - core index']
  #allocation1 [shape = 'u32[144,128]{1,0:T(1,128)}', space=vmem, size = 0x12000, scoped, tag = 'internal scratch']
  #allocation2 [shape = 's32[1]{0}', space=sflag, size = 0x4, scoped, tag = 'scoped memory for generator2_forward.11']
  #allocation3 [shape = 'u8[512]{0}', space=smem, size = 0x200, scoped, tag = 'prefetched SMEM operand 0']
  %s0 = inlined_call_operand.hbm [shape: s32[2], index: 0, kind: input, shape index: {}]
  %s1 = inlined_call_operand.hbm [shape: bf16[2,8,32], index: 1, kind: input, shape index: {}]
  %s2 = inlined_call_operand.hbm [shape: f32[1,32], index: 2, kind: input, shape index: {}]
  %s3 = inlined_call_operand.hbm [shape: f32[1,32], index: 3, kind: input, shape index: {}, may-alias: {3,7}]
  %s4 = inlined_call_operand.hbm [shape: bf16[32,96], index: 4, kind: input, shape index: {}]
  %s5 = inlined_call_operand.hbm [shape: f32[1,96], index: 5, kind: input, shape index: {}]
  %s6 = inlined_call_operand.hbm [shape: bf16[32,32], index: 6, kind: input, shape index: {}]
  %s7 = inlined_call_operand.hbm [shape: f32[1,32], index: 7, kind: input, shape index: {}, may-alias: {3,7}]
  %s8 = inlined_call_operand.hbm [shape: bf16[2,8,32], index: 8, kind: output, shape index: {}]
  %s9 = sld [smem:[#allocation0]]
  $region89: #{generator2_forward.11} parent=0
    _
  %s11 = ssub.s32 1, %s9
  %s12 = scalar_select 0, %s11, %s9
  %14 = dma.hbm_to_smem %s0, 16, [#allocation3], [#allocation2]
  %15 = dma.done [#allocation2], 16
  %16 = sfence
  $region1: #{generator2_forward.11} parent=0
    #allocation4 [shape = 'u8[4096]{0}', space=vmem, size = 0x1000, scoped, tag = 'input window, operand 1']
    #allocation5 [shape = 's32[2]{0}', space=sflag, size = 0x8, scoped, tag = 'scoped memory for generator2_forward.11']
    #allocation6 [shape = 's32[2]{0}', space=sflag, size = 0x8, scoped, tag = 'scoped memory for generator2_forward.11']
    #allocation7 [shape = 'u8[512]{0}', space=vmem, size = 0x400, scoped, tag = 'input window, operand 2, single buffered']
    #allocation8 [shape = 's32[1]{0}', space=sflag, size = 0x4, scoped, tag = 'scoped memory for generator2_forward.11']
    #allocation9 [shape = 'u8[512]{0}', space=vmem, size = 0x400, scoped, tag = 'input window, operand 3, single buffered']
    #allocation10 [shape = 'u8[8192]{0}', space=vmem, size = 0x2000, scoped, tag = 'input window, operand 4, single buffered']
    #allocation11 [shape = 's32[1]{0}', space=sflag, size = 0x4, scoped, tag = 'scoped memory for generator2_forward.11']
    #allocation12 [shape = 'u8[512]{0}', space=vmem, size = 0x400, scoped, tag = 'input window, operand 5, single buffered']
    #allocation13 [shape = 'u8[8192]{0}', space=vmem, size = 0x2000, scoped, tag = 'input window, operand 6, single buffered']
    #allocation14 [shape = 's32[1]{0}', space=sflag, size = 0x4, scoped, tag = 'scoped memory for generator2_forward.11']
    #allocation15 [shape = 'u8[512]{0}', space=vmem, size = 0x400, scoped, tag = 'input window, operand 7, single buffered']
    #allocation16 [shape = 'u8[4096]{0}', space=vmem, size = 0x1000, scoped, tag = 'output window, operand 0']
    %17 = vsyncpa [#allocation5], 0
    %s18 = scalar_lea.sflag [#allocation5], 1
    %19 = vsyncpa %s18, 0
    %20 = vsyncpa [#allocation8], 0
    %21 = vsyncpa [#allocation11], 0
    %22 = vsyncpa [#allocation14], 0
    %23 = vsyncpa [#allocation6], 0
    %s24 = scalar_lea.sflag [#allocation6], 1
    %25 = vsyncpa %s24, 0
    loop: start=0, step=1, limit=4
    $region2: #{generator2_forward.11} parent=1 // loop_pre_header
      _
    $region3: #{generator2_forward.11} parent=1 // loop_header
      %s27 = sphi 0, %s31
      %p28 = scmp.ge.s32.totalorder %s27, 4
      %s37 = sphi 0, %s39
      %s40 = sphi 0, %s37
      %s41 = sphi 0, %s40
      %s57 = sphi 0, %s41
      %s61 = sphi 0, %s61
      %s63 = sphi 0, %s61
      %s64 = sphi 0, %s63
      %s78 = sphi 0, %s64
      %s82 = sphi 0, %s82
      %s84 = sphi 0, %s82
      %s85 = sphi 0, %s84
      %s99 = sphi 0, %s85
      %s103 = sphi 0, %s103
      %s105 = sphi 0, %s103
      %s106 = sphi 0, %s105
      %s120 = sphi 0, %s106
      %s124 = sphi 0, %s124
      %s126 = sphi 0, %s124
      %s127 = sphi 0, %s126
      %s141 = sphi 0, %s127
      %s145 = sphi 0, %s145
      %s147 = sphi 0, %s145
      %s148 = sphi 0, %s147
      %s162 = sphi 0, %s148
      %s166 = sphi 0, %s166
      %s168 = sphi 0, %s166
      %s169 = sphi 0, %s168
      %s183 = sphi 0, %s169
      %s189 = sphi 0, %s191
      %s192 = sphi 0, %s189
      %s193 = sphi 0, %s192
      %s209 = sphi 0, %s193
    $region4: #{generator2_forward.11} parent=1 // loop_header_branch
      %30 = sbr.rel (%p28) target = $region8
    $region5: #{generator2_forward.11} parent=1 // loop_body
      %s32 = ssub.s32 %s27, 1
      %s33 = ssub.s32 %s27, 2
      %s34 = sadd.s32 %s27, 1
      %s35 = ssub.s32 %s27, %s34
      %p36 = scmp.eq.s32.totalorder %s35, 0
      %s38 = sadd.s32 %s37, 1
      %s39 = scalar_select %p36, %s37, %s38
      %p42 = pneg %p36
      %p43 = scmp.eq.s32.totalorder %s27, 1
      %p44 = por %p42, %p43
      %p45 = scmp.ne.s32.totalorder %s37, %s40
      %p46 = scmp.eq.s32.totalorder %s27, 0
      %p47 = por %p45, %p46
      %p48 = scmp.ne.s32.totalorder %s37, %s40
      %p49 = scmp.eq.s32.totalorder %s32, 1
      %p50 = por %p48, %p49
      %p51 = scmp.ne.s32.totalorder %s40, %s41
      %p52 = scmp.eq.s32.totalorder %s32, 0
      %p53 = por %p51, %p52
      %p54 = scmp.ne.s32.totalorder %s40, %s41
      %p55 = scmp.eq.s32.totalorder %s33, 1
      %p56 = por %p54, %p55
      %p58 = scmp.ne.s32.totalorder %s41, %s57
      %p59 = scmp.eq.s32.totalorder %s33, 0
      %p60 = por %p58, %p59
      %s62 = sadd.s32 %s61, 1
      %p65 = scmp.eq.s32.totalorder %s27, 1
      %p66 = scmp.ne.s32.totalorder %s61, %s63
      %p67 = scmp.eq.s32.totalorder %s27, 0
      %p68 = por %p66, %p67
      %p69 = scmp.ne.s32.totalorder %s61, %s63
      %p70 = scmp.eq.s32.totalorder %s32, 1
      %p71 = por %p69, %p70
      %p72 = scmp.ne.s32.totalorder %s63, %s64
      %p73 = scmp.eq.s32.totalorder %s32, 0
      %p74 = por %p72, %p73
      %p75 = scmp.ne.s32.totalorder %s63, %s64
      %p76 = scmp.eq.s32.totalorder %s33, 1
      %p77 = por %p75, %p76
      %p79 = scmp.ne.s32.totalorder %s64, %s78
      %p80 = scmp.eq.s32.totalorder %s33, 0
      %p81 = por %p79, %p80
      %s83 = sadd.s32 %s82, 1
      %p86 = scmp.eq.s32.totalorder %s27, 1
      %p87 = scmp.ne.s32.totalorder %s82, %s84
      %p88 = scmp.eq.s32.totalorder %s27, 0
      %p89 = por %p87, %p88
      %p90 = scmp.ne.s32.totalorder %s82, %s84
      %p91 = scmp.eq.s32.totalorder %s32, 1
      %p92 = por %p90, %p91
      %p93 = scmp.ne.s32.totalorder %s84, %s85
      %p94 = scmp.eq.s32.totalorder %s32, 0
      %p95 = por %p93, %p94
      %p96 = scmp.ne.s32.totalorder %s84, %s85
      %p97 = scmp.eq.s32.totalorder %s33, 1
      %p98 = por %p96, %p97
      %p100 = scmp.ne.s32.totalorder %s85, %s99
      %p101 = scmp.eq.s32.totalorder %s33, 0
      %p102 = por %p100, %p101
      %s104 = sadd.s32 %s103, 1
      %p107 = scmp.eq.s32.totalorder %s27, 1
      %p108 = scmp.ne.s32.totalorder %s103, %s105
      %p109 = scmp.eq.s32.totalorder %s27, 0
      %p110 = por %p108, %p109
      %p111 = scmp.ne.s32.totalorder %s103, %s105
      %p112 = scmp.eq.s32.totalorder %s32, 1
      %p113 = por %p111, %p112
      %p114 = scmp.ne.s32.totalorder %s105, %s106
      %p115 = scmp.eq.s32.totalorder %s32, 0
      %p116 = por %p114, %p115
      %p117 = scmp.ne.s32.totalorder %s105, %s106
      %p118 = scmp.eq.s32.totalorder %s33, 1
      %p119 = por %p117, %p118
      %p121 = scmp.ne.s32.totalorder %s106, %s120
      %p122 = scmp.eq.s32.totalorder %s33, 0
      %p123 = por %p121, %p122
      %s125 = sadd.s32 %s124, 1
      %p128 = scmp.eq.s32.totalorder %s27, 1
      %p129 = scmp.ne.s32.totalorder %s124, %s126
      %p130 = scmp.eq.s32.totalorder %s27, 0
      %p131 = por %p129, %p130
      %p132 = scmp.ne.s32.totalorder %s124, %s126
      %p133 = scmp.eq.s32.totalorder %s32, 1
      %p134 = por %p132, %p133
      %p135 = scmp.ne.s32.totalorder %s126, %s127
      %p136 = scmp.eq.s32.totalorder %s32, 0
      %p137 = por %p135, %p136
      %p138 = scmp.ne.s32.totalorder %s126, %s127
      %p139 = scmp.eq.s32.totalorder %s33, 1
      %p140 = por %p138, %p139
      %p142 = scmp.ne.s32.totalorder %s127, %s141
      %p143 = scmp.eq.s32.totalorder %s33, 0
      %p144 = por %p142, %p143
      %s146 = sadd.s32 %s145, 1
      %p149 = scmp.eq.s32.totalorder %s27, 1
      %p150 = scmp.ne.s32.totalorder %s145, %s147
      %p151 = scmp.eq.s32.totalorder %s27, 0
      %p152 = por %p150, %p151
      %p153 = scmp.ne.s32.totalorder %s145, %s147
      %p154 = scmp.eq.s32.totalorder %s32, 1
      %p155 = por %p153, %p154
      %p156 = scmp.ne.s32.totalorder %s147, %s148
      %p157 = scmp.eq.s32.totalorder %s32, 0
      %p158 = por %p156, %p157
      %p159 = scmp.ne.s32.totalorder %s147, %s148
      %p160 = scmp.eq.s32.totalorder %s33, 1
      %p161 = por %p159, %p160
      %p163 = scmp.ne.s32.totalorder %s148, %s162
      %p164 = scmp.eq.s32.totalorder %s33, 0
      %p165 = por %p163, %p164
      %s167 = sadd.s32 %s166, 1
      %p170 = scmp.eq.s32.totalorder %s27, 1
      %p171 = scmp.ne.s32.totalorder %s166, %s168
      %p172 = scmp.eq.s32.totalorder %s27, 0
      %p173 = por %p171, %p172
      %p174 = scmp.ne.s32.totalorder %s166, %s168
      %p175 = scmp.eq.s32.totalorder %s32, 1
      %p176 = por %p174, %p175
      %p177 = scmp.ne.s32.totalorder %s168, %s169
      %p178 = scmp.eq.s32.totalorder %s32, 0
      %p179 = por %p177, %p178
      %p180 = scmp.ne.s32.totalorder %s168, %s169
      %p181 = scmp.eq.s32.totalorder %s33, 1
      %p182 = por %p180, %p181
      %p184 = scmp.ne.s32.totalorder %s169, %s183
      %p185 = scmp.eq.s32.totalorder %s33, 0
      %p186 = por %p184, %p185
      %s187 = ssub.s32 %s27, %s34
      %p188 = scmp.eq.s32.totalorder %s187, 0
      %s190 = sadd.s32 %s189, 1
      %s191 = scalar_select %p188, %s189, %s190
      %p194 = pneg %p188
      %p195 = scmp.eq.s32.totalorder %s27, 1
      %p196 = por %p194, %p195
      %p197 = scmp.ne.s32.totalorder %s189, %s192
      %p198 = scmp.eq.s32.totalorder %s27, 0
      %p199 = por %p197, %p198
      %p200 = scmp.ne.s32.totalorder %s189, %s192
      %p201 = scmp.eq.s32.totalorder %s32, 1
      %p202 = por %p200, %p201
      %p203 = scmp.ne.s32.totalorder %s192, %s193
      %p204 = scmp.eq.s32.totalorder %s32, 0
      %p205 = por %p203, %p204
      %p206 = scmp.ne.s32.totalorder %s192, %s193
      %p207 = scmp.eq.s32.totalorder %s33, 1
      %p208 = por %p206, %p207
      %p210 = scmp.ne.s32.totalorder %s193, %s209
      %p211 = scmp.eq.s32.totalorder %s33, 0
      %p212 = por %p210, %p211
      %p213 = scmp.le.s32.totalorder 1, %s27
      %p214 = scmp.lt.s32.totalorder %s27, 3
      %p215 = pnand %p213, %p214
      %p216 = pneg %p215
      // Predicated region
      $region9: #{generator2_forward.11} parent=5 // pred_check
        _
      $region10: #{generator2_forward.11} parent=5 // pred_check_branch
        %218 = sbr.rel (%p215) target = $region12
      $region11: #{generator2_forward.11} parent=5 // pred_region
        %s219 = ssub.s32 %s27, 1
        // Predicated region
        $region13: #{generator2_forward.11} parent=11 // pred_check
          %p220 = pneg %p74
        $region14: #{generator2_forward.11} parent=11 // pred_check_branch
          %222 = sbr.rel (%p220) target = $region16
        $region15: #{generator2_forward.11} parent=11 // pred_region
          %s224 = ssub.s32 16, 16
          %225 = vsyncadd [#allocation8], %s224
          %s227 = sshll.u32 [#allocation7], 4
          %s228 = int_to_ptr.vmem [resolvable:$true] %s227
          %230 = dma.hbm_to_vmem [thread:$0]  %s2, 16, %s228, [#allocation8]
        $region16: #{generator2_forward.11} parent=11 // pred_fallthru
          _
        // Predicated region
        $region17: #{generator2_forward.11} parent=11 // pred_check
          %p231 = pneg %p95
        $region18: #{generator2_forward.11} parent=11 // pred_check_branch
          %233 = sbr.rel (%p231) target = $region20
        $region19: #{generator2_forward.11} parent=11 // pred_region
          %s235 = ssub.s32 16, 16
          %236 = vsyncadd [#allocation8], %s235
          %s238 = sshll.u32 [#allocation9], 4
          %s239 = int_to_ptr.vmem [resolvable:$true] %s238
          %241 = dma.hbm_to_vmem [thread:$0]  %s3, 16, %s239, [#allocation8]
        $region20: #{generator2_forward.11} parent=11 // pred_fallthru
          _
        // Predicated region
        $region21: #{generator2_forward.11} parent=11 // pred_check
          %p242 = pneg %p116
        $region22: #{generator2_forward.11} parent=11 // pred_check_branch
          %244 = sbr.rel (%p242) target = $region24
        $region23: #{generator2_forward.11} parent=11 // pred_region
          %s246 = ssub.s32 256, 256
          %247 = vsyncadd [#allocation11], %s246
          %s248 = sshll.u32 [#allocation10], 4
          %s249 = int_to_ptr.vmem [resolvable:$true] %s248
          %254 = dma.hbm_to_vmem [thread:$0]  %s4, 256, %s249, [#allocation11], 64, 64, 4
        $region24: #{generator2_forward.11} parent=11 // pred_fallthru
          _
        // Predicated region
        $region25: #{generator2_forward.11} parent=11 // pred_check
          %p255 = pneg %p137
        $region26: #{generator2_forward.11} parent=11 // pred_check_branch
          %257 = sbr.rel (%p255) target = $region28
        $region27: #{generator2_forward.11} parent=11 // pred_region
          %s259 = ssub.s32 16, 16
          %260 = vsyncadd [#allocation11], %s259
          %s262 = sshll.u32 [#allocation12], 4
          %s263 = int_to_ptr.vmem [resolvable:$true] %s262
          %265 = dma.hbm_to_vmem [thread:$0]  %s5, 16, %s263, [#allocation11]
        $region28: #{generator2_forward.11} parent=11 // pred_fallthru
          _
        // Predicated region
        $region29: #{generator2_forward.11} parent=11 // pred_check
          %p266 = pneg %p158
        $region30: #{generator2_forward.11} parent=11 // pred_check_branch
          %268 = sbr.rel (%p266) target = $region32
        $region31: #{generator2_forward.11} parent=11 // pred_region
          %s270 = ssub.s32 256, 256
          %271 = vsyncadd [#allocation14], %s270
          %s272 = sshll.u32 [#allocation13], 4
          %s273 = int_to_ptr.vmem [resolvable:$true] %s272
          %278 = dma.hbm_to_vmem [thread:$0]  %s6, 256, %s273, [#allocation14], 64, 64, 4
        $region32: #{generator2_forward.11} parent=11 // pred_fallthru
          _
        // Predicated region
        $region33: #{generator2_forward.11} parent=11 // pred_check
          %p279 = pneg %p179
        $region34: #{generator2_forward.11} parent=11 // pred_check_branch
          %281 = sbr.rel (%p279) target = $region36
        $region35: #{generator2_forward.11} parent=11 // pred_region
          %s283 = ssub.s32 16, 16
          %284 = vsyncadd [#allocation14], %s283
          %s286 = sshll.u32 [#allocation15], 4
          %s287 = int_to_ptr.vmem [resolvable:$true] %s286
          %289 = dma.hbm_to_vmem [thread:$0]  %s7, 16, %s287, [#allocation14]
        $region36: #{generator2_forward.11} parent=11 // pred_fallthru
          _
      $region12: #{generator2_forward.11} parent=5 // pred_fallthru
        _
      %p290 = scmp.lt.s32.totalorder %s27, 2
      // Predicated region
      $region37: #{generator2_forward.11} parent=5 // pred_check
        %p291 = pneg %p290
      $region38: #{generator2_forward.11} parent=5 // pred_check_branch
        %293 = sbr.rel (%p291) target = $region40
      $region39: #{generator2_forward.11} parent=5 // pred_region
        // Predicated region
        $region41: #{generator2_forward.11} parent=39 // pred_check
          %p294 = pneg %p47
        $region42: #{generator2_forward.11} parent=39 // pred_check_branch
          %296 = sbr.rel (%p294) target = $region44
        $region43: #{generator2_forward.11} parent=39 // pred_region
          %s297 = sand.u32 %s37, 1
          %s298 = scalar_lea.sflag [#allocation5], %s297
          %s299 = sand.u32 %s37, 1
          %s300 = smul.addr %s299, 4
          %s301 = scalar_lea.vmem [#allocation4], %s300
          %s303 = ssub.s32 64, 64
          %304 = vsyncadd %s298, %s303
          %s305 = smul.addr %s27, 64
          %s306 = scalar_lea.hbm %s1, %s305
          %s308 = sshll.u32 %s301, 4
          %s309 = int_to_ptr.vmem [resolvable:$true] %s308
          %311 = dma.hbm_to_vmem [thread:$0]  %s306, 64, %s309, %s298
        $region44: #{generator2_forward.11} parent=39 // pred_fallthru
          _
      $region40: #{generator2_forward.11} parent=5 // pred_fallthru
        _
      %p312 = scmp.le.s32.totalorder 1, %s27
      %p313 = scmp.lt.s32.totalorder %s27, 3
      %p314 = pnand %p312, %p313
      %p315 = pneg %p314
      // Predicated region
      $region45: #{generator2_forward.11} parent=5 // pred_check
        _
      $region46: #{generator2_forward.11} parent=5 // pred_check_branch
        %317 = sbr.rel (%p314) target = $region48
      $region47: #{generator2_forward.11} parent=5 // pred_region
        %s318 = ssub.s32 %s27, 1
        %s319 = sand.u32 %s40, 1
        %s320 = scalar_lea.sflag [#allocation5], %s319
        %s321 = sand.u32 %s40, 1
        %s322 = smul.addr %s321, 4
        %s323 = scalar_lea.vmem [#allocation4], %s322
        // Predicated region
        $region49: #{generator2_forward.11} parent=47 // pred_check
          %p324 = pneg %p53
        $region50: #{generator2_forward.11} parent=47 // pred_check_branch
          %326 = sbr.rel (%p324) target = $region52
        $region51: #{generator2_forward.11} parent=47 // pred_region
          %327 = dma.done %s320, 64
        $region52: #{generator2_forward.11} parent=47 // pred_fallthru
          _
        // Predicated region
        $region53: #{generator2_forward.11} parent=47 // pred_check
          %p328 = pneg %p74
        $region54: #{generator2_forward.11} parent=47 // pred_check_branch
          %330 = sbr.rel (%p328) target = $region56
        $region55: #{generator2_forward.11} parent=47 // pred_region
          %331 = dma.done [#allocation8], 16
        $region56: #{generator2_forward.11} parent=47 // pred_fallthru
          _
        // Predicated region
        $region57: #{generator2_forward.11} parent=47 // pred_check
          %p332 = pneg %p95
        $region58: #{generator2_forward.11} parent=47 // pred_check_branch
          %334 = sbr.rel (%p332) target = $region60
        $region59: #{generator2_forward.11} parent=47 // pred_region
          %335 = dma.done [#allocation8], 16
        $region60: #{generator2_forward.11} parent=47 // pred_fallthru
          _
        // Predicated region
        $region61: #{generator2_forward.11} parent=47 // pred_check
          %p336 = pneg %p116
        $region62: #{generator2_forward.11} parent=47 // pred_check_branch
          %338 = sbr.rel (%p336) target = $region64
        $region63: #{generator2_forward.11} parent=47 // pred_region
          %339 = dma.done [#allocation11], 256
        $region64: #{generator2_forward.11} parent=47 // pred_fallthru
          _
        // Predicated region
        $region65: #{generator2_forward.11} parent=47 // pred_check
          %p340 = pneg %p137
        $region66: #{generator2_forward.11} parent=47 // pred_check_branch
          %342 = sbr.rel (%p340) target = $region68
        $region67: #{generator2_forward.11} parent=47 // pred_region
          %343 = dma.done [#allocation11], 16
        $region68: #{generator2_forward.11} parent=47 // pred_fallthru
          _
        // Predicated region
        $region69: #{generator2_forward.11} parent=47 // pred_check
          %p344 = pneg %p158
        $region70: #{generator2_forward.11} parent=47 // pred_check_branch
          %346 = sbr.rel (%p344) target = $region72
        $region71: #{generator2_forward.11} parent=47 // pred_region
          %347 = dma.done [#allocation14], 256
        $region72: #{generator2_forward.11} parent=47 // pred_fallthru
          _
        // Predicated region
        $region73: #{generator2_forward.11} parent=47 // pred_check
          %p348 = pneg %p179
        $region74: #{generator2_forward.11} parent=47 // pred_check_branch
          %350 = sbr.rel (%p348) target = $region76
        $region75: #{generator2_forward.11} parent=47 // pred_region
          %351 = dma.done [#allocation14], 16
        $region76: #{generator2_forward.11} parent=47 // pred_fallthru
          _
        %s352 = sand.u32 %s40, 1
        %s353 = scalar_lea.sflag [#allocation5], %s352
        %s354 = sand.u32 %s40, 1
        %s355 = smul.addr %s354, 4
        %s356 = scalar_lea.vmem [#allocation4], %s355
        %p357 = pneg %p53
        %p358 = pneg %p50
        %p359 = pneg %p74
        %p360 = pneg %p71
        %p361 = pneg %p95
        %p362 = pneg %p92
        %p363 = pneg %p116
        %p364 = pneg %p113
        %p365 = pneg %p137
        %p366 = pneg %p134
        %p367 = pneg %p158
        %p368 = pneg %p155
        %p369 = pneg %p179
        %p370 = pneg %p176
        %p371 = pneg %p205
        %p372 = pneg %p202
        %s373 = sand.u32 %s192, 1
        %s374 = scalar_lea.sflag [#allocation6], %s373
        %s375 = sand.u32 %s192, 1
        %s376 = smul.addr %s375, 4
        %s377 = scalar_lea.vmem [#allocation16], %s376
        %v379 = vld [vmem:[%s323] sm:$0xf]
        %v380 = vunpack.c.l.bf16 %v379
        %vm381 = vcmask 261120
        %v382 = vsel %vm381, %v380, 0.0
        %383 = vadd.xlane.f32.xlu0 %v382
        %v384 = vpop.xlane.xlu0 %383
        %v385 = vrcp.pop 32.0
        %v386 = vmul.f32 %v384, %v385
        %v387 = vsub.f32 %v380, %v386
        %v388 = vmul.f32 %v387, %v387
        %v389 = vsel %vm381, %v388, 0.0
        %390 = vadd.xlane.f32.xlu0 %v389
        %v391 = vpop.xlane.xlu0 %390
        %v392 = vmul.f32 %v391, %v385
        %v393 = vadd.f32 %v392, 1e-06
        %v394 = vrsqrt.pop %v393
        %v395 = vmul.f32 %v387, %v394
        %v396 = vld [vmem:[#allocation7] sm:$0x1]
        %v398 = vlaneseq
        %v399 = vshrl.u32 %v398, 7
        %v400 = vsub.s32 0, %v399
        %v401 = vrot.slane %v396, %v400
        %v403 = vmul.f32 %v395, %v401
        %v404 = vld [vmem:[#allocation9] sm:$0x1]
        %v406 = vlaneseq
        %v407 = vshrl.u32 %v406, 7
        %v408 = vsub.s32 0, %v407
        %v409 = vrot.slane %v404, %v408
        %v411 = vadd.f32 %v403, %v409
        %v412 = vpack.c.bf16 %v411, %v411
        %v413 = vld [vmem:[#allocation10] sm:$0xf]
        %v414 = vld [vmem:[#allocation10 + $0x4] sm:$0xf]
        %v415 = vld [vmem:[#allocation10 + $0x8] sm:$0xf]
        %v416 = vld [vmem:[#allocation10 + $0xc] sm:$0xf]
        %v417 = vld [vmem:[#allocation12] sm:$0x1]
        %v419 = vlaneseq
        %v420 = vshrl.u32 %v419, 7
        %v421 = vsub.s32 0, %v420
        %v422 = vrot.slane %v417, %v421
        %v428 = vunpack.c.l.b16 %v413
        %v429 = vunpack.c.l.b16 %v414
        %v430 = vunpack.c.l.b16 %v415
        %v431 = vunpack.c.l.b16 %v416
        %v432 = vpack.c.b16 %v429, %v428
        %v433 = vpack.c.b16 %v431, %v430
        %v437 = vsel %vm381, %v412, 0
        %439 = vmatprep.subr.bf16.mxu0 0
        %440 = vmatpush1.bf16.msra.mxu0 %v432
        %441 = vmatprep.subr.bf16.mxu0 0
        %442 = vmatpush1.bf16.msra.mxu0 %v433
        %443 = vmatprep.subr.bf16.mxu0 0
        %444 = vmatpush1.bf16.msra.mxu0 0
        %445 = vmatprep.subr.bf16.mxu0 0
        %446 = vmatpush1.bf16.msra.mxu0 0
        %447 = vmatprep.subr.bf16.mxu0 0
        %448 = vmatpush1.bf16.msra.mxu0 0
        %449 = vmatprep.subr.bf16.mxu0 0
        %450 = vmatpush1.bf16.msra.mxu0 0
        %451 = vmatprep.subr.bf16.mxu0 0
        %452 = vmatpush1.bf16.msra.mxu0 0
        %453 = vmatprep.subr.bf16.mxu0 0
        %454 = vmatpush1.bf16.msra.mxu0 0
        %455 = vmatprep.subr.bf16.mxu0 0
        %456 = vmatpush1.bf16.msra.mxu0 0
        %457 = vmatprep.subr.bf16.mxu0 0
        %458 = vmatpush1.bf16.msra.mxu0 0
        %459 = vmatprep.subr.bf16.mxu0 0
        %460 = vmatpush1.bf16.msra.mxu0 0
        %461 = vmatprep.subr.bf16.mxu0 0
        %462 = vmatpush1.bf16.msra.mxu0 0
        %463 = vmatprep.subr.bf16.mxu0 0
        %464 = vmatpush1.bf16.msra.mxu0 0
        %465 = vmatprep.subr.bf16.mxu0 0
        %466 = vmatpush1.bf16.msra.mxu0 0
        %467 = vmatprep.subr.bf16.mxu0 0
        %468 = vmatpush1.bf16.msra.mxu0 0
        %469 = vmatprep.subr.bf16.mxu0 0
        %470 = vmatpush1.bf16.msra.mxu0 0
        %471 = vmatprep.mubr.bf16.mxu0 0
        %472 = vmatmul.mubr.bf16.gmra.mrb[0].mxu0 %v437
        %v473 = vpop.f32.mrb[0].mxu0
        %v474 = vadd.f32 %v422, %v473
        %v475 = vpop.f32.mrb[0].mxu0
        %v476 = vpop.f32.mrb[0].mxu0
        %v477 = vpop.f32.mrb[0].mxu0
        %478 = vdwg.mxu0
        %s479 = sld [smem:[#allocation3 + %s32]]
        %v480 = vlaneseq
        %v481 = vand.u32 %v480, 127
        %v482 = vstv %s479
        %vm483 = vcmp.lt.s32.totalorder %v481, %v482
        %v484 = vmul.f32 %v474, 0.35355338
        %v485 = vpack.c.bf16 %v484, %v484
        %v486 = vpack.c.bf16 %v474, %v474
        %488 = vrot.lane.b32.xlu0 %v486, 96
        %v489 = vpop.permute.xlu0 %488
        %vm490 = vcmask 64512
        %v492 = vsel %vm490, %v485, 0
        %v495 = vsel %vm490, %v489, 0
        %497 = vmatprep.subr.bf16.mxu0 0
        %498 = vmatpush1.bf16.xpose.msra.mxu0 %v495
        %499 = vmatprep.subr.bf16.mxu0 0
        %500 = vmatpush1.bf16.xpose.msra.mxu0 0
        %501 = vmatprep.subr.bf16.mxu0 0
        %502 = vmatpush1.bf16.xpose.msra.mxu0 0
        %503 = vmatprep.subr.bf16.mxu0 0
        %504 = vmatpush1.bf16.xpose.msra.mxu0 0
        %505 = vmatprep.subr.bf16.mxu0 0
        %506 = vmatpush1.bf16.xpose.msra.mxu0 0
        %507 = vmatprep.subr.bf16.mxu0 0
        %508 = vmatpush1.bf16.xpose.msra.mxu0 0
        %509 = vmatprep.subr.bf16.mxu0 0
        %510 = vmatpush1.bf16.xpose.msra.mxu0 0
        %511 = vmatprep.subr.bf16.mxu0 0
        %512 = vmatpush1.bf16.xpose.msra.mxu0 0
        %513 = vmatprep.subr.bf16.mxu0 0
        %514 = vmatpush1.bf16.xpose.msra.mxu0 0
        %515 = vmatprep.subr.bf16.mxu0 0
        %516 = vmatpush1.bf16.xpose.msra.mxu0 0
        %517 = vmatprep.subr.bf16.mxu0 0
        %518 = vmatpush1.bf16.xpose.msra.mxu0 0
        %519 = vmatprep.subr.bf16.mxu0 0
        %520 = vmatpush1.bf16.xpose.msra.mxu0 0
        %521 = vmatprep.subr.bf16.mxu0 0
        %522 = vmatpush1.bf16.xpose.msra.mxu0 0
        %523 = vmatprep.subr.bf16.mxu0 0
        %524 = vmatpush1.bf16.xpose.msra.mxu0 0
        %525 = vmatprep.subr.bf16.mxu0 0
        %526 = vmatpush1.bf16.xpose.msra.mxu0 0
        %527 = vmatprep.subr.bf16.mxu0 0
        %528 = vmatpush1.bf16.xpose.msra.mxu0 0
        %529 = vmatprep.mubr.bf16.mxu0 0
        %530 = vmatmul.mubr.bf16.gmra.mrb[0].mxu0 %v492
        %v531 = vpop.f32.mrb[0].mxu0
        %v532 = vadd.f32 0.0, %v531
        %v533 = vpop.f32.mrb[0].mxu0
        %v534 = vpop.f32.mrb[0].mxu0
        %v535 = vpop.f32.mrb[0].mxu0
        %536 = vdwg.mxu0
        %v537 = vsel %vm483, %v532, -1e+09
        %v538 = vsel %vm490, %v537, -inf
        %539 = vmax.xlane.f32.xlu0 %v538
        %v540 = vpop.xlane.xlu0 %539
        %v541 = vsub.f32 %v537, %v540
        %v542 = vmul.f32 %v541, 1.442695
        %v543 = vpow.pop %v542
        %v544 = vsel %vm490, %v543, 0.0
        %545 = vadd.xlane.f32.xlu0 %v544
        %v546 = vpop.xlane.xlu0 %545
        %v547 = vrcp.pop %v546
        %v548 = vmul.f32 %v543, %v547
        %v549 = vpack.c.bf16 %v548, %v548
        %550 = vrot.lane.b32.xlu0 %v486, 64
        %v551 = vpop.permute.xlu0 %550
        %v553 = vsel %vm490, %v549, 0
        %vm555 = vcmask 1043456
        %v557 = vsel %vm555, %v551, 0
        %559 = vmatprep.subr.bf16.mxu0 0
        %560 = vmatpush1.bf16.msra.mxu0 %v557
        %561 = vmatprep.subr.bf16.mxu0 0
        %562 = vmatpush1.bf16.msra.mxu0 0
        %563 = vmatprep.subr.bf16.mxu0 0
        %564 = vmatpush1.bf16.msra.mxu0 0
        %565 = vmatprep.subr.bf16.mxu0 0
        %566 = vmatpush1.bf16.msra.mxu0 0
        %567 = vmatprep.subr.bf16.mxu0 0
        %568 = vmatpush1.bf16.msra.mxu0 0
        %569 = vmatprep.subr.bf16.mxu0 0
        %570 = vmatpush1.bf16.msra.mxu0 0
        %571 = vmatprep.subr.bf16.mxu0 0
        %572 = vmatpush1.bf16.msra.mxu0 0
        %573 = vmatprep.subr.bf16.mxu0 0
        %574 = vmatpush1.bf16.msra.mxu0 0
        %575 = vmatprep.subr.bf16.mxu0 0
        %576 = vmatpush1.bf16.msra.mxu0 0
        %577 = vmatprep.subr.bf16.mxu0 0
        %578 = vmatpush1.bf16.msra.mxu0 0
        %579 = vmatprep.subr.bf16.mxu0 0
        %580 = vmatpush1.bf16.msra.mxu0 0
        %581 = vmatprep.subr.bf16.mxu0 0
        %582 = vmatpush1.bf16.msra.mxu0 0
        %583 = vmatprep.subr.bf16.mxu0 0
        %584 = vmatpush1.bf16.msra.mxu0 0
        %585 = vmatprep.subr.bf16.mxu0 0
        %586 = vmatpush1.bf16.msra.mxu0 0
        %587 = vmatprep.subr.bf16.mxu0 0
        %588 = vmatpush1.bf16.msra.mxu0 0
        %589 = vmatprep.subr.bf16.mxu0 0
        %590 = vmatpush1.bf16.msra.mxu0 0
        %591 = vmatprep.mubr.bf16.mxu0 0
        %592 = vmatmul.mubr.bf16.gmra.mrb[0].mxu0 %v553
        %v593 = vpop.f32.mrb[0].mxu0
        %v594 = vadd.f32 0.0, %v593
        %v595 = vpop.f32.mrb[0].mxu0
        %v596 = vpop.f32.mrb[0].mxu0
        %v597 = vpop.f32.mrb[0].mxu0
        %598 = vdwg.mxu0
        %600 = vrot.lane.b32.xlu0 %v485, 120
        %v601 = vpop.permute.xlu0 %600
        %602 = vrot.lane.b32.xlu0 %v486, 88
        %v603 = vpop.permute.xlu0 %602
        %v605 = vsel %vm490, %v601, 0
        %v608 = vsel %vm490, %v603, 0
        %610 = vmatprep.subr.bf16.mxu0 0
        %611 = vmatpush1.bf16.xpose.msra.mxu0 %v608
        %612 = vmatprep.subr.bf16.mxu0 0
        %613 = vmatpush1.bf16.xpose.msra.mxu0 0
        %614 = vmatprep.subr.bf16.mxu0 0
        %615 = vmatpush1.bf16.xpose.msra.mxu0 0
        %616 = vmatprep.subr.bf16.mxu0 0
        %617 = vmatpush1.bf16.xpose.msra.mxu0 0
        %618 = vmatprep.subr.bf16.mxu0 0
        %619 = vmatpush1.bf16.xpose.msra.mxu0 0
        %620 = vmatprep.subr.bf16.mxu0 0
        %621 = vmatpush1.bf16.xpose.msra.mxu0 0
        %622 = vmatprep.subr.bf16.mxu0 0
        %623 = vmatpush1.bf16.xpose.msra.mxu0 0
        %624 = vmatprep.subr.bf16.mxu0 0
        %625 = vmatpush1.bf16.xpose.msra.mxu0 0
        %626 = vmatprep.subr.bf16.mxu0 0
        %627 = vmatpush1.bf16.xpose.msra.mxu0 0
        %628 = vmatprep.subr.bf16.mxu0 0
        %629 = vmatpush1.bf16.xpose.msra.mxu0 0
        %630 = vmatprep.subr.bf16.mxu0 0
        %631 = vmatpush1.bf16.xpose.msra.mxu0 0
        %632 = vmatprep.subr.bf16.mxu0 0
        %633 = vmatpush1.bf16.xpose.msra.mxu0 0
        %634 = vmatprep.subr.bf16.mxu0 0
        %635 = vmatpush1.bf16.xpose.msra.mxu0 0
        %636 = vmatprep.subr.bf16.mxu0 0
        %637 = vmatpush1.bf16.xpose.msra.mxu0 0
        %638 = vmatprep.subr.bf16.mxu0 0
        %639 = vmatpush1.bf16.xpose.msra.mxu0 0
        %640 = vmatprep.subr.bf16.mxu0 0
        %641 = vmatpush1.bf16.xpose.msra.mxu0 0
        %642 = vmatprep.mubr.bf16.mxu0 0
        %643 = vmatmul.mubr.bf16.gmra.mrb[0].mxu0 %v605
        %v644 = vpop.f32.mrb[0].mxu0
        %v645 = vadd.f32 0.0, %v644
        %v646 = vpop.f32.mrb[0].mxu0
        %v647 = vpop.f32.mrb[0].mxu0
        %v648 = vpop.f32.mrb[0].mxu0
        %649 = vdwg.mxu0
        %v650 = vsel %vm483, %v645, -1e+09
        %v651 = vsel %vm490, %v650, -inf
        %652 = vmax.xlane.f32.xlu0 %v651
        %v653 = vpop.xlane.xlu0 %652
        %v654 = vsub.f32 %v650, %v653
        %v655 = vmul.f32 %v654, 1.442695
        %v656 = vpow.pop %v655
        %v657 = vsel %vm490, %v656, 0.0
        %658 = vadd.xlane.f32.xlu0 %v657
        %v659 = vpop.xlane.xlu0 %658
        %v660 = vrcp.pop %v659
        %v661 = vmul.f32 %v656, %v660
        %v662 = vpack.c.bf16 %v661, %v661
        %663 = vrot.lane.b32.xlu0 %v486, 56
        %v664 = vpop.permute.xlu0 %663
        %v666 = vsel %vm490, %v662, 0
        %v669 = vsel %vm555, %v664, 0
        %671 = vmatprep.subr.bf16.mxu0 0
        %672 = vmatpush1.bf16.msra.mxu0 %v669
        %673 = vmatprep.subr.bf16.mxu0 0
        %674 = vmatpush1.bf16.msra.mxu0 0
        %675 = vmatprep.subr.bf16.mxu0 0
        %676 = vmatpush1.bf16.msra.mxu0 0
        %677 = vmatprep.subr.bf16.mxu0 0
        %678 = vmatpush1.bf16.msra.mxu0 0
        %679 = vmatprep.subr.bf16.mxu0 0
        %680 = vmatpush1.bf16.msra.mxu0 0
        %681 = vmatprep.subr.bf16.mxu0 0
        %682 = vmatpush1.bf16.msra.mxu0 0
        %683 = vmatprep.subr.bf16.mxu0 0
        %684 = vmatpush1.bf16.msra.mxu0 0
        %685 = vmatprep.subr.bf16.mxu0 0
        %686 = vmatpush1.bf16.msra.mxu0 0
        %687 = vmatprep.subr.bf16.mxu0 0
        %688 = vmatpush1.bf16.msra.mxu0 0
        %689 = vmatprep.subr.bf16.mxu0 0
        %690 = vmatpush1.bf16.msra.mxu0 0
        %691 = vmatprep.subr.bf16.mxu0 0
        %692 = vmatpush1.bf16.msra.mxu0 0
        %693 = vmatprep.subr.bf16.mxu0 0
        %694 = vmatpush1.bf16.msra.mxu0 0
        %695 = vmatprep.subr.bf16.mxu0 0
        %696 = vmatpush1.bf16.msra.mxu0 0
        %697 = vmatprep.subr.bf16.mxu0 0
        %698 = vmatpush1.bf16.msra.mxu0 0
        %699 = vmatprep.subr.bf16.mxu0 0
        %700 = vmatpush1.bf16.msra.mxu0 0
        %701 = vmatprep.subr.bf16.mxu0 0
        %702 = vmatpush1.bf16.msra.mxu0 0
        %703 = vmatprep.mubr.bf16.mxu0 0
        %704 = vmatmul.mubr.bf16.gmra.mrb[0].mxu0 %v666
        %v705 = vpop.f32.mrb[0].mxu0
        %v706 = vadd.f32 0.0, %v705
        %v707 = vpop.f32.mrb[0].mxu0
        %v708 = vpop.f32.mrb[0].mxu0
        %v709 = vpop.f32.mrb[0].mxu0
        %710 = vdwg.mxu0
        %711 = vrot.lane.b32.xlu0 %v485, 112
        %v712 = vpop.permute.xlu0 %711
        %713 = vrot.lane.b32.xlu0 %v486, 80
        %v714 = vpop.permute.xlu0 %713
        %v716 = vsel %vm490, %v712, 0
        %v719 = vsel %vm490, %v714, 0
        %721 = vmatprep.subr.bf16.mxu0 0
        %722 = vmatpush1.bf16.xpose.msra.mxu0 %v719
        %723 = vmatprep.subr.bf16.mxu0 0
        %724 = vmatpush1.bf16.xpose.msra.mxu0 0
        %725 = vmatprep.subr.bf16.mxu0 0
        %726 = vmatpush1.bf16.xpose.msra.mxu0 0
        %727 = vmatprep.subr.bf16.mxu0 0
        %728 = vmatpush1.bf16.xpose.msra.mxu0 0
        %729 = vmatprep.subr.bf16.mxu0 0
        %730 = vmatpush1.bf16.xpose.msra.mxu0 0
        %731 = vmatprep.subr.bf16.mxu0 0
        %732 = vmatpush1.bf16.xpose.msra.mxu0 0
        %733 = vmatprep.subr.bf16.mxu0 0
        %734 = vmatpush1.bf16.xpose.msra.mxu0 0
        %735 = vmatprep.subr.bf16.mxu0 0
        %736 = vmatpush1.bf16.xpose.msra.mxu0 0
        %737 = vmatprep.subr.bf16.mxu0 0
        %738 = vmatpush1.bf16.xpose.msra.mxu0 0
        %739 = vmatprep.subr.bf16.mxu0 0
        %740 = vmatpush1.bf16.xpose.msra.mxu0 0
        %741 = vmatprep.subr.bf16.mxu0 0
        %742 = vmatpush1.bf16.xpose.msra.mxu0 0
        %743 = vmatprep.subr.bf16.mxu0 0
        %744 = vmatpush1.bf16.xpose.msra.mxu0 0
        %745 = vmatprep.subr.bf16.mxu0 0
        %746 = vmatpush1.bf16.xpose.msra.mxu0 0
        %747 = vmatprep.subr.bf16.mxu0 0
        %748 = vmatpush1.bf16.xpose.msra.mxu0 0
        %749 = vmatprep.subr.bf16.mxu0 0
        %750 = vmatpush1.bf16.xpose.msra.mxu0 0
        %751 = vmatprep.subr.bf16.mxu0 0
        %752 = vmatpush1.bf16.xpose.msra.mxu0 0
        %753 = vmatprep.mubr.bf16.mxu0 0
        %754 = vmatmul.mubr.bf16.gmra.mrb[0].mxu0 %v716
        %v755 = vpop.f32.mrb[0].mxu0
        %v756 = vadd.f32 0.0, %v755
        %v757 = vpop.f32.mrb[0].mxu0
        %v758 = vpop.f32.mrb[0].mxu0
        %v759 = vpop.f32.mrb[0].mxu0
        %760 = vdwg.mxu0
        %v761 = vsel %vm483, %v756, -1e+09
        %v762 = vsel %vm490, %v761, -inf
        %763 = vmax.xlane.f32.xlu0 %v762
        %v764 = vpop.xlane.xlu0 %763
        %v765 = vsub.f32 %v761, %v764
        %v766 = vmul.f32 %v765, 1.442695
        %v767 = vpow.pop %v766
        %v768 = vsel %vm490, %v767, 0.0
        %769 = vadd.xlane.f32.xlu0 %v768
        %v770 = vpop.xlane.xlu0 %769
        %v771 = vrcp.pop %v770
        %v772 = vmul.f32 %v767, %v771
        %v773 = vpack.c.bf16 %v772, %v772
        %774 = vrot.lane.b32.xlu0 %v486, 48
        %v775 = vpop.permute.xlu0 %774
        %v777 = vsel %vm490, %v773, 0
        %v780 = vsel %vm555, %v775, 0
        %782 = vmatprep.subr.bf16.mxu0 0
        %783 = vmatpush1.bf16.msra.mxu0 %v780
        %784 = vmatprep.subr.bf16.mxu0 0
        %785 = vmatpush1.bf16.msra.mxu0 0
        %786 = vmatprep.subr.bf16.mxu0 0
        %787 = vmatpush1.bf16.msra.mxu0 0
        %788 = vmatprep.subr.bf16.mxu0 0
        %789 = vmatpush1.bf16.msra.mxu0 0
        %790 = vmatprep.subr.bf16.mxu0 0
        %791 = vmatpush1.bf16.msra.mxu0 0
        %792 = vmatprep.subr.bf16.mxu0 0
        %793 = vmatpush1.bf16.msra.mxu0 0
        %794 = vmatprep.subr.bf16.mxu0 0
        %795 = vmatpush1.bf16.msra.mxu0 0
        %796 = vmatprep.subr.bf16.mxu0 0
        %797 = vmatpush1.bf16.msra.mxu0 0
        %798 = vmatprep.subr.bf16.mxu0 0
        %799 = vmatpush1.bf16.msra.mxu0 0
        %800 = vmatprep.subr.bf16.mxu0 0
        %801 = vmatpush1.bf16.msra.mxu0 0
        %802 = vmatprep.subr.bf16.mxu0 0
        %803 = vmatpush1.bf16.msra.mxu0 0
        %804 = vmatprep.subr.bf16.mxu0 0
        %805 = vmatpush1.bf16.msra.mxu0 0
        %806 = vmatprep.subr.bf16.mxu0 0
        %807 = vmatpush1.bf16.msra.mxu0 0
        %808 = vmatprep.subr.bf16.mxu0 0
        %809 = vmatpush1.bf16.msra.mxu0 0
        %810 = vmatprep.subr.bf16.mxu0 0
        %811 = vmatpush1.bf16.msra.mxu0 0
        %812 = vmatprep.subr.bf16.mxu0 0
        %813 = vmatpush1.bf16.msra.mxu0 0
        %814 = vmatprep.mubr.bf16.mxu0 0
        %815 = vmatmul.mubr.bf16.gmra.mrb[0].mxu0 %v777
        %v816 = vpop.f32.mrb[0].mxu0
        %v817 = vadd.f32 0.0, %v816
        %v818 = vpop.f32.mrb[0].mxu0
        %v819 = vpop.f32.mrb[0].mxu0
        %v820 = vpop.f32.mrb[0].mxu0
        %821 = vdwg.mxu0
        %822 = vrot.lane.b32.xlu0 %v485, 104
        %v823 = vpop.permute.xlu0 %822
        %824 = vrot.lane.b32.xlu0 %v486, 72
        %v825 = vpop.permute.xlu0 %824
        %v827 = vsel %vm490, %v823, 0
        %v830 = vsel %vm490, %v825, 0
        %832 = vmatprep.subr.bf16.mxu0 0
        %833 = vmatpush1.bf16.xpose.msra.mxu0 %v830
        %834 = vmatprep.subr.bf16.mxu0 0
        %835 = vmatpush1.bf16.xpose.msra.mxu0 0
        %836 = vmatprep.subr.bf16.mxu0 0
        %837 = vmatpush1.bf16.xpose.msra.mxu0 0
        %838 = vmatprep.subr.bf16.mxu0 0
        %839 = vmatpush1.bf16.xpose.msra.mxu0 0
        %840 = vmatprep.subr.bf16.mxu0 0
        %841 = vmatpush1.bf16.xpose.msra.mxu0 0
        %842 = vmatprep.subr.bf16.mxu0 0
        %843 = vmatpush1.bf16.xpose.msra.mxu0 0
        %844 = vmatprep.subr.bf16.mxu0 0
        %845 = vmatpush1.bf16.xpose.msra.mxu0 0
        %846 = vmatprep.subr.bf16.mxu0 0
        %847 = vmatpush1.bf16.xpose.msra.mxu0 0
        %848 = vmatprep.subr.bf16.mxu0 0
        %849 = vmatpush1.bf16.xpose.msra.mxu0 0
        %850 = vmatprep.subr.bf16.mxu0 0
        %851 = vmatpush1.bf16.xpose.msra.mxu0 0
        %852 = vmatprep.subr.bf16.mxu0 0
        %853 = vmatpush1.bf16.xpose.msra.mxu0 0
        %854 = vmatprep.subr.bf16.mxu0 0
        %855 = vmatpush1.bf16.xpose.msra.mxu0 0
        %856 = vmatprep.subr.bf16.mxu0 0
        %857 = vmatpush1.bf16.xpose.msra.mxu0 0
        %858 = vmatprep.subr.bf16.mxu0 0
        %859 = vmatpush1.bf16.xpose.msra.mxu0 0
        %860 = vmatprep.subr.bf16.mxu0 0
        %861 = vmatpush1.bf16.xpose.msra.mxu0 0
        %862 = vmatprep.subr.bf16.mxu0 0
        %863 = vmatpush1.bf16.xpose.msra.mxu0 0
        %864 = vmatprep.mubr.bf16.mxu0 0
        %865 = vmatmul.mubr.bf16.gmra.mrb[0].mxu0 %v827
        %v866 = vpop.f32.mrb[0].mxu0
        %v867 = vadd.f32 0.0, %v866
        %v868 = vpop.f32.mrb[0].mxu0
        %v869 = vpop.f32.mrb[0].mxu0
        %v870 = vpop.f32.mrb[0].mxu0
        %871 = vdwg.mxu0
        %v872 = vsel %vm483, %v867, -1e+09
        %v873 = vsel %vm490, %v872, -inf
        %874 = vmax.xlane.f32.xlu0 %v873
        %v875 = vpop.xlane.xlu0 %874
        %v876 = vsub.f32 %v872, %v875
        %v877 = vmul.f32 %v876, 1.442695
        %v878 = vpow.pop %v877
        %v879 = vsel %vm490, %v878, 0.0
        %880 = vadd.xlane.f32.xlu0 %v879
        %v881 = vpop.xlane.xlu0 %880
        %v882 = vrcp.pop %v881
        %v883 = vmul.f32 %v878, %v882
        %v884 = vpack.c.bf16 %v883, %v883
        %885 = vrot.lane.b32.xlu0 %v486, 40
        %v886 = vpop.permute.xlu0 %885
        %v888 = vsel %vm490, %v884, 0
        %v891 = vsel %vm555, %v886, 0
        %893 = vmatprep.subr.bf16.mxu0 0
        %894 = vmatpush1.bf16.msra.mxu0 %v891
        %895 = vmatprep.subr.bf16.mxu0 0
        %896 = vmatpush1.bf16.msra.mxu0 0
        %897 = vmatprep.subr.bf16.mxu0 0
        %898 = vmatpush1.bf16.msra.mxu0 0
        %899 = vmatprep.subr.bf16.mxu0 0
        %900 = vmatpush1.bf16.msra.mxu0 0
        %901 = vmatprep.subr.bf16.mxu0 0
        %902 = vmatpush1.bf16.msra.mxu0 0
        %903 = vmatprep.subr.bf16.mxu0 0
        %904 = vmatpush1.bf16.msra.mxu0 0
        %905 = vmatprep.subr.bf16.mxu0 0
        %906 = vmatpush1.bf16.msra.mxu0 0
        %907 = vmatprep.subr.bf16.mxu0 0
        %908 = vmatpush1.bf16.msra.mxu0 0
        %909 = vmatprep.subr.bf16.mxu0 0
        %910 = vmatpush1.bf16.msra.mxu0 0
        %911 = vmatprep.subr.bf16.mxu0 0
        %912 = vmatpush1.bf16.msra.mxu0 0
        %913 = vmatprep.subr.bf16.mxu0 0
        %914 = vmatpush1.bf16.msra.mxu0 0
        %915 = vmatprep.subr.bf16.mxu0 0
        %916 = vmatpush1.bf16.msra.mxu0 0
        %917 = vmatprep.subr.bf16.mxu0 0
        %918 = vmatpush1.bf16.msra.mxu0 0
        %919 = vmatprep.subr.bf16.mxu0 0
        %920 = vmatpush1.bf16.msra.mxu0 0
        %921 = vmatprep.subr.bf16.mxu0 0
        %922 = vmatpush1.bf16.msra.mxu0 0
        %923 = vmatprep.subr.bf16.mxu0 0
        %924 = vmatpush1.bf16.msra.mxu0 0
        %925 = vmatprep.mubr.bf16.mxu0 0
        %926 = vmatmul.mubr.bf16.gmra.mrb[0].mxu0 %v888
        %v927 = vpop.f32.mrb[0].mxu0
        %v928 = vadd.f32 0.0, %v927
        %v929 = vpop.f32.mrb[0].mxu0
        %v930 = vpop.f32.mrb[0].mxu0
        %v931 = vpop.f32.mrb[0].mxu0
        %932 = vdwg.mxu0
        %934 = vrot.lane.b32.xlu0 %v706, 8
        %v935 = vpop.permute.xlu0 %934
        %938 = vrot.lane.b32.xlu0 %v817, 16
        %v939 = vpop.permute.xlu0 %938
        %942 = vrot.lane.b32.xlu0 %v928, 24
        %v943 = vpop.permute.xlu0 %942
        %v945 = vsel %vm490, %v594, %v935
        %vm946 = vcmask 130048
        %v947 = vsel %vm946, %v945, %v939
        %vm948 = vcmask 195584
        %v949 = vsel %vm948, %v947, %v943
        %v950 = vpack.c.bf16 %v949, %v949
        %v951 = vld [vmem:[#allocation13] sm:$0xf]
        %v952 = vld [vmem:[#allocation13 + $0x4] sm:$0xf]
        %v953 = vld [vmem:[#allocation13 + $0x8] sm:$0xf]
        %v954 = vld [vmem:[#allocation13 + $0xc] sm:$0xf]
        %v955 = vld [vmem:[#allocation15] sm:$0x1]
        %v957 = vlaneseq
        %v958 = vshrl.u32 %v957, 7
        %v959 = vsub.s32 0, %v958
        %v960 = vrot.slane %v955, %v959
        %v966 = vunpack.c.l.b16 %v951
        %v967 = vunpack.c.l.b16 %v952
        %v968 = vunpack.c.l.b16 %v953
        %v969 = vunpack.c.l.b16 %v954
        %v970 = vpack.c.b16 %v967, %v966
        %v971 = vpack.c.b16 %v969, %v968
        %v975 = vsel %vm381, %v950, 0
        %977 = vmatprep.subr.bf16.mxu0 0
        %978 = vmatpush1.bf16.msra.mxu0 %v970
        %979 = vmatprep.subr.bf16.mxu0 0
        %980 = vmatpush1.bf16.msra.mxu0 %v971
        %981 = vmatprep.subr.bf16.mxu0 0
        %982 = vmatpush1.bf16.msra.mxu0 0
        %983 = vmatprep.subr.bf16.mxu0 0
        %984 = vmatpush1.bf16.msra.mxu0 0
        %985 = vmatprep.subr.bf16.mxu0 0
        %986 = vmatpush1.bf16.msra.mxu0 0
        %987 = vmatprep.subr.bf16.mxu0 0
        %988 = vmatpush1.bf16.msra.mxu0 0
        %989 = vmatprep.subr.bf16.mxu0 0
        %990 = vmatpush1.bf16.msra.mxu0 0
        %991 = vmatprep.subr.bf16.mxu0 0
        %992 = vmatpush1.bf16.msra.mxu0 0
        %993 = vmatprep.subr.bf16.mxu0 0
        %994 = vmatpush1.bf16.msra.mxu0 0
        %995 = vmatprep.subr.bf16.mxu0 0
        %996 = vmatpush1.bf16.msra.mxu0 0
        %997 = vmatprep.subr.bf16.mxu0 0
        %998 = vmatpush1.bf16.msra.mxu0 0
        %999 = vmatprep.subr.bf16.mxu0 0
        %1000 = vmatpush1.bf16.msra.mxu0 0
        %1001 = vmatprep.subr.bf16.mxu0 0
        %1002 = vmatpush1.bf16.msra.mxu0 0
        %1003 = vmatprep.subr.bf16.mxu0 0
        %1004 = vmatpush1.bf16.msra.mxu0 0
        %1005 = vmatprep.subr.bf16.mxu0 0
        %1006 = vmatpush1.bf16.msra.mxu0 0
        %1007 = vmatprep.subr.bf16.mxu0 0
        %1008 = vmatpush1.bf16.msra.mxu0 0
        %1009 = vmatprep.mubr.bf16.mxu0 0
        %1010 = vmatmul.mubr.bf16.gmra.mrb[0].mxu0 %v975
        %v1011 = vpop.f32.mrb[0].mxu0
        %v1012 = vadd.f32 %v960, %v1011
        %v1013 = vpop.f32.mrb[0].mxu0
        %v1014 = vpop.f32.mrb[0].mxu0
        %v1015 = vpop.f32.mrb[0].mxu0
        %1016 = vdwg.mxu0
        %v1017 = vadd.f32 %v1012, %v380
        %v1018 = vpack.c.bf16 %v1017, %v1017
        %vm1019 = vcmask 257024
        %1020 = vst.msk [vmem:[%s377] sm:$0xf] %vm1019, %v1018
        %s1021 = sand.u32 %s192, 1
        %s1022 = scalar_lea.sflag [#allocation6], %s1021
        %s1023 = sand.u32 %s192, 1
        %s1024 = smul.addr %s1023, 4
        %s1025 = scalar_lea.vmem [#allocation16], %s1024
        // Predicated region
        $region77: #{generator2_forward.11} parent=47 // pred_check
          %p1026 = pneg %p202
        $region78: #{generator2_forward.11} parent=47 // pred_check_branch
          %1028 = sbr.rel (%p1026) target = $region80
        $region79: #{generator2_forward.11} parent=47 // pred_region
          %s1030 = ssub.s32 64, 64
          %1031 = vsyncadd %s1022, %s1030
          %s1032 = smul.addr %s32, 64
          %s1033 = scalar_lea.hbm %s8, %s1032
          %s1035 = sshll.u32 %s1025, 4
          %s1036 = int_to_ptr.vmem [resolvable:$true] %s1035
          %1038 = dma.vmem_to_hbm [thread:$0]  %s1036, 64, %s1033, %s1022
        $region80: #{generator2_forward.11} parent=47 // pred_fallthru
          _
      $region48: #{generator2_forward.11} parent=5 // pred_fallthru
        _
      %p1039 = scmp.le.s32.totalorder 2, %s27
      // Predicated region
      $region81: #{generator2_forward.11} parent=5 // pred_check
        %p1040 = pneg %p1039
      $region82: #{generator2_forward.11} parent=5 // pred_check_branch
        %1042 = sbr.rel (%p1040) target = $region84
      $region83: #{generator2_forward.11} parent=5 // pred_region
        %s1043 = ssub.s32 %s27, 2
        // Predicated region
        $region85: #{generator2_forward.11} parent=83 // pred_check
          %p1044 = pneg %p208
        $region86: #{generator2_forward.11} parent=83 // pred_check_branch
          %1046 = sbr.rel (%p1044) target = $region88
        $region87: #{generator2_forward.11} parent=83 // pred_region
          %s1047 = sand.u32 %s193, 1
          %s1048 = scalar_lea.sflag [#allocation6], %s1047
          %s1049 = sand.u32 %s193, 1
          %s1050 = smul.addr %s1049, 4
          %s1051 = scalar_lea.vmem [#allocation16], %s1050
          %1052 = dma.done %s1048, 64
        $region88: #{generator2_forward.11} parent=83 // pred_fallthru
          _
      $region84: #{generator2_forward.11} parent=5 // pred_fallthru
        _
    $region6: #{generator2_forward.11} parent=1 // loop_footer
      %s31 = sadd.s32 1, %s27
    $region7: #{generator2_forward.11} parent=1 // loop_footer_branch
      %26 = sbr.rel target = $region3
    $region8: #{generator2_forward.11} parent=1 // loop_exit
      _
    %1053 = vsyncpa [#allocation5], 1
    %s1054 = scalar_lea.sflag [#allocation5], 1
    %1055 = vsyncpa %s1054, 1
    %1056 = vsyncpa [#allocation8], 1
    %1057 = vsyncpa [#allocation11], 1
    %1058 = vsyncpa [#allocation14], 1
    %1059 = vsyncpa [#allocation6], 1
    %s1060 = scalar_lea.sflag [#allocation6], 1
    %1061 = vsyncpa %s1060, 1

// kernel: generator2_forward.13
$region0: #{generator2_forward.13}
  #allocation0 [shape = 'u32[]', space=smem, size = 0x4, offset = 0x4, fixed_abs, tag = 'smem constant byte address 0x4 - core index']
  #allocation1 [shape = 'u32[144,128]{1,0:T(1,128)}', space=vmem, size = 0x12000, scoped, tag = 'internal scratch']
  %s0 = inlined_call_operand.vmem [shape: f32[2,8,16], index: 0, kind: input, shape index: {}]
  %s1 = inlined_call_operand.vmem [shape: bf16[16,32], index: 1, kind: input, shape index: {}]
  %s2 = inlined_call_operand.vmem [shape: f32[1,32], index: 2, kind: input, shape index: {}]
  %s3 = inlined_call_operand.vmem [shape: f32[8,32], index: 3, kind: input, shape index: {}]
  %s4 = inlined_call_operand.hbm [shape: bf16[2,8,32], index: 4, kind: output, shape index: {}]
  %s5 = sld [smem:[#allocation0]]
  $region49: #{generator2_forward.13} parent=0
    _
  %s7 = ssub.s32 1, %s5
  %s8 = scalar_select 0, %s7, %s5
  $region1: #{generator2_forward.13} parent=0
    #allocation2 [shape = 'u8[4096]{0}', space=vmem, size = 0x1000, scoped, tag = 'output window, operand 0']
    #allocation3 [shape = 's32[2]{0}', space=sflag, size = 0x8, scoped, tag = 'scoped memory for generator2_forward.13']
    %9 = vsyncpa [#allocation3], 0
    %s10 = scalar_lea.sflag [#allocation3], 1
    %11 = vsyncpa %s10, 0
    loop: start=0, step=1, limit=4
    $region2: #{generator2_forward.13} parent=1 // loop_pre_header
      _
    $region3: #{generator2_forward.13} parent=1 // loop_header
      %s13 = sphi 0, %s17
      %p14 = scmp.ge.s32.totalorder %s13, 4
      %s23 = sphi 0, %s25
      %s26 = sphi 0, %s23
      %s27 = sphi 0, %s26
      %s43 = sphi 0, %s27
      %s47 = sphi 0, %s47
      %s49 = sphi 0, %s47
      %s50 = sphi 0, %s49
      %s64 = sphi 0, %s50
      %s68 = sphi 0, %s68
      %s70 = sphi 0, %s68
      %s71 = sphi 0, %s70
      %s85 = sphi 0, %s71
      %s89 = sphi 0, %s89
      %s91 = sphi 0, %s89
      %s92 = sphi 0, %s91
      %s106 = sphi 0, %s92
      %s112 = sphi 0, %s114
      %s115 = sphi 0, %s112
      %s116 = sphi 0, %s115
      %s132 = sphi 0, %s116
    $region4: #{generator2_forward.13} parent=1 // loop_header_branch
      %16 = sbr.rel (%p14) target = $region8
    $region5: #{generator2_forward.13} parent=1 // loop_body
      %s18 = ssub.s32 %s13, 1
      %s19 = ssub.s32 %s13, 2
      %s20 = sadd.s32 %s13, 1
      %s21 = ssub.s32 %s13, %s20
      %p22 = scmp.eq.s32.totalorder %s21, 0
      %s24 = sadd.s32 %s23, 1
      %s25 = scalar_select %p22, %s23, %s24
      %p28 = pneg %p22
      %p29 = scmp.eq.s32.totalorder %s13, 1
      %p30 = por %p28, %p29
      %p31 = scmp.ne.s32.totalorder %s23, %s26
      %p32 = scmp.eq.s32.totalorder %s13, 0
      %p33 = por %p31, %p32
      %p34 = scmp.ne.s32.totalorder %s23, %s26
      %p35 = scmp.eq.s32.totalorder %s18, 1
      %p36 = por %p34, %p35
      %p37 = scmp.ne.s32.totalorder %s26, %s27
      %p38 = scmp.eq.s32.totalorder %s18, 0
      %p39 = por %p37, %p38
      %p40 = scmp.ne.s32.totalorder %s26, %s27
      %p41 = scmp.eq.s32.totalorder %s19, 1
      %p42 = por %p40, %p41
      %p44 = scmp.ne.s32.totalorder %s27, %s43
      %p45 = scmp.eq.s32.totalorder %s19, 0
      %p46 = por %p44, %p45
      %s48 = sadd.s32 %s47, 1
      %p51 = scmp.eq.s32.totalorder %s13, 1
      %p52 = scmp.ne.s32.totalorder %s47, %s49
      %p53 = scmp.eq.s32.totalorder %s13, 0
      %p54 = por %p52, %p53
      %p55 = scmp.ne.s32.totalorder %s47, %s49
      %p56 = scmp.eq.s32.totalorder %s18, 1
      %p57 = por %p55, %p56
      %p58 = scmp.ne.s32.totalorder %s49, %s50
      %p59 = scmp.eq.s32.totalorder %s18, 0
      %p60 = por %p58, %p59
      %p61 = scmp.ne.s32.totalorder %s49, %s50
      %p62 = scmp.eq.s32.totalorder %s19, 1
      %p63 = por %p61, %p62
      %p65 = scmp.ne.s32.totalorder %s50, %s64
      %p66 = scmp.eq.s32.totalorder %s19, 0
      %p67 = por %p65, %p66
      %s69 = sadd.s32 %s68, 1
      %p72 = scmp.eq.s32.totalorder %s13, 1
      %p73 = scmp.ne.s32.totalorder %s68, %s70
      %p74 = scmp.eq.s32.totalorder %s13, 0
      %p75 = por %p73, %p74
      %p76 = scmp.ne.s32.totalorder %s68, %s70
      %p77 = scmp.eq.s32.totalorder %s18, 1
      %p78 = por %p76, %p77
      %p79 = scmp.ne.s32.totalorder %s70, %s71
      %p80 = scmp.eq.s32.totalorder %s18, 0
      %p81 = por %p79, %p80
      %p82 = scmp.ne.s32.totalorder %s70, %s71
      %p83 = scmp.eq.s32.totalorder %s19, 1
      %p84 = por %p82, %p83
      %p86 = scmp.ne.s32.totalorder %s71, %s85
      %p87 = scmp.eq.s32.totalorder %s19, 0
      %p88 = por %p86, %p87
      %s90 = sadd.s32 %s89, 1
      %p93 = scmp.eq.s32.totalorder %s13, 1
      %p94 = scmp.ne.s32.totalorder %s89, %s91
      %p95 = scmp.eq.s32.totalorder %s13, 0
      %p96 = por %p94, %p95
      %p97 = scmp.ne.s32.totalorder %s89, %s91
      %p98 = scmp.eq.s32.totalorder %s18, 1
      %p99 = por %p97, %p98
      %p100 = scmp.ne.s32.totalorder %s91, %s92
      %p101 = scmp.eq.s32.totalorder %s18, 0
      %p102 = por %p100, %p101
      %p103 = scmp.ne.s32.totalorder %s91, %s92
      %p104 = scmp.eq.s32.totalorder %s19, 1
      %p105 = por %p103, %p104
      %p107 = scmp.ne.s32.totalorder %s92, %s106
      %p108 = scmp.eq.s32.totalorder %s19, 0
      %p109 = por %p107, %p108
      %s110 = ssub.s32 %s13, %s20
      %p111 = scmp.eq.s32.totalorder %s110, 0
      %s113 = sadd.s32 %s112, 1
      %s114 = scalar_select %p111, %s112, %s113
      %p117 = pneg %p111
      %p118 = scmp.eq.s32.totalorder %s13, 1
      %p119 = por %p117, %p118
      %p120 = scmp.ne.s32.totalorder %s112, %s115
      %p121 = scmp.eq.s32.totalorder %s13, 0
      %p122 = por %p120, %p121
      %p123 = scmp.ne.s32.totalorder %s112, %s115
      %p124 = scmp.eq.s32.totalorder %s18, 1
      %p125 = por %p123, %p124
      %p126 = scmp.ne.s32.totalorder %s115, %s116
      %p127 = scmp.eq.s32.totalorder %s18, 0
      %p128 = por %p126, %p127
      %p129 = scmp.ne.s32.totalorder %s115, %s116
      %p130 = scmp.eq.s32.totalorder %s19, 1
      %p131 = por %p129, %p130
      %p133 = scmp.ne.s32.totalorder %s116, %s132
      %p134 = scmp.eq.s32.totalorder %s19, 0
      %p135 = por %p133, %p134
      %p136 = scmp.le.s32.totalorder 1, %s13
      %p137 = scmp.lt.s32.totalorder %s13, 3
      %p138 = pnand %p136, %p137
      %p139 = pneg %p138
      // Predicated region
      $region9: #{generator2_forward.13} parent=5 // pred_check
        _
      $region10: #{generator2_forward.13} parent=5 // pred_check_branch
        %141 = sbr.rel (%p138) target = $region12
      $region11: #{generator2_forward.13} parent=5 // pred_region
        %s142 = ssub.s32 %s13, 1
        // Predicated region
        $region13: #{generator2_forward.13} parent=11 // pred_check
          %p143 = pneg %p60
        $region14: #{generator2_forward.13} parent=11 // pred_check_branch
          %145 = sbr.rel (%p143) target = $region16
        $region15: #{generator2_forward.13} parent=11 // pred_region
          _
        $region16: #{generator2_forward.13} parent=11 // pred_fallthru
          _
        // Predicated region
        $region17: #{generator2_forward.13} parent=11 // pred_check
          %p146 = pneg %p81
        $region18: #{generator2_forward.13} parent=11 // pred_check_branch
          %148 = sbr.rel (%p146) target = $region20
        $region19: #{generator2_forward.13} parent=11 // pred_region
          _
        $region20: #{generator2_forward.13} parent=11 // pred_fallthru
          _
        // Predicated region
        $region21: #{generator2_forward.13} parent=11 // pred_check
          %p149 = pneg %p102
        $region22: #{generator2_forward.13} parent=11 // pred_check_branch
          %151 = sbr.rel (%p149) target = $region24
        $region23: #{generator2_forward.13} parent=11 // pred_region
          _
        $region24: #{generator2_forward.13} parent=11 // pred_fallthru
          _
      $region12: #{generator2_forward.13} parent=5 // pred_fallthru
        _
      %p152 = scmp.lt.s32.totalorder %s13, 2
      // Predicated region
      $region25: #{generator2_forward.13} parent=5 // pred_check
        %p153 = pneg %p152
      $region26: #{generator2_forward.13} parent=5 // pred_check_branch
        %155 = sbr.rel (%p153) target = $region28
      $region27: #{generator2_forward.13} parent=5 // pred_region
        // Predicated region
        $region29: #{generator2_forward.13} parent=27 // pred_check
          %p156 = pneg %p33
        $region30: #{generator2_forward.13} parent=27 // pred_check_branch
          %158 = sbr.rel (%p156) target = $region32
        $region31: #{generator2_forward.13} parent=27 // pred_region
          %p159 = scmp.lt.s32.totalorder %s13, 1
          %s160 = scalar_select %p159, %s13, 1
          %s161 = smul.addr %s160, 8
          %s162 = scalar_lea.vmem %s0, %s161
        $region32: #{generator2_forward.13} parent=27 // pred_fallthru
          _
      $region28: #{generator2_forward.13} parent=5 // pred_fallthru
        _
      %p163 = scmp.le.s32.totalorder 1, %s13
      %p164 = scmp.lt.s32.totalorder %s13, 3
      %p165 = pnand %p163, %p164
      %p166 = pneg %p165
      // Predicated region
      $region33: #{generator2_forward.13} parent=5 // pred_check
        _
      $region34: #{generator2_forward.13} parent=5 // pred_check_branch
        %168 = sbr.rel (%p165) target = $region36
      $region35: #{generator2_forward.13} parent=5 // pred_region
        %s169 = ssub.s32 %s13, 1
        %p170 = scmp.lt.s32.totalorder %s18, 1
        %s171 = scalar_select %p170, %s18, 1
        %s172 = smul.addr %s171, 8
        %s173 = scalar_lea.vmem %s0, %s172
        %p174 = pneg %p39
        %p175 = pneg %p36
        %p176 = pneg %p60
        %p177 = pneg %p57
        %p178 = pneg %p81
        %p179 = pneg %p78
        %p180 = pneg %p102
        %p181 = pneg %p99
        %p182 = pneg %p128
        %p183 = pneg %p125
        %s184 = sand.u32 %s115, 1
        %s185 = scalar_lea.sflag [#allocation3], %s184
        %s186 = sand.u32 %s115, 1
        %s187 = smul.addr %s186, 4
        %s188 = scalar_lea.vmem [#allocation2], %s187
        %p189 = scmp.lt.s32.totalorder %s18, 1
        %s190 = scalar_select %p189, %s18, 1
        %s191 = smul.addr %s190, 8
        %s192 = scalar_lea.vmem %s0, %s191
        %v194 = vld [vmem:[%s192] sm:$0xff]
        %v195 = vpack.c.bf16 %v194, %v194
        %v196 = vld [vmem:[%s1] sm:$0xf]
        %v197 = vld [vmem:[%s1 + $0x4] sm:$0xf]
        %v198 = vld [vmem:[%s2] sm:$0x1]
        %v200 = vlaneseq
        %v201 = vshrl.u32 %v200, 7
        %v202 = vsub.s32 0, %v201
        %v203 = vrot.slane %v198, %v202
        %v207 = vunpack.c.l.b16 %v196
        %v208 = vunpack.c.l.b16 %v197
        %v209 = vpack.c.b16 %v208, %v207
        %vm211 = vcmask 130048
        %v213 = vsel %vm211, %v195, 0
        %215 = vmatprep.subr.bf16.mxu0 0
        %216 = vmatpush1.bf16.msra.mxu0 %v209
        %217 = vmatprep.subr.bf16.mxu0 0
        %218 = vmatpush1.bf16.msra.mxu0 0
        %219 = vmatprep.subr.bf16.mxu0 0
        %220 = vmatpush1.bf16.msra.mxu0 0
        %221 = vmatprep.subr.bf16.mxu0 0
        %222 = vmatpush1.bf16.msra.mxu0 0
        %223 = vmatprep.subr.bf16.mxu0 0
        %224 = vmatpush1.bf16.msra.mxu0 0
        %225 = vmatprep.subr.bf16.mxu0 0
        %226 = vmatpush1.bf16.msra.mxu0 0
        %227 = vmatprep.subr.bf16.mxu0 0
        %228 = vmatpush1.bf16.msra.mxu0 0
        %229 = vmatprep.subr.bf16.mxu0 0
        %230 = vmatpush1.bf16.msra.mxu0 0
        %231 = vmatprep.subr.bf16.mxu0 0
        %232 = vmatpush1.bf16.msra.mxu0 0
        %233 = vmatprep.subr.bf16.mxu0 0
        %234 = vmatpush1.bf16.msra.mxu0 0
        %235 = vmatprep.subr.bf16.mxu0 0
        %236 = vmatpush1.bf16.msra.mxu0 0
        %237 = vmatprep.subr.bf16.mxu0 0
        %238 = vmatpush1.bf16.msra.mxu0 0
        %239 = vmatprep.subr.bf16.mxu0 0
        %240 = vmatpush1.bf16.msra.mxu0 0
        %241 = vmatprep.subr.bf16.mxu0 0
        %242 = vmatpush1.bf16.msra.mxu0 0
        %243 = vmatprep.subr.bf16.mxu0 0
        %244 = vmatpush1.bf16.msra.mxu0 0
        %245 = vmatprep.subr.bf16.mxu0 0
        %246 = vmatpush1.bf16.msra.mxu0 0
        %247 = vmatprep.mubr.bf16.mxu0 0
        %248 = vmatmul.mubr.bf16.gmra.mrb[0].mxu0 %v213
        %v249 = vpop.f32.mrb[0].mxu0
        %v250 = vadd.f32 %v203, %v249
        %v251 = vpop.f32.mrb[0].mxu0
        %v252 = vpop.f32.mrb[0].mxu0
        %v253 = vpop.f32.mrb[0].mxu0
        %254 = vdwg.mxu0
        %v255 = vmul.f32 %v250, 5.656854
        %v256 = vld [vmem:[%s3] sm:$0xff]
        %v257 = vadd.f32 %v255, %v256
        %v258 = vpack.c.bf16 %v257, %v257
        %vm259 = vcmask 257024
        %260 = vst.msk [vmem:[%s188] sm:$0xf] %vm259, %v258
        %s261 = sand.u32 %s115, 1
        %s262 = scalar_lea.sflag [#allocation3], %s261
        %s263 = sand.u32 %s115, 1
        %s264 = smul.addr %s263, 4
        %s265 = scalar_lea.vmem [#allocation2], %s264
        // Predicated region
        $region37: #{generator2_forward.13} parent=35 // pred_check
          %p266 = pneg %p125
        $region38: #{generator2_forward.13} parent=35 // pred_check_branch
          %268 = sbr.rel (%p266) target = $region40
        $region39: #{generator2_forward.13} parent=35 // pred_region
          %s270 = ssub.s32 64, 64
          %271 = vsyncadd %s262, %s270
          %s272 = smul.addr %s18, 64
          %s273 = scalar_lea.hbm %s4, %s272
          %s275 = sshll.u32 %s265, 4
          %s276 = int_to_ptr.vmem [resolvable:$true] %s275
          %278 = dma.vmem_to_hbm [thread:$0]  %s276, 64, %s273, %s262
        $region40: #{generator2_forward.13} parent=35 // pred_fallthru
          _
      $region36: #{generator2_forward.13} parent=5 // pred_fallthru
        _
      %p279 = scmp.le.s32.totalorder 2, %s13
      // Predicated region
      $region41: #{generator2_forward.13} parent=5 // pred_check
        %p280 = pneg %p279
      $region42: #{generator2_forward.13} parent=5 // pred_check_branch
        %282 = sbr.rel (%p280) target = $region44
      $region43: #{generator2_forward.13} parent=5 // pred_region
        %s283 = ssub.s32 %s13, 2
        // Predicated region
        $region45: #{generator2_forward.13} parent=43 // pred_check
          %p284 = pneg %p131
        $region46: #{generator2_forward.13} parent=43 // pred_check_branch
          %286 = sbr.rel (%p284) target = $region48
        $region47: #{generator2_forward.13} parent=43 // pred_region
          %s287 = sand.u32 %s116, 1
          %s288 = scalar_lea.sflag [#allocation3], %s287
          %s289 = sand.u32 %s116, 1
          %s290 = smul.addr %s289, 4
          %s291 = scalar_lea.vmem [#allocation2], %s290
          %292 = dma.done %s288, 64
        $region48: #{generator2_forward.13} parent=43 // pred_fallthru
          _
      $region44: #{generator2_forward.13} parent=5 // pred_fallthru
        _
    $region6: #{generator2_forward.13} parent=1 // loop_footer
      %s17 = sadd.s32 1, %s13
    $region7: #{generator2_forward.13} parent=1 // loop_footer_branch
      %12 = sbr.rel target = $region3
    $region8: #{generator2_forward.13} parent=1 // loop_exit
      _
    %293 = vsyncpa [#allocation3], 1
    %s294 = scalar_lea.sflag [#allocation3], 1
    %295 = vsyncpa %s294, 1

// kernel: generator2_forward.14
$region0: #{generator2_forward.14}
  #allocation0 [shape = 'u32[]', space=smem, size = 0x4, offset = 0x4, fixed_abs, tag = 'smem constant byte address 0x4 - core index']
  #allocation1 [shape = 'u32[144,128]{1,0:T(1,128)}', space=vmem, size = 0x12000, scoped, tag = 'internal scratch']
  #allocation2 [shape = 's32[1]{0}', space=sflag, size = 0x4, scoped, tag = 'scoped memory for generator2_forward.14']
  #allocation3 [shape = 'u8[512]{0}', space=smem, size = 0x200, scoped, tag = 'prefetched SMEM operand 0']
  %s0 = inlined_call_operand.hbm [shape: s32[2], index: 0, kind: input, shape index: {}]
  %s1 = inlined_call_operand.hbm [shape: bf16[2,8,32], index: 1, kind: input, shape index: {}]
  %s2 = inlined_call_operand.hbm [shape: f32[1,32], index: 2, kind: input, shape index: {}]
  %s3 = inlined_call_operand.hbm [shape: f32[1,32], index: 3, kind: input, shape index: {}, may-alias: {3,7}]
  %s4 = inlined_call_operand.hbm [shape: bf16[32,96], index: 4, kind: input, shape index: {}]
  %s5 = inlined_call_operand.hbm [shape: f32[1,96], index: 5, kind: input, shape index: {}]
  %s6 = inlined_call_operand.hbm [shape: bf16[32,32], index: 6, kind: input, shape index: {}]
  %s7 = inlined_call_operand.hbm [shape: f32[1,32], index: 7, kind: input, shape index: {}, may-alias: {3,7}]
  %s8 = inlined_call_operand.hbm [shape: bf16[2,8,32], index: 8, kind: output, shape index: {}]
  %s9 = sld [smem:[#allocation0]]
  $region89: #{generator2_forward.14} parent=0
    _
  %s11 = ssub.s32 1, %s9
  %s12 = scalar_select 0, %s11, %s9
  %14 = dma.hbm_to_smem %s0, 16, [#allocation3], [#allocation2]
  %15 = dma.done [#allocation2], 16
  %16 = sfence
  $region1: #{generator2_forward.14} parent=0
    #allocation4 [shape = 'u8[4096]{0}', space=vmem, size = 0x1000, scoped, tag = 'input window, operand 1']
    #allocation5 [shape = 's32[2]{0}', space=sflag, size = 0x8, scoped, tag = 'scoped memory for generator2_forward.14']
    #allocation6 [shape = 's32[2]{0}', space=sflag, size = 0x8, scoped, tag = 'scoped memory for generator2_forward.14']
    #allocation7 [shape = 'u8[512]{0}', space=vmem, size = 0x400, scoped, tag = 'input window, operand 2, single buffered']
    #allocation8 [shape = 's32[1]{0}', space=sflag, size = 0x4, scoped, tag = 'scoped memory for generator2_forward.14']
    #allocation9 [shape = 'u8[512]{0}', space=vmem, size = 0x400, scoped, tag = 'input window, operand 3, single buffered']
    #allocation10 [shape = 'u8[8192]{0}', space=vmem, size = 0x2000, scoped, tag = 'input window, operand 4, single buffered']
    #allocation11 [shape = 's32[1]{0}', space=sflag, size = 0x4, scoped, tag = 'scoped memory for generator2_forward.14']
    #allocation12 [shape = 'u8[512]{0}', space=vmem, size = 0x400, scoped, tag = 'input window, operand 5, single buffered']
    #allocation13 [shape = 'u8[8192]{0}', space=vmem, size = 0x2000, scoped, tag = 'input window, operand 6, single buffered']
    #allocation14 [shape = 's32[1]{0}', space=sflag, size = 0x4, scoped, tag = 'scoped memory for generator2_forward.14']
    #allocation15 [shape = 'u8[512]{0}', space=vmem, size = 0x400, scoped, tag = 'input window, operand 7, single buffered']
    #allocation16 [shape = 'u8[4096]{0}', space=vmem, size = 0x1000, scoped, tag = 'output window, operand 0']
    %17 = vsyncpa [#allocation5], 0
    %s18 = scalar_lea.sflag [#allocation5], 1
    %19 = vsyncpa %s18, 0
    %20 = vsyncpa [#allocation8], 0
    %21 = vsyncpa [#allocation11], 0
    %22 = vsyncpa [#allocation14], 0
    %23 = vsyncpa [#allocation6], 0
    %s24 = scalar_lea.sflag [#allocation6], 1
    %25 = vsyncpa %s24, 0
    loop: start=0, step=1, limit=4
    $region2: #{generator2_forward.14} parent=1 // loop_pre_header
      _
    $region3: #{generator2_forward.14} parent=1 // loop_header
      %s27 = sphi 0, %s31
      %p28 = scmp.ge.s32.totalorder %s27, 4
      %s37 = sphi 0, %s39
      %s40 = sphi 0, %s37
      %s41 = sphi 0, %s40
      %s57 = sphi 0, %s41
      %s61 = sphi 0, %s61
      %s63 = sphi 0, %s61
      %s64 = sphi 0, %s63
      %s78 = sphi 0, %s64
      %s82 = sphi 0, %s82
      %s84 = sphi 0, %s82
      %s85 = sphi 0, %s84
      %s99 = sphi 0, %s85
      %s103 = sphi 0, %s103
      %s105 = sphi 0, %s103
      %s106 = sphi 0, %s105
      %s120 = sphi 0, %s106
      %s124 = sphi 0, %s124
      %s126 = sphi 0, %s124
      %s127 = sphi 0, %s126
      %s141 = sphi 0, %s127
      %s145 = sphi 0, %s145
      %s147 = sphi 0, %s145
      %s148 = sphi 0, %s147
      %s162 = sphi 0, %s148
      %s166 = sphi 0, %s166
      %s168 = sphi 0, %s166
      %s169 = sphi 0, %s168
      %s183 = sphi 0, %s169
      %s189 = sphi 0, %s191
      %s192 = sphi 0, %s189
      %s193 = sphi 0, %s192
      %s209 = sphi 0, %s193
    $region4: #{generator2_forward.14} parent=1 // loop_header_branch
      %30 = sbr.rel (%p28) target = $region8
    $region5: #{generator2_forward.14} parent=1 // loop_body
      %s32 = ssub.s32 %s27, 1
      %s33 = ssub.s32 %s27, 2
      %s34 = sadd.s32 %s27, 1
      %s35 = ssub.s32 %s27, %s34
      %p36 = scmp.eq.s32.totalorder %s35, 0
      %s38 = sadd.s32 %s37, 1
      %s39 = scalar_select %p36, %s37, %s38
      %p42 = pneg %p36
      %p43 = scmp.eq.s32.totalorder %s27, 1
      %p44 = por %p42, %p43
      %p45 = scmp.ne.s32.totalorder %s37, %s40
      %p46 = scmp.eq.s32.totalorder %s27, 0
      %p47 = por %p45, %p46
      %p48 = scmp.ne.s32.totalorder %s37, %s40
      %p49 = scmp.eq.s32.totalorder %s32, 1
      %p50 = por %p48, %p49
      %p51 = scmp.ne.s32.totalorder %s40, %s41
      %p52 = scmp.eq.s32.totalorder %s32, 0
      %p53 = por %p51, %p52
      %p54 = scmp.ne.s32.totalorder %s40, %s41
      %p55 = scmp.eq.s32.totalorder %s33, 1
      %p56 = por %p54, %p55
      %p58 = scmp.ne.s32.totalorder %s41, %s57
      %p59 = scmp.eq.s32.totalorder %s33, 0
      %p60 = por %p58, %p59
      %s62 = sadd.s32 %s61, 1
      %p65 = scmp.eq.s32.totalorder %s27, 1
      %p66 = scmp.ne.s32.totalorder %s61, %s63
      %p67 = scmp.eq.s32.totalorder %s27, 0
      %p68 = por %p66, %p67
      %p69 = scmp.ne.s32.totalorder %s61, %s63
      %p70 = scmp.eq.s32.totalorder %s32, 1
      %p71 = por %p69, %p70
      %p72 = scmp.ne.s32.totalorder %s63, %s64
      %p73 = scmp.eq.s32.totalorder %s32, 0
      %p74 = por %p72, %p73
      %p75 = scmp.ne.s32.totalorder %s63, %s64
      %p76 = scmp.eq.s32.totalorder %s33, 1
      %p77 = por %p75, %p76
      %p79 = scmp.ne.s32.totalorder %s64, %s78
      %p80 = scmp.eq.s32.totalorder %s33, 0
      %p81 = por %p79, %p80
      %s83 = sadd.s32 %s82, 1
      %p86 = scmp.eq.s32.totalorder %s27, 1
      %p87 = scmp.ne.s32.totalorder %s82, %s84
      %p88 = scmp.eq.s32.totalorder %s27, 0
      %p89 = por %p87, %p88
      %p90 = scmp.ne.s32.totalorder %s82, %s84
      %p91 = scmp.eq.s32.totalorder %s32, 1
      %p92 = por %p90, %p91
      %p93 = scmp.ne.s32.totalorder %s84, %s85
      %p94 = scmp.eq.s32.totalorder %s32, 0
      %p95 = por %p93, %p94
      %p96 = scmp.ne.s32.totalorder %s84, %s85
      %p97 = scmp.eq.s32.totalorder %s33, 1
      %p98 = por %p96, %p97
      %p100 = scmp.ne.s32.totalorder %s85, %s99
      %p101 = scmp.eq.s32.totalorder %s33, 0
      %p102 = por %p100, %p101
      %s104 = sadd.s32 %s103, 1
      %p107 = scmp.eq.s32.totalorder %s27, 1
      %p108 = scmp.ne.s32.totalorder %s103, %s105
      %p109 = scmp.eq.s32.totalorder %s27, 0
      %p110 = por %p108, %p109
      %p111 = scmp.ne.s32.totalorder %s103, %s105
      %p112 = scmp.eq.s32.totalorder %s32, 1
      %p113 = por %p111, %p112
      %p114 = scmp.ne.s32.totalorder %s105, %s106
      %p115 = scmp.eq.s32.totalorder %s32, 0
      %p116 = por %p114, %p115
      %p117 = scmp.ne.s32.totalorder %s105, %s106
      %p118 = scmp.eq.s32.totalorder %s33, 1
      %p119 = por %p117, %p118
      %p121 = scmp.ne.s32.totalorder %s106, %s120
      %p122 = scmp.eq.s32.totalorder %s33, 0
      %p123 = por %p121, %p122
      %s125 = sadd.s32 %s124, 1
      %p128 = scmp.eq.s32.totalorder %s27, 1
      %p129 = scmp.ne.s32.totalorder %s124, %s126
      %p130 = scmp.eq.s32.totalorder %s27, 0
      %p131 = por %p129, %p130
      %p132 = scmp.ne.s32.totalorder %s124, %s126
      %p133 = scmp.eq.s32.totalorder %s32, 1
      %p134 = por %p132, %p133
      %p135 = scmp.ne.s32.totalorder %s126, %s127
      %p136 = scmp.eq.s32.totalorder %s32, 0
      %p137 = por %p135, %p136
      %p138 = scmp.ne.s32.totalorder %s126, %s127
      %p139 = scmp.eq.s32.totalorder %s33, 1
      %p140 = por %p138, %p139
      %p142 = scmp.ne.s32.totalorder %s127, %s141
      %p143 = scmp.eq.s32.totalorder %s33, 0
      %p144 = por %p142, %p143
      %s146 = sadd.s32 %s145, 1
      %p149 = scmp.eq.s32.totalorder %s27, 1
      %p150 = scmp.ne.s32.totalorder %s145, %s147
      %p151 = scmp.eq.s32.totalorder %s27, 0
      %p152 = por %p150, %p151
      %p153 = scmp.ne.s32.totalorder %s145, %s147
      %p154 = scmp.eq.s32.totalorder %s32, 1
      %p155 = por %p153, %p154
      %p156 = scmp.ne.s32.totalorder %s147, %s148
      %p157 = scmp.eq.s32.totalorder %s32, 0
      %p158 = por %p156, %p157
      %p159 = scmp.ne.s32.totalorder %s147, %s148
      %p160 = scmp.eq.s32.totalorder %s33, 1
      %p161 = por %p159, %p160
      %p163 = scmp.ne.s32.totalorder %s148, %s162
      %p164 = scmp.eq.s32.totalorder %s33, 0
      %p165 = por %p163, %p164
      %s167 = sadd.s32 %s166, 1
      %p170 = scmp.eq.s32.totalorder %s27, 1
      %p171 = scmp.ne.s32.totalorder %s166, %s168
      %p172 = scmp.eq.s32.totalorder %s27, 0
      %p173 = por %p171, %p172
      %p174 = scmp.ne.s32.totalorder %s166, %s168
      %p175 = scmp.eq.s32.totalorder %s32, 1
      %p176 = por %p174, %p175
      %p177 = scmp.ne.s32.totalorder %s168, %s169
      %p178 = scmp.eq.s32.totalorder %s32, 0
      %p179 = por %p177, %p178
      %p180 = scmp.ne.s32.totalorder %s168, %s169
      %p181 = scmp.eq.s32.totalorder %s33, 1
      %p182 = por %p180, %p181
      %p184 = scmp.ne.s32.totalorder %s169, %s183
      %p185 = scmp.eq.s32.totalorder %s33, 0
      %p186 = por %p184, %p185
      %s187 = ssub.s32 %s27, %s34
      %p188 = scmp.eq.s32.totalorder %s187, 0
      %s190 = sadd.s32 %s189, 1
      %s191 = scalar_select %p188, %s189, %s190
      %p194 = pneg %p188
      %p195 = scmp.eq.s32.totalorder %s27, 1
      %p196 = por %p194, %p195
      %p197 = scmp.ne.s32.totalorder %s189, %s192
      %p198 = scmp.eq.s32.totalorder %s27, 0
      %p199 = por %p197, %p198
      %p200 = scmp.ne.s32.totalorder %s189, %s192
      %p201 = scmp.eq.s32.totalorder %s32, 1
      %p202 = por %p200, %p201
      %p203 = scmp.ne.s32.totalorder %s192, %s193
      %p204 = scmp.eq.s32.totalorder %s32, 0
      %p205 = por %p203, %p204
      %p206 = scmp.ne.s32.totalorder %s192, %s193
      %p207 = scmp.eq.s32.totalorder %s33, 1
      %p208 = por %p206, %p207
      %p210 = scmp.ne.s32.totalorder %s193, %s209
      %p211 = scmp.eq.s32.totalorder %s33, 0
      %p212 = por %p210, %p211
      %p213 = scmp.le.s32.totalorder 1, %s27
      %p214 = scmp.lt.s32.totalorder %s27, 3
      %p215 = pnand %p213, %p214
      %p216 = pneg %p215
      // Predicated region
      $region9: #{generator2_forward.14} parent=5 // pred_check
        _
      $region10: #{generator2_forward.14} parent=5 // pred_check_branch
        %218 = sbr.rel (%p215) target = $region12
      $region11: #{generator2_forward.14} parent=5 // pred_region
        %s219 = ssub.s32 %s27, 1
        // Predicated region
        $region13: #{generator2_forward.14} parent=11 // pred_check
          %p220 = pneg %p74
        $region14: #{generator2_forward.14} parent=11 // pred_check_branch
          %222 = sbr.rel (%p220) target = $region16
        $region15: #{generator2_forward.14} parent=11 // pred_region
          %s224 = ssub.s32 16, 16
          %225 = vsyncadd [#allocation8], %s224
          %s227 = sshll.u32 [#allocation7], 4
          %s228 = int_to_ptr.vmem [resolvable:$true] %s227
          %230 = dma.hbm_to_vmem [thread:$0]  %s2, 16, %s228, [#allocation8]
        $region16: #{generator2_forward.14} parent=11 // pred_fallthru
          _
        // Predicated region
        $region17: #{generator2_forward.14} parent=11 // pred_check
          %p231 = pneg %p95
        $region18: #{generator2_forward.14} parent=11 // pred_check_branch
          %233 = sbr.rel (%p231) target = $region20
        $region19: #{generator2_forward.14} parent=11 // pred_region
          %s235 = ssub.s32 16, 16
          %236 = vsyncadd [#allocation8], %s235
          %s238 = sshll.u32 [#allocation9], 4
          %s239 = int_to_ptr.vmem [resolvable:$true] %s238
          %241 = dma.hbm_to_vmem [thread:$0]  %s3, 16, %s239, [#allocation8]
        $region20: #{generator2_forward.14} parent=11 // pred_fallthru
          _
        // Predicated region
        $region21: #{generator2_forward.14} parent=11 // pred_check
          %p242 = pneg %p116
        $region22: #{generator2_forward.14} parent=11 // pred_check_branch
          %244 = sbr.rel (%p242) target = $region24
        $region23: #{generator2_forward.14} parent=11 // pred_region
          %s246 = ssub.s32 256, 256
          %247 = vsyncadd [#allocation11], %s246
          %s248 = sshll.u32 [#allocation10], 4
          %s249 = int_to_ptr.vmem [resolvable:$true] %s248
          %254 = dma.hbm_to_vmem [thread:$0]  %s4, 256, %s249, [#allocation11], 64, 64, 4
        $region24: #{generator2_forward.14} parent=11 // pred_fallthru
          _
        // Predicated region
        $region25: #{generator2_forward.14} parent=11 // pred_check
          %p255 = pneg %p137
        $region26: #{generator2_forward.14} parent=11 // pred_check_branch
          %257 = sbr.rel (%p255) target = $region28
        $region27: #{generator2_forward.14} parent=11 // pred_region
          %s259 = ssub.s32 16, 16
          %260 = vsyncadd [#allocation11], %s259
          %s262 = sshll.u32 [#allocation12], 4
          %s263 = int_to_ptr.vmem [resolvable:$true] %s262
          %265 = dma.hbm_to_vmem [thread:$0]  %s5, 16, %s263, [#allocation11]
        $region28: #{generator2_forward.14} parent=11 // pred_fallthru
          _
        // Predicated region
        $region29: #{generator2_forward.14} parent=11 // pred_check
          %p266 = pneg %p158
        $region30: #{generator2_forward.14} parent=11 // pred_check_branch
          %268 = sbr.rel (%p266) target = $region32
        $region31: #{generator2_forward.14} parent=11 // pred_region
          %s270 = ssub.s32 256, 256
          %271 = vsyncadd [#allocation14], %s270
          %s272 = sshll.u32 [#allocation13], 4
          %s273 = int_to_ptr.vmem [resolvable:$true] %s272
          %278 = dma.hbm_to_vmem [thread:$0]  %s6, 256, %s273, [#allocation14], 64, 64, 4
        $region32: #{generator2_forward.14} parent=11 // pred_fallthru
          _
        // Predicated region
        $region33: #{generator2_forward.14} parent=11 // pred_check
          %p279 = pneg %p179
        $region34: #{generator2_forward.14} parent=11 // pred_check_branch
          %281 = sbr.rel (%p279) target = $region36
        $region35: #{generator2_forward.14} parent=11 // pred_region
          %s283 = ssub.s32 16, 16
          %284 = vsyncadd [#allocation14], %s283
          %s286 = sshll.u32 [#allocation15], 4
          %s287 = int_to_ptr.vmem [resolvable:$true] %s286
          %289 = dma.hbm_to_vmem [thread:$0]  %s7, 16, %s287, [#allocation14]
        $region36: #{generator2_forward.14} parent=11 // pred_fallthru
          _
      $region12: #{generator2_forward.14} parent=5 // pred_fallthru
        _
      %p290 = scmp.lt.s32.totalorder %s27, 2
      // Predicated region
      $region37: #{generator2_forward.14} parent=5 // pred_check
        %p291 = pneg %p290
      $region38: #{generator2_forward.14} parent=5 // pred_check_branch
        %293 = sbr.rel (%p291) target = $region40
      $region39: #{generator2_forward.14} parent=5 // pred_region
        // Predicated region
        $region41: #{generator2_forward.14} parent=39 // pred_check
          %p294 = pneg %p47
        $region42: #{generator2_forward.14} parent=39 // pred_check_branch
          %296 = sbr.rel (%p294) target = $region44
        $region43: #{generator2_forward.14} parent=39 // pred_region
          %s297 = sand.u32 %s37, 1
          %s298 = scalar_lea.sflag [#allocation5], %s297
          %s299 = sand.u32 %s37, 1
          %s300 = smul.addr %s299, 4
          %s301 = scalar_lea.vmem [#allocation4], %s300
          %s303 = ssub.s32 64, 64
          %304 = vsyncadd %s298, %s303
          %s305 = smul.addr %s27, 64
          %s306 = scalar_lea.hbm %s1, %s305
          %s308 = sshll.u32 %s301, 4
          %s309 = int_to_ptr.vmem [resolvable:$true] %s308
          %311 = dma.hbm_to_vmem [thread:$0]  %s306, 64, %s309, %s298
        $region44: #{generator2_forward.14} parent=39 // pred_fallthru
          _
      $region40: #{generator2_forward.14} parent=5 // pred_fallthru
        _
      %p312 = scmp.le.s32.totalorder 1, %s27
      %p313 = scmp.lt.s32.totalorder %s27, 3
      %p314 = pnand %p312, %p313
      %p315 = pneg %p314
      // Predicated region
      $region45: #{generator2_forward.14} parent=5 // pred_check
        _
      $region46: #{generator2_forward.14} parent=5 // pred_check_branch
        %317 = sbr.rel (%p314) target = $region48
      $region47: #{generator2_forward.14} parent=5 // pred_region
        %s318 = ssub.s32 %s27, 1
        %s319 = sand.u32 %s40, 1
        %s320 = scalar_lea.sflag [#allocation5], %s319
        %s321 = sand.u32 %s40, 1
        %s322 = smul.addr %s321, 4
        %s323 = scalar_lea.vmem [#allocation4], %s322
        // Predicated region
        $region49: #{generator2_forward.14} parent=47 // pred_check
          %p324 = pneg %p53
        $region50: #{generator2_forward.14} parent=47 // pred_check_branch
          %326 = sbr.rel (%p324) target = $region52
        $region51: #{generator2_forward.14} parent=47 // pred_region
          %327 = dma.done %s320, 64
        $region52: #{generator2_forward.14} parent=47 // pred_fallthru
          _
        // Predicated region
        $region53: #{generator2_forward.14} parent=47 // pred_check
          %p328 = pneg %p74
        $region54: #{generator2_forward.14} parent=47 // pred_check_branch
          %330 = sbr.rel (%p328) target = $region56
        $region55: #{generator2_forward.14} parent=47 // pred_region
          %331 = dma.done [#allocation8], 16
        $region56: #{generator2_forward.14} parent=47 // pred_fallthru
          _
        // Predicated region
        $region57: #{generator2_forward.14} parent=47 // pred_check
          %p332 = pneg %p95
        $region58: #{generator2_forward.14} parent=47 // pred_check_branch
          %334 = sbr.rel (%p332) target = $region60
        $region59: #{generator2_forward.14} parent=47 // pred_region
          %335 = dma.done [#allocation8], 16
        $region60: #{generator2_forward.14} parent=47 // pred_fallthru
          _
        // Predicated region
        $region61: #{generator2_forward.14} parent=47 // pred_check
          %p336 = pneg %p116
        $region62: #{generator2_forward.14} parent=47 // pred_check_branch
          %338 = sbr.rel (%p336) target = $region64
        $region63: #{generator2_forward.14} parent=47 // pred_region
          %339 = dma.done [#allocation11], 256
        $region64: #{generator2_forward.14} parent=47 // pred_fallthru
          _
        // Predicated region
        $region65: #{generator2_forward.14} parent=47 // pred_check
          %p340 = pneg %p137
        $region66: #{generator2_forward.14} parent=47 // pred_check_branch
          %342 = sbr.rel (%p340) target = $region68
        $region67: #{generator2_forward.14} parent=47 // pred_region
          %343 = dma.done [#allocation11], 16
        $region68: #{generator2_forward.14} parent=47 // pred_fallthru
          _
        // Predicated region
        $region69: #{generator2_forward.14} parent=47 // pred_check
          %p344 = pneg %p158
        $region70: #{generator2_forward.14} parent=47 // pred_check_branch
          %346 = sbr.rel (%p344) target = $region72
        $region71: #{generator2_forward.14} parent=47 // pred_region
          %347 = dma.done [#allocation14], 256
        $region72: #{generator2_forward.14} parent=47 // pred_fallthru
          _
        // Predicated region
        $region73: #{generator2_forward.14} parent=47 // pred_check
          %p348 = pneg %p179
        $region74: #{generator2_forward.14} parent=47 // pred_check_branch
          %350 = sbr.rel (%p348) target = $region76
        $region75: #{generator2_forward.14} parent=47 // pred_region
          %351 = dma.done [#allocation14], 16
        $region76: #{generator2_forward.14} parent=47 // pred_fallthru
          _
        %s352 = sand.u32 %s40, 1
        %s353 = scalar_lea.sflag [#allocation5], %s352
        %s354 = sand.u32 %s40, 1
        %s355 = smul.addr %s354, 4
        %s356 = scalar_lea.vmem [#allocation4], %s355
        %p357 = pneg %p53
        %p358 = pneg %p50
        %p359 = pneg %p74
        %p360 = pneg %p71
        %p361 = pneg %p95
        %p362 = pneg %p92
        %p363 = pneg %p116
        %p364 = pneg %p113
        %p365 = pneg %p137
        %p366 = pneg %p134
        %p367 = pneg %p158
        %p368 = pneg %p155
        %p369 = pneg %p179
        %p370 = pneg %p176
        %p371 = pneg %p205
        %p372 = pneg %p202
        %s373 = sand.u32 %s192, 1
        %s374 = scalar_lea.sflag [#allocation6], %s373
        %s375 = sand.u32 %s192, 1
        %s376 = smul.addr %s375, 4
        %s377 = scalar_lea.vmem [#allocation16], %s376
        %v379 = vld [vmem:[%s323] sm:$0xf]
        %v380 = vunpack.c.l.bf16 %v379
        %vm381 = vcmask 261120
        %v382 = vsel %vm381, %v380, 0.0
        %383 = vadd.xlane.f32.xlu0 %v382
        %v384 = vpop.xlane.xlu0 %383
        %v385 = vrcp.pop 32.0
        %v386 = vmul.f32 %v384, %v385
        %v387 = vsub.f32 %v380, %v386
        %v388 = vmul.f32 %v387, %v387
        %v389 = vsel %vm381, %v388, 0.0
        %390 = vadd.xlane.f32.xlu0 %v389
        %v391 = vpop.xlane.xlu0 %390
        %v392 = vmul.f32 %v391, %v385
        %v393 = vadd.f32 %v392, 1e-06
        %v394 = vrsqrt.pop %v393
        %v395 = vmul.f32 %v387, %v394
        %v396 = vld [vmem:[#allocation7] sm:$0x1]
        %v398 = vlaneseq
        %v399 = vshrl.u32 %v398, 7
        %v400 = vsub.s32 0, %v399
        %v401 = vrot.slane %v396, %v400
        %v403 = vmul.f32 %v395, %v401
        %v404 = vld [vmem:[#allocation9] sm:$0x1]
        %v406 = vlaneseq
        %v407 = vshrl.u32 %v406, 7
        %v408 = vsub.s32 0, %v407
        %v409 = vrot.slane %v404, %v408
        %v411 = vadd.f32 %v403, %v409
        %v412 = vpack.c.bf16 %v411, %v411
        %v413 = vld [vmem:[#allocation10] sm:$0xf]
        %v414 = vld [vmem:[#allocation10 + $0x4] sm:$0xf]
        %v415 = vld [vmem:[#allocation10 + $0x8] sm:$0xf]
        %v416 = vld [vmem:[#allocation10 + $0xc] sm:$0xf]
        %v417 = vld [vmem:[#allocation12] sm:$0x1]
        %v419 = vlaneseq
        %v420 = vshrl.u32 %v419, 7
        %v421 = vsub.s32 0, %v420
        %v422 = vrot.slane %v417, %v421
        %v428 = vunpack.c.l.b16 %v413
        %v429 = vunpack.c.l.b16 %v414
        %v430 = vunpack.c.l.b16 %v415
        %v431 = vunpack.c.l.b16 %v416
        %v432 = vpack.c.b16 %v429, %v428
        %v433 = vpack.c.b16 %v431, %v430
        %v437 = vsel %vm381, %v412, 0
        %439 = vmatprep.subr.bf16.mxu0 0
        %440 = vmatpush1.bf16.msra.mxu0 %v432
        %441 = vmatprep.subr.bf16.mxu0 0
        %442 = vmatpush1.bf16.msra.mxu0 %v433
        %443 = vmatprep.subr.bf16.mxu0 0
        %444 = vmatpush1.bf16.msra.mxu0 0
        %445 = vmatprep.subr.bf16.mxu0 0
        %446 = vmatpush1.bf16.msra.mxu0 0
        %447 = vmatprep.subr.bf16.mxu0 0
        %448 = vmatpush1.bf16.msra.mxu0 0
        %449 = vmatprep.subr.bf16.mxu0 0
        %450 = vmatpush1.bf16.msra.mxu0 0
        %451 = vmatprep.subr.bf16.mxu0 0
        %452 = vmatpush1.bf16.msra.mxu0 0
        %453 = vmatprep.subr.bf16.mxu0 0
        %454 = vmatpush1.bf16.msra.mxu0 0
        %455 = vmatprep.subr.bf16.mxu0 0
        %456 = vmatpush1.bf16.msra.mxu0 0
        %457 = vmatprep.subr.bf16.mxu0 0
        %458 = vmatpush1.bf16.msra.mxu0 0
        %459 = vmatprep.subr.bf16.mxu0 0
        %460 = vmatpush1.bf16.msra.mxu0 0
        %461 = vmatprep.subr.bf16.mxu0 0
        %462 = vmatpush1.bf16.msra.mxu0 0
        %463 = vmatprep.subr.bf16.mxu0 0
        %464 = vmatpush1.bf16.msra.mxu0 0
        %465 = vmatprep.subr.bf16.mxu0 0
        %466 = vmatpush1.bf16.msra.mxu0 0
        %467 = vmatprep.subr.bf16.mxu0 0
        %468 = vmatpush1.bf16.msra.mxu0 0
        %469 = vmatprep.subr.bf16.mxu0 0
        %470 = vmatpush1.bf16.msra.mxu0 0
        %471 = vmatprep.mubr.bf16.mxu0 0
        %472 = vmatmul.mubr.bf16.gmra.mrb[0].mxu0 %v437
        %v473 = vpop.f32.mrb[0].mxu0
        %v474 = vadd.f32 %v422, %v473
        %v475 = vpop.f32.mrb[0].mxu0
        %v476 = vpop.f32.mrb[0].mxu0
        %v477 = vpop.f32.mrb[0].mxu0
        %478 = vdwg.mxu0
        %s479 = sld [smem:[#allocation3 + %s32]]
        %v480 = vlaneseq
        %v481 = vand.u32 %v480, 127
        %v482 = vstv %s479
        %vm483 = vcmp.lt.s32.totalorder %v481, %v482
        %v484 = vlaneseq
        %v485 = vshrl.u32 %v484, 7
        %vm486 = vcmp.le.s32.totalorder %v481, %v485
        %vm487 = vmand %vm483, %vm486
        %v488 = vmul.f32 %v474, 0.35355338
        %v489 = vpack.c.bf16 %v488, %v488
        %v490 = vpack.c.bf16 %v474, %v474
        %492 = vrot.lane.b32.xlu0 %v490, 96
        %v493 = vpop.permute.xlu0 %492
        %vm494 = vcmask 64512
        %v496 = vsel %vm494, %v489, 0
        %v499 = vsel %vm494, %v493, 0
        %501 = vmatprep.subr.bf16.mxu0 0
        %502 = vmatpush1.bf16.xpose.msra.mxu0 %v499
        %503 = vmatprep.subr.bf16.mxu0 0
        %504 = vmatpush1.bf16.xpose.msra.mxu0 0
        %505 = vmatprep.subr.bf16.mxu0 0
        %506 = vmatpush1.bf16.xpose.msra.mxu0 0
        %507 = vmatprep.subr.bf16.mxu0 0
        %508 = vmatpush1.bf16.xpose.msra.mxu0 0
        %509 = vmatprep.subr.bf16.mxu0 0
        %510 = vmatpush1.bf16.xpose.msra.mxu0 0
        %511 = vmatprep.subr.bf16.mxu0 0
        %512 = vmatpush1.bf16.xpose.msra.mxu0 0
        %513 = vmatprep.subr.bf16.mxu0 0
        %514 = vmatpush1.bf16.xpose.msra.mxu0 0
        %515 = vmatprep.subr.bf16.mxu0 0
        %516 = vmatpush1.bf16.xpose.msra.mxu0 0
        %517 = vmatprep.subr.bf16.mxu0 0
        %518 = vmatpush1.bf16.xpose.msra.mxu0 0
        %519 = vmatprep.subr.bf16.mxu0 0
        %520 = vmatpush1.bf16.xpose.msra.mxu0 0
        %521 = vmatprep.subr.bf16.mxu0 0
        %522 = vmatpush1.bf16.xpose.msra.mxu0 0
        %523 = vmatprep.subr.bf16.mxu0 0
        %524 = vmatpush1.bf16.xpose.msra.mxu0 0
        %525 = vmatprep.subr.bf16.mxu0 0
        %526 = vmatpush1.bf16.xpose.msra.mxu0 0
        %527 = vmatprep.subr.bf16.mxu0 0
        %528 = vmatpush1.bf16.xpose.msra.mxu0 0
        %529 = vmatprep.subr.bf16.mxu0 0
        %530 = vmatpush1.bf16.xpose.msra.mxu0 0
        %531 = vmatprep.subr.bf16.mxu0 0
        %532 = vmatpush1.bf16.xpose.msra.mxu0 0
        %533 = vmatprep.mubr.bf16.mxu0 0
        %534 = vmatmul.mubr.bf16.gmra.mrb[0].mxu0 %v496
        %v535 = vpop.f32.mrb[0].mxu0
        %v536 = vadd.f32 0.0, %v535
        %v537 = vpop.f32.mrb[0].mxu0
        %v538 = vpop.f32.mrb[0].mxu0
        %v539 = vpop.f32.mrb[0].mxu0
        %540 = vdwg.mxu0
        %v541 = vsel %vm487, %v536, -1e+09
        %v542 = vsel %vm494, %v541, -inf
        %543 = vmax.xlane.f32.xlu0 %v542
        %v544 = vpop.xlane.xlu0 %543
        %v545 = vsub.f32 %v541, %v544
        %v546 = vmul.f32 %v545, 1.442695
        %v547 = vpow.pop %v546
        %v548 = vsel %vm494, %v547, 0.0
        %549 = vadd.xlane.f32.xlu0 %v548
        %v550 = vpop.xlane.xlu0 %549
        %v551 = vrcp.pop %v550
        %v552 = vmul.f32 %v547, %v551
        %v553 = vpack.c.bf16 %v552, %v552
        %554 = vrot.lane.b32.xlu0 %v490, 64
        %v555 = vpop.permute.xlu0 %554
        %v557 = vsel %vm494, %v553, 0
        %vm559 = vcmask 1043456
        %v561 = vsel %vm559, %v555, 0
        %563 = vmatprep.subr.bf16.mxu0 0
        %564 = vmatpush1.bf16.msra.mxu0 %v561
        %565 = vmatprep.subr.bf16.mxu0 0
        %566 = vmatpush1.bf16.msra.mxu0 0
        %567 = vmatprep.subr.bf16.mxu0 0
        %568 = vmatpush1.bf16.msra.mxu0 0
        %569 = vmatprep.subr.bf16.mxu0 0
        %570 = vmatpush1.bf16.msra.mxu0 0
        %571 = vmatprep.subr.bf16.mxu0 0
        %572 = vmatpush1.bf16.msra.mxu0 0
        %573 = vmatprep.subr.bf16.mxu0 0
        %574 = vmatpush1.bf16.msra.mxu0 0
        %575 = vmatprep.subr.bf16.mxu0 0
        %576 = vmatpush1.bf16.msra.mxu0 0
        %577 = vmatprep.subr.bf16.mxu0 0
        %578 = vmatpush1.bf16.msra.mxu0 0
        %579 = vmatprep.subr.bf16.mxu0 0
        %580 = vmatpush1.bf16.msra.mxu0 0
        %581 = vmatprep.subr.bf16.mxu0 0
        %582 = vmatpush1.bf16.msra.mxu0 0
        %583 = vmatprep.subr.bf16.mxu0 0
        %584 = vmatpush1.bf16.msra.mxu0 0
        %585 = vmatprep.subr.bf16.mxu0 0
        %586 = vmatpush1.bf16.msra.mxu0 0
        %587 = vmatprep.subr.bf16.mxu0 0
        %588 = vmatpush1.bf16.msra.mxu0 0
        %589 = vmatprep.subr.bf16.mxu0 0
        %590 = vmatpush1.bf16.msra.mxu0 0
        %591 = vmatprep.subr.bf16.mxu0 0
        %592 = vmatpush1.bf16.msra.mxu0 0
        %593 = vmatprep.subr.bf16.mxu0 0
        %594 = vmatpush1.bf16.msra.mxu0 0
        %595 = vmatprep.mubr.bf16.mxu0 0
        %596 = vmatmul.mubr.bf16.gmra.mrb[0].mxu0 %v557
        %v597 = vpop.f32.mrb[0].mxu0
        %v598 = vadd.f32 0.0, %v597
        %v599 = vpop.f32.mrb[0].mxu0
        %v600 = vpop.f32.mrb[0].mxu0
        %v601 = vpop.f32.mrb[0].mxu0
        %602 = vdwg.mxu0
        %604 = vrot.lane.b32.xlu0 %v489, 120
        %v605 = vpop.permute.xlu0 %604
        %606 = vrot.lane.b32.xlu0 %v490, 88
        %v607 = vpop.permute.xlu0 %606
        %v609 = vsel %vm494, %v605, 0
        %v612 = vsel %vm494, %v607, 0
        %614 = vmatprep.subr.bf16.mxu0 0
        %615 = vmatpush1.bf16.xpose.msra.mxu0 %v612
        %616 = vmatprep.subr.bf16.mxu0 0
        %617 = vmatpush1.bf16.xpose.msra.mxu0 0
        %618 = vmatprep.subr.bf16.mxu0 0
        %619 = vmatpush1.bf16.xpose.msra.mxu0 0
        %620 = vmatprep.subr.bf16.mxu0 0
        %621 = vmatpush1.bf16.xpose.msra.mxu0 0
        %622 = vmatprep.subr.bf16.mxu0 0
        %623 = vmatpush1.bf16.xpose.msra.mxu0 0
        %624 = vmatprep.subr.bf16.mxu0 0
        %625 = vmatpush1.bf16.xpose.msra.mxu0 0
        %626 = vmatprep.subr.bf16.mxu0 0
        %627 = vmatpush1.bf16.xpose.msra.mxu0 0
        %628 = vmatprep.subr.bf16.mxu0 0
        %629 = vmatpush1.bf16.xpose.msra.mxu0 0
        %630 = vmatprep.subr.bf16.mxu0 0
        %631 = vmatpush1.bf16.xpose.msra.mxu0 0
        %632 = vmatprep.subr.bf16.mxu0 0
        %633 = vmatpush1.bf16.xpose.msra.mxu0 0
        %634 = vmatprep.subr.bf16.mxu0 0
        %635 = vmatpush1.bf16.xpose.msra.mxu0 0
        %636 = vmatprep.subr.bf16.mxu0 0
        %637 = vmatpush1.bf16.xpose.msra.mxu0 0
        %638 = vmatprep.subr.bf16.mxu0 0
        %639 = vmatpush1.bf16.xpose.msra.mxu0 0
        %640 = vmatprep.subr.bf16.mxu0 0
        %641 = vmatpush1.bf16.xpose.msra.mxu0 0
        %642 = vmatprep.subr.bf16.mxu0 0
        %643 = vmatpush1.bf16.xpose.msra.mxu0 0
        %644 = vmatprep.subr.bf16.mxu0 0
        %645 = vmatpush1.bf16.xpose.msra.mxu0 0
        %646 = vmatprep.mubr.bf16.mxu0 0
        %647 = vmatmul.mubr.bf16.gmra.mrb[0].mxu0 %v609
        %v648 = vpop.f32.mrb[0].mxu0
        %v649 = vadd.f32 0.0, %v648
        %v650 = vpop.f32.mrb[0].mxu0
        %v651 = vpop.f32.mrb[0].mxu0
        %v652 = vpop.f32.mrb[0].mxu0
        %653 = vdwg.mxu0
        %v654 = vsel %vm487, %v649, -1e+09
        %v655 = vsel %vm494, %v654, -inf
        %656 = vmax.xlane.f32.xlu0 %v655
        %v657 = vpop.xlane.xlu0 %656
        %v658 = vsub.f32 %v654, %v657
        %v659 = vmul.f32 %v658, 1.442695
        %v660 = vpow.pop %v659
        %v661 = vsel %vm494, %v660, 0.0
        %662 = vadd.xlane.f32.xlu0 %v661
        %v663 = vpop.xlane.xlu0 %662
        %v664 = vrcp.pop %v663
        %v665 = vmul.f32 %v660, %v664
        %v666 = vpack.c.bf16 %v665, %v665
        %667 = vrot.lane.b32.xlu0 %v490, 56
        %v668 = vpop.permute.xlu0 %667
        %v670 = vsel %vm494, %v666, 0
        %v673 = vsel %vm559, %v668, 0
        %675 = vmatprep.subr.bf16.mxu0 0
        %676 = vmatpush1.bf16.msra.mxu0 %v673
        %677 = vmatprep.subr.bf16.mxu0 0
        %678 = vmatpush1.bf16.msra.mxu0 0
        %679 = vmatprep.subr.bf16.mxu0 0
        %680 = vmatpush1.bf16.msra.mxu0 0
        %681 = vmatprep.subr.bf16.mxu0 0
        %682 = vmatpush1.bf16.msra.mxu0 0
        %683 = vmatprep.subr.bf16.mxu0 0
        %684 = vmatpush1.bf16.msra.mxu0 0
        %685 = vmatprep.subr.bf16.mxu0 0
        %686 = vmatpush1.bf16.msra.mxu0 0
        %687 = vmatprep.subr.bf16.mxu0 0
        %688 = vmatpush1.bf16.msra.mxu0 0
        %689 = vmatprep.subr.bf16.mxu0 0
        %690 = vmatpush1.bf16.msra.mxu0 0
        %691 = vmatprep.subr.bf16.mxu0 0
        %692 = vmatpush1.bf16.msra.mxu0 0
        %693 = vmatprep.subr.bf16.mxu0 0
        %694 = vmatpush1.bf16.msra.mxu0 0
        %695 = vmatprep.subr.bf16.mxu0 0
        %696 = vmatpush1.bf16.msra.mxu0 0
        %697 = vmatprep.subr.bf16.mxu0 0
        %698 = vmatpush1.bf16.msra.mxu0 0
        %699 = vmatprep.subr.bf16.mxu0 0
        %700 = vmatpush1.bf16.msra.mxu0 0
        %701 = vmatprep.subr.bf16.mxu0 0
        %702 = vmatpush1.bf16.msra.mxu0 0
        %703 = vmatprep.subr.bf16.mxu0 0
        %704 = vmatpush1.bf16.msra.mxu0 0
        %705 = vmatprep.subr.bf16.mxu0 0
        %706 = vmatpush1.bf16.msra.mxu0 0
        %707 = vmatprep.mubr.bf16.mxu0 0
        %708 = vmatmul.mubr.bf16.gmra.mrb[0].mxu0 %v670
        %v709 = vpop.f32.mrb[0].mxu0
        %v710 = vadd.f32 0.0, %v709
        %v711 = vpop.f32.mrb[0].mxu0
        %v712 = vpop.f32.mrb[0].mxu0
        %v713 = vpop.f32.mrb[0].mxu0
        %714 = vdwg.mxu0
        %715 = vrot.lane.b32.xlu0 %v489, 112
        %v716 = vpop.permute.xlu0 %715
        %717 = vrot.lane.b32.xlu0 %v490, 80
        %v718 = vpop.permute.xlu0 %717
        %v720 = vsel %vm494, %v716, 0
        %v723 = vsel %vm494, %v718, 0
        %725 = vmatprep.subr.bf16.mxu0 0
        %726 = vmatpush1.bf16.xpose.msra.mxu0 %v723
        %727 = vmatprep.subr.bf16.mxu0 0
        %728 = vmatpush1.bf16.xpose.msra.mxu0 0
        %729 = vmatprep.subr.bf16.mxu0 0
        %730 = vmatpush1.bf16.xpose.msra.mxu0 0
        %731 = vmatprep.subr.bf16.mxu0 0
        %732 = vmatpush1.bf16.xpose.msra.mxu0 0
        %733 = vmatprep.subr.bf16.mxu0 0
        %734 = vmatpush1.bf16.xpose.msra.mxu0 0
        %735 = vmatprep.subr.bf16.mxu0 0
        %736 = vmatpush1.bf16.xpose.msra.mxu0 0
        %737 = vmatprep.subr.bf16.mxu0 0
        %738 = vmatpush1.bf16.xpose.msra.mxu0 0
        %739 = vmatprep.subr.bf16.mxu0 0
        %740 = vmatpush1.bf16.xpose.msra.mxu0 0
        %741 = vmatprep.subr.bf16.mxu0 0
        %742 = vmatpush1.bf16.xpose.msra.mxu0 0
        %743 = vmatprep.subr.bf16.mxu0 0
        %744 = vmatpush1.bf16.xpose.msra.mxu0 0
        %745 = vmatprep.subr.bf16.mxu0 0
        %746 = vmatpush1.bf16.xpose.msra.mxu0 0
        %747 = vmatprep.subr.bf16.mxu0 0
        %748 = vmatpush1.bf16.xpose.msra.mxu0 0
        %749 = vmatprep.subr.bf16.mxu0 0
        %750 = vmatpush1.bf16.xpose.msra.mxu0 0
        %751 = vmatprep.subr.bf16.mxu0 0
        %752 = vmatpush1.bf16.xpose.msra.mxu0 0
        %753 = vmatprep.subr.bf16.mxu0 0
        %754 = vmatpush1.bf16.xpose.msra.mxu0 0
        %755 = vmatprep.subr.bf16.mxu0 0
        %756 = vmatpush1.bf16.xpose.msra.mxu0 0
        %757 = vmatprep.mubr.bf16.mxu0 0
        %758 = vmatmul.mubr.bf16.gmra.mrb[0].mxu0 %v720
        %v759 = vpop.f32.mrb[0].mxu0
        %v760 = vadd.f32 0.0, %v759
        %v761 = vpop.f32.mrb[0].mxu0
        %v762 = vpop.f32.mrb[0].mxu0
        %v763 = vpop.f32.mrb[0].mxu0
        %764 = vdwg.mxu0
        %v765 = vsel %vm487, %v760, -1e+09
        %v766 = vsel %vm494, %v765, -inf
        %767 = vmax.xlane.f32.xlu0 %v766
        %v768 = vpop.xlane.xlu0 %767
        %v769 = vsub.f32 %v765, %v768
        %v770 = vmul.f32 %v769, 1.442695
        %v771 = vpow.pop %v770
        %v772 = vsel %vm494, %v771, 0.0
        %773 = vadd.xlane.f32.xlu0 %v772
        %v774 = vpop.xlane.xlu0 %773
        %v775 = vrcp.pop %v774
        %v776 = vmul.f32 %v771, %v775
        %v777 = vpack.c.bf16 %v776, %v776
        %778 = vrot.lane.b32.xlu0 %v490, 48
        %v779 = vpop.permute.xlu0 %778
        %v781 = vsel %vm494, %v777, 0
        %v784 = vsel %vm559, %v779, 0
        %786 = vmatprep.subr.bf16.mxu0 0
        %787 = vmatpush1.bf16.msra.mxu0 %v784
        %788 = vmatprep.subr.bf16.mxu0 0
        %789 = vmatpush1.bf16.msra.mxu0 0
        %790 = vmatprep.subr.bf16.mxu0 0
        %791 = vmatpush1.bf16.msra.mxu0 0
        %792 = vmatprep.subr.bf16.mxu0 0
        %793 = vmatpush1.bf16.msra.mxu0 0
        %794 = vmatprep.subr.bf16.mxu0 0
        %795 = vmatpush1.bf16.msra.mxu0 0
        %796 = vmatprep.subr.bf16.mxu0 0
        %797 = vmatpush1.bf16.msra.mxu0 0
        %798 = vmatprep.subr.bf16.mxu0 0
        %799 = vmatpush1.bf16.msra.mxu0 0
        %800 = vmatprep.subr.bf16.mxu0 0
        %801 = vmatpush1.bf16.msra.mxu0 0
        %802 = vmatprep.subr.bf16.mxu0 0
        %803 = vmatpush1.bf16.msra.mxu0 0
        %804 = vmatprep.subr.bf16.mxu0 0
        %805 = vmatpush1.bf16.msra.mxu0 0
        %806 = vmatprep.subr.bf16.mxu0 0
        %807 = vmatpush1.bf16.msra.mxu0 0
        %808 = vmatprep.subr.bf16.mxu0 0
        %809 = vmatpush1.bf16.msra.mxu0 0
        %810 = vmatprep.subr.bf16.mxu0 0
        %811 = vmatpush1.bf16.msra.mxu0 0
        %812 = vmatprep.subr.bf16.mxu0 0
        %813 = vmatpush1.bf16.msra.mxu0 0
        %814 = vmatprep.subr.bf16.mxu0 0
        %815 = vmatpush1.bf16.msra.mxu0 0
        %816 = vmatprep.subr.bf16.mxu0 0
        %817 = vmatpush1.bf16.msra.mxu0 0
        %818 = vmatprep.mubr.bf16.mxu0 0
        %819 = vmatmul.mubr.bf16.gmra.mrb[0].mxu0 %v781
        %v820 = vpop.f32.mrb[0].mxu0
        %v821 = vadd.f32 0.0, %v820
        %v822 = vpop.f32.mrb[0].mxu0
        %v823 = vpop.f32.mrb[0].mxu0
        %v824 = vpop.f32.mrb[0].mxu0
        %825 = vdwg.mxu0
        %826 = vrot.lane.b32.xlu0 %v489, 104
        %v827 = vpop.permute.xlu0 %826
        %828 = vrot.lane.b32.xlu0 %v490, 72
        %v829 = vpop.permute.xlu0 %828
        %v831 = vsel %vm494, %v827, 0
        %v834 = vsel %vm494, %v829, 0
        %836 = vmatprep.subr.bf16.mxu0 0
        %837 = vmatpush1.bf16.xpose.msra.mxu0 %v834
        %838 = vmatprep.subr.bf16.mxu0 0
        %839 = vmatpush1.bf16.xpose.msra.mxu0 0
        %840 = vmatprep.subr.bf16.mxu0 0
        %841 = vmatpush1.bf16.xpose.msra.mxu0 0
        %842 = vmatprep.subr.bf16.mxu0 0
        %843 = vmatpush1.bf16.xpose.msra.mxu0 0
        %844 = vmatprep.subr.bf16.mxu0 0
        %845 = vmatpush1.bf16.xpose.msra.mxu0 0
        %846 = vmatprep.subr.bf16.mxu0 0
        %847 = vmatpush1.bf16.xpose.msra.mxu0 0
        %848 = vmatprep.subr.bf16.mxu0 0
        %849 = vmatpush1.bf16.xpose.msra.mxu0 0
        %850 = vmatprep.subr.bf16.mxu0 0
        %851 = vmatpush1.bf16.xpose.msra.mxu0 0
        %852 = vmatprep.subr.bf16.mxu0 0
        %853 = vmatpush1.bf16.xpose.msra.mxu0 0
        %854 = vmatprep.subr.bf16.mxu0 0
        %855 = vmatpush1.bf16.xpose.msra.mxu0 0
        %856 = vmatprep.subr.bf16.mxu0 0
        %857 = vmatpush1.bf16.xpose.msra.mxu0 0
        %858 = vmatprep.subr.bf16.mxu0 0
        %859 = vmatpush1.bf16.xpose.msra.mxu0 0
        %860 = vmatprep.subr.bf16.mxu0 0
        %861 = vmatpush1.bf16.xpose.msra.mxu0 0
        %862 = vmatprep.subr.bf16.mxu0 0
        %863 = vmatpush1.bf16.xpose.msra.mxu0 0
        %864 = vmatprep.subr.bf16.mxu0 0
        %865 = vmatpush1.bf16.xpose.msra.mxu0 0
        %866 = vmatprep.subr.bf16.mxu0 0
        %867 = vmatpush1.bf16.xpose.msra.mxu0 0
        %868 = vmatprep.mubr.bf16.mxu0 0
        %869 = vmatmul.mubr.bf16.gmra.mrb[0].mxu0 %v831
        %v870 = vpop.f32.mrb[0].mxu0
        %v871 = vadd.f32 0.0, %v870
        %v872 = vpop.f32.mrb[0].mxu0
        %v873 = vpop.f32.mrb[0].mxu0
        %v874 = vpop.f32.mrb[0].mxu0
        %875 = vdwg.mxu0
        %v876 = vsel %vm487, %v871, -1e+09
        %v877 = vsel %vm494, %v876, -inf
        %878 = vmax.xlane.f32.xlu0 %v877
        %v879 = vpop.xlane.xlu0 %878
        %v880 = vsub.f32 %v876, %v879
        %v881 = vmul.f32 %v880, 1.442695
        %v882 = vpow.pop %v881
        %v883 = vsel %vm494, %v882, 0.0
        %884 = vadd.xlane.f32.xlu0 %v883
        %v885 = vpop.xlane.xlu0 %884
        %v886 = vrcp.pop %v885
        %v887 = vmul.f32 %v882, %v886
        %v888 = vpack.c.bf16 %v887, %v887
        %889 = vrot.lane.b32.xlu0 %v490, 40
        %v890 = vpop.permute.xlu0 %889
        %v892 = vsel %vm494, %v888, 0
        %v895 = vsel %vm559, %v890, 0
        %897 = vmatprep.subr.bf16.mxu0 0
        %898 = vmatpush1.bf16.msra.mxu0 %v895
        %899 = vmatprep.subr.bf16.mxu0 0
        %900 = vmatpush1.bf16.msra.mxu0 0
        %901 = vmatprep.subr.bf16.mxu0 0
        %902 = vmatpush1.bf16.msra.mxu0 0
        %903 = vmatprep.subr.bf16.mxu0 0
        %904 = vmatpush1.bf16.msra.mxu0 0
        %905 = vmatprep.subr.bf16.mxu0 0
        %906 = vmatpush1.bf16.msra.mxu0 0
        %907 = vmatprep.subr.bf16.mxu0 0
        %908 = vmatpush1.bf16.msra.mxu0 0
        %909 = vmatprep.subr.bf16.mxu0 0
        %910 = vmatpush1.bf16.msra.mxu0 0
        %911 = vmatprep.subr.bf16.mxu0 0
        %912 = vmatpush1.bf16.msra.mxu0 0
        %913 = vmatprep.subr.bf16.mxu0 0
        %914 = vmatpush1.bf16.msra.mxu0 0
        %915 = vmatprep.subr.bf16.mxu0 0
        %916 = vmatpush1.bf16.msra.mxu0 0
        %917 = vmatprep.subr.bf16.mxu0 0
        %918 = vmatpush1.bf16.msra.mxu0 0
        %919 = vmatprep.subr.bf16.mxu0 0
        %920 = vmatpush1.bf16.msra.mxu0 0
        %921 = vmatprep.subr.bf16.mxu0 0
        %922 = vmatpush1.bf16.msra.mxu0 0
        %923 = vmatprep.subr.bf16.mxu0 0
        %924 = vmatpush1.bf16.msra.mxu0 0
        %925 = vmatprep.subr.bf16.mxu0 0
        %926 = vmatpush1.bf16.msra.mxu0 0
        %927 = vmatprep.subr.bf16.mxu0 0
        %928 = vmatpush1.bf16.msra.mxu0 0
        %929 = vmatprep.mubr.bf16.mxu0 0
        %930 = vmatmul.mubr.bf16.gmra.mrb[0].mxu0 %v892
        %v931 = vpop.f32.mrb[0].mxu0
        %v932 = vadd.f32 0.0, %v931
        %v933 = vpop.f32.mrb[0].mxu0
        %v934 = vpop.f32.mrb[0].mxu0
        %v935 = vpop.f32.mrb[0].mxu0
        %936 = vdwg.mxu0
        %938 = vrot.lane.b32.xlu0 %v710, 8
        %v939 = vpop.permute.xlu0 %938
        %942 = vrot.lane.b32.xlu0 %v821, 16
        %v943 = vpop.permute.xlu0 %942
        %946 = vrot.lane.b32.xlu0 %v932, 24
        %v947 = vpop.permute.xlu0 %946
        %v949 = vsel %vm494, %v598, %v939
        %vm950 = vcmask 130048
        %v951 = vsel %vm950, %v949, %v943
        %vm952 = vcmask 195584
        %v953 = vsel %vm952, %v951, %v947
        %v954 = vpack.c.bf16 %v953, %v953
        %v955 = vld [vmem:[#allocation13] sm:$0xf]
        %v956 = vld [vmem:[#allocation13 + $0x4] sm:$0xf]
        %v957 = vld [vmem:[#allocation13 + $0x8] sm:$0xf]
        %v958 = vld [vmem:[#allocation13 + $0xc] sm:$0xf]
        %v959 = vld [vmem:[#allocation15] sm:$0x1]
        %v961 = vlaneseq
        %v962 = vshrl.u32 %v961, 7
        %v963 = vsub.s32 0, %v962
        %v964 = vrot.slane %v959, %v963
        %v970 = vunpack.c.l.b16 %v955
        %v971 = vunpack.c.l.b16 %v956
        %v972 = vunpack.c.l.b16 %v957
        %v973 = vunpack.c.l.b16 %v958
        %v974 = vpack.c.b16 %v971, %v970
        %v975 = vpack.c.b16 %v973, %v972
        %v979 = vsel %vm381, %v954, 0
        %981 = vmatprep.subr.bf16.mxu0 0
        %982 = vmatpush1.bf16.msra.mxu0 %v974
        %983 = vmatprep.subr.bf16.mxu0 0
        %984 = vmatpush1.bf16.msra.mxu0 %v975
        %985 = vmatprep.subr.bf16.mxu0 0
        %986 = vmatpush1.bf16.msra.mxu0 0
        %987 = vmatprep.subr.bf16.mxu0 0
        %988 = vmatpush1.bf16.msra.mxu0 0
        %989 = vmatprep.subr.bf16.mxu0 0
        %990 = vmatpush1.bf16.msra.mxu0 0
        %991 = vmatprep.subr.bf16.mxu0 0
        %992 = vmatpush1.bf16.msra.mxu0 0
        %993 = vmatprep.subr.bf16.mxu0 0
        %994 = vmatpush1.bf16.msra.mxu0 0
        %995 = vmatprep.subr.bf16.mxu0 0
        %996 = vmatpush1.bf16.msra.mxu0 0
        %997 = vmatprep.subr.bf16.mxu0 0
        %998 = vmatpush1.bf16.msra.mxu0 0
        %999 = vmatprep.subr.bf16.mxu0 0
        %1000 = vmatpush1.bf16.msra.mxu0 0
        %1001 = vmatprep.subr.bf16.mxu0 0
        %1002 = vmatpush1.bf16.msra.mxu0 0
        %1003 = vmatprep.subr.bf16.mxu0 0
        %1004 = vmatpush1.bf16.msra.mxu0 0
        %1005 = vmatprep.subr.bf16.mxu0 0
        %1006 = vmatpush1.bf16.msra.mxu0 0
        %1007 = vmatprep.subr.bf16.mxu0 0
        %1008 = vmatpush1.bf16.msra.mxu0 0
        %1009 = vmatprep.subr.bf16.mxu0 0
        %1010 = vmatpush1.bf16.msra.mxu0 0
        %1011 = vmatprep.subr.bf16.mxu0 0
        %1012 = vmatpush1.bf16.msra.mxu0 0
        %1013 = vmatprep.mubr.bf16.mxu0 0
        %1014 = vmatmul.mubr.bf16.gmra.mrb[0].mxu0 %v979
        %v1015 = vpop.f32.mrb[0].mxu0
        %v1016 = vadd.f32 %v964, %v1015
        %v1017 = vpop.f32.mrb[0].mxu0
        %v1018 = vpop.f32.mrb[0].mxu0
        %v1019 = vpop.f32.mrb[0].mxu0
        %1020 = vdwg.mxu0
        %v1021 = vadd.f32 %v1016, %v380
        %v1022 = vpack.c.bf16 %v1021, %v1021
        %vm1023 = vcmask 257024
        %1024 = vst.msk [vmem:[%s377] sm:$0xf] %vm1023, %v1022
        %s1025 = sand.u32 %s192, 1
        %s1026 = scalar_lea.sflag [#allocation6], %s1025
        %s1027 = sand.u32 %s192, 1
        %s1028 = smul.addr %s1027, 4
        %s1029 = scalar_lea.vmem [#allocation16], %s1028
        // Predicated region
        $region77: #{generator2_forward.14} parent=47 // pred_check
          %p1030 = pneg %p202
        $region78: #{generator2_forward.14} parent=47 // pred_check_branch
          %1032 = sbr.rel (%p1030) target = $region80
        $region79: #{generator2_forward.14} parent=47 // pred_region
          %s1034 = ssub.s32 64, 64
          %1035 = vsyncadd %s1026, %s1034
          %s1036 = smul.addr %s32, 64
          %s1037 = scalar_lea.hbm %s8, %s1036
          %s1039 = sshll.u32 %s1029, 4
          %s1040 = int_to_ptr.vmem [resolvable:$true] %s1039
          %1042 = dma.vmem_to_hbm [thread:$0]  %s1040, 64, %s1037, %s1026
        $region80: #{generator2_forward.14} parent=47 // pred_fallthru
          _
      $region48: #{generator2_forward.14} parent=5 // pred_fallthru
        _
      %p1043 = scmp.le.s32.totalorder 2, %s27
      // Predicated region
      $region81: #{generator2_forward.14} parent=5 // pred_check
        %p1044 = pneg %p1043
      $region82: #{generator2_forward.14} parent=5 // pred_check_branch
        %1046 = sbr.rel (%p1044) target = $region84
      $region83: #{generator2_forward.14} parent=5 // pred_region
        %s1047 = ssub.s32 %s27, 2
        // Predicated region
        $region85: #{generator2_forward.14} parent=83 // pred_check
          %p1048 = pneg %p208
        $region86: #{generator2_forward.14} parent=83 // pred_check_branch
          %1050 = sbr.rel (%p1048) target = $region88
        $region87: #{generator2_forward.14} parent=83 // pred_region
          %s1051 = sand.u32 %s193, 1
          %s1052 = scalar_lea.sflag [#allocation6], %s1051
          %s1053 = sand.u32 %s193, 1
          %s1054 = smul.addr %s1053, 4
          %s1055 = scalar_lea.vmem [#allocation16], %s1054
          %1056 = dma.done %s1052, 64
        $region88: #{generator2_forward.14} parent=83 // pred_fallthru
          _
      $region84: #{generator2_forward.14} parent=5 // pred_fallthru
        _
    $region6: #{generator2_forward.14} parent=1 // loop_footer
      %s31 = sadd.s32 1, %s27
    $region7: #{generator2_forward.14} parent=1 // loop_footer_branch
      %26 = sbr.rel target = $region3
    $region8: #{generator2_forward.14} parent=1 // loop_exit
      _
    %1057 = vsyncpa [#allocation5], 1
    %s1058 = scalar_lea.sflag [#allocation5], 1
    %1059 = vsyncpa %s1058, 1
    %1060 = vsyncpa [#allocation8], 1
    %1061 = vsyncpa [#allocation11], 1
    %1062 = vsyncpa [#allocation14], 1
    %1063 = vsyncpa [#allocation6], 1
    %s1064 = scalar_lea.sflag [#allocation6], 1
    %1065 = vsyncpa %s1064, 1

// kernel: generator2_forward.17
$region0: #{generator2_forward.17}
  #allocation0 [shape = 'u32[]', space=smem, size = 0x4, offset = 0x4, fixed_abs, tag = 'smem constant byte address 0x4 - core index']
  #allocation1 [shape = 'u32[144,128]{1,0:T(1,128)}', space=vmem, size = 0x12000, scoped, tag = 'internal scratch']
  %s0 = inlined_call_operand.hbm [shape: bf16[16,32], index: 0, kind: input, shape index: {}]
  %s1 = inlined_call_operand.vmem [shape: f32[1,32], index: 1, kind: input, shape index: {}]
  %s2 = inlined_call_operand.vmem [shape: f32[1,32], index: 2, kind: input, shape index: {}]
  %s3 = inlined_call_operand.hbm [shape: bf16[32,17], index: 3, kind: input, shape index: {}]
  %s4 = inlined_call_operand.vmem [shape: f32[1,17], index: 4, kind: input, shape index: {}]
  %s5 = inlined_call_operand.vmem [shape: f32[16,17], index: 5, kind: output, shape index: {}]
  %s6 = sld [smem:[#allocation0]]
  $region38: #{generator2_forward.17} parent=0
    _
  %s8 = ssub.s32 1, %s6
  %s9 = scalar_select 0, %s8, %s6
  $region1: #{generator2_forward.17} parent=0
    #allocation2 [shape = 'u8[4096]{0}', space=vmem, size = 0x1000, scoped, tag = 'input window, operand 0, single buffered']
    #allocation3 [shape = 's32[1]{0}', space=sflag, size = 0x4, scoped, tag = 'scoped memory for generator2_forward.17']
    #allocation4 [shape = 'u8[8192]{0}', space=vmem, size = 0x2000, scoped, tag = 'input window, operand 3, single buffered']
    #allocation5 [shape = 's32[1]{0}', space=sflag, size = 0x4, scoped, tag = 'scoped memory for generator2_forward.17']
    %10 = vsyncpa [#allocation3], 0
    %11 = vsyncpa [#allocation5], 0
    // Predicated region
    $region2: #{generator2_forward.17} parent=1 // pred_check
      _
    $region3: #{generator2_forward.17} parent=1 // pred_check_branch
      %13 = sbr.rel (0) target = $region5
    $region4: #{generator2_forward.17} parent=1 // pred_region
      %s15 = ssub.s32 128, 128
      %16 = vsyncadd [#allocation3], %s15
      %s17 = sshll.u32 [#allocation2], 4
      %s18 = int_to_ptr.vmem [resolvable:$true] %s17
      %23 = dma.hbm_to_vmem [thread:$0]  %s0, 128, %s18, [#allocation3], 64, 64, 4
    $region5: #{generator2_forward.17} parent=1 // pred_fallthru
      _
    // Predicated region
    $region6: #{generator2_forward.17} parent=1 // pred_check
      _
    $region7: #{generator2_forward.17} parent=1 // pred_check_branch
      %25 = sbr.rel (0) target = $region9
    $region8: #{generator2_forward.17} parent=1 // pred_region
      _
    $region9: #{generator2_forward.17} parent=1 // pred_fallthru
      _
    // Predicated region
    $region10: #{generator2_forward.17} parent=1 // pred_check
      _
    $region11: #{generator2_forward.17} parent=1 // pred_check_branch
      %27 = sbr.rel (0) target = $region13
    $region12: #{generator2_forward.17} parent=1 // pred_region
      _
    $region13: #{generator2_forward.17} parent=1 // pred_fallthru
      _
    // Predicated region
    $region14: #{generator2_forward.17} parent=1 // pred_check
      _
    $region15: #{generator2_forward.17} parent=1 // pred_check_branch
      %29 = sbr.rel (0) target = $region17
    $region16: #{generator2_forward.17} parent=1 // pred_region
      %s31 = ssub.s32 256, 256
      %32 = vsyncadd [#allocation5], %s31
      %s33 = sshll.u32 [#allocation4], 4
      %s34 = int_to_ptr.vmem [resolvable:$true] %s33
      %39 = dma.hbm_to_vmem [thread:$0]  %s3, 256, %s34, [#allocation5], 64, 64, 4
    $region17: #{generator2_forward.17} parent=1 // pred_fallthru
      _
    // Predicated region
    $region18: #{generator2_forward.17} parent=1 // pred_check
      _
    $region19: #{generator2_forward.17} parent=1 // pred_check_branch
      %41 = sbr.rel (0) target = $region21
    $region20: #{generator2_forward.17} parent=1 // pred_region
      _
    $region21: #{generator2_forward.17} parent=1 // pred_fallthru
      _
    // Predicated region
    $region22: #{generator2_forward.17} parent=1 // pred_check
      _
    $region23: #{generator2_forward.17} parent=1 // pred_check_branch
      %43 = sbr.rel (0) target = $region25
    $region24: #{generator2_forward.17} parent=1 // pred_region
      %44 = dma.done [#allocation3], 128
    $region25: #{generator2_forward.17} parent=1 // pred_fallthru
      _
    // Predicated region
    $region26: #{generator2_forward.17} parent=1 // pred_check
      _
    $region27: #{generator2_forward.17} parent=1 // pred_check_branch
      %46 = sbr.rel (0) target = $region29
    $region28: #{generator2_forward.17} parent=1 // pred_region
      %47 = dma.done [#allocation5], 256
    $region29: #{generator2_forward.17} parent=1 // pred_fallthru
      _
    %v49 = vld [vmem:[#allocation2] sm:$0xf]
    %v50 = vld [vmem:[#allocation2 + $0x4] sm:$0xf]
    %v51 = vunpack.c.l.bf16 %v49
    %v52 = vunpack.c.l.bf16 %v50
    %vm53 = vcmask 261120
    %v54 = vsel %vm53, %v51, 0.0
    %55 = vadd.xlane.f32.xlu0 %v54
    %v56 = vpop.xlane.xlu0 %55
    %v57 = vsel %vm53, %v52, 0.0
    %58 = vadd.xlane.f32.xlu0 %v57
    %v59 = vpop.xlane.xlu0 %58
    %v60 = vrcp.pop 32.0
    %v61 = vmul.f32 %v56, %v60
    %v62 = vmul.f32 %v59, %v60
    %v63 = vsub.f32 %v51, %v61
    %v64 = vsub.f32 %v52, %v62
    %v65 = vmul.f32 %v63, %v63
    %v66 = vmul.f32 %v64, %v64
    %v67 = vsel %vm53, %v65, 0.0
    %68 = vadd.xlane.f32.xlu0 %v67
    %v69 = vpop.xlane.xlu0 %68
    %v70 = vsel %vm53, %v66, 0.0
    %71 = vadd.xlane.f32.xlu0 %v70
    %v72 = vpop.xlane.xlu0 %71
    %v73 = vmul.f32 %v69, %v60
    %v74 = vmul.f32 %v72, %v60
    %v75 = vadd.f32 %v73, 1e-06
    %v76 = vadd.f32 %v74, 1e-06
    %v77 = vrsqrt.pop %v75
    %v78 = vrsqrt.pop %v76
    %v79 = vmul.f32 %v63, %v77
    %v80 = vmul.f32 %v64, %v78
    %v81 = vld [vmem:[%s1] sm:$0x1]
    %v83 = vlaneseq
    %v84 = vshrl.u32 %v83, 7
    %v85 = vsub.s32 0, %v84
    %v86 = vrot.slane %v81, %v85
    %v88 = vmul.f32 %v79, %v86
    %v89 = vmul.f32 %v80, %v86
    %v90 = vld [vmem:[%s2] sm:$0x1]
    %v92 = vlaneseq
    %v93 = vshrl.u32 %v92, 7
    %v94 = vsub.s32 0, %v93
    %v95 = vrot.slane %v90, %v94
    %v97 = vadd.f32 %v88, %v95
    %v98 = vadd.f32 %v89, %v95
    %v99 = vpack.c.bf16 %v98, %v97
    %v100 = vld [vmem:[#allocation4] sm:$0xf]
    %v101 = vld [vmem:[#allocation4 + $0x4] sm:$0xf]
    %v102 = vld [vmem:[#allocation4 + $0x8] sm:$0xf]
    %v103 = vld [vmem:[#allocation4 + $0xc] sm:$0xf]
    %v104 = vld [vmem:[%s4] sm:$0x1]
    %v106 = vlaneseq
    %v107 = vshrl.u32 %v106, 7
    %v108 = vsub.s32 0, %v107
    %v109 = vrot.slane %v104, %v108
    %v115 = vunpack.c.l.b16 %v100
    %v116 = vunpack.c.l.b16 %v101
    %v117 = vunpack.c.l.b16 %v102
    %v118 = vunpack.c.l.b16 %v103
    %v119 = vpack.c.b16 %v116, %v115
    %v120 = vpack.c.b16 %v118, %v117
    %v124 = vsel %vm53, %v99, 0
    %126 = vmatprep.subr.bf16.mxu0 0
    %127 = vmatpush1.bf16.msra.mxu0 %v119
    %128 = vmatprep.subr.bf16.mxu0 0
    %129 = vmatpush1.bf16.msra.mxu0 %v120
    %130 = vmatprep.subr.bf16.mxu0 0
    %131 = vmatpush1.bf16.msra.mxu0 0
    %132 = vmatprep.subr.bf16.mxu0 0
    %133 = vmatpush1.bf16.msra.mxu0 0
    %134 = vmatprep.subr.bf16.mxu0 0
    %135 = vmatpush1.bf16.msra.mxu0 0
    %136 = vmatprep.subr.bf16.mxu0 0
    %137 = vmatpush1.bf16.msra.mxu0 0
    %138 = vmatprep.subr.bf16.mxu0 0
    %139 = vmatpush1.bf16.msra.mxu0 0
    %140 = vmatprep.subr.bf16.mxu0 0
    %141 = vmatpush1.bf16.msra.mxu0 0
    %142 = vmatprep.subr.bf16.mxu0 0
    %143 = vmatpush1.bf16.msra.mxu0 0
    %144 = vmatprep.subr.bf16.mxu0 0
    %145 = vmatpush1.bf16.msra.mxu0 0
    %146 = vmatprep.subr.bf16.mxu0 0
    %147 = vmatpush1.bf16.msra.mxu0 0
    %148 = vmatprep.subr.bf16.mxu0 0
    %149 = vmatpush1.bf16.msra.mxu0 0
    %150 = vmatprep.subr.bf16.mxu0 0
    %151 = vmatpush1.bf16.msra.mxu0 0
    %152 = vmatprep.subr.bf16.mxu0 0
    %153 = vmatpush1.bf16.msra.mxu0 0
    %154 = vmatprep.subr.bf16.mxu0 0
    %155 = vmatpush1.bf16.msra.mxu0 0
    %156 = vmatprep.subr.bf16.mxu0 0
    %157 = vmatpush1.bf16.msra.mxu0 0
    %158 = vmatprep.mubr.bf16.mxu0 0
    %159 = vmatmul.mubr.bf16.gmra.mrb[0].mxu0 %v124
    %v160 = vpop.f32.mrb[0].mxu0
    %v161 = vadd.f32 %v109, %v160
    %v162 = vpop.f32.mrb[0].mxu0
    %v163 = vpop.f32.mrb[0].mxu0
    %v164 = vadd.f32 %v109, %v163
    %v165 = vpop.f32.mrb[0].mxu0
    %166 = vdwg.mxu0
    %vm167 = vcmask 138240
    %168 = vst.msk [vmem:[%s5] sm:$0xff] %vm167, %v161
    %169 = vst.msk [vmem:[%s5 + $0x8] sm:$0xff] %vm167, %v164
    // Predicated region
    $region30: #{generator2_forward.17} parent=1 // pred_check
      _
    $region31: #{generator2_forward.17} parent=1 // pred_check_branch
      %171 = sbr.rel (0) target = $region33
    $region32: #{generator2_forward.17} parent=1 // pred_region
      _
    $region33: #{generator2_forward.17} parent=1 // pred_fallthru
      _
    // Predicated region
    $region34: #{generator2_forward.17} parent=1 // pred_check
      _
    $region35: #{generator2_forward.17} parent=1 // pred_check_branch
      %173 = sbr.rel (0) target = $region37
    $region36: #{generator2_forward.17} parent=1 // pred_region
      _
    $region37: #{generator2_forward.17} parent=1 // pred_fallthru
      _
    %174 = vsyncpa [#allocation3], 1
    %175 = vsyncpa [#allocation5], 1

// kernel: generator2_forward.16
$region0: #{generator2_forward.16}
  #allocation0 [shape = 'u32[]', space=smem, size = 0x4, offset = 0x4, fixed_abs, tag = 'smem constant byte address 0x4 - core index']
  #allocation1 [shape = 'u32[144,128]{1,0:T(1,128)}', space=vmem, size = 0x12000, scoped, tag = 'internal scratch']
  %s0 = inlined_call_operand.hbm [shape: bf16[16,32], index: 0, kind: input, shape index: {}]
  %s1 = inlined_call_operand.hbm [shape: f32[1,32], index: 1, kind: input, shape index: {}]
  %s2 = inlined_call_operand.hbm [shape: f32[1,32], index: 2, kind: input, shape index: {}, may-alias: {2,6}]
  %s3 = inlined_call_operand.hbm [shape: bf16[32,64], index: 3, kind: input, shape index: {}]
  %s4 = inlined_call_operand.hbm [shape: f32[1,64], index: 4, kind: input, shape index: {}]
  %s5 = inlined_call_operand.hbm [shape: bf16[64,32], index: 5, kind: input, shape index: {}]
  %s6 = inlined_call_operand.hbm [shape: f32[1,32], index: 6, kind: input, shape index: {}, may-alias: {2,6}]
  %s7 = inlined_call_operand.hbm [shape: bf16[16,32], index: 7, kind: output, shape index: {}]
  %s8 = sld [smem:[#allocation0]]
  $region66: #{generator2_forward.16} parent=0
    _
  %s10 = ssub.s32 1, %s8
  %s11 = scalar_select 0, %s10, %s8
  $region1: #{generator2_forward.16} parent=0
    #allocation2 [shape = 'u8[4096]{0}', space=vmem, size = 0x1000, scoped, tag = 'input window, operand 0, single buffered']
    #allocation3 [shape = 's32[1]{0}', space=sflag, size = 0x4, scoped, tag = 'scoped memory for generator2_forward.16']
    #allocation4 [shape = 's32[1]{0}', space=sflag, size = 0x4, scoped, tag = 'scoped memory for generator2_forward.16']
    #allocation5 [shape = 'u8[512]{0}', space=vmem, size = 0x400, scoped, tag = 'input window, operand 1, single buffered']
    #allocation6 [shape = 's32[1]{0}', space=sflag, size = 0x4, scoped, tag = 'scoped memory for generator2_forward.16']
    #allocation7 [shape = 'u8[512]{0}', space=vmem, size = 0x400, scoped, tag = 'input window, operand 2, single buffered']
    #allocation8 [shape = 'u8[8192]{0}', space=vmem, size = 0x2000, scoped, tag = 'input window, operand 3, single buffered']
    #allocation9 [shape = 's32[1]{0}', space=sflag, size = 0x4, scoped, tag = 'scoped memory for generator2_forward.16']
    #allocation10 [shape = 'u8[512]{0}', space=vmem, size = 0x400, scoped, tag = 'input window, operand 4, single buffered']
    #allocation11 [shape = 'u8[16384]{0}', space=vmem, size = 0x4000, scoped, tag = 'input window, operand 5, single buffered']
    #allocation12 [shape = 's32[1]{0}', space=sflag, size = 0x4, scoped, tag = 'scoped memory for generator2_forward.16']
    #allocation13 [shape = 'u8[512]{0}', space=vmem, size = 0x400, scoped, tag = 'input window, operand 6, single buffered']
    #allocation14 [shape = 'u8[4096]{0}', space=vmem, size = 0x1000, scoped, tag = 'output window, operand 0, single buffered']
    %12 = vsyncpa [#allocation3], 0
    %13 = vsyncpa [#allocation6], 0
    %14 = vsyncpa [#allocation9], 0
    %15 = vsyncpa [#allocation12], 0
    %16 = vsyncpa [#allocation4], 0
    // Predicated region
    $region2: #{generator2_forward.16} parent=1 // pred_check
      _
    $region3: #{generator2_forward.16} parent=1 // pred_check_branch
      %18 = sbr.rel (0) target = $region5
    $region4: #{generator2_forward.16} parent=1 // pred_region
      %s20 = ssub.s32 128, 128
      %21 = vsyncadd [#allocation3], %s20
      %s22 = sshll.u32 [#allocation2], 4
      %s23 = int_to_ptr.vmem [resolvable:$true] %s22
      %28 = dma.hbm_to_vmem [thread:$0]  %s0, 128, %s23, [#allocation3], 64, 64, 4
    $region5: #{generator2_forward.16} parent=1 // pred_fallthru
      _
    // Predicated region
    $region6: #{generator2_forward.16} parent=1 // pred_check
      _
    $region7: #{generator2_forward.16} parent=1 // pred_check_branch
      %30 = sbr.rel (0) target = $region9
    $region8: #{generator2_forward.16} parent=1 // pred_region
      %s32 = ssub.s32 16, 16
      %33 = vsyncadd [#allocation6], %s32
      %s35 = sshll.u32 [#allocation5], 4
      %s36 = int_to_ptr.vmem [resolvable:$true] %s35
      %38 = dma.hbm_to_vmem [thread:$0]  %s1, 16, %s36, [#allocation6]
    $region9: #{generator2_forward.16} parent=1 // pred_fallthru
      _
    // Predicated region
    $region10: #{generator2_forward.16} parent=1 // pred_check
      _
    $region11: #{generator2_forward.16} parent=1 // pred_check_branch
      %40 = sbr.rel (0) target = $region13
    $region12: #{generator2_forward.16} parent=1 // pred_region
      %s42 = ssub.s32 16, 16
      %43 = vsyncadd [#allocation6], %s42
      %s45 = sshll.u32 [#allocation7], 4
      %s46 = int_to_ptr.vmem [resolvable:$true] %s45
      %48 = dma.hbm_to_vmem [thread:$0]  %s2, 16, %s46, [#allocation6]
    $region13: #{generator2_forward.16} parent=1 // pred_fallthru
      _
    // Predicated region
    $region14: #{generator2_forward.16} parent=1 // pred_check
      _
    $region15: #{generator2_forward.16} parent=1 // pred_check_branch
      %50 = sbr.rel (0) target = $region17
    $region16: #{generator2_forward.16} parent=1 // pred_region
      %s52 = ssub.s32 256, 256
      %53 = vsyncadd [#allocation9], %s52
      %s54 = sshll.u32 [#allocation8], 4
      %s55 = int_to_ptr.vmem [resolvable:$true] %s54
      %60 = dma.hbm_to_vmem [thread:$0]  %s3, 256, %s55, [#allocation9], 64, 64, 4
    $region17: #{generator2_forward.16} parent=1 // pred_fallthru
      _
    // Predicated region
    $region18: #{generator2_forward.16} parent=1 // pred_check
      _
    $region19: #{generator2_forward.16} parent=1 // pred_check_branch
      %62 = sbr.rel (0) target = $region21
    $region20: #{generator2_forward.16} parent=1 // pred_region
      %s64 = ssub.s32 16, 16
      %65 = vsyncadd [#allocation9], %s64
      %s67 = sshll.u32 [#allocation10], 4
      %s68 = int_to_ptr.vmem [resolvable:$true] %s67
      %70 = dma.hbm_to_vmem [thread:$0]  %s4, 16, %s68, [#allocation9]
    $region21: #{generator2_forward.16} parent=1 // pred_fallthru
      _
    // Predicated region
    $region22: #{generator2_forward.16} parent=1 // pred_check
      _
    $region23: #{generator2_forward.16} parent=1 // pred_check_branch
      %72 = sbr.rel (0) target = $region25
    $region24: #{generator2_forward.16} parent=1 // pred_region
      %s74 = ssub.s32 512, 512
      %75 = vsyncadd [#allocation12], %s74
      %s76 = sshll.u32 [#allocation11], 4
      %s77 = int_to_ptr.vmem [resolvable:$true] %s76
      %82 = dma.hbm_to_vmem [thread:$0]  %s5, 512, %s77, [#allocation12], 64, 64, 4
    $region25: #{generator2_forward.16} parent=1 // pred_fallthru
      _
    // Predicated region
    $region26: #{generator2_forward.16} parent=1 // pred_check
      _
    $region27: #{generator2_forward.16} parent=1 // pred_check_branch
      %84 = sbr.rel (0) target = $region29
    $region28: #{generator2_forward.16} parent=1 // pred_region
      %s86 = ssub.s32 16, 16
      %87 = vsyncadd [#allocation12], %s86
      %s89 = sshll.u32 [#allocation13], 4
      %s90 = int_to_ptr.vmem [resolvable:$true] %s89
      %92 = dma.hbm_to_vmem [thread:$0]  %s6, 16, %s90, [#allocation12]
    $region29: #{generator2_forward.16} parent=1 // pred_fallthru
      _
    // Predicated region
    $region30: #{generator2_forward.16} parent=1 // pred_check
      _
    $region31: #{generator2_forward.16} parent=1 // pred_check_branch
      %94 = sbr.rel (0) target = $region33
    $region32: #{generator2_forward.16} parent=1 // pred_region
      %95 = dma.done [#allocation3], 128
    $region33: #{generator2_forward.16} parent=1 // pred_fallthru
      _
    // Predicated region
    $region34: #{generator2_forward.16} parent=1 // pred_check
      _
    $region35: #{generator2_forward.16} parent=1 // pred_check_branch
      %97 = sbr.rel (0) target = $region37
    $region36: #{generator2_forward.16} parent=1 // pred_region
      %98 = dma.done [#allocation6], 16
    $region37: #{generator2_forward.16} parent=1 // pred_fallthru
      _
    // Predicated region
    $region38: #{generator2_forward.16} parent=1 // pred_check
      _
    $region39: #{generator2_forward.16} parent=1 // pred_check_branch
      %100 = sbr.rel (0) target = $region41
    $region40: #{generator2_forward.16} parent=1 // pred_region
      %101 = dma.done [#allocation6], 16
    $region41: #{generator2_forward.16} parent=1 // pred_fallthru
      _
    // Predicated region
    $region42: #{generator2_forward.16} parent=1 // pred_check
      _
    $region43: #{generator2_forward.16} parent=1 // pred_check_branch
      %103 = sbr.rel (0) target = $region45
    $region44: #{generator2_forward.16} parent=1 // pred_region
      %104 = dma.done [#allocation9], 256
    $region45: #{generator2_forward.16} parent=1 // pred_fallthru
      _
    // Predicated region
    $region46: #{generator2_forward.16} parent=1 // pred_check
      _
    $region47: #{generator2_forward.16} parent=1 // pred_check_branch
      %106 = sbr.rel (0) target = $region49
    $region48: #{generator2_forward.16} parent=1 // pred_region
      %107 = dma.done [#allocation9], 16
    $region49: #{generator2_forward.16} parent=1 // pred_fallthru
      _
    // Predicated region
    $region50: #{generator2_forward.16} parent=1 // pred_check
      _
    $region51: #{generator2_forward.16} parent=1 // pred_check_branch
      %109 = sbr.rel (0) target = $region53
    $region52: #{generator2_forward.16} parent=1 // pred_region
      %110 = dma.done [#allocation12], 512
    $region53: #{generator2_forward.16} parent=1 // pred_fallthru
      _
    // Predicated region
    $region54: #{generator2_forward.16} parent=1 // pred_check
      _
    $region55: #{generator2_forward.16} parent=1 // pred_check_branch
      %112 = sbr.rel (0) target = $region57
    $region56: #{generator2_forward.16} parent=1 // pred_region
      %113 = dma.done [#allocation12], 16
    $region57: #{generator2_forward.16} parent=1 // pred_fallthru
      _
    %v115 = vld [vmem:[#allocation2] sm:$0xf]
    %v116 = vld [vmem:[#allocation2 + $0x4] sm:$0xf]
    %v117 = vunpack.c.l.bf16 %v115
    %v118 = vunpack.c.l.bf16 %v116
    %vm119 = vcmask 261120
    %v120 = vsel %vm119, %v117, 0.0
    %121 = vadd.xlane.f32.xlu0 %v120
    %v122 = vpop.xlane.xlu0 %121
    %v123 = vsel %vm119, %v118, 0.0
    %124 = vadd.xlane.f32.xlu0 %v123
    %v125 = vpop.xlane.xlu0 %124
    %v126 = vrcp.pop 32.0
    %v127 = vmul.f32 %v122, %v126
    %v128 = vmul.f32 %v125, %v126
    %v129 = vsub.f32 %v117, %v127
    %v130 = vsub.f32 %v118, %v128
    %v131 = vmul.f32 %v129, %v129
    %v132 = vmul.f32 %v130, %v130
    %v133 = vsel %vm119, %v131, 0.0
    %134 = vadd.xlane.f32.xlu0 %v133
    %v135 = vpop.xlane.xlu0 %134
    %v136 = vsel %vm119, %v132, 0.0
    %137 = vadd.xlane.f32.xlu0 %v136
    %v138 = vpop.xlane.xlu0 %137
    %v139 = vmul.f32 %v135, %v126
    %v140 = vmul.f32 %v138, %v126
    %v141 = vadd.f32 %v139, 1e-06
    %v142 = vadd.f32 %v140, 1e-06
    %v143 = vrsqrt.pop %v141
    %v144 = vrsqrt.pop %v142
    %v145 = vmul.f32 %v129, %v143
    %v146 = vmul.f32 %v130, %v144
    %v147 = vld [vmem:[#allocation5] sm:$0x1]
    %v149 = vlaneseq
    %v150 = vshrl.u32 %v149, 7
    %v151 = vsub.s32 0, %v150
    %v152 = vrot.slane %v147, %v151
    %v154 = vmul.f32 %v145, %v152
    %v155 = vmul.f32 %v146, %v152
    %v156 = vld [vmem:[#allocation7] sm:$0x1]
    %v158 = vlaneseq
    %v159 = vshrl.u32 %v158, 7
    %v160 = vsub.s32 0, %v159
    %v161 = vrot.slane %v156, %v160
    %v163 = vadd.f32 %v154, %v161
    %v164 = vadd.f32 %v155, %v161
    %v165 = vpack.c.bf16 %v164, %v163
    %v166 = vld [vmem:[#allocation8] sm:$0xf]
    %v167 = vld [vmem:[#allocation8 + $0x4] sm:$0xf]
    %v168 = vld [vmem:[#allocation8 + $0x8] sm:$0xf]
    %v169 = vld [vmem:[#allocation8 + $0xc] sm:$0xf]
    %v170 = vld [vmem:[#allocation10] sm:$0x1]
    %v172 = vlaneseq
    %v173 = vshrl.u32 %v172, 7
    %v174 = vsub.s32 0, %v173
    %v175 = vrot.slane %v170, %v174
    %v181 = vunpack.c.l.b16 %v166
    %v182 = vunpack.c.l.b16 %v167
    %v183 = vunpack.c.l.b16 %v168
    %v184 = vunpack.c.l.b16 %v169
    %v185 = vpack.c.b16 %v182, %v181
    %v186 = vpack.c.b16 %v184, %v183
    %v190 = vsel %vm119, %v165, 0
    %192 = vmatprep.subr.bf16.mxu0 0
    %193 = vmatpush1.bf16.msra.mxu0 %v185
    %194 = vmatprep.subr.bf16.mxu0 0
    %195 = vmatpush1.bf16.msra.mxu0 %v186
    %196 = vmatprep.subr.bf16.mxu0 0
    %197 = vmatpush1.bf16.msra.mxu0 0
    %198 = vmatprep.subr.bf16.mxu0 0
    %199 = vmatpush1.bf16.msra.mxu0 0
    %200 = vmatprep.subr.bf16.mxu0 0
    %201 = vmatpush1.bf16.msra.mxu0 0
    %202 = vmatprep.subr.bf16.mxu0 0
    %203 = vmatpush1.bf16.msra.mxu0 0
    %204 = vmatprep.subr.bf16.mxu0 0
    %205 = vmatpush1.bf16.msra.mxu0 0
    %206 = vmatprep.subr.bf16.mxu0 0
    %207 = vmatpush1.bf16.msra.mxu0 0
    %208 = vmatprep.subr.bf16.mxu0 0
    %209 = vmatpush1.bf16.msra.mxu0 0
    %210 = vmatprep.subr.bf16.mxu0 0
    %211 = vmatpush1.bf16.msra.mxu0 0
    %212 = vmatprep.subr.bf16.mxu0 0
    %213 = vmatpush1.bf16.msra.mxu0 0
    %214 = vmatprep.subr.bf16.mxu0 0
    %215 = vmatpush1.bf16.msra.mxu0 0
    %216 = vmatprep.subr.bf16.mxu0 0
    %217 = vmatpush1.bf16.msra.mxu0 0
    %218 = vmatprep.subr.bf16.mxu0 0
    %219 = vmatpush1.bf16.msra.mxu0 0
    %220 = vmatprep.subr.bf16.mxu0 0
    %221 = vmatpush1.bf16.msra.mxu0 0
    %222 = vmatprep.subr.bf16.mxu0 0
    %223 = vmatpush1.bf16.msra.mxu0 0
    %224 = vmatprep.mubr.bf16.mxu0 0
    %225 = vmatmul.mubr.bf16.gmra.mrb[0].mxu0 %v190
    %v226 = vpop.f32.mrb[0].mxu0
    %v227 = vadd.f32 %v175, %v226
    %v228 = vpop.f32.mrb[0].mxu0
    %v229 = vpop.f32.mrb[0].mxu0
    %v230 = vadd.f32 %v175, %v229
    %v231 = vpop.f32.mrb[0].mxu0
    %232 = vdwg.mxu0
    %v233 = vmax.f32 %v227, 0.0
    %v234 = vmax.f32 %v230, 0.0
    %v235 = vpack.c.bf16 %v234, %v233
    %v236 = vld [vmem:[#allocation11] sm:$0xf]
    %v237 = vld [vmem:[#allocation11 + $0x4] sm:$0xf]
    %v238 = vld [vmem:[#allocation11 + $0x8] sm:$0xf]
    %v239 = vld [vmem:[#allocation11 + $0xc] sm:$0xf]
    %v240 = vld [vmem:[#allocation11 + $0x10] sm:$0xf]
    %v241 = vld [vmem:[#allocation11 + $0x14] sm:$0xf]
    %v242 = vld [vmem:[#allocation11 + $0x18] sm:$0xf]
    %v243 = vld [vmem:[#allocation11 + $0x1c] sm:$0xf]
    %v244 = vld [vmem:[#allocation13] sm:$0x1]
    %v246 = vlaneseq
    %v247 = vshrl.u32 %v246, 7
    %v248 = vsub.s32 0, %v247
    %v249 = vrot.slane %v244, %v248
    %v259 = vunpack.c.l.b16 %v236
    %v260 = vunpack.c.l.b16 %v237
    %v261 = vunpack.c.l.b16 %v238
    %v262 = vunpack.c.l.b16 %v239
    %v263 = vunpack.c.l.b16 %v240
    %v264 = vunpack.c.l.b16 %v241
    %v265 = vunpack.c.l.b16 %v242
    %v266 = vunpack.c.l.b16 %v243
    %v267 = vpack.c.b16 %v260, %v259
    %v268 = vpack.c.b16 %v262, %v261
    %v269 = vpack.c.b16 %v264, %v263
    %v270 = vpack.c.b16 %v266, %v265
    %vm275 = vcmask 523264
    %v277 = vsel %vm275, %v235, 0
    %279 = vmatprep.subr.bf16.mxu0 0
    %280 = vmatpush1.bf16.msra.mxu0 %v267
    %281 = vmatprep.subr.bf16.mxu0 0
    %282 = vmatpush1.bf16.msra.mxu0 %v268
    %283 = vmatprep.subr.bf16.mxu0 0
    %284 = vmatpush1.bf16.msra.mxu0 %v269
    %285 = vmatprep.subr.bf16.mxu0 0
    %286 = vmatpush1.bf16.msra.mxu0 %v270
    %287 = vmatprep.subr.bf16.mxu0 0
    %288 = vmatpush1.bf16.msra.mxu0 0
    %289 = vmatprep.subr.bf16.mxu0 0
    %290 = vmatpush1.bf16.msra.mxu0 0
    %291 = vmatprep.subr.bf16.mxu0 0
    %292 = vmatpush1.bf16.msra.mxu0 0
    %293 = vmatprep.subr.bf16.mxu0 0
    %294 = vmatpush1.bf16.msra.mxu0 0
    %295 = vmatprep.subr.bf16.mxu0 0
    %296 = vmatpush1.bf16.msra.mxu0 0
    %297 = vmatprep.subr.bf16.mxu0 0
    %298 = vmatpush1.bf16.msra.mxu0 0
    %299 = vmatprep.subr.bf16.mxu0 0
    %300 = vmatpush1.bf16.msra.mxu0 0
    %301 = vmatprep.subr.bf16.mxu0 0
    %302 = vmatpush1.bf16.msra.mxu0 0
    %303 = vmatprep.subr.bf16.mxu0 0
    %304 = vmatpush1.bf16.msra.mxu0 0
    %305 = vmatprep.subr.bf16.mxu0 0
    %306 = vmatpush1.bf16.msra.mxu0 0
    %307 = vmatprep.subr.bf16.mxu0 0
    %308 = vmatpush1.bf16.msra.mxu0 0
    %309 = vmatprep.subr.bf16.mxu0 0
    %310 = vmatpush1.bf16.msra.mxu0 0
    %311 = vmatprep.mubr.bf16.mxu0 0
    %312 = vmatmul.mubr.bf16.gmra.mrb[0].mxu0 %v277
    %v313 = vpop.f32.mrb[0].mxu0
    %v314 = vadd.f32 %v249, %v313
    %v315 = vpop.f32.mrb[0].mxu0
    %v316 = vpop.f32.mrb[0].mxu0
    %v317 = vadd.f32 %v249, %v316
    %v318 = vpop.f32.mrb[0].mxu0
    %319 = vdwg.mxu0
    %v320 = vadd.f32 %v314, %v117
    %v321 = vadd.f32 %v317, %v118
    %v322 = vpack.c.bf16 %v321, %v320
    %v324 = vunpack.c.l.b16 %v322
    %v325 = vunpack.c.h.b16 %v322
    %v326 = vpack.c.b16 %v324, %v324
    %v327 = vpack.c.b16 %v325, %v325
    %vm330 = vcmask 257024
    %331 = vst.msk [vmem:[#allocation14] sm:$0xf] %vm330, %v326
    %332 = vst.msk [vmem:[#allocation14 + $0x4] sm:$0xf] %vm330, %v327
    // Predicated region
    $region58: #{generator2_forward.16} parent=1 // pred_check
      _
    $region59: #{generator2_forward.16} parent=1 // pred_check_branch
      %334 = sbr.rel (0) target = $region61
    $region60: #{generator2_forward.16} parent=1 // pred_region
      %s336 = ssub.s32 128, 128
      %337 = vsyncadd [#allocation4], %s336
      %s338 = sshll.u32 [#allocation14], 4
      %s339 = int_to_ptr.vmem [resolvable:$true] %s338
      %344 = dma.vmem_to_hbm [thread:$0]  %s339, 128, %s7, [#allocation4], 64, 64, 4
    $region61: #{generator2_forward.16} parent=1 // pred_fallthru
      _
    // Predicated region
    $region62: #{generator2_forward.16} parent=1 // pred_check
      _
    $region63: #{generator2_forward.16} parent=1 // pred_check_branch
      %346 = sbr.rel (0) target = $region65
    $region64: #{generator2_forward.16} parent=1 // pred_region
      %347 = dma.done [#allocation4], 128
    $region65: #{generator2_forward.16} parent=1 // pred_fallthru
      _
    %348 = vsyncpa [#allocation3], 1
    %349 = vsyncpa [#allocation6], 1
    %350 = vsyncpa [#allocation9], 1
    %351 = vsyncpa [#allocation12], 1
    %352 = vsyncpa [#allocation4], 1

// kernel: generator2_forward.15
$region0: #{generator2_forward.15}
  #allocation0 [shape = 'u32[]', space=smem, size = 0x4, offset = 0x4, fixed_abs, tag = 'smem constant byte address 0x4 - core index']
  #allocation1 [shape = 'u32[144,128]{1,0:T(1,128)}', space=vmem, size = 0x12000, scoped, tag = 'internal scratch']
  #allocation2 [shape = 's32[1]{0}', space=sflag, size = 0x4, scoped, tag = 'scoped memory for generator2_forward.15']
  #allocation3 [shape = 'u8[512]{0}', space=smem, size = 0x200, scoped, tag = 'prefetched SMEM operand 0']
  %s0 = inlined_call_operand.hbm [shape: s32[2], index: 0, kind: input, shape index: {}]
  %s1 = inlined_call_operand.hbm [shape: bf16[2,8,32], index: 1, kind: input, shape index: {}]
  %s2 = inlined_call_operand.hbm [shape: bf16[2,8,32], index: 2, kind: input, shape index: {}]
  %s3 = inlined_call_operand.hbm [shape: f32[2,1,8], index: 3, kind: input, shape index: {}]
  %s4 = inlined_call_operand.hbm [shape: bf16[8,32], index: 4, kind: input, shape index: {}]
  %s5 = inlined_call_operand.hbm [shape: f32[1,32], index: 5, kind: input, shape index: {}, may-alias: {5,7,9,13}]
  %s6 = inlined_call_operand.hbm [shape: f32[1,32], index: 6, kind: input, shape index: {}]
  %s7 = inlined_call_operand.hbm [shape: f32[1,32], index: 7, kind: input, shape index: {}, may-alias: {5,7,9,13}]
  %s8 = inlined_call_operand.hbm [shape: bf16[32,32], index: 8, kind: input, shape index: {}]
  %s9 = inlined_call_operand.hbm [shape: f32[1,32], index: 9, kind: input, shape index: {}, may-alias: {5,7,9,13}]
  %s10 = inlined_call_operand.hbm [shape: bf16[32,64], index: 10, kind: input, shape index: {}]
  %s11 = inlined_call_operand.hbm [shape: f32[1,64], index: 11, kind: input, shape index: {}]
  %s12 = inlined_call_operand.hbm [shape: bf16[32,32], index: 12, kind: input, shape index: {}]
  %s13 = inlined_call_operand.hbm [shape: f32[1,32], index: 13, kind: input, shape index: {}, may-alias: {5,7,9,13}]
  %s14 = inlined_call_operand.hbm [shape: bf16[2,8,32], index: 14, kind: output, shape index: {}]
  %s15 = sld [smem:[#allocation0]]
  $region137: #{generator2_forward.15} parent=0
    _
  %s17 = ssub.s32 1, %s15
  %s18 = scalar_select 0, %s17, %s15
  %20 = dma.hbm_to_smem %s0, 16, [#allocation3], [#allocation2]
  %21 = dma.done [#allocation2], 16
  %22 = sfence
  $region1: #{generator2_forward.15} parent=0
    #allocation4 [shape = 'u8[4096]{0}', space=vmem, size = 0x1000, scoped, tag = 'input window, operand 1']
    #allocation5 [shape = 's32[2]{0}', space=sflag, size = 0x8, scoped, tag = 'scoped memory for generator2_forward.15']
    #allocation6 [shape = 's32[2]{0}', space=sflag, size = 0x8, scoped, tag = 'scoped memory for generator2_forward.15']
    #allocation7 [shape = 'u8[4096]{0}', space=vmem, size = 0x1000, scoped, tag = 'input window, operand 2']
    #allocation8 [shape = 's32[2]{0}', space=sflag, size = 0x8, scoped, tag = 'scoped memory for generator2_forward.15']
    #allocation9 [shape = 'u8[1024]{0}', space=vmem, size = 0x400, scoped, tag = 'input window, operand 3']
    #allocation10 [shape = 'u8[2048]{0}', space=vmem, size = 0x800, scoped, tag = 'input window, operand 4, single buffered']
    #allocation11 [shape = 's32[1]{0}', space=sflag, size = 0x4, scoped, tag = 'scoped memory for generator2_forward.15']
    #allocation12 [shape = 'u8[512]{0}', space=vmem, size = 0x400, scoped, tag = 'input window, operand 5, single buffered']
    #allocation13 [shape = 'u8[512]{0}', space=vmem, size = 0x400, scoped, tag = 'input window, operand 6, single buffered']
    #allocation14 [shape = 's32[1]{0}', space=sflag, size = 0x4, scoped, tag = 'scoped memory for generator2_forward.15']
    #allocation15 [shape = 'u8[512]{0}', space=vmem, size = 0x400, scoped, tag = 'input window, operand 7, single buffered']
    #allocation16 [shape = 'u8[8192]{0}', space=vmem, size = 0x2000, scoped, tag = 'input window, operand 8, single buffered']
    #allocation17 [shape = 's32[1]{0}', space=sflag, size = 0x4, scoped, tag = 'scoped memory for generator2_forward.15']
    #allocation18 [shape = 'u8[512]{0}', space=vmem, size = 0x400, scoped, tag = 'input window, operand 9, single buffered']
    #allocation19 [shape = 'u8[8192]{0}', space=vmem, size = 0x2000, scoped, tag = 'input window, operand 10, single buffered']
    #allocation20 [shape = 's32[1]{0}', space=sflag, size = 0x4, scoped, tag = 'scoped memory for generator2_forward.15']
    #allocation21 [shape = 'u8[512]{0}', space=vmem, size = 0x400, scoped, tag = 'input window, operand 11, single buffered']
    #allocation22 [shape = 'u8[8192]{0}', space=vmem, size = 0x2000, scoped, tag = 'input window, operand 12, single buffered']
    #allocation23 [shape = 's32[1]{0}', space=sflag, size = 0x4, scoped, tag = 'scoped memory for generator2_forward.15']
    #allocation24 [shape = 'u8[512]{0}', space=vmem, size = 0x400, scoped, tag = 'input window, operand 13, single buffered']
    #allocation25 [shape = 'u8[4096]{0}', space=vmem, size = 0x1000, scoped, tag = 'output window, operand 0']
    %23 = vsyncpa [#allocation5], 0
    %s24 = scalar_lea.sflag [#allocation5], 1
    %25 = vsyncpa %s24, 0
    %26 = vsyncpa [#allocation8], 0
    %s27 = scalar_lea.sflag [#allocation8], 1
    %28 = vsyncpa %s27, 0
    %29 = vsyncpa [#allocation11], 0
    %30 = vsyncpa [#allocation14], 0
    %31 = vsyncpa [#allocation17], 0
    %32 = vsyncpa [#allocation20], 0
    %33 = vsyncpa [#allocation23], 0
    %34 = vsyncpa [#allocation6], 0
    %s35 = scalar_lea.sflag [#allocation6], 1
    %36 = vsyncpa %s35, 0
    loop: start=0, step=1, limit=4
    $region2: #{generator2_forward.15} parent=1 // loop_pre_header
      _
    $region3: #{generator2_forward.15} parent=1 // loop_header
      %s38 = sphi 0, %s42
      %p39 = scmp.ge.s32.totalorder %s38, 4
      %s48 = sphi 0, %s50
      %s51 = sphi 0, %s48
      %s52 = sphi 0, %s51
      %s68 = sphi 0, %s52
      %s74 = sphi 0, %s76
      %s77 = sphi 0, %s74
      %s78 = sphi 0, %s77
      %s94 = sphi 0, %s78
      %s100 = sphi 0, %s102
      %s103 = sphi 0, %s100
      %s104 = sphi 0, %s103
      %s120 = sphi 0, %s104
      %s124 = sphi 0, %s124
      %s126 = sphi 0, %s124
      %s127 = sphi 0, %s126
      %s141 = sphi 0, %s127
      %s145 = sphi 0, %s145
      %s147 = sphi 0, %s145
      %s148 = sphi 0, %s147
      %s162 = sphi 0, %s148
      %s166 = sphi 0, %s166
      %s168 = sphi 0, %s166
      %s169 = sphi 0, %s168
      %s183 = sphi 0, %s169
      %s187 = sphi 0, %s187
      %s189 = sphi 0, %s187
      %s190 = sphi 0, %s189
      %s204 = sphi 0, %s190
      %s208 = sphi 0, %s208
      %s210 = sphi 0, %s208
      %s211 = sphi 0, %s210
      %s225 = sphi 0, %s211
      %s229 = sphi 0, %s229
      %s231 = sphi 0, %s229
      %s232 = sphi 0, %s231
      %s246 = sphi 0, %s232
      %s250 = sphi 0, %s250
      %s252 = sphi 0, %s250
      %s253 = sphi 0, %s252
      %s267 = sphi 0, %s253
      %s271 = sphi 0, %s271
      %s273 = sphi 0, %s271
      %s274 = sphi 0, %s273
      %s288 = sphi 0, %s274
      %s292 = sphi 0, %s292
      %s294 = sphi 0, %s292
      %s295 = sphi 0, %s294
      %s309 = sphi 0, %s295
      %s313 = sphi 0, %s313
      %s315 = sphi 0, %s313
      %s316 = sphi 0, %s315
      %s330 = sphi 0, %s316
      %s336 = sphi 0, %s338
      %s339 = sphi 0, %s336
      %s340 = sphi 0, %s339
      %s356 = sphi 0, %s340
    $region4: #{generator2_forward.15} parent=1 // loop_header_branch
      %41 = sbr.rel (%p39) target = $region8
    $region5: #{generator2_forward.15} parent=1 // loop_body
      %s43 = ssub.s32 %s38, 1
      %s44 = ssub.s32 %s38, 2
      %s45 = sadd.s32 %s38, 1
      %s46 = ssub.s32 %s38, %s45
      %p47 = scmp.eq.s32.totalorder %s46, 0
      %s49 = sadd.s32 %s48, 1
      %s50 = scalar_select %p47, %s48, %s49
      %p53 = pneg %p47
      %p54 = scmp.eq.s32.totalorder %s38, 1
      %p55 = por %p53, %p54
      %p56 = scmp.ne.s32.totalorder %s48, %s51
      %p57 = scmp.eq.s32.totalorder %s38, 0
      %p58 = por %p56, %p57
      %p59 = scmp.ne.s32.totalorder %s48, %s51
      %p60 = scmp.eq.s32.totalorder %s43, 1
      %p61 = por %p59, %p60
      %p62 = scmp.ne.s32.totalorder %s51, %s52
      %p63 = scmp.eq.s32.totalorder %s43, 0
      %p64 = por %p62, %p63
      %p65 = scmp.ne.s32.totalorder %s51, %s52
      %p66 = scmp.eq.s32.totalorder %s44, 1
      %p67 = por %p65, %p66
      %p69 = scmp.ne.s32.totalorder %s52, %s68
      %p70 = scmp.eq.s32.totalorder %s44, 0
      %p71 = por %p69, %p70
      %s72 = ssub.s32 %s38, %s45
      %p73 = scmp.eq.s32.totalorder %s72, 0
      %s75 = sadd.s32 %s74, 1
      %s76 = scalar_select %p73, %s74, %s75
      %p79 = pneg %p73
      %p80 = scmp.eq.s32.totalorder %s38, 1
      %p81 = por %p79, %p80
      %p82 = scmp.ne.s32.totalorder %s74, %s77
      %p83 = scmp.eq.s32.totalorder %s38, 0
      %p84 = por %p82, %p83
      %p85 = scmp.ne.s32.totalorder %s74, %s77
      %p86 = scmp.eq.s32.totalorder %s43, 1
      %p87 = por %p85, %p86
      %p88 = scmp.ne.s32.totalorder %s77, %s78
      %p89 = scmp.eq.s32.totalorder %s43, 0
      %p90 = por %p88, %p89
      %p91 = scmp.ne.s32.totalorder %s77, %s78
      %p92 = scmp.eq.s32.totalorder %s44, 1
      %p93 = por %p91, %p92
      %p95 = scmp.ne.s32.totalorder %s78, %s94
      %p96 = scmp.eq.s32.totalorder %s44, 0
      %p97 = por %p95, %p96
      %s98 = ssub.s32 %s38, %s45
      %p99 = scmp.eq.s32.totalorder %s98, 0
      %s101 = sadd.s32 %s100, 1
      %s102 = scalar_select %p99, %s100, %s101
      %p105 = pneg %p99
      %p106 = scmp.eq.s32.totalorder %s38, 1
      %p107 = por %p105, %p106
      %p108 = scmp.ne.s32.totalorder %s100, %s103
      %p109 = scmp.eq.s32.totalorder %s38, 0
      %p110 = por %p108, %p109
      %p111 = scmp.ne.s32.totalorder %s100, %s103
      %p112 = scmp.eq.s32.totalorder %s43, 1
      %p113 = por %p111, %p112
      %p114 = scmp.ne.s32.totalorder %s103, %s104
      %p115 = scmp.eq.s32.totalorder %s43, 0
      %p116 = por %p114, %p115
      %p117 = scmp.ne.s32.totalorder %s103, %s104
      %p118 = scmp.eq.s32.totalorder %s44, 1
      %p119 = por %p117, %p118
      %p121 = scmp.ne.s32.totalorder %s104, %s120
      %p122 = scmp.eq.s32.totalorder %s44, 0
      %p123 = por %p121, %p122
      %s125 = sadd.s32 %s124, 1
      %p128 = scmp.eq.s32.totalorder %s38, 1
      %p129 = scmp.ne.s32.totalorder %s124, %s126
      %p130 = scmp.eq.s32.totalorder %s38, 0
      %p131 = por %p129, %p130
      %p132 = scmp.ne.s32.totalorder %s124, %s126
      %p133 = scmp.eq.s32.totalorder %s43, 1
      %p134 = por %p132, %p133
      %p135 = scmp.ne.s32.totalorder %s126, %s127
      %p136 = scmp.eq.s32.totalorder %s43, 0
      %p137 = por %p135, %p136
      %p138 = scmp.ne.s32.totalorder %s126, %s127
      %p139 = scmp.eq.s32.totalorder %s44, 1
      %p140 = por %p138, %p139
      %p142 = scmp.ne.s32.totalorder %s127, %s141
      %p143 = scmp.eq.s32.totalorder %s44, 0
      %p144 = por %p142, %p143
      %s146 = sadd.s32 %s145, 1
      %p149 = scmp.eq.s32.totalorder %s38, 1
      %p150 = scmp.ne.s32.totalorder %s145, %s147
      %p151 = scmp.eq.s32.totalorder %s38, 0
      %p152 = por %p150, %p151
      %p153 = scmp.ne.s32.totalorder %s145, %s147
      %p154 = scmp.eq.s32.totalorder %s43, 1
      %p155 = por %p153, %p154
      %p156 = scmp.ne.s32.totalorder %s147, %s148
      %p157 = scmp.eq.s32.totalorder %s43, 0
      %p158 = por %p156, %p157
      %p159 = scmp.ne.s32.totalorder %s147, %s148
      %p160 = scmp.eq.s32.totalorder %s44, 1
      %p161 = por %p159, %p160
      %p163 = scmp.ne.s32.totalorder %s148, %s162
      %p164 = scmp.eq.s32.totalorder %s44, 0
      %p165 = por %p163, %p164
      %s167 = sadd.s32 %s166, 1
      %p170 = scmp.eq.s32.totalorder %s38, 1
      %p171 = scmp.ne.s32.totalorder %s166, %s168
      %p172 = scmp.eq.s32.totalorder %s38, 0
      %p173 = por %p171, %p172
      %p174 = scmp.ne.s32.totalorder %s166, %s168
      %p175 = scmp.eq.s32.totalorder %s43, 1
      %p176 = por %p174, %p175
      %p177 = scmp.ne.s32.totalorder %s168, %s169
      %p178 = scmp.eq.s32.totalorder %s43, 0
      %p179 = por %p177, %p178
      %p180 = scmp.ne.s32.totalorder %s168, %s169
      %p181 = scmp.eq.s32.totalorder %s44, 1
      %p182 = por %p180, %p181
      %p184 = scmp.ne.s32.totalorder %s169, %s183
      %p185 = scmp.eq.s32.totalorder %s44, 0
      %p186 = por %p184, %p185
      %s188 = sadd.s32 %s187, 1
      %p191 = scmp.eq.s32.totalorder %s38, 1
      %p192 = scmp.ne.s32.totalorder %s187, %s189
      %p193 = scmp.eq.s32.totalorder %s38, 0
      %p194 = por %p192, %p193
      %p195 = scmp.ne.s32.totalorder %s187, %s189
      %p196 = scmp.eq.s32.totalorder %s43, 1
      %p197 = por %p195, %p196
      %p198 = scmp.ne.s32.totalorder %s189, %s190
      %p199 = scmp.eq.s32.totalorder %s43, 0
      %p200 = por %p198, %p199
      %p201 = scmp.ne.s32.totalorder %s189, %s190
      %p202 = scmp.eq.s32.totalorder %s44, 1
      %p203 = por %p201, %p202
      %p205 = scmp.ne.s32.totalorder %s190, %s204
      %p206 = scmp.eq.s32.totalorder %s44, 0
      %p207 = por %p205, %p206
      %s209 = sadd.s32 %s208, 1
      %p212 = scmp.eq.s32.totalorder %s38, 1
      %p213 = scmp.ne.s32.totalorder %s208, %s210
      %p214 = scmp.eq.s32.totalorder %s38, 0
      %p215 = por %p213, %p214
      %p216 = scmp.ne.s32.totalorder %s208, %s210
      %p217 = scmp.eq.s32.totalorder %s43, 1
      %p218 = por %p216, %p217
      %p219 = scmp.ne.s32.totalorder %s210, %s211
      %p220 = scmp.eq.s32.totalorder %s43, 0
      %p221 = por %p219, %p220
      %p222 = scmp.ne.s32.totalorder %s210, %s211
      %p223 = scmp.eq.s32.totalorder %s44, 1
      %p224 = por %p222, %p223
      %p226 = scmp.ne.s32.totalorder %s211, %s225
      %p227 = scmp.eq.s32.totalorder %s44, 0
      %p228 = por %p226, %p227
      %s230 = sadd.s32 %s229, 1
      %p233 = scmp.eq.s32.totalorder %s38, 1
      %p234 = scmp.ne.s32.totalorder %s229, %s231
      %p235 = scmp.eq.s32.totalorder %s38, 0
      %p236 = por %p234, %p235
      %p237 = scmp.ne.s32.totalorder %s229, %s231
      %p238 = scmp.eq.s32.totalorder %s43, 1
      %p239 = por %p237, %p238
      %p240 = scmp.ne.s32.totalorder %s231, %s232
      %p241 = scmp.eq.s32.totalorder %s43, 0
      %p242 = por %p240, %p241
      %p243 = scmp.ne.s32.totalorder %s231, %s232
      %p244 = scmp.eq.s32.totalorder %s44, 1
      %p245 = por %p243, %p244
      %p247 = scmp.ne.s32.totalorder %s232, %s246
      %p248 = scmp.eq.s32.totalorder %s44, 0
      %p249 = por %p247, %p248
      %s251 = sadd.s32 %s250, 1
      %p254 = scmp.eq.s32.totalorder %s38, 1
      %p255 = scmp.ne.s32.totalorder %s250, %s252
      %p256 = scmp.eq.s32.totalorder %s38, 0
      %p257 = por %p255, %p256
      %p258 = scmp.ne.s32.totalorder %s250, %s252
      %p259 = scmp.eq.s32.totalorder %s43, 1
      %p260 = por %p258, %p259
      %p261 = scmp.ne.s32.totalorder %s252, %s253
      %p262 = scmp.eq.s32.totalorder %s43, 0
      %p263 = por %p261, %p262
      %p264 = scmp.ne.s32.totalorder %s252, %s253
      %p265 = scmp.eq.s32.totalorder %s44, 1
      %p266 = por %p264, %p265
      %p268 = scmp.ne.s32.totalorder %s253, %s267
      %p269 = scmp.eq.s32.totalorder %s44, 0
      %p270 = por %p268, %p269
      %s272 = sadd.s32 %s271, 1
      %p275 = scmp.eq.s32.totalorder %s38, 1
      %p276 = scmp.ne.s32.totalorder %s271, %s273
      %p277 = scmp.eq.s32.totalorder %s38, 0
      %p278 = por %p276, %p277
      %p279 = scmp.ne.s32.totalorder %s271, %s273
      %p280 = scmp.eq.s32.totalorder %s43, 1
      %p281 = por %p279, %p280
      %p282 = scmp.ne.s32.totalorder %s273, %s274
      %p283 = scmp.eq.s32.totalorder %s43, 0
      %p284 = por %p282, %p283
      %p285 = scmp.ne.s32.totalorder %s273, %s274
      %p286 = scmp.eq.s32.totalorder %s44, 1
      %p287 = por %p285, %p286
      %p289 = scmp.ne.s32.totalorder %s274, %s288
      %p290 = scmp.eq.s32.totalorder %s44, 0
      %p291 = por %p289, %p290
      %s293 = sadd.s32 %s292, 1
      %p296 = scmp.eq.s32.totalorder %s38, 1
      %p297 = scmp.ne.s32.totalorder %s292, %s294
      %p298 = scmp.eq.s32.totalorder %s38, 0
      %p299 = por %p297, %p298
      %p300 = scmp.ne.s32.totalorder %s292, %s294
      %p301 = scmp.eq.s32.totalorder %s43, 1
      %p302 = por %p300, %p301
      %p303 = scmp.ne.s32.totalorder %s294, %s295
      %p304 = scmp.eq.s32.totalorder %s43, 0
      %p305 = por %p303, %p304
      %p306 = scmp.ne.s32.totalorder %s294, %s295
      %p307 = scmp.eq.s32.totalorder %s44, 1
      %p308 = por %p306, %p307
      %p310 = scmp.ne.s32.totalorder %s295, %s309
      %p311 = scmp.eq.s32.totalorder %s44, 0
      %p312 = por %p310, %p311
      %s314 = sadd.s32 %s313, 1
      %p317 = scmp.eq.s32.totalorder %s38, 1
      %p318 = scmp.ne.s32.totalorder %s313, %s315
      %p319 = scmp.eq.s32.totalorder %s38, 0
      %p320 = por %p318, %p319
      %p321 = scmp.ne.s32.totalorder %s313, %s315
      %p322 = scmp.eq.s32.totalorder %s43, 1
      %p323 = por %p321, %p322
      %p324 = scmp.ne.s32.totalorder %s315, %s316
      %p325 = scmp.eq.s32.totalorder %s43, 0
      %p326 = por %p324, %p325
      %p327 = scmp.ne.s32.totalorder %s315, %s316
      %p328 = scmp.eq.s32.totalorder %s44, 1
      %p329 = por %p327, %p328
      %p331 = scmp.ne.s32.totalorder %s316, %s330
      %p332 = scmp.eq.s32.totalorder %s44, 0
      %p333 = por %p331, %p332
      %s334 = ssub.s32 %s38, %s45
      %p335 = scmp.eq.s32.totalorder %s334, 0
      %s337 = sadd.s32 %s336, 1
      %s338 = scalar_select %p335, %s336, %s337
      %p341 = pneg %p335
      %p342 = scmp.eq.s32.totalorder %s38, 1
      %p343 = por %p341, %p342
      %p344 = scmp.ne.s32.totalorder %s336, %s339
      %p345 = scmp.eq.s32.totalorder %s38, 0
      %p346 = por %p344, %p345
      %p347 = scmp.ne.s32.totalorder %s336, %s339
      %p348 = scmp.eq.s32.totalorder %s43, 1
      %p349 = por %p347, %p348
      %p350 = scmp.ne.s32.totalorder %s339, %s340
      %p351 = scmp.eq.s32.totalorder %s43, 0
      %p352 = por %p350, %p351
      %p353 = scmp.ne.s32.totalorder %s339, %s340
      %p354 = scmp.eq.s32.totalorder %s44, 1
      %p355 = por %p353, %p354
      %p357 = scmp.ne.s32.totalorder %s340, %s356
      %p358 = scmp.eq.s32.totalorder %s44, 0
      %p359 = por %p357, %p358
      %p360 = scmp.le.s32.totalorder 1, %s38
      %p361 = scmp.lt.s32.totalorder %s38, 3
      %p362 = pnand %p360, %p361
      %p363 = pneg %p362
      // Predicated region
      $region9: #{generator2_forward.15} parent=5 // pred_check
        _
      $region10: #{generator2_forward.15} parent=5 // pred_check_branch
        %365 = sbr.rel (%p362) target = $region12
      $region11: #{generator2_forward.15} parent=5 // pred_region
        %s366 = ssub.s32 %s38, 1
        // Predicated region
        $region13: #{generator2_forward.15} parent=11 // pred_check
          %p367 = pneg %p137
        $region14: #{generator2_forward.15} parent=11 // pred_check_branch
          %369 = sbr.rel (%p367) target = $region16
        $region15: #{generator2_forward.15} parent=11 // pred_region
          %s371 = ssub.s32 64, 64
          %372 = vsyncadd [#allocation11], %s371
          %s374 = sshll.u32 [#allocation10], 4
          %s375 = int_to_ptr.vmem [resolvable:$true] %s374
          %377 = dma.hbm_to_vmem [thread:$0]  %s4, 64, %s375, [#allocation11]
        $region16: #{generator2_forward.15} parent=11 // pred_fallthru
          _
        // Predicated region
        $region17: #{generator2_forward.15} parent=11 // pred_check
          %p378 = pneg %p158
        $region18: #{generator2_forward.15} parent=11 // pred_check_branch
          %380 = sbr.rel (%p378) target = $region20
        $region19: #{generator2_forward.15} parent=11 // pred_region
          %s382 = ssub.s32 16, 16
          %383 = vsyncadd [#allocation11], %s382
          %s385 = sshll.u32 [#allocation12], 4
          %s386 = int_to_ptr.vmem [resolvable:$true] %s385
          %388 = dma.hbm_to_vmem [thread:$0]  %s5, 16, %s386, [#allocation11]
        $region20: #{generator2_forward.15} parent=11 // pred_fallthru
          _
        // Predicated region
        $region21: #{generator2_forward.15} parent=11 // pred_check
          %p389 = pneg %p179
        $region22: #{generator2_forward.15} parent=11 // pred_check_branch
          %391 = sbr.rel (%p389) target = $region24
        $region23: #{generator2_forward.15} parent=11 // pred_region
          %s393 = ssub.s32 16, 16
          %394 = vsyncadd [#allocation14], %s393
          %s396 = sshll.u32 [#allocation13], 4
          %s397 = int_to_ptr.vmem [resolvable:$true] %s396
          %399 = dma.hbm_to_vmem [thread:$0]  %s6, 16, %s397, [#allocation14]
        $region24: #{generator2_forward.15} parent=11 // pred_fallthru
          _
        // Predicated region
        $region25: #{generator2_forward.15} parent=11 // pred_check
          %p400 = pneg %p200
        $region26: #{generator2_forward.15} parent=11 // pred_check_branch
          %402 = sbr.rel (%p400) target = $region28
        $region27: #{generator2_forward.15} parent=11 // pred_region
          %s404 = ssub.s32 16, 16
          %405 = vsyncadd [#allocation14], %s404
          %s407 = sshll.u32 [#allocation15], 4
          %s408 = int_to_ptr.vmem [resolvable:$true] %s407
          %410 = dma.hbm_to_vmem [thread:$0]  %s7, 16, %s408, [#allocation14]
        $region28: #{generator2_forward.15} parent=11 // pred_fallthru
          _
        // Predicated region
        $region29: #{generator2_forward.15} parent=11 // pred_check
          %p411 = pneg %p221
        $region30: #{generator2_forward.15} parent=11 // pred_check_branch
          %413 = sbr.rel (%p411) target = $region32
        $region31: #{generator2_forward.15} parent=11 // pred_region
          %s415 = ssub.s32 256, 256
          %416 = vsyncadd [#allocation17], %s415
          %s417 = sshll.u32 [#allocation16], 4
          %s418 = int_to_ptr.vmem [resolvable:$true] %s417
          %423 = dma.hbm_to_vmem [thread:$0]  %s8, 256, %s418, [#allocation17], 64, 64, 4
        $region32: #{generator2_forward.15} parent=11 // pred_fallthru
          _
        // Predicated region
        $region33: #{generator2_forward.15} parent=11 // pred_check
          %p424 = pneg %p242
        $region34: #{generator2_forward.15} parent=11 // pred_check_branch
          %426 = sbr.rel (%p424) target = $region36
        $region35: #{generator2_forward.15} parent=11 // pred_region
          %s428 = ssub.s32 16, 16
          %429 = vsyncadd [#allocation17], %s428
          %s431 = sshll.u32 [#allocation18], 4
          %s432 = int_to_ptr.vmem [resolvable:$true] %s431
          %434 = dma.hbm_to_vmem [thread:$0]  %s9, 16, %s432, [#allocation17]
        $region36: #{generator2_forward.15} parent=11 // pred_fallthru
          _
        // Predicated region
        $region37: #{generator2_forward.15} parent=11 // pred_check
          %p435 = pneg %p263
        $region38: #{generator2_forward.15} parent=11 // pred_check_branch
          %437 = sbr.rel (%p435) target = $region40
        $region39: #{generator2_forward.15} parent=11 // pred_region
          %s439 = ssub.s32 256, 256
          %440 = vsyncadd [#allocation20], %s439
          %s441 = sshll.u32 [#allocation19], 4
          %s442 = int_to_ptr.vmem [resolvable:$true] %s441
          %447 = dma.hbm_to_vmem [thread:$0]  %s10, 256, %s442, [#allocation20], 64, 64, 4
        $region40: #{generator2_forward.15} parent=11 // pred_fallthru
          _
        // Predicated region
        $region41: #{generator2_forward.15} parent=11 // pred_check
          %p448 = pneg %p284
        $region42: #{generator2_forward.15} parent=11 // pred_check_branch
          %450 = sbr.rel (%p448) target = $region44
        $region43: #{generator2_forward.15} parent=11 // pred_region
          %s452 = ssub.s32 16, 16
          %453 = vsyncadd [#allocation20], %s452
          %s455 = sshll.u32 [#allocation21], 4
          %s456 = int_to_ptr.vmem [resolvable:$true] %s455
          %458 = dma.hbm_to_vmem [thread:$0]  %s11, 16, %s456, [#allocation20]
        $region44: #{generator2_forward.15} parent=11 // pred_fallthru
          _
        // Predicated region
        $region45: #{generator2_forward.15} parent=11 // pred_check
          %p459 = pneg %p305
        $region46: #{generator2_forward.15} parent=11 // pred_check_branch
          %461 = sbr.rel (%p459) target = $region48
        $region47: #{generator2_forward.15} parent=11 // pred_region
          %s463 = ssub.s32 256, 256
          %464 = vsyncadd [#allocation23], %s463
          %s465 = sshll.u32 [#allocation22], 4
          %s466 = int_to_ptr.vmem [resolvable:$true] %s465
          %471 = dma.hbm_to_vmem [thread:$0]  %s12, 256, %s466, [#allocation23], 64, 64, 4
        $region48: #{generator2_forward.15} parent=11 // pred_fallthru
          _
        // Predicated region
        $region49: #{generator2_forward.15} parent=11 // pred_check
          %p472 = pneg %p326
        $region50: #{generator2_forward.15} parent=11 // pred_check_branch
          %474 = sbr.rel (%p472) target = $region52
        $region51: #{generator2_forward.15} parent=11 // pred_region
          %s476 = ssub.s32 16, 16
          %477 = vsyncadd [#allocation23], %s476
          %s479 = sshll.u32 [#allocation24], 4
          %s480 = int_to_ptr.vmem [resolvable:$true] %s479
          %482 = dma.hbm_to_vmem [thread:$0]  %s13, 16, %s480, [#allocation23]
        $region52: #{generator2_forward.15} parent=11 // pred_fallthru
          _
      $region12: #{generator2_forward.15} parent=5 // pred_fallthru
        _
      %p483 = scmp.lt.s32.totalorder %s38, 2
      // Predicated region
      $region53: #{generator2_forward.15} parent=5 // pred_check
        %p484 = pneg %p483
      $region54: #{generator2_forward.15} parent=5 // pred_check_branch
        %486 = sbr.rel (%p484) target = $region56
      $region55: #{generator2_forward.15} parent=5 // pred_region
        // Predicated region
        $region57: #{generator2_forward.15} parent=55 // pred_check
          %p487 = pneg %p58
        $region58: #{generator2_forward.15} parent=55 // pred_check_branch
          %489 = sbr.rel (%p487) target = $region60
        $region59: #{generator2_forward.15} parent=55 // pred_region
          %s490 = sand.u32 %s48, 1
          %s491 = scalar_lea.sflag [#allocation5], %s490
          %s492 = sand.u32 %s48, 1
          %s493 = smul.addr %s492, 4
          %s494 = scalar_lea.vmem [#allocation4], %s493
          %s496 = ssub.s32 64, 64
          %497 = vsyncadd %s491, %s496
          %s498 = smul.addr %s38, 64
          %s499 = scalar_lea.hbm %s1, %s498
          %s501 = sshll.u32 %s494, 4
          %s502 = int_to_ptr.vmem [resolvable:$true] %s501
          %504 = dma.hbm_to_vmem [thread:$0]  %s499, 64, %s502, %s491
        $region60: #{generator2_forward.15} parent=55 // pred_fallthru
          _
        // Predicated region
        $region61: #{generator2_forward.15} parent=55 // pred_check
          %p505 = pneg %p84
        $region62: #{generator2_forward.15} parent=55 // pred_check_branch
          %507 = sbr.rel (%p505) target = $region64
        $region63: #{generator2_forward.15} parent=55 // pred_region
          %s508 = sand.u32 %s38, 1
          %s509 = scalar_lea.sflag [#allocation8], %s508
          %s510 = sand.u32 %s74, 1
          %s511 = smul.addr %s510, 4
          %s512 = scalar_lea.vmem [#allocation7], %s511
          %s514 = ssub.s32 64, 64
          %515 = vsyncadd %s509, %s514
          %s516 = smul.addr %s38, 64
          %s517 = scalar_lea.hbm %s2, %s516
          %s519 = sshll.u32 %s512, 4
          %s520 = int_to_ptr.vmem [resolvable:$true] %s519
          %522 = dma.hbm_to_vmem [thread:$0]  %s517, 64, %s520, %s509
        $region64: #{generator2_forward.15} parent=55 // pred_fallthru
          _
        // Predicated region
        $region65: #{generator2_forward.15} parent=55 // pred_check
          %p523 = pneg %p110
        $region66: #{generator2_forward.15} parent=55 // pred_check_branch
          %525 = sbr.rel (%p523) target = $region68
        $region67: #{generator2_forward.15} parent=55 // pred_region
          %s526 = sand.u32 %s38, 1
          %s527 = scalar_lea.sflag [#allocation8], %s526
          %s528 = sand.u32 %s100, 1
          %s529 = scalar_lea.vmem [#allocation9], %s528
          %s531 = ssub.s32 16, 16
          %532 = vsyncadd %s527, %s531
          %s533 = smul.addr %s38, 16
          %s534 = scalar_lea.hbm %s3, %s533
          %s536 = sshll.u32 %s529, 4
          %s537 = int_to_ptr.vmem [resolvable:$true] %s536
          %539 = dma.hbm_to_vmem [thread:$0]  %s534, 16, %s537, %s527
        $region68: #{generator2_forward.15} parent=55 // pred_fallthru
          _
      $region56: #{generator2_forward.15} parent=5 // pred_fallthru
        _
      %p540 = scmp.le.s32.totalorder 1, %s38
      %p541 = scmp.lt.s32.totalorder %s38, 3
      %p542 = pnand %p540, %p541
      %p543 = pneg %p542
      // Predicated region
      $region69: #{generator2_forward.15} parent=5 // pred_check
        _
      $region70: #{generator2_forward.15} parent=5 // pred_check_branch
        %545 = sbr.rel (%p542) target = $region72
      $region71: #{generator2_forward.15} parent=5 // pred_region
        %s546 = ssub.s32 %s38, 1
        %s547 = sand.u32 %s51, 1
        %s548 = scalar_lea.sflag [#allocation5], %s547
        %s549 = sand.u32 %s51, 1
        %s550 = smul.addr %s549, 4
        %s551 = scalar_lea.vmem [#allocation4], %s550
        // Predicated region
        $region73: #{generator2_forward.15} parent=71 // pred_check
          %p552 = pneg %p64
        $region74: #{generator2_forward.15} parent=71 // pred_check_branch
          %554 = sbr.rel (%p552) target = $region76
        $region75: #{generator2_forward.15} parent=71 // pred_region
          %555 = dma.done %s548, 64
        $region76: #{generator2_forward.15} parent=71 // pred_fallthru
          _
        %s556 = sand.u32 %s43, 1
        %s557 = scalar_lea.sflag [#allocation8], %s556
        %s558 = sand.u32 %s77, 1
        %s559 = smul.addr %s558, 4
        %s560 = scalar_lea.vmem [#allocation7], %s559
        // Predicated region
        $region77: #{generator2_forward.15} parent=71 // pred_check
          %p561 = pneg %p90
        $region78: #{generator2_forward.15} parent=71 // pred_check_branch
          %563 = sbr.rel (%p561) target = $region80
        $region79: #{generator2_forward.15} parent=71 // pred_region
          %564 = dma.done %s557, 64
        $region80: #{generator2_forward.15} parent=71 // pred_fallthru
          _
        %s565 = sand.u32 %s43, 1
        %s566 = scalar_lea.sflag [#allocation8], %s565
        %s567 = sand.u32 %s103, 1
        %s568 = scalar_lea.vmem [#allocation9], %s567
        // Predicated region
        $region81: #{generator2_forward.15} parent=71 // pred_check
          %p569 = pneg %p116
        $region82: #{generator2_forward.15} parent=71 // pred_check_branch
          %571 = sbr.rel (%p569) target = $region84
        $region83: #{generator2_forward.15} parent=71 // pred_region
          %572 = dma.done %s566, 16
        $region84: #{generator2_forward.15} parent=71 // pred_fallthru
          _
        // Predicated region
        $region85: #{generator2_forward.15} parent=71 // pred_check
          %p573 = pneg %p137
        $region86: #{generator2_forward.15} parent=71 // pred_check_branch
          %575 = sbr.rel (%p573) target = $region88
        $region87: #{generator2_forward.15} parent=71 // pred_region
          %576 = dma.done [#allocation11], 64
        $region88: #{generator2_forward.15} parent=71 // pred_fallthru
          _
        // Predicated region
        $region89: #{generator2_forward.15} parent=71 // pred_check
          %p577 = pneg %p158
        $region90: #{generator2_forward.15} parent=71 // pred_check_branch
          %579 = sbr.rel (%p577) target = $region92
        $region91: #{generator2_forward.15} parent=71 // pred_region
          %580 = dma.done [#allocation11], 16
        $region92: #{generator2_forward.15} parent=71 // pred_fallthru
          _
        // Predicated region
        $region93: #{generator2_forward.15} parent=71 // pred_check
          %p581 = pneg %p179
        $region94: #{generator2_forward.15} parent=71 // pred_check_branch
          %583 = sbr.rel (%p581) target = $region96
        $region95: #{generator2_forward.15} parent=71 // pred_region
          %584 = dma.done [#allocation14], 16
        $region96: #{generator2_forward.15} parent=71 // pred_fallthru
          _
        // Predicated region
        $region97: #{generator2_forward.15} parent=71 // pred_check
          %p585 = pneg %p200
        $region98: #{generator2_forward.15} parent=71 // pred_check_branch
          %587 = sbr.rel (%p585) target = $region100
        $region99: #{generator2_forward.15} parent=71 // pred_region
          %588 = dma.done [#allocation14], 16
        $region100: #{generator2_forward.15} parent=71 // pred_fallthru
          _
        // Predicated region
        $region101: #{generator2_forward.15} parent=71 // pred_check
          %p589 = pneg %p221
        $region102: #{generator2_forward.15} parent=71 // pred_check_branch
          %591 = sbr.rel (%p589) target = $region104
        $region103: #{generator2_forward.15} parent=71 // pred_region
          %592 = dma.done [#allocation17], 256
        $region104: #{generator2_forward.15} parent=71 // pred_fallthru
          _
        // Predicated region
        $region105: #{generator2_forward.15} parent=71 // pred_check
          %p593 = pneg %p242
        $region106: #{generator2_forward.15} parent=71 // pred_check_branch
          %595 = sbr.rel (%p593) target = $region108
        $region107: #{generator2_forward.15} parent=71 // pred_region
          %596 = dma.done [#allocation17], 16
        $region108: #{generator2_forward.15} parent=71 // pred_fallthru
          _
        // Predicated region
        $region109: #{generator2_forward.15} parent=71 // pred_check
          %p597 = pneg %p263
        $region110: #{generator2_forward.15} parent=71 // pred_check_branch
          %599 = sbr.rel (%p597) target = $region112
        $region111: #{generator2_forward.15} parent=71 // pred_region
          %600 = dma.done [#allocation20], 256
        $region112: #{generator2_forward.15} parent=71 // pred_fallthru
          _
        // Predicated region
        $region113: #{generator2_forward.15} parent=71 // pred_check
          %p601 = pneg %p284
        $region114: #{generator2_forward.15} parent=71 // pred_check_branch
          %603 = sbr.rel (%p601) target = $region116
        $region115: #{generator2_forward.15} parent=71 // pred_region
          %604 = dma.done [#allocation20], 16
        $region116: #{generator2_forward.15} parent=71 // pred_fallthru
          _
        // Predicated region
        $region117: #{generator2_forward.15} parent=71 // pred_check
          %p605 = pneg %p305
        $region118: #{generator2_forward.15} parent=71 // pred_check_branch
          %607 = sbr.rel (%p605) target = $region120
        $region119: #{generator2_forward.15} parent=71 // pred_region
          %608 = dma.done [#allocation23], 256
        $region120: #{generator2_forward.15} parent=71 // pred_fallthru
          _
        // Predicated region
        $region121: #{generator2_forward.15} parent=71 // pred_check
          %p609 = pneg %p326
        $region122: #{generator2_forward.15} parent=71 // pred_check_branch
          %611 = sbr.rel (%p609) target = $region124
        $region123: #{generator2_forward.15} parent=71 // pred_region
          %612 = dma.done [#allocation23], 16
        $region124: #{generator2_forward.15} parent=71 // pred_fallthru
          _
        %s613 = sand.u32 %s51, 1
        %s614 = scalar_lea.sflag [#allocation5], %s613
        %s615 = sand.u32 %s51, 1
        %s616 = smul.addr %s615, 4
        %s617 = scalar_lea.vmem [#allocation4], %s616
        %p618 = pneg %p64
        %p619 = pneg %p61
        %s620 = sand.u32 %s43, 1
        %s621 = scalar_lea.sflag [#allocation8], %s620
        %s622 = sand.u32 %s77, 1
        %s623 = smul.addr %s622, 4
        %s624 = scalar_lea.vmem [#allocation7], %s623
        %p625 = pneg %p90
        %p626 = pneg %p87
        %s627 = sand.u32 %s43, 1
        %s628 = scalar_lea.sflag [#allocation8], %s627
        %s629 = sand.u32 %s103, 1
        %s630 = scalar_lea.vmem [#allocation9], %s629
        %p631 = pneg %p116
        %p632 = pneg %p113
        %p633 = pneg %p137
        %p634 = pneg %p134
        %p635 = pneg %p158
        %p636 = pneg %p155
        %p637 = pneg %p179
        %p638 = pneg %p176
        %p639 = pneg %p200
        %p640 = pneg %p197
        %p641 = pneg %p221
        %p642 = pneg %p218
        %p643 = pneg %p242
        %p644 = pneg %p239
        %p645 = pneg %p263
        %p646 = pneg %p260
        %p647 = pneg %p284
        %p648 = pneg %p281
        %p649 = pneg %p305
        %p650 = pneg %p302
        %p651 = pneg %p326
        %p652 = pneg %p323
        %p653 = pneg %p352
        %p654 = pneg %p349
        %s655 = sand.u32 %s339, 1
        %s656 = scalar_lea.sflag [#allocation6], %s655
        %s657 = sand.u32 %s339, 1
        %s658 = smul.addr %s657, 4
        %s659 = scalar_lea.vmem [#allocation25], %s658
        %v661 = vld [vmem:[%s551] sm:$0xf]
        %v662 = vunpack.c.l.bf16 %v661
        %vm663 = vcmask 261120
        %v664 = vsel %vm663, %v662, 0.0
        %665 = vadd.xlane.f32.xlu0 %v664
        %v666 = vpop.xlane.xlu0 %665
        %v667 = vrcp.pop 32.0
        %v668 = vmul.f32 %v666, %v667
        %v669 = vsub.f32 %v662, %v668
        %v670 = vmul.f32 %v669, %v669
        %v671 = vsel %vm663, %v670, 0.0
        %672 = vadd.xlane.f32.xlu0 %v671
        %v673 = vpop.xlane.xlu0 %672
        %v674 = vmul.f32 %v673, %v667
        %v675 = vadd.f32 %v674, 1e-06
        %v676 = vrsqrt.pop %v675
        %v677 = vmul.f32 %v669, %v676
        %v678 = vld [vmem:[#allocation13] sm:$0x1]
        %v680 = vlaneseq
        %v681 = vshrl.u32 %v680, 7
        %v682 = vsub.s32 0, %v681
        %v683 = vrot.slane %v678, %v682
        %v685 = vmul.f32 %v677, %v683
        %v686 = vld [vmem:[#allocation15] sm:$0x1]
        %v688 = vlaneseq
        %v689 = vshrl.u32 %v688, 7
        %v690 = vsub.s32 0, %v689
        %v691 = vrot.slane %v686, %v690
        %v693 = vadd.f32 %v685, %v691
        %v694 = vpack.c.bf16 %v693, %v693
        %v695 = vld [vmem:[#allocation16] sm:$0xf]
        %v696 = vld [vmem:[#allocation16 + $0x4] sm:$0xf]
        %v697 = vld [vmem:[#allocation16 + $0x8] sm:$0xf]
        %v698 = vld [vmem:[#allocation16 + $0xc] sm:$0xf]
        %v699 = vld [vmem:[#allocation18] sm:$0x1]
        %v701 = vlaneseq
        %v702 = vshrl.u32 %v701, 7
        %v703 = vsub.s32 0, %v702
        %v704 = vrot.slane %v699, %v703
        %v710 = vunpack.c.l.b16 %v695
        %v711 = vunpack.c.l.b16 %v696
        %v712 = vunpack.c.l.b16 %v697
        %v713 = vunpack.c.l.b16 %v698
        %v714 = vpack.c.b16 %v711, %v710
        %v715 = vpack.c.b16 %v713, %v712
        %v719 = vsel %vm663, %v694, 0
        %721 = vmatprep.subr.bf16.mxu0 0
        %722 = vmatpush1.bf16.msra.mxu0 %v714
        %723 = vmatprep.subr.bf16.mxu0 0
        %724 = vmatpush1.bf16.msra.mxu0 %v715
        %725 = vmatprep.subr.bf16.mxu0 0
        %726 = vmatpush1.bf16.msra.mxu0 0
        %727 = vmatprep.subr.bf16.mxu0 0
        %728 = vmatpush1.bf16.msra.mxu0 0
        %729 = vmatprep.subr.bf16.mxu0 0
        %730 = vmatpush1.bf16.msra.mxu0 0
        %731 = vmatprep.subr.bf16.mxu0 0
        %732 = vmatpush1.bf16.msra.mxu0 0
        %733 = vmatprep.subr.bf16.mxu0 0
        %734 = vmatpush1.bf16.msra.mxu0 0
        %735 = vmatprep.subr.bf16.mxu0 0
        %736 = vmatpush1.bf16.msra.mxu0 0
        %737 = vmatprep.subr.bf16.mxu0 0
        %738 = vmatpush1.bf16.msra.mxu0 0
        %739 = vmatprep.subr.bf16.mxu0 0
        %740 = vmatpush1.bf16.msra.mxu0 0
        %741 = vmatprep.subr.bf16.mxu0 0
        %742 = vmatpush1.bf16.msra.mxu0 0
        %743 = vmatprep.subr.bf16.mxu0 0
        %744 = vmatpush1.bf16.msra.mxu0 0
        %745 = vmatprep.subr.bf16.mxu0 0
        %746 = vmatpush1.bf16.msra.mxu0 0
        %747 = vmatprep.subr.bf16.mxu0 0
        %748 = vmatpush1.bf16.msra.mxu0 0
        %749 = vmatprep.subr.bf16.mxu0 0
        %750 = vmatpush1.bf16.msra.mxu0 0
        %751 = vmatprep.subr.bf16.mxu0 0
        %752 = vmatpush1.bf16.msra.mxu0 0
        %753 = vmatprep.mubr.bf16.mxu0 0
        %754 = vmatmul.mubr.bf16.gmra.mrb[0].mxu0 %v719
        %v755 = vpop.f32.mrb[0].mxu0
        %v756 = vadd.f32 %v704, %v755
        %v757 = vpop.f32.mrb[0].mxu0
        %v758 = vpop.f32.mrb[0].mxu0
        %v759 = vpop.f32.mrb[0].mxu0
        %760 = vdwg.mxu0
        %v761 = vld [vmem:[%s568] sm:$0x1]
        %v762 = vpack.c.bf16 %v761, %v761
        %v763 = vld [vmem:[#allocation10] sm:$0xf]
        %v764 = vld [vmem:[#allocation12] sm:$0x1]
        %vm765 = vcmask 64512
        %v767 = vsel %vm765, %v762, 0
        %vm769 = vcmask 1043456
        %v771 = vsel %vm769, %v763, 0
        %773 = vmatprep.subr.bf16.mxu0 0
        %774 = vmatpush1.bf16.msra.mxu0 %v771
        %775 = vmatprep.subr.bf16.mxu0 0
        %776 = vmatpush1.bf16.msra.mxu0 0
        %777 = vmatprep.subr.bf16.mxu0 0
        %778 = vmatpush1.bf16.msra.mxu0 0
        %779 = vmatprep.subr.bf16.mxu0 0
        %780 = vmatpush1.bf16.msra.mxu0 0
        %781 = vmatprep.subr.bf16.mxu0 0
        %782 = vmatpush1.bf16.msra.mxu0 0
        %783 = vmatprep.subr.bf16.mxu0 0
        %784 = vmatpush1.bf16.msra.mxu0 0
        %785 = vmatprep.subr.bf16.mxu0 0
        %786 = vmatpush1.bf16.msra.mxu0 0
        %787 = vmatprep.subr.bf16.mxu0 0
        %788 = vmatpush1.bf16.msra.mxu0 0
        %789 = vmatprep.subr.bf16.mxu0 0
        %790 = vmatpush1.bf16.msra.mxu0 0
        %791 = vmatprep.subr.bf16.mxu0 0
        %792 = vmatpush1.bf16.msra.mxu0 0
        %793 = vmatprep.subr.bf16.mxu0 0
        %794 = vmatpush1.bf16.msra.mxu0 0
        %795 = vmatprep.subr.bf16.mxu0 0
        %796 = vmatpush1.bf16.msra.mxu0 0
        %797 = vmatprep.subr.bf16.mxu0 0
        %798 = vmatpush1.bf16.msra.mxu0 0
        %799 = vmatprep.subr.bf16.mxu0 0
        %800 = vmatpush1.bf16.msra.mxu0 0
        %801 = vmatprep.subr.bf16.mxu0 0
        %802 = vmatpush1.bf16.msra.mxu0 0
        %803 = vmatprep.subr.bf16.mxu0 0
        %804 = vmatpush1.bf16.msra.mxu0 0
        %805 = vmatprep.mubr.bf16.mxu0 0
        %806 = vmatmul.mubr.bf16.gmra.mrb[0].mxu0 %v767
        %v807 = vpop.f32.mrb[0].mxu0
        %v808 = vadd.f32 %v764, %v807
        %v809 = vpop.f32.mrb[0].mxu0
        %v810 = vpop.f32.mrb[0].mxu0
        %v811 = vpop.f32.mrb[0].mxu0
        %812 = vdwg.mxu0
        %v813 = vld [vmem:[%s560] sm:$0xf]
        %v814 = vld [vmem:[#allocation19] sm:$0xf]
        %v815 = vld [vmem:[#allocation19 + $0x4] sm:$0xf]
        %v816 = vld [vmem:[#allocation19 + $0x8] sm:$0xf]
        %v817 = vld [vmem:[#allocation19 + $0xc] sm:$0xf]
        %v818 = vld [vmem:[#allocation21] sm:$0x1]
        %v820 = vlaneseq
        %v821 = vshrl.u32 %v820, 7
        %v822 = vsub.s32 0, %v821
        %v823 = vrot.slane %v818, %v822
        %v829 = vunpack.c.l.b16 %v814
        %v830 = vunpack.c.l.b16 %v815
        %v831 = vunpack.c.l.b16 %v816
        %v832 = vunpack.c.l.b16 %v817
        %v833 = vpack.c.b16 %v830, %v829
        %v834 = vpack.c.b16 %v832, %v831
        %v838 = vsel %vm663, %v813, 0
        %840 = vmatprep.subr.bf16.mxu0 0
        %841 = vmatpush1.bf16.msra.mxu0 %v833
        %842 = vmatprep.subr.bf16.mxu0 0
        %843 = vmatpush1.bf16.msra.mxu0 %v834
        %844 = vmatprep.subr.bf16.mxu0 0
        %845 = vmatpush1.bf16.msra.mxu0 0
        %846 = vmatprep.subr.bf16.mxu0 0
        %847 = vmatpush1.bf16.msra.mxu0 0
        %848 = vmatprep.subr.bf16.mxu0 0
        %849 = vmatpush1.bf16.msra.mxu0 0
        %850 = vmatprep.subr.bf16.mxu0 0
        %851 = vmatpush1.bf16.msra.mxu0 0
        %852 = vmatprep.subr.bf16.mxu0 0
        %853 = vmatpush1.bf16.msra.mxu0 0
        %854 = vmatprep.subr.bf16.mxu0 0
        %855 = vmatpush1.bf16.msra.mxu0 0
        %856 = vmatprep.subr.bf16.mxu0 0
        %857 = vmatpush1.bf16.msra.mxu0 0
        %858 = vmatprep.subr.bf16.mxu0 0
        %859 = vmatpush1.bf16.msra.mxu0 0
        %860 = vmatprep.subr.bf16.mxu0 0
        %861 = vmatpush1.bf16.msra.mxu0 0
        %862 = vmatprep.subr.bf16.mxu0 0
        %863 = vmatpush1.bf16.msra.mxu0 0
        %864 = vmatprep.subr.bf16.mxu0 0
        %865 = vmatpush1.bf16.msra.mxu0 0
        %866 = vmatprep.subr.bf16.mxu0 0
        %867 = vmatpush1.bf16.msra.mxu0 0
        %868 = vmatprep.subr.bf16.mxu0 0
        %869 = vmatpush1.bf16.msra.mxu0 0
        %870 = vmatprep.subr.bf16.mxu0 0
        %871 = vmatpush1.bf16.msra.mxu0 0
        %872 = vmatprep.mubr.bf16.mxu0 0
        %873 = vmatmul.mubr.bf16.gmra.mrb[0].mxu0 %v838
        %v874 = vpop.f32.mrb[0].mxu0
        %v875 = vadd.f32 %v823, %v874
        %v876 = vpop.f32.mrb[0].mxu0
        %v877 = vpop.f32.mrb[0].mxu0
        %v878 = vpop.f32.mrb[0].mxu0
        %879 = vdwg.mxu0
        %v880 = vpack.c.bf16 %v808, %v808
        %v882 = vsel %vm663, %v880, 0
        %884 = vmatprep.subr.bf16.mxu0 0
        %885 = vmatpush1.bf16.msra.mxu0 %v833
        %886 = vmatprep.subr.bf16.mxu0 0
        %887 = vmatpush1.bf16.msra.mxu0 %v834
        %888 = vmatprep.subr.bf16.mxu0 0
        %889 = vmatpush1.bf16.msra.mxu0 0
        %890 = vmatprep.subr.bf16.mxu0 0
        %891 = vmatpush1.bf16.msra.mxu0 0
        %892 = vmatprep.subr.bf16.mxu0 0
        %893 = vmatpush1.bf16.msra.mxu0 0
        %894 = vmatprep.subr.bf16.mxu0 0
        %895 = vmatpush1.bf16.msra.mxu0 0
        %896 = vmatprep.subr.bf16.mxu0 0
        %897 = vmatpush1.bf16.msra.mxu0 0
        %898 = vmatprep.subr.bf16.mxu0 0
        %899 = vmatpush1.bf16.msra.mxu0 0
        %900 = vmatprep.subr.bf16.mxu0 0
        %901 = vmatpush1.bf16.msra.mxu0 0
        %902 = vmatprep.subr.bf16.mxu0 0
        %903 = vmatpush1.bf16.msra.mxu0 0
        %904 = vmatprep.subr.bf16.mxu0 0
        %905 = vmatpush1.bf16.msra.mxu0 0
        %906 = vmatprep.subr.bf16.mxu0 0
        %907 = vmatpush1.bf16.msra.mxu0 0
        %908 = vmatprep.subr.bf16.mxu0 0
        %909 = vmatpush1.bf16.msra.mxu0 0
        %910 = vmatprep.subr.bf16.mxu0 0
        %911 = vmatpush1.bf16.msra.mxu0 0
        %912 = vmatprep.subr.bf16.mxu0 0
        %913 = vmatpush1.bf16.msra.mxu0 0
        %914 = vmatprep.subr.bf16.mxu0 0
        %915 = vmatpush1.bf16.msra.mxu0 0
        %916 = vmatprep.mubr.bf16.mxu0 0
        %917 = vmatmul.mubr.bf16.gmra.mrb[0].mxu0 %v882
        %v918 = vpop.f32.mrb[0].mxu0
        %v919 = vadd.f32 %v818, %v918
        %v920 = vpop.f32.mrb[0].mxu0
        %v921 = vpop.f32.mrb[0].mxu0
        %v922 = vpop.f32.mrb[0].mxu0
        %923 = vdwg.mxu0
        %s924 = sld [smem:[#allocation3 + %s43]]
        %v925 = vlaneseq
        %v926 = vand.u32 %v925, 127
        %v927 = vstv %s924
        %vm928 = vcmp.lt.s32.totalorder %v926, %v927
        %v929 = vmul.f32 %v756, 0.35355338
        %v930 = vpack.c.bf16 %v929, %v929
        %v931 = vpack.c.bf16 %v875, %v875
        %v933 = vsel %vm765, %v930, 0
        %v936 = vsel %vm765, %v931, 0
        %938 = vmatprep.subr.bf16.mxu0 0
        %939 = vmatpush1.bf16.xpose.msra.mxu0 %v936
        %940 = vmatprep.subr.bf16.mxu0 0
        %941 = vmatpush1.bf16.xpose.msra.mxu0 0
        %942 = vmatprep.subr.bf16.mxu0 0
        %943 = vmatpush1.bf16.xpose.msra.mxu0 0
        %944 = vmatprep.subr.bf16.mxu0 0
        %945 = vmatpush1.bf16.xpose.msra.mxu0 0
        %946 = vmatprep.subr.bf16.mxu0 0
        %947 = vmatpush1.bf16.xpose.msra.mxu0 0
        %948 = vmatprep.subr.bf16.mxu0 0
        %949 = vmatpush1.bf16.xpose.msra.mxu0 0
        %950 = vmatprep.subr.bf16.mxu0 0
        %951 = vmatpush1.bf16.xpose.msra.mxu0 0
        %952 = vmatprep.subr.bf16.mxu0 0
        %953 = vmatpush1.bf16.xpose.msra.mxu0 0
        %954 = vmatprep.subr.bf16.mxu0 0
        %955 = vmatpush1.bf16.xpose.msra.mxu0 0
        %956 = vmatprep.subr.bf16.mxu0 0
        %957 = vmatpush1.bf16.xpose.msra.mxu0 0
        %958 = vmatprep.subr.bf16.mxu0 0
        %959 = vmatpush1.bf16.xpose.msra.mxu0 0
        %960 = vmatprep.subr.bf16.mxu0 0
        %961 = vmatpush1.bf16.xpose.msra.mxu0 0
        %962 = vmatprep.subr.bf16.mxu0 0
        %963 = vmatpush1.bf16.xpose.msra.mxu0 0
        %964 = vmatprep.subr.bf16.mxu0 0
        %965 = vmatpush1.bf16.xpose.msra.mxu0 0
        %966 = vmatprep.subr.bf16.mxu0 0
        %967 = vmatpush1.bf16.xpose.msra.mxu0 0
        %968 = vmatprep.subr.bf16.mxu0 0
        %969 = vmatpush1.bf16.xpose.msra.mxu0 0
        %970 = vmatprep.mubr.bf16.mxu0 0
        %971 = vmatmul.mubr.bf16.gmra.mrb[0].mxu0 %v933
        %v972 = vpop.f32.mrb[0].mxu0
        %v973 = vadd.f32 0.0, %v972
        %v974 = vpop.f32.mrb[0].mxu0
        %v975 = vpop.f32.mrb[0].mxu0
        %v976 = vpop.f32.mrb[0].mxu0
        %977 = vdwg.mxu0
        %v978 = vsel %vm928, %v973, -1e+09
        %v979 = vunpack.c.l.bf16 %v930
        %v980 = vlaneseq
        %v981 = vshrl.u32 %v980, 7
        %v982 = vsub.s32 0, %v981
        %v983 = vrot.slane %v919, %v982
        %v984 = vmul.f32 %v979, %v983
        %v985 = vsel %vm765, %v984, 0.0
        %986 = vadd.xlane.f32.xlu0 %v985
        %v987 = vpop.xlane.xlu0 %986
        %v988 = vsel %vm765, %v978, -inf
        %989 = vmax.xlane.f32.xlu0 %v988
        %v990 = vpop.xlane.xlu0 %989
        %v991 = vmax.f32 %v990, %v987
        %v992 = vsub.f32 %v978, %v991
        %v993 = vmul.f32 %v992, 1.442695
        %v994 = vpow.pop %v993
        %v995 = vsub.f32 %v987, %v991
        %v996 = vmul.f32 %v995, 1.442695
        %v997 = vpow.pop %v996
        %v998 = vsel %vm765, %v994, 0.0
        %999 = vadd.xlane.f32.xlu0 %v998
        %v1000 = vpop.xlane.xlu0 %999
        %v1001 = vadd.f32 %v1000, %v997
        %v1002 = vrcp.pop %v1001
        %v1003 = vpack.c.bf16 %v994, %v994
        %v1004 = vmul.f32 %v997, %v983
        %1006 = vrot.lane.b32.xlu0 %v931, 96
        %v1007 = vpop.permute.xlu0 %1006
        %1009 = vrot.lane.b32.xlu0 %v1004, 96
        %v1010 = vpop.permute.xlu0 %1009
        %v1013 = vsel %vm765, %v1003, 0
        %v1016 = vsel %vm769, %v1007, 0
        %1018 = vmatprep.subr.bf16.mxu0 0
        %1019 = vmatpush1.bf16.msra.mxu0 %v1016
        %1020 = vmatprep.subr.bf16.mxu0 0
        %1021 = vmatpush1.bf16.msra.mxu0 0
        %1022 = vmatprep.subr.bf16.mxu0 0
        %1023 = vmatpush1.bf16.msra.mxu0 0
        %1024 = vmatprep.subr.bf16.mxu0 0
        %1025 = vmatpush1.bf16.msra.mxu0 0
        %1026 = vmatprep.subr.bf16.mxu0 0
        %1027 = vmatpush1.bf16.msra.mxu0 0
        %1028 = vmatprep.subr.bf16.mxu0 0
        %1029 = vmatpush1.bf16.msra.mxu0 0
        %1030 = vmatprep.subr.bf16.mxu0 0
        %1031 = vmatpush1.bf16.msra.mxu0 0
        %1032 = vmatprep.subr.bf16.mxu0 0
        %1033 = vmatpush1.bf16.msra.mxu0 0
        %1034 = vmatprep.subr.bf16.mxu0 0
        %1035 = vmatpush1.bf16.msra.mxu0 0
        %1036 = vmatprep.subr.bf16.mxu0 0
        %1037 = vmatpush1.bf16.msra.mxu0 0
        %1038 = vmatprep.subr.bf16.mxu0 0
        %1039 = vmatpush1.bf16.msra.mxu0 0
        %1040 = vmatprep.subr.bf16.mxu0 0
        %1041 = vmatpush1.bf16.msra.mxu0 0
        %1042 = vmatprep.subr.bf16.mxu0 0
        %1043 = vmatpush1.bf16.msra.mxu0 0
        %1044 = vmatprep.subr.bf16.mxu0 0
        %1045 = vmatpush1.bf16.msra.mxu0 0
        %1046 = vmatprep.subr.bf16.mxu0 0
        %1047 = vmatpush1.bf16.msra.mxu0 0
        %1048 = vmatprep.subr.bf16.mxu0 0
        %1049 = vmatpush1.bf16.msra.mxu0 0
        %1050 = vmatprep.mubr.bf16.mxu0 0
        %1051 = vmatmul.mubr.bf16.gmra.mrb[0].mxu0 %v1013
        %v1052 = vpop.f32.mrb[0].mxu0
        %v1053 = vadd.f32 %v1010, %v1052
        %v1054 = vpop.f32.mrb[0].mxu0
        %v1055 = vpop.f32.mrb[0].mxu0
        %v1056 = vpop.f32.mrb[0].mxu0
        %1057 = vdwg.mxu0
        %v1058 = vmul.f32 %v1053, %v1002
        %1060 = vrot.lane.b32.xlu0 %v930, 120
        %v1061 = vpop.permute.xlu0 %1060
        %1062 = vrot.lane.b32.xlu0 %v931, 120
        %v1063 = vpop.permute.xlu0 %1062
        %v1065 = vsel %vm765, %v1061, 0
        %v1068 = vsel %vm765, %v1063, 0
        %1070 = vmatprep.subr.bf16.mxu0 0
        %1071 = vmatpush1.bf16.xpose.msra.mxu0 %v1068
        %1072 = vmatprep.subr.bf16.mxu0 0
        %1073 = vmatpush1.bf16.xpose.msra.mxu0 0
        %1074 = vmatprep.subr.bf16.mxu0 0
        %1075 = vmatpush1.bf16.xpose.msra.mxu0 0
        %1076 = vmatprep.subr.bf16.mxu0 0
        %1077 = vmatpush1.bf16.xpose.msra.mxu0 0
        %1078 = vmatprep.subr.bf16.mxu0 0
        %1079 = vmatpush1.bf16.xpose.msra.mxu0 0
        %1080 = vmatprep.subr.bf16.mxu0 0
        %1081 = vmatpush1.bf16.xpose.msra.mxu0 0
        %1082 = vmatprep.subr.bf16.mxu0 0
        %1083 = vmatpush1.bf16.xpose.msra.mxu0 0
        %1084 = vmatprep.subr.bf16.mxu0 0
        %1085 = vmatpush1.bf16.xpose.msra.mxu0 0
        %1086 = vmatprep.subr.bf16.mxu0 0
        %1087 = vmatpush1.bf16.xpose.msra.mxu0 0
        %1088 = vmatprep.subr.bf16.mxu0 0
        %1089 = vmatpush1.bf16.xpose.msra.mxu0 0
        %1090 = vmatprep.subr.bf16.mxu0 0
        %1091 = vmatpush1.bf16.xpose.msra.mxu0 0
        %1092 = vmatprep.subr.bf16.mxu0 0
        %1093 = vmatpush1.bf16.xpose.msra.mxu0 0
        %1094 = vmatprep.subr.bf16.mxu0 0
        %1095 = vmatpush1.bf16.xpose.msra.mxu0 0
        %1096 = vmatprep.subr.bf16.mxu0 0
        %1097 = vmatpush1.bf16.xpose.msra.mxu0 0
        %1098 = vmatprep.subr.bf16.mxu0 0
        %1099 = vmatpush1.bf16.xpose.msra.mxu0 0
        %1100 = vmatprep.subr.bf16.mxu0 0
        %1101 = vmatpush1.bf16.xpose.msra.mxu0 0
        %1102 = vmatprep.mubr.bf16.mxu0 0
        %1103 = vmatmul.mubr.bf16.gmra.mrb[0].mxu0 %v1065
        %v1104 = vpop.f32.mrb[0].mxu0
        %v1105 = vadd.f32 0.0, %v1104
        %v1106 = vpop.f32.mrb[0].mxu0
        %v1107 = vpop.f32.mrb[0].mxu0
        %v1108 = vpop.f32.mrb[0].mxu0
        %1109 = vdwg.mxu0
        %v1110 = vsel %vm928, %v1105, -1e+09
        %1112 = vrot.lane.b32.xlu0 %v984, 120
        %v1113 = vpop.permute.xlu0 %1112
        %v1115 = vsel %vm765, %v1113, 0.0
        %1116 = vadd.xlane.f32.xlu0 %v1115
        %v1117 = vpop.xlane.xlu0 %1116
        %v1118 = vsel %vm765, %v1110, -inf
        %1119 = vmax.xlane.f32.xlu0 %v1118
        %v1120 = vpop.xlane.xlu0 %1119
        %v1121 = vmax.f32 %v1120, %v1117
        %v1122 = vsub.f32 %v1110, %v1121
        %v1123 = vmul.f32 %v1122, 1.442695
        %v1124 = vpow.pop %v1123
        %v1125 = vsub.f32 %v1117, %v1121
        %v1126 = vmul.f32 %v1125, 1.442695
        %v1127 = vpow.pop %v1126
        %v1128 = vsel %vm765, %v1124, 0.0
        %1129 = vadd.xlane.f32.xlu0 %v1128
        %v1130 = vpop.xlane.xlu0 %1129
        %v1131 = vadd.f32 %v1130, %v1127
        %v1132 = vrcp.pop %v1131
        %v1133 = vpack.c.bf16 %v1124, %v1124
        %v1134 = vmul.f32 %v1127, %v983
        %1135 = vrot.lane.b32.xlu0 %v931, 88
        %v1136 = vpop.permute.xlu0 %1135
        %1138 = vrot.lane.b32.xlu0 %v1134, 88
        %v1139 = vpop.permute.xlu0 %1138
        %v1142 = vsel %vm765, %v1133, 0
        %v1145 = vsel %vm769, %v1136, 0
        %1147 = vmatprep.subr.bf16.mxu0 0
        %1148 = vmatpush1.bf16.msra.mxu0 %v1145
        %1149 = vmatprep.subr.bf16.mxu0 0
        %1150 = vmatpush1.bf16.msra.mxu0 0
        %1151 = vmatprep.subr.bf16.mxu0 0
        %1152 = vmatpush1.bf16.msra.mxu0 0
        %1153 = vmatprep.subr.bf16.mxu0 0
        %1154 = vmatpush1.bf16.msra.mxu0 0
        %1155 = vmatprep.subr.bf16.mxu0 0
        %1156 = vmatpush1.bf16.msra.mxu0 0
        %1157 = vmatprep.subr.bf16.mxu0 0
        %1158 = vmatpush1.bf16.msra.mxu0 0
        %1159 = vmatprep.subr.bf16.mxu0 0
        %1160 = vmatpush1.bf16.msra.mxu0 0
        %1161 = vmatprep.subr.bf16.mxu0 0
        %1162 = vmatpush1.bf16.msra.mxu0 0
        %1163 = vmatprep.subr.bf16.mxu0 0
        %1164 = vmatpush1.bf16.msra.mxu0 0
        %1165 = vmatprep.subr.bf16.mxu0 0
        %1166 = vmatpush1.bf16.msra.mxu0 0
        %1167 = vmatprep.subr.bf16.mxu0 0
        %1168 = vmatpush1.bf16.msra.mxu0 0
        %1169 = vmatprep.subr.bf16.mxu0 0
        %1170 = vmatpush1.bf16.msra.mxu0 0
        %1171 = vmatprep.subr.bf16.mxu0 0
        %1172 = vmatpush1.bf16.msra.mxu0 0
        %1173 = vmatprep.subr.bf16.mxu0 0
        %1174 = vmatpush1.bf16.msra.mxu0 0
        %1175 = vmatprep.subr.bf16.mxu0 0
        %1176 = vmatpush1.bf16.msra.mxu0 0
        %1177 = vmatprep.subr.bf16.mxu0 0
        %1178 = vmatpush1.bf16.msra.mxu0 0
        %1179 = vmatprep.mubr.bf16.mxu0 0
        %1180 = vmatmul.mubr.bf16.gmra.mrb[0].mxu0 %v1142
        %v1181 = vpop.f32.mrb[0].mxu0
        %v1182 = vadd.f32 %v1139, %v1181
        %v1183 = vpop.f32.mrb[0].mxu0
        %v1184 = vpop.f32.mrb[0].mxu0
        %v1185 = vpop.f32.mrb[0].mxu0
        %1186 = vdwg.mxu0
        %v1187 = vmul.f32 %v1182, %v1132
        %1188 = vrot.lane.b32.xlu0 %v930, 112
        %v1189 = vpop.permute.xlu0 %1188
        %1190 = vrot.lane.b32.xlu0 %v931, 112
        %v1191 = vpop.permute.xlu0 %1190
        %v1193 = vsel %vm765, %v1189, 0
        %v1196 = vsel %vm765, %v1191, 0
        %1198 = vmatprep.subr.bf16.mxu0 0
        %1199 = vmatpush1.bf16.xpose.msra.mxu0 %v1196
        %1200 = vmatprep.subr.bf16.mxu0 0
        %1201 = vmatpush1.bf16.xpose.msra.mxu0 0
        %1202 = vmatprep.subr.bf16.mxu0 0
        %1203 = vmatpush1.bf16.xpose.msra.mxu0 0
        %1204 = vmatprep.subr.bf16.mxu0 0
        %1205 = vmatpush1.bf16.xpose.msra.mxu0 0
        %1206 = vmatprep.subr.bf16.mxu0 0
        %1207 = vmatpush1.bf16.xpose.msra.mxu0 0
        %1208 = vmatprep.subr.bf16.mxu0 0
        %1209 = vmatpush1.bf16.xpose.msra.mxu0 0
        %1210 = vmatprep.subr.bf16.mxu0 0
        %1211 = vmatpush1.bf16.xpose.msra.mxu0 0
        %1212 = vmatprep.subr.bf16.mxu0 0
        %1213 = vmatpush1.bf16.xpose.msra.mxu0 0
        %1214 = vmatprep.subr.bf16.mxu0 0
        %1215 = vmatpush1.bf16.xpose.msra.mxu0 0
        %1216 = vmatprep.subr.bf16.mxu0 0
        %1217 = vmatpush1.bf16.xpose.msra.mxu0 0
        %1218 = vmatprep.subr.bf16.mxu0 0
        %1219 = vmatpush1.bf16.xpose.msra.mxu0 0
        %1220 = vmatprep.subr.bf16.mxu0 0
        %1221 = vmatpush1.bf16.xpose.msra.mxu0 0
        %1222 = vmatprep.subr.bf16.mxu0 0
        %1223 = vmatpush1.bf16.xpose.msra.mxu0 0
        %1224 = vmatprep.subr.bf16.mxu0 0
        %1225 = vmatpush1.bf16.xpose.msra.mxu0 0
        %1226 = vmatprep.subr.bf16.mxu0 0
        %1227 = vmatpush1.bf16.xpose.msra.mxu0 0
        %1228 = vmatprep.subr.bf16.mxu0 0
        %1229 = vmatpush1.bf16.xpose.msra.mxu0 0
        %1230 = vmatprep.mubr.bf16.mxu0 0
        %1231 = vmatmul.mubr.bf16.gmra.mrb[0].mxu0 %v1193
        %v1232 = vpop.f32.mrb[0].mxu0
        %v1233 = vadd.f32 0.0, %v1232
        %v1234 = vpop.f32.mrb[0].mxu0
        %v1235 = vpop.f32.mrb[0].mxu0
        %v1236 = vpop.f32.mrb[0].mxu0
        %1237 = vdwg.mxu0
        %v1238 = vsel %vm928, %v1233, -1e+09
        %1239 = vrot.lane.b32.xlu0 %v984, 112
        %v1240 = vpop.permute.xlu0 %1239
        %v1242 = vsel %vm765, %v1240, 0.0
        %1243 = vadd.xlane.f32.xlu0 %v1242
        %v1244 = vpop.xlane.xlu0 %1243
        %v1245 = vsel %vm765, %v1238, -inf
        %1246 = vmax.xlane.f32.xlu0 %v1245
        %v1247 = vpop.xlane.xlu0 %1246
        %v1248 = vmax.f32 %v1247, %v1244
        %v1249 = vsub.f32 %v1238, %v1248
        %v1250 = vmul.f32 %v1249, 1.442695
        %v1251 = vpow.pop %v1250
        %v1252 = vsub.f32 %v1244, %v1248
        %v1253 = vmul.f32 %v1252, 1.442695
        %v1254 = vpow.pop %v1253
        %v1255 = vsel %vm765, %v1251, 0.0
        %1256 = vadd.xlane.f32.xlu0 %v1255
        %v1257 = vpop.xlane.xlu0 %1256
        %v1258 = vadd.f32 %v1257, %v1254
        %v1259 = vrcp.pop %v1258
        %v1260 = vpack.c.bf16 %v1251, %v1251
        %v1261 = vmul.f32 %v1254, %v983
        %1262 = vrot.lane.b32.xlu0 %v931, 80
        %v1263 = vpop.permute.xlu0 %1262
        %1265 = vrot.lane.b32.xlu0 %v1261, 80
        %v1266 = vpop.permute.xlu0 %1265
        %v1269 = vsel %vm765, %v1260, 0
        %v1272 = vsel %vm769, %v1263, 0
        %1274 = vmatprep.subr.bf16.mxu0 0
        %1275 = vmatpush1.bf16.msra.mxu0 %v1272
        %1276 = vmatprep.subr.bf16.mxu0 0
        %1277 = vmatpush1.bf16.msra.mxu0 0
        %1278 = vmatprep.subr.bf16.mxu0 0
        %1279 = vmatpush1.bf16.msra.mxu0 0
        %1280 = vmatprep.subr.bf16.mxu0 0
        %1281 = vmatpush1.bf16.msra.mxu0 0
        %1282 = vmatprep.subr.bf16.mxu0 0
        %1283 = vmatpush1.bf16.msra.mxu0 0
        %1284 = vmatprep.subr.bf16.mxu0 0
        %1285 = vmatpush1.bf16.msra.mxu0 0
        %1286 = vmatprep.subr.bf16.mxu0 0
        %1287 = vmatpush1.bf16.msra.mxu0 0
        %1288 = vmatprep.subr.bf16.mxu0 0
        %1289 = vmatpush1.bf16.msra.mxu0 0
        %1290 = vmatprep.subr.bf16.mxu0 0
        %1291 = vmatpush1.bf16.msra.mxu0 0
        %1292 = vmatprep.subr.bf16.mxu0 0
        %1293 = vmatpush1.bf16.msra.mxu0 0
        %1294 = vmatprep.subr.bf16.mxu0 0
        %1295 = vmatpush1.bf16.msra.mxu0 0
        %1296 = vmatprep.subr.bf16.mxu0 0
        %1297 = vmatpush1.bf16.msra.mxu0 0
        %1298 = vmatprep.subr.bf16.mxu0 0
        %1299 = vmatpush1.bf16.msra.mxu0 0
        %1300 = vmatprep.subr.bf16.mxu0 0
        %1301 = vmatpush1.bf16.msra.mxu0 0
        %1302 = vmatprep.subr.bf16.mxu0 0
        %1303 = vmatpush1.bf16.msra.mxu0 0
        %1304 = vmatprep.subr.bf16.mxu0 0
        %1305 = vmatpush1.bf16.msra.mxu0 0
        %1306 = vmatprep.mubr.bf16.mxu0 0
        %1307 = vmatmul.mubr.bf16.gmra.mrb[0].mxu0 %v1269
        %v1308 = vpop.f32.mrb[0].mxu0
        %v1309 = vadd.f32 %v1266, %v1308
        %v1310 = vpop.f32.mrb[0].mxu0
        %v1311 = vpop.f32.mrb[0].mxu0
        %v1312 = vpop.f32.mrb[0].mxu0
        %1313 = vdwg.mxu0
        %v1314 = vmul.f32 %v1309, %v1259
        %1315 = vrot.lane.b32.xlu0 %v930, 104
        %v1316 = vpop.permute.xlu0 %1315
        %1317 = vrot.lane.b32.xlu0 %v931, 104
        %v1318 = vpop.permute.xlu0 %1317
        %v1320 = vsel %vm765, %v1316, 0
        %v1323 = vsel %vm765, %v1318, 0
        %1325 = vmatprep.subr.bf16.mxu0 0
        %1326 = vmatpush1.bf16.xpose.msra.mxu0 %v1323
        %1327 = vmatprep.subr.bf16.mxu0 0
        %1328 = vmatpush1.bf16.xpose.msra.mxu0 0
        %1329 = vmatprep.subr.bf16.mxu0 0
        %1330 = vmatpush1.bf16.xpose.msra.mxu0 0
        %1331 = vmatprep.subr.bf16.mxu0 0
        %1332 = vmatpush1.bf16.xpose.msra.mxu0 0
        %1333 = vmatprep.subr.bf16.mxu0 0
        %1334 = vmatpush1.bf16.xpose.msra.mxu0 0
        %1335 = vmatprep.subr.bf16.mxu0 0
        %1336 = vmatpush1.bf16.xpose.msra.mxu0 0
        %1337 = vmatprep.subr.bf16.mxu0 0
        %1338 = vmatpush1.bf16.xpose.msra.mxu0 0
        %1339 = vmatprep.subr.bf16.mxu0 0
        %1340 = vmatpush1.bf16.xpose.msra.mxu0 0
        %1341 = vmatprep.subr.bf16.mxu0 0
        %1342 = vmatpush1.bf16.xpose.msra.mxu0 0
        %1343 = vmatprep.subr.bf16.mxu0 0
        %1344 = vmatpush1.bf16.xpose.msra.mxu0 0
        %1345 = vmatprep.subr.bf16.mxu0 0
        %1346 = vmatpush1.bf16.xpose.msra.mxu0 0
        %1347 = vmatprep.subr.bf16.mxu0 0
        %1348 = vmatpush1.bf16.xpose.msra.mxu0 0
        %1349 = vmatprep.subr.bf16.mxu0 0
        %1350 = vmatpush1.bf16.xpose.msra.mxu0 0
        %1351 = vmatprep.subr.bf16.mxu0 0
        %1352 = vmatpush1.bf16.xpose.msra.mxu0 0
        %1353 = vmatprep.subr.bf16.mxu0 0
        %1354 = vmatpush1.bf16.xpose.msra.mxu0 0
        %1355 = vmatprep.subr.bf16.mxu0 0
        %1356 = vmatpush1.bf16.xpose.msra.mxu0 0
        %1357 = vmatprep.mubr.bf16.mxu0 0
        %1358 = vmatmul.mubr.bf16.gmra.mrb[0].mxu0 %v1320
        %v1359 = vpop.f32.mrb[0].mxu0
        %v1360 = vadd.f32 0.0, %v1359
        %v1361 = vpop.f32.mrb[0].mxu0
        %v1362 = vpop.f32.mrb[0].mxu0
        %v1363 = vpop.f32.mrb[0].mxu0
        %1364 = vdwg.mxu0
        %v1365 = vsel %vm928, %v1360, -1e+09
        %1366 = vrot.lane.b32.xlu0 %v984, 104
        %v1367 = vpop.permute.xlu0 %1366
        %v1369 = vsel %vm765, %v1367, 0.0
        %1370 = vadd.xlane.f32.xlu0 %v1369
        %v1371 = vpop.xlane.xlu0 %1370
        %v1372 = vsel %vm765, %v1365, -inf
        %1373 = vmax.xlane.f32.xlu0 %v1372
        %v1374 = vpop.xlane.xlu0 %1373
        %v1375 = vmax.f32 %v1374, %v1371
        %v1376 = vsub.f32 %v1365, %v1375
        %v1377 = vmul.f32 %v1376, 1.442695
        %v1378 = vpow.pop %v1377
        %v1379 = vsub.f32 %v1371, %v1375
        %v1380 = vmul.f32 %v1379, 1.442695
        %v1381 = vpow.pop %v1380
        %v1382 = vsel %vm765, %v1378, 0.0
        %1383 = vadd.xlane.f32.xlu0 %v1382
        %v1384 = vpop.xlane.xlu0 %1383
        %v1385 = vadd.f32 %v1384, %v1381
        %v1386 = vrcp.pop %v1385
        %v1387 = vpack.c.bf16 %v1378, %v1378
        %v1388 = vmul.f32 %v1381, %v983
        %1389 = vrot.lane.b32.xlu0 %v931, 72
        %v1390 = vpop.permute.xlu0 %1389
        %1392 = vrot.lane.b32.xlu0 %v1388, 72
        %v1393 = vpop.permute.xlu0 %1392
        %v1396 = vsel %vm765, %v1387, 0
        %v1399 = vsel %vm769, %v1390, 0
        %1401 = vmatprep.subr.bf16.mxu0 0
        %1402 = vmatpush1.bf16.msra.mxu0 %v1399
        %1403 = vmatprep.subr.bf16.mxu0 0
        %1404 = vmatpush1.bf16.msra.mxu0 0
        %1405 = vmatprep.subr.bf16.mxu0 0
        %1406 = vmatpush1.bf16.msra.mxu0 0
        %1407 = vmatprep.subr.bf16.mxu0 0
        %1408 = vmatpush1.bf16.msra.mxu0 0
        %1409 = vmatprep.subr.bf16.mxu0 0
        %1410 = vmatpush1.bf16.msra.mxu0 0
        %1411 = vmatprep.subr.bf16.mxu0 0
        %1412 = vmatpush1.bf16.msra.mxu0 0
        %1413 = vmatprep.subr.bf16.mxu0 0
        %1414 = vmatpush1.bf16.msra.mxu0 0
        %1415 = vmatprep.subr.bf16.mxu0 0
        %1416 = vmatpush1.bf16.msra.mxu0 0
        %1417 = vmatprep.subr.bf16.mxu0 0
        %1418 = vmatpush1.bf16.msra.mxu0 0
        %1419 = vmatprep.subr.bf16.mxu0 0
        %1420 = vmatpush1.bf16.msra.mxu0 0
        %1421 = vmatprep.subr.bf16.mxu0 0
        %1422 = vmatpush1.bf16.msra.mxu0 0
        %1423 = vmatprep.subr.bf16.mxu0 0
        %1424 = vmatpush1.bf16.msra.mxu0 0
        %1425 = vmatprep.subr.bf16.mxu0 0
        %1426 = vmatpush1.bf16.msra.mxu0 0
        %1427 = vmatprep.subr.bf16.mxu0 0
        %1428 = vmatpush1.bf16.msra.mxu0 0
        %1429 = vmatprep.subr.bf16.mxu0 0
        %1430 = vmatpush1.bf16.msra.mxu0 0
        %1431 = vmatprep.subr.bf16.mxu0 0
        %1432 = vmatpush1.bf16.msra.mxu0 0
        %1433 = vmatprep.mubr.bf16.mxu0 0
        %1434 = vmatmul.mubr.bf16.gmra.mrb[0].mxu0 %v1396
        %v1435 = vpop.f32.mrb[0].mxu0
        %v1436 = vadd.f32 %v1393, %v1435
        %v1437 = vpop.f32.mrb[0].mxu0
        %v1438 = vpop.f32.mrb[0].mxu0
        %v1439 = vpop.f32.mrb[0].mxu0
        %1440 = vdwg.mxu0
        %v1441 = vmul.f32 %v1436, %v1386
        %1443 = vrot.lane.b32.xlu0 %v1187, 8
        %v1444 = vpop.permute.xlu0 %1443
        %1447 = vrot.lane.b32.xlu0 %v1314, 16
        %v1448 = vpop.permute.xlu0 %1447
        %1451 = vrot.lane.b32.xlu0 %v1441, 24
        %v1452 = vpop.permute.xlu0 %1451
        %v1454 = vsel %vm765, %v1058, %v1444
        %vm1455 = vcmask 130048
        %v1456 = vsel %vm1455, %v1454, %v1448
        %vm1457 = vcmask 195584
        %v1458 = vsel %vm1457, %v1456, %v1452
        %v1459 = vpack.c.bf16 %v1458, %v1458
        %v1460 = vld [vmem:[#allocation22] sm:$0xf]
        %v1461 = vld [vmem:[#allocation22 + $0x4] sm:$0xf]
        %v1462 = vld [vmem:[#allocation22 + $0x8] sm:$0xf]
        %v1463 = vld [vmem:[#allocation22 + $0xc] sm:$0xf]
        %v1464 = vld [vmem:[#allocation24] sm:$0x1]
        %v1466 = vlaneseq
        %v1467 = vshrl.u32 %v1466, 7
        %v1468 = vsub.s32 0, %v1467
        %v1469 = vrot.slane %v1464, %v1468
        %v1475 = vunpack.c.l.b16 %v1460
        %v1476 = vunpack.c.l.b16 %v1461
        %v1477 = vunpack.c.l.b16 %v1462
        %v1478 = vunpack.c.l.b16 %v1463
        %v1479 = vpack.c.b16 %v1476, %v1475
        %v1480 = vpack.c.b16 %v1478, %v1477
        %v1484 = vsel %vm663, %v1459, 0
        %1486 = vmatprep.subr.bf16.mxu0 0
        %1487 = vmatpush1.bf16.msra.mxu0 %v1479
        %1488 = vmatprep.subr.bf16.mxu0 0
        %1489 = vmatpush1.bf16.msra.mxu0 %v1480
        %1490 = vmatprep.subr.bf16.mxu0 0
        %1491 = vmatpush1.bf16.msra.mxu0 0
        %1492 = vmatprep.subr.bf16.mxu0 0
        %1493 = vmatpush1.bf16.msra.mxu0 0
        %1494 = vmatprep.subr.bf16.mxu0 0
        %1495 = vmatpush1.bf16.msra.mxu0 0
        %1496 = vmatprep.subr.bf16.mxu0 0
        %1497 = vmatpush1.bf16.msra.mxu0 0
        %1498 = vmatprep.subr.bf16.mxu0 0
        %1499 = vmatpush1.bf16.msra.mxu0 0
        %1500 = vmatprep.subr.bf16.mxu0 0
        %1501 = vmatpush1.bf16.msra.mxu0 0
        %1502 = vmatprep.subr.bf16.mxu0 0
        %1503 = vmatpush1.bf16.msra.mxu0 0
        %1504 = vmatprep.subr.bf16.mxu0 0
        %1505 = vmatpush1.bf16.msra.mxu0 0
        %1506 = vmatprep.subr.bf16.mxu0 0
        %1507 = vmatpush1.bf16.msra.mxu0 0
        %1508 = vmatprep.subr.bf16.mxu0 0
        %1509 = vmatpush1.bf16.msra.mxu0 0
        %1510 = vmatprep.subr.bf16.mxu0 0
        %1511 = vmatpush1.bf16.msra.mxu0 0
        %1512 = vmatprep.subr.bf16.mxu0 0
        %1513 = vmatpush1.bf16.msra.mxu0 0
        %1514 = vmatprep.subr.bf16.mxu0 0
        %1515 = vmatpush1.bf16.msra.mxu0 0
        %1516 = vmatprep.subr.bf16.mxu0 0
        %1517 = vmatpush1.bf16.msra.mxu0 0
        %1518 = vmatprep.mubr.bf16.mxu0 0
        %1519 = vmatmul.mubr.bf16.gmra.mrb[0].mxu0 %v1484
        %v1520 = vpop.f32.mrb[0].mxu0
        %v1521 = vadd.f32 %v1469, %v1520
        %v1522 = vpop.f32.mrb[0].mxu0
        %v1523 = vpop.f32.mrb[0].mxu0
        %v1524 = vpop.f32.mrb[0].mxu0
        %1525 = vdwg.mxu0
        %v1526 = vadd.f32 %v1521, %v662
        %v1527 = vpack.c.bf16 %v1526, %v1526
        %vm1528 = vcmask 257024
        %1529 = vst.msk [vmem:[%s659] sm:$0xf] %vm1528, %v1527
        %s1530 = sand.u32 %s339, 1
        %s1531 = scalar_lea.sflag [#allocation6], %s1530
        %s1532 = sand.u32 %s339, 1
        %s1533 = smul.addr %s1532, 4
        %s1534 = scalar_lea.vmem [#allocation25], %s1533
        // Predicated region
        $region125: #{generator2_forward.15} parent=71 // pred_check
          %p1535 = pneg %p349
        $region126: #{generator2_forward.15} parent=71 // pred_check_branch
          %1537 = sbr.rel (%p1535) target = $region128
        $region127: #{generator2_forward.15} parent=71 // pred_region
          %s1539 = ssub.s32 64, 64
          %1540 = vsyncadd %s1531, %s1539
          %s1541 = smul.addr %s43, 64
          %s1542 = scalar_lea.hbm %s14, %s1541
          %s1544 = sshll.u32 %s1534, 4
          %s1545 = int_to_ptr.vmem [resolvable:$true] %s1544
          %1547 = dma.vmem_to_hbm [thread:$0]  %s1545, 64, %s1542, %s1531
        $region128: #{generator2_forward.15} parent=71 // pred_fallthru
          _
      $region72: #{generator2_forward.15} parent=5 // pred_fallthru
        _
      %p1548 = scmp.le.s32.totalorder 2, %s38
      // Predicated region
      $region129: #{generator2_forward.15} parent=5 // pred_check
        %p1549 = pneg %p1548
      $region130: #{generator2_forward.15} parent=5 // pred_check_branch
        %1551 = sbr.rel (%p1549) target = $region132
      $region131: #{generator2_forward.15} parent=5 // pred_region
        %s1552 = ssub.s32 %s38, 2
        // Predicated region
        $region133: #{generator2_forward.15} parent=131 // pred_check
          %p1553 = pneg %p355
        $region134: #{generator2_forward.15} parent=131 // pred_check_branch
          %1555 = sbr.rel (%p1553) target = $region136
        $region135: #{generator2_forward.15} parent=131 // pred_region
          %s1556 = sand.u32 %s340, 1
          %s1557 = scalar_lea.sflag [#allocation6], %s1556
          %s1558 = sand.u32 %s340, 1
          %s1559 = smul.addr %s1558, 4
          %s1560 = scalar_lea.vmem [#allocation25], %s1559
          %1561 = dma.done %s1557, 64
        $region136: #{generator2_forward.15} parent=131 // pred_fallthru
          _
      $region132: #{generator2_forward.15} parent=5 // pred_fallthru
        _
    $region6: #{generator2_forward.15} parent=1 // loop_footer
      %s42 = sadd.s32 1, %s38
    $region7: #{generator2_forward.15} parent=1 // loop_footer_branch
      %37 = sbr.rel target = $region3
    $region8: #{generator2_forward.15} parent=1 // loop_exit
      _
    %1562 = vsyncpa [#allocation5], 1
    %s1563 = scalar_lea.sflag [#allocation5], 1
    %1564 = vsyncpa %s1563, 1
    %1565 = vsyncpa [#allocation8], 1
    %s1566 = scalar_lea.sflag [#allocation8], 1
    %1567 = vsyncpa %s1566, 1
    %1568 = vsyncpa [#allocation11], 1
    %1569 = vsyncpa [#allocation14], 1
    %1570 = vsyncpa [#allocation17], 1
    %1571 = vsyncpa [#allocation20], 1
    %1572 = vsyncpa [#allocation23], 1
    %1573 = vsyncpa [#allocation6], 1
    %s1574 = scalar_lea.sflag [#allocation6], 1
    %1575 = vsyncpa %s1574, 1

</llo_original>
